<compile_context>
chip_gen: v5e
topology: v5e:2x2
jax: 0.10.0
libtpu: 0.0.40
codegen_flags: <defaults>
</compile_context>

<pallas_src>
import math

import jax
import jax.numpy as jnp
from jax.experimental import pallas as pl
from jax.experimental.pallas import tpu as pltpu

INPUT_SIZE = 64
HIDDEN_SIZES = (128, 64, 32, 16)
GP = 128                  # per-gate lane padding (one full vreg lane width)
B_TILE = 8                # batch rows per grid step (one sublane tile)
INPUT_PROJ_BF16 = True    # bf16 operands for the hoisted layer-0 projection (MXU-native)


def stacked_lstm_kernel(*refs):
    """refs = [x(T,Bt,D)] + [wih,whh,bias]*L + [wfc,bfc] + [out(Bt,1)] + [xg0 scratch]."""
    x_ref = refs[0]
    xg0_ref = refs[-1]                     # VMEM scratch: (T, Bt, 4*GP)
    out_ref = refs[-2]
    wfc_ref, bfc_ref = refs[-4], refs[-3]
    layer_refs = refs[1:-4]
    L = len(layer_refs) // 3

    T, B, D = x_ref.shape

    # ---- layer-0 input projection, hoisted: one MXU matmul for the whole block ----
    x = x_ref[...].reshape(T * B, D)
    w0 = layer_refs[0][...]
    if INPUT_PROJ_BF16:
        xg = jnp.dot(x.astype(jnp.bfloat16), w0.astype(jnp.bfloat16),
                     preferred_element_type=jnp.float32)
    else:
        xg = jnp.dot(x, w0, preferred_element_type=jnp.float32)
    # bias folded in here; streamed back one time-slab per wavefront step below.
    xg0_ref[...] = (xg + layer_refs[2][...]).reshape(T, B, 4 * GP)

    # ---- wavefronted stacked recurrence (fully unrolled; T and L are small/static) --
    hs = [jnp.zeros((B, GP), jnp.float32) for _ in range(L)]
    cs = [jnp.zeros((B, GP), jnp.float32) for _ in range(L)]

    for s in range(T + L - 1):
        new_hs = list(hs)
        new_cs = list(cs)
        for li in range(L):
            t = s - li
            if not (0 <= t < T):
                continue
            wih_ref = layer_refs[3 * li + 0]
            whh_ref = layer_refs[3 * li + 1]
            b_ref = layer_refs[3 * li + 2]
            if li == 0:
                gin = xg0_ref[t]                                   # (B, 4*GP), bias included
            else:
                # per-step input projection from the layer below (previous-step h),
                # weight loaded in-loop so its live range is a single matmul.
                gin = jnp.dot(hs[li - 1], wih_ref[...],
                              preferred_element_type=jnp.float32) + b_ref[...]
            # single fused recurrent matmul; gate blocks are 128-lane aligned.
            gates = gin + jnp.dot(hs[li], whh_ref[...],
                                  preferred_element_type=jnp.float32)
            i_t = jax.nn.sigmoid(gates[:, 0 * GP:1 * GP])
            f_t = jax.nn.sigmoid(gates[:, 1 * GP:2 * GP])
            g_t = jnp.tanh(gates[:, 2 * GP:3 * GP])
            o_t = jax.nn.sigmoid(gates[:, 3 * GP:4 * GP])
            c_new = f_t * cs[li] + i_t * g_t
            new_cs[li] = c_new
            new_hs[li] = o_t * jnp.tanh(c_new)
        hs, cs = new_hs, new_cs
        # nn.Dropout(p=0.15) between layers is identity in eval/inference mode.

    # fc(h_T) of the last layer: lane-reduction instead of a degenerate N=1 matmul.
    out_ref[...] = (jnp.sum(hs[L - 1] * wfc_ref[...], axis=1, keepdims=True)
                    + bfc_ref[...])


@jax.jit
def stacked_lstm_forward(x_btd, packed_layers, packed_fc):
    """x_btd: (B, T, D) batch-first (PyTorch convention). Returns (B, 1) f32."""
    B, T, D = x_btd.shape
    B_pad = ((B + B_TILE - 1) // B_TILE) * B_TILE       # sublane-dense batch
    x = x_btd.astype(jnp.float32)
    if B_pad != B:
        x = jnp.pad(x, ((0, B_pad - B), (0, 0), (0, 0)))
    x_tm = jnp.transpose(x, (1, 0, 2))                  # (T, B_pad, D) time-major

    wfc_p, bfc_p = packed_fc
    flat_inputs = [x_tm]
    in_specs = [pl.BlockSpec((T, B_TILE, D), lambda b: (0, b, 0))]
    for (wih_p, whh_p, bias_p) in packed_layers:
        flat_inputs += [wih_p, whh_p, bias_p]
        in_specs += [pl.BlockSpec(wih_p.shape, lambda b: (0, 0)),
                     pl.BlockSpec(whh_p.shape, lambda b: (0, 0)),
                     pl.BlockSpec(bias_p.shape, lambda b: (0, 0))]
    flat_inputs += [wfc_p, bfc_p]
    in_specs += [pl.BlockSpec(wfc_p.shape, lambda b: (0, 0)),
                 pl.BlockSpec(bfc_p.shape, lambda b: (0, 0))]

    grid_spec = pltpu.PrefetchScalarGridSpec(
        num_scalar_prefetch=0,
        grid=(B_pad // B_TILE,),
        in_specs=in_specs,
        out_specs=pl.BlockSpec((B_TILE, 1), lambda b: (b, 0)),
        scratch_shapes=[pltpu.VMEM((T, B_TILE, 4 * GP), jnp.float32)],
    )
    # TODO(synk): for long sequences add a T-chunked grid axis (persistent h/c in
    # VMEM scratch, T-blocked x BlockSpec) once T*B_TILE*4*GP*4B nears the scoped
    # VMEM budget; re-derive the threshold for v7x's 64 MiB (half of v5e/v6e) and
    # raise pltpu.CompilerParams(vmem_limit_bytes=...) if needed.
    out = pl.pallas_call(
        stacked_lstm_kernel,
        out_shape=jax.ShapeDtypeStruct((B_pad, 1), jnp.float32),
        grid_spec=grid_spec,
        compiler_params=pltpu.CompilerParams(
            dimension_semantics=("parallel",)),        # batch tiles shard across v7x TCs
    )(*flat_inputs)
    return out[:B]


def init_params(key, input_size=INPUT_SIZE, hidden_sizes=HIDDEN_SIZES):
    """PyTorch-matching shapes/init in raw PyTorch layout (gate order i,f,g,o)."""
    layers = []
    d_in = input_size
    keys = jax.random.split(key, len(hidden_sizes) + 1)
    for k, H in zip(keys[:-1], hidden_sizes):
        k1, k2, k3, k4 = jax.random.split(k, 4)
        bound = 1.0 / math.sqrt(H)
        w_ih = jax.random.uniform(k1, (4 * H, d_in), jnp.float32, -bound, bound)
        w_hh = jax.random.uniform(k2, (4 * H, H), jnp.float32, -bound, bound)
        b_ih = jax.random.uniform(k3, (4 * H,), jnp.float32, -bound, bound)
        b_hh = jax.random.uniform(k4, (4 * H,), jnp.float32, -bound, bound)
        layers.append((w_ih, w_hh, b_ih, b_hh))
        d_in = H
    kf1, kf2 = jax.random.split(keys[-1], 2)
    H_last = hidden_sizes[-1]
    fb = 1.0 / math.sqrt(H_last)
    w_fc = jax.random.uniform(kf1, (1, H_last), jnp.float32, -fb, fb)
    b_fc = jax.random.uniform(kf2, (1,), jnp.float32, -fb, fb)
    return layers, (w_fc, b_fc)


def pack_params(raw_layers, raw_fc, input_size=INPUT_SIZE):
    """Repack PyTorch-layout weights for the kernel: per-gate output blocks zero-padded
    to GP=128 lanes (one fused h @ W matmul per step, 128-aligned gate slices) and all
    recurrent inputs zero-padded to GP rows so h/c carry a uniform 128-lane width."""
    packed_layers = []
    d_in_real, d_in_pad = input_size, input_size        # layer 0 consumes raw x rows
    for (w_ih, w_hh, b_ih, b_hh) in raw_layers:
        H = w_hh.shape[1]
        wih_p = jnp.zeros((d_in_pad, 4 * GP), jnp.float32)
        whh_p = jnp.zeros((GP, 4 * GP), jnp.float32)
        bias_p = jnp.zeros((1, 4 * GP), jnp.float32)
        for g in range(4):
            wih_p = wih_p.at[:d_in_real, g * GP:g * GP + H].set(w_ih[g * H:(g + 1) * H, :].T)
            whh_p = whh_p.at[:H, g * GP:g * GP + H].set(w_hh[g * H:(g + 1) * H, :].T)
            bias_p = bias_p.at[0, g * GP:g * GP + H].set(
                b_ih[g * H:(g + 1) * H] + b_hh[g * H:(g + 1) * H])
        packed_layers.append((wih_p, whh_p, bias_p))
        d_in_real, d_in_pad = H, GP                      # deeper layers consume padded h
    w_fc, b_fc = raw_fc
    H_last = w_fc.shape[1]
    wfc_p = jnp.zeros((1, GP), jnp.float32).at[0, :H_last].set(w_fc[0])
    bfc_p = b_fc.reshape(1, 1).astype(jnp.float32)
    return packed_layers, (wfc_p, bfc_p)


def reference_forward(x_btd, raw_layers, raw_fc):
    """Pure-JAX float32 replica of the PyTorch StackedLSTM forward (eval mode)."""
    seq = x_btd.astype(jnp.float32)
    B, T, _ = seq.shape
    for (w_ih, w_hh, b_ih, b_hh) in raw_layers:
        H = w_hh.shape[1]
        h = jnp.zeros((B, H), jnp.float32)
        c = jnp.zeros((B, H), jnp.float32)
        outs = []
        for t in range(T):
            g = seq[:, t, :] @ w_ih.T + b_ih + h @ w_hh.T + b_hh
            i_t = jax.nn.sigmoid(g[:, 0 * H:1 * H])
            f_t = jax.nn.sigmoid(g[:, 1 * H:2 * H])
            g_t = jnp.tanh(g[:, 2 * H:3 * H])
            o_t = jax.nn.sigmoid(g[:, 3 * H:4 * H])
            c = f_t * c + i_t * g_t
            h = o_t * jnp.tanh(c)
            outs.append(h)
        seq = jnp.stack(outs, axis=1)
    w_fc, b_fc = raw_fc
    return seq[:, -1, :] @ w_fc.T + b_fc


if __name__ == "__main__":
    key = jax.random.PRNGKey(0)
    k_x, k_p = jax.random.split(key)

    B, T, D = 2, 8, INPUT_SIZE
    x = jax.random.normal(k_x, (B, T, D), jnp.float32)
    raw_layers, raw_fc = init_params(k_p)
    packed_layers, packed_fc = pack_params(raw_layers, raw_fc)

    out = stacked_lstm_forward(x, packed_layers, packed_fc)
    out = jax.block_until_ready(out)

    ref = reference_forward(x, raw_layers, raw_fc)
    assert out.shape == (B, 1), out.shape
    tol = 2e-2 if INPUT_PROJ_BF16 else 1e-3   # bf16 layer-0 projection loosens tolerance
    assert jnp.allclose(out, ref, atol=tol, rtol=tol), (out, ref)

    print("KERNEL_OK")
</pallas_src>

<mosaic_0001>
module attributes {stable_mosaic.version = 11 : i64} {
  func.func @stacked_lstm_kernel(%arg0: i32, %arg1: memref<8x8x64xf32, #tpu.memory_space<vmem>>, %arg2: memref<64x512xf32, #tpu.memory_space<vmem>>, %arg3: memref<128x512xf32, #tpu.memory_space<vmem>>, %arg4: memref<1x512xf32, #tpu.memory_space<vmem>>, %arg5: memref<128x512xf32, #tpu.memory_space<vmem>>, %arg6: memref<128x512xf32, #tpu.memory_space<vmem>>, %arg7: memref<1x512xf32, #tpu.memory_space<vmem>>, %arg8: memref<128x512xf32, #tpu.memory_space<vmem>>, %arg9: memref<128x512xf32, #tpu.memory_space<vmem>>, %arg10: memref<1x512xf32, #tpu.memory_space<vmem>>, %arg11: memref<128x512xf32, #tpu.memory_space<vmem>>, %arg12: memref<128x512xf32, #tpu.memory_space<vmem>>, %arg13: memref<1x512xf32, #tpu.memory_space<vmem>>, %arg14: memref<1x128xf32, #tpu.memory_space<vmem>>, %arg15: memref<1x1xf32, #tpu.memory_space<vmem>>, %arg16: memref<8x1xf32, #tpu.memory_space<vmem>>, %arg17: memref<8x8x512xf32, #tpu.memory_space<vmem>>) attributes {dimension_semantics = [#tpu.dimension_semantics<parallel>], iteration_bounds = array<i64: 1>, scalar_prefetch = 0 : i64, scratch_operands = 1 : i64, tpu.core_type = #tpu.core_type<tc>, window_params = [{transform_indices = @transform_0, window_bounds = array<i64: 8, 8, 64>}, {pipeline_mode = #tpu.pipeline_mode<synchronous>, transform_indices = @transform_1, window_bounds = array<i64: 64, 512>}, {pipeline_mode = #tpu.pipeline_mode<synchronous>, transform_indices = @transform_2, window_bounds = array<i64: 128, 512>}, {pipeline_mode = #tpu.pipeline_mode<synchronous>, transform_indices = @transform_3, window_bounds = array<i64: 1, 512>}, {pipeline_mode = #tpu.pipeline_mode<synchronous>, transform_indices = @transform_4, window_bounds = array<i64: 128, 512>}, {pipeline_mode = #tpu.pipeline_mode<synchronous>, transform_indices = @transform_5, window_bounds = array<i64: 128, 512>}, {pipeline_mode = #tpu.pipeline_mode<synchronous>, transform_indices = @transform_6, window_bounds = array<i64: 1, 512>}, {pipeline_mode = #tpu.pipeline_mode<synchronous>, transform_indices = @transform_7, window_bounds = array<i64: 128, 512>}, {pipeline_mode = #tpu.pipeline_mode<synchronous>, transform_indices = @transform_8, window_bounds = array<i64: 128, 512>}, {pipeline_mode = #tpu.pipeline_mode<synchronous>, transform_indices = @transform_9, window_bounds = array<i64: 1, 512>}, {pipeline_mode = #tpu.pipeline_mode<synchronous>, transform_indices = @transform_10, window_bounds = array<i64: 128, 512>}, {pipeline_mode = #tpu.pipeline_mode<synchronous>, transform_indices = @transform_11, window_bounds = array<i64: 128, 512>}, {pipeline_mode = #tpu.pipeline_mode<synchronous>, transform_indices = @transform_12, window_bounds = array<i64: 1, 512>}, {pipeline_mode = #tpu.pipeline_mode<synchronous>, transform_indices = @transform_13, window_bounds = array<i64: 1, 128>}, {pipeline_mode = #tpu.pipeline_mode<synchronous>, transform_indices = @transform_14, window_bounds = array<i64: 1, 1>}, {transform_indices = @transform_15, window_bounds = array<i64: 8, 1>}]} {
    %c0 = arith.constant 0 : index
    %c0_0 = arith.constant 0 : index
    %c0_1 = arith.constant 0 : index
    %0 = vector.load %arg1[%c0, %c0_0, %c0_1] : memref<8x8x64xf32, #tpu.memory_space<vmem>>, vector<8x8x64xf32>
    %1 = vector.shape_cast %0 : vector<8x8x64xf32> to vector<64x64xf32>
    %c0_2 = arith.constant 0 : index
    %c0_3 = arith.constant 0 : index
    %2 = vector.load %arg2[%c0_2, %c0_3] : memref<64x512xf32, #tpu.memory_space<vmem>>, vector<64x512xf32>
    %3 = arith.truncf %1 : vector<64x64xf32> to vector<64x64xbf16>
    %4 = arith.truncf %2 : vector<64x512xf32> to vector<64x512xbf16>
    %cst = arith.constant dense<0.000000e+00> : vector<64x512xf32>
    %5 = tpu.matmul %3, %4, %cst {dimension_numbers = #tpu.dot_dimension_numbers<[1], [0], [0], [1], [0, 0, 1, 1], [], []>} : vector<64x64xbf16>, vector<64x512xbf16>, vector<64x512xf32> -> vector<64x512xf32>
    %c0_4 = arith.constant 0 : index
    %c0_5 = arith.constant 0 : index
    %6 = vector.load %arg4[%c0_4, %c0_5] : memref<1x512xf32, #tpu.memory_space<vmem>>, vector<1x512xf32>
    %7 = vector.broadcast %6 : vector<1x512xf32> to vector<64x512xf32>
    %8 = arith.addf %5, %7 : vector<64x512xf32>
    %9 = vector.shape_cast %8 : vector<64x512xf32> to vector<8x8x512xf32>
    %c0_6 = arith.constant 0 : index
    %c0_7 = arith.constant 0 : index
    %c0_8 = arith.constant 0 : index
    %10 = vector.load %arg17[%c0_6, %c0_7, %c0_8] : memref<8x8x512xf32, #tpu.memory_space<vmem>>, vector<8x8x512xf32>
    tpu.vector_store %arg17[%c0_6, %c0_7, %c0_8], %9 {strides = array<i32>} : memref<8x8x512xf32, #tpu.memory_space<vmem>>, vector<8x8x512xf32>,
    %cst_9 = arith.constant 0.000000e+00 : f32
    %11 = vector.broadcast %cst_9 : f32 to vector<8x128xf32>
    %cst_10 = arith.constant 0.000000e+00 : f32
    %12 = vector.broadcast %cst_10 : f32 to vector<8x128xf32>
    %cst_11 = arith.constant 0.000000e+00 : f32
    %13 = vector.broadcast %cst_11 : f32 to vector<8x128xf32>
    %cst_12 = arith.constant 0.000000e+00 : f32
    %14 = vector.broadcast %cst_12 : f32 to vector<8x128xf32>
    %cst_13 = arith.constant 0.000000e+00 : f32
    %15 = vector.broadcast %cst_13 : f32 to vector<8x128xf32>
    %cst_14 = arith.constant 0.000000e+00 : f32
    %16 = vector.broadcast %cst_14 : f32 to vector<8x128xf32>
    %cst_15 = arith.constant 0.000000e+00 : f32
    %17 = vector.broadcast %cst_15 : f32 to vector<8x128xf32>
    %cst_16 = arith.constant 0.000000e+00 : f32
    %18 = vector.broadcast %cst_16 : f32 to vector<8x128xf32>
    %c0_17 = arith.constant 0 : index
    %c0_18 = arith.constant 0 : index
    %c0_19 = arith.constant 0 : index
    %19 = vector.load %arg17[%c0_17, %c0_18, %c0_19] : memref<8x8x512xf32, #tpu.memory_space<vmem>>, vector<1x8x512xf32>
    %20 = vector.shape_cast %19 : vector<1x8x512xf32> to vector<8x512xf32>
    %c0_20 = arith.constant 0 : index
    %c0_21 = arith.constant 0 : index
    %21 = vector.load %arg3[%c0_20, %c0_21] : memref<128x512xf32, #tpu.memory_space<vmem>>, vector<128x512xf32>
    %cst_22 = arith.constant dense<0.000000e+00> : vector<8x512xf32>
    %22 = tpu.matmul %11, %21, %cst_22 {dimension_numbers = #tpu.dot_dimension_numbers<[1], [0], [0], [1], [0, 0, 1, 1], [], []>} : vector<8x128xf32>, vector<128x512xf32>, vector<8x512xf32> -> vector<8x512xf32>
    %23 = arith.addf %20, %22 : vector<8x512xf32>
    %24 = vector.extract_strided_slice %23 {offsets = [0, 0], sizes = [8, 128], strides = [1, 1]} : vector<8x512xf32> to vector<8x128xf32>
    %25 = arith.negf %24 : vector<8x128xf32>
    %26 = math.exp %25 : vector<8x128xf32>
    %cst_23 = arith.constant 1.000000e+00 : f32
    %27 = vector.broadcast %cst_23 : f32 to vector<8x128xf32>
    %28 = arith.addf %27, %26 : vector<8x128xf32>
    %29 = arith.divf %27, %28 : vector<8x128xf32>
    %30 = vector.extract_strided_slice %23 {offsets = [0, 128], sizes = [8, 128], strides = [1, 1]} : vector<8x512xf32> to vector<8x128xf32>
    %31 = arith.negf %30 : vector<8x128xf32>
    %32 = math.exp %31 : vector<8x128xf32>
    %cst_24 = arith.constant 1.000000e+00 : f32
    %33 = vector.broadcast %cst_24 : f32 to vector<8x128xf32>
    %34 = arith.addf %33, %32 : vector<8x128xf32>
    %35 = arith.divf %33, %34 : vector<8x128xf32>
    %36 = vector.extract_strided_slice %23 {offsets = [0, 256], sizes = [8, 128], strides = [1, 1]} : vector<8x512xf32> to vector<8x128xf32>
    %37 = math.tanh %36 : vector<8x128xf32>
    %38 = vector.extract_strided_slice %23 {offsets = [0, 384], sizes = [8, 128], strides = [1, 1]} : vector<8x512xf32> to vector<8x128xf32>
    %39 = arith.negf %38 : vector<8x128xf32>
    %40 = math.exp %39 : vector<8x128xf32>
    %cst_25 = arith.constant 1.000000e+00 : f32
    %41 = vector.broadcast %cst_25 : f32 to vector<8x128xf32>
    %42 = arith.addf %41, %40 : vector<8x128xf32>
    %43 = arith.divf %41, %42 : vector<8x128xf32>
    %44 = arith.mulf %35, %15 : vector<8x128xf32>
    %45 = arith.mulf %29, %37 : vector<8x128xf32>
    %46 = arith.addf %44, %45 : vector<8x128xf32>
    %47 = math.tanh %46 : vector<8x128xf32>
    %48 = arith.mulf %43, %47 : vector<8x128xf32>
    %c1 = arith.constant 1 : index
    %c0_26 = arith.constant 0 : index
    %c0_27 = arith.constant 0 : index
    %49 = vector.load %arg17[%c1, %c0_26, %c0_27] : memref<8x8x512xf32, #tpu.memory_space<vmem>>, vector<1x8x512xf32>
    %50 = vector.shape_cast %49 : vector<1x8x512xf32> to vector<8x512xf32>
    %c0_28 = arith.constant 0 : index
    %c0_29 = arith.constant 0 : index
    %51 = vector.load %arg3[%c0_28, %c0_29] : memref<128x512xf32, #tpu.memory_space<vmem>>, vector<128x512xf32>
    %cst_30 = arith.constant dense<0.000000e+00> : vector<8x512xf32>
    %52 = tpu.matmul %48, %51, %cst_30 {dimension_numbers = #tpu.dot_dimension_numbers<[1], [0], [0], [1], [0, 0, 1, 1], [], []>} : vector<8x128xf32>, vector<128x512xf32>, vector<8x512xf32> -> vector<8x512xf32>
    %53 = arith.addf %50, %52 : vector<8x512xf32>
    %54 = vector.extract_strided_slice %53 {offsets = [0, 0], sizes = [8, 128], strides = [1, 1]} : vector<8x512xf32> to vector<8x128xf32>
    %55 = arith.negf %54 : vector<8x128xf32>
    %56 = math.exp %55 : vector<8x128xf32>
    %cst_31 = arith.constant 1.000000e+00 : f32
    %57 = vector.broadcast %cst_31 : f32 to vector<8x128xf32>
    %58 = arith.addf %57, %56 : vector<8x128xf32>
    %59 = arith.divf %57, %58 : vector<8x128xf32>
    %60 = vector.extract_strided_slice %53 {offsets = [0, 128], sizes = [8, 128], strides = [1, 1]} : vector<8x512xf32> to vector<8x128xf32>
    %61 = arith.negf %60 : vector<8x128xf32>
    %62 = math.exp %61 : vector<8x128xf32>
    %cst_32 = arith.constant 1.000000e+00 : f32
    %63 = vector.broadcast %cst_32 : f32 to vector<8x128xf32>
    %64 = arith.addf %63, %62 : vector<8x128xf32>
    %65 = arith.divf %63, %64 : vector<8x128xf32>
    %66 = vector.extract_strided_slice %53 {offsets = [0, 256], sizes = [8, 128], strides = [1, 1]} : vector<8x512xf32> to vector<8x128xf32>
    %67 = math.tanh %66 : vector<8x128xf32>
    %68 = vector.extract_strided_slice %53 {offsets = [0, 384], sizes = [8, 128], strides = [1, 1]} : vector<8x512xf32> to vector<8x128xf32>
    %69 = arith.negf %68 : vector<8x128xf32>
    %70 = math.exp %69 : vector<8x128xf32>
    %cst_33 = arith.constant 1.000000e+00 : f32
    %71 = vector.broadcast %cst_33 : f32 to vector<8x128xf32>
    %72 = arith.addf %71, %70 : vector<8x128xf32>
    %73 = arith.divf %71, %72 : vector<8x128xf32>
    %74 = arith.mulf %65, %46 : vector<8x128xf32>
    %75 = arith.mulf %59, %67 : vector<8x128xf32>
    %76 = arith.addf %74, %75 : vector<8x128xf32>
    %77 = math.tanh %76 : vector<8x128xf32>
    %78 = arith.mulf %73, %77 : vector<8x128xf32>
    %c0_34 = arith.constant 0 : index
    %c0_35 = arith.constant 0 : index
    %79 = vector.load %arg5[%c0_34, %c0_35] : memref<128x512xf32, #tpu.memory_space<vmem>>, vector<128x512xf32>
    %cst_36 = arith.constant dense<0.000000e+00> : vector<8x512xf32>
    %80 = tpu.matmul %48, %79, %cst_36 {dimension_numbers = #tpu.dot_dimension_numbers<[1], [0], [0], [1], [0, 0, 1, 1], [], []>} : vector<8x128xf32>, vector<128x512xf32>, vector<8x512xf32> -> vector<8x512xf32>
    %c0_37 = arith.constant 0 : index
    %c0_38 = arith.constant 0 : index
    %81 = vector.load %arg7[%c0_37, %c0_38] : memref<1x512xf32, #tpu.memory_space<vmem>>, vector<1x512xf32>
    %82 = vector.broadcast %81 : vector<1x512xf32> to vector<8x512xf32>
    %83 = arith.addf %80, %82 : vector<8x512xf32>
    %c0_39 = arith.constant 0 : index
    %c0_40 = arith.constant 0 : index
    %84 = vector.load %arg6[%c0_39, %c0_40] : memref<128x512xf32, #tpu.memory_space<vmem>>, vector<128x512xf32>
    %cst_41 = arith.constant dense<0.000000e+00> : vector<8x512xf32>
    %85 = tpu.matmul %12, %84, %cst_41 {dimension_numbers = #tpu.dot_dimension_numbers<[1], [0], [0], [1], [0, 0, 1, 1], [], []>} : vector<8x128xf32>, vector<128x512xf32>, vector<8x512xf32> -> vector<8x512xf32>
    %86 = arith.addf %83, %85 : vector<8x512xf32>
    %87 = vector.extract_strided_slice %86 {offsets = [0, 0], sizes = [8, 128], strides = [1, 1]} : vector<8x512xf32> to vector<8x128xf32>
    %88 = arith.negf %87 : vector<8x128xf32>
    %89 = math.exp %88 : vector<8x128xf32>
    %cst_42 = arith.constant 1.000000e+00 : f32
    %90 = vector.broadcast %cst_42 : f32 to vector<8x128xf32>
    %91 = arith.addf %90, %89 : vector<8x128xf32>
    %92 = arith.divf %90, %91 : vector<8x128xf32>
    %93 = vector.extract_strided_slice %86 {offsets = [0, 128], sizes = [8, 128], strides = [1, 1]} : vector<8x512xf32> to vector<8x128xf32>
    %94 = arith.negf %93 : vector<8x128xf32>
    %95 = math.exp %94 : vector<8x128xf32>
    %cst_43 = arith.constant 1.000000e+00 : f32
    %96 = vector.broadcast %cst_43 : f32 to vector<8x128xf32>
    %97 = arith.addf %96, %95 : vector<8x128xf32>
    %98 = arith.divf %96, %97 : vector<8x128xf32>
    %99 = vector.extract_strided_slice %86 {offsets = [0, 256], sizes = [8, 128], strides = [1, 1]} : vector<8x512xf32> to vector<8x128xf32>
    %100 = math.tanh %99 : vector<8x128xf32>
    %101 = vector.extract_strided_slice %86 {offsets = [0, 384], sizes = [8, 128], strides = [1, 1]} : vector<8x512xf32> to vector<8x128xf32>
    %102 = arith.negf %101 : vector<8x128xf32>
    %103 = math.exp %102 : vector<8x128xf32>
    %cst_44 = arith.constant 1.000000e+00 : f32
    %104 = vector.broadcast %cst_44 : f32 to vector<8x128xf32>
    %105 = arith.addf %104, %103 : vector<8x128xf32>
    %106 = arith.divf %104, %105 : vector<8x128xf32>
    %107 = arith.mulf %98, %16 : vector<8x128xf32>
    %108 = arith.mulf %92, %100 : vector<8x128xf32>
    %109 = arith.addf %107, %108 : vector<8x128xf32>
    %110 = math.tanh %109 : vector<8x128xf32>
    %111 = arith.mulf %106, %110 : vector<8x128xf32>
    %c2 = arith.constant 2 : index
    %c0_45 = arith.constant 0 : index
    %c0_46 = arith.constant 0 : index
    %112 = vector.load %arg17[%c2, %c0_45, %c0_46] : memref<8x8x512xf32, #tpu.memory_space<vmem>>, vector<1x8x512xf32>
    %113 = vector.shape_cast %112 : vector<1x8x512xf32> to vector<8x512xf32>
    %c0_47 = arith.constant 0 : index
    %c0_48 = arith.constant 0 : index
    %114 = vector.load %arg3[%c0_47, %c0_48] : memref<128x512xf32, #tpu.memory_space<vmem>>, vector<128x512xf32>
    %cst_49 = arith.constant dense<0.000000e+00> : vector<8x512xf32>
    %115 = tpu.matmul %78, %114, %cst_49 {dimension_numbers = #tpu.dot_dimension_numbers<[1], [0], [0], [1], [0, 0, 1, 1], [], []>} : vector<8x128xf32>, vector<128x512xf32>, vector<8x512xf32> -> vector<8x512xf32>
    %116 = arith.addf %113, %115 : vector<8x512xf32>
    %117 = vector.extract_strided_slice %116 {offsets = [0, 0], sizes = [8, 128], strides = [1, 1]} : vector<8x512xf32> to vector<8x128xf32>
    %118 = arith.negf %117 : vector<8x128xf32>
    %119 = math.exp %118 : vector<8x128xf32>
    %cst_50 = arith.constant 1.000000e+00 : f32
    %120 = vector.broadcast %cst_50 : f32 to vector<8x128xf32>
    %121 = arith.addf %120, %119 : vector<8x128xf32>
    %122 = arith.divf %120, %121 : vector<8x128xf32>
    %123 = vector.extract_strided_slice %116 {offsets = [0, 128], sizes = [8, 128], strides = [1, 1]} : vector<8x512xf32> to vector<8x128xf32>
    %124 = arith.negf %123 : vector<8x128xf32>
    %125 = math.exp %124 : vector<8x128xf32>
    %cst_51 = arith.constant 1.000000e+00 : f32
    %126 = vector.broadcast %cst_51 : f32 to vector<8x128xf32>
    %127 = arith.addf %126, %125 : vector<8x128xf32>
    %128 = arith.divf %126, %127 : vector<8x128xf32>
    %129 = vector.extract_strided_slice %116 {offsets = [0, 256], sizes = [8, 128], strides = [1, 1]} : vector<8x512xf32> to vector<8x128xf32>
    %130 = math.tanh %129 : vector<8x128xf32>
    %131 = vector.extract_strided_slice %116 {offsets = [0, 384], sizes = [8, 128], strides = [1, 1]} : vector<8x512xf32> to vector<8x128xf32>
    %132 = arith.negf %131 : vector<8x128xf32>
    %133 = math.exp %132 : vector<8x128xf32>
    %cst_52 = arith.constant 1.000000e+00 : f32
    %134 = vector.broadcast %cst_52 : f32 to vector<8x128xf32>
    %135 = arith.addf %134, %133 : vector<8x128xf32>
    %136 = arith.divf %134, %135 : vector<8x128xf32>
    %137 = arith.mulf %128, %76 : vector<8x128xf32>
    %138 = arith.mulf %122, %130 : vector<8x128xf32>
    %139 = arith.addf %137, %138 : vector<8x128xf32>
    %140 = math.tanh %139 : vector<8x128xf32>
    %141 = arith.mulf %136, %140 : vector<8x128xf32>
    %c0_53 = arith.constant 0 : index
    %c0_54 = arith.constant 0 : index
    %142 = vector.load %arg5[%c0_53, %c0_54] : memref<128x512xf32, #tpu.memory_space<vmem>>, vector<128x512xf32>
    %cst_55 = arith.constant dense<0.000000e+00> : vector<8x512xf32>
    %143 = tpu.matmul %78, %142, %cst_55 {dimension_numbers = #tpu.dot_dimension_numbers<[1], [0], [0], [1], [0, 0, 1, 1], [], []>} : vector<8x128xf32>, vector<128x512xf32>, vector<8x512xf32> -> vector<8x512xf32>
    %c0_56 = arith.constant 0 : index
    %c0_57 = arith.constant 0 : index
    %144 = vector.load %arg7[%c0_56, %c0_57] : memref<1x512xf32, #tpu.memory_space<vmem>>, vector<1x512xf32>
    %145 = vector.broadcast %144 : vector<1x512xf32> to vector<8x512xf32>
    %146 = arith.addf %143, %145 : vector<8x512xf32>
    %c0_58 = arith.constant 0 : index
    %c0_59 = arith.constant 0 : index
    %147 = vector.load %arg6[%c0_58, %c0_59] : memref<128x512xf32, #tpu.memory_space<vmem>>, vector<128x512xf32>
    %cst_60 = arith.constant dense<0.000000e+00> : vector<8x512xf32>
    %148 = tpu.matmul %111, %147, %cst_60 {dimension_numbers = #tpu.dot_dimension_numbers<[1], [0], [0], [1], [0, 0, 1, 1], [], []>} : vector<8x128xf32>, vector<128x512xf32>, vector<8x512xf32> -> vector<8x512xf32>
    %149 = arith.addf %146, %148 : vector<8x512xf32>
    %150 = vector.extract_strided_slice %149 {offsets = [0, 0], sizes = [8, 128], strides = [1, 1]} : vector<8x512xf32> to vector<8x128xf32>
    %151 = arith.negf %150 : vector<8x128xf32>
    %152 = math.exp %151 : vector<8x128xf32>
    %cst_61 = arith.constant 1.000000e+00 : f32
    %153 = vector.broadcast %cst_61 : f32 to vector<8x128xf32>
    %154 = arith.addf %153, %152 : vector<8x128xf32>
    %155 = arith.divf %153, %154 : vector<8x128xf32>
    %156 = vector.extract_strided_slice %149 {offsets = [0, 128], sizes = [8, 128], strides = [1, 1]} : vector<8x512xf32> to vector<8x128xf32>
    %157 = arith.negf %156 : vector<8x128xf32>
    %158 = math.exp %157 : vector<8x128xf32>
    %cst_62 = arith.constant 1.000000e+00 : f32
    %159 = vector.broadcast %cst_62 : f32 to vector<8x128xf32>
    %160 = arith.addf %159, %158 : vector<8x128xf32>
    %161 = arith.divf %159, %160 : vector<8x128xf32>
    %162 = vector.extract_strided_slice %149 {offsets = [0, 256], sizes = [8, 128], strides = [1, 1]} : vector<8x512xf32> to vector<8x128xf32>
    %163 = math.tanh %162 : vector<8x128xf32>
    %164 = vector.extract_strided_slice %149 {offsets = [0, 384], sizes = [8, 128], strides = [1, 1]} : vector<8x512xf32> to vector<8x128xf32>
    %165 = arith.negf %164 : vector<8x128xf32>
    %166 = math.exp %165 : vector<8x128xf32>
    %cst_63 = arith.constant 1.000000e+00 : f32
    %167 = vector.broadcast %cst_63 : f32 to vector<8x128xf32>
    %168 = arith.addf %167, %166 : vector<8x128xf32>
    %169 = arith.divf %167, %168 : vector<8x128xf32>
    %170 = arith.mulf %161, %109 : vector<8x128xf32>
    %171 = arith.mulf %155, %163 : vector<8x128xf32>
    %172 = arith.addf %170, %171 : vector<8x128xf32>
    %173 = math.tanh %172 : vector<8x128xf32>
    %174 = arith.mulf %169, %173 : vector<8x128xf32>
    %c0_64 = arith.constant 0 : index
    %c0_65 = arith.constant 0 : index
    %175 = vector.load %arg8[%c0_64, %c0_65] : memref<128x512xf32, #tpu.memory_space<vmem>>, vector<128x512xf32>
    %cst_66 = arith.constant dense<0.000000e+00> : vector<8x512xf32>
    %176 = tpu.matmul %111, %175, %cst_66 {dimension_numbers = #tpu.dot_dimension_numbers<[1], [0], [0], [1], [0, 0, 1, 1], [], []>} : vector<8x128xf32>, vector<128x512xf32>, vector<8x512xf32> -> vector<8x512xf32>
    %c0_67 = arith.constant 0 : index
    %c0_68 = arith.constant 0 : index
    %177 = vector.load %arg10[%c0_67, %c0_68] : memref<1x512xf32, #tpu.memory_space<vmem>>, vector<1x512xf32>
    %178 = vector.broadcast %177 : vector<1x512xf32> to vector<8x512xf32>
    %179 = arith.addf %176, %178 : vector<8x512xf32>
    %c0_69 = arith.constant 0 : index
    %c0_70 = arith.constant 0 : index
    %180 = vector.load %arg9[%c0_69, %c0_70] : memref<128x512xf32, #tpu.memory_space<vmem>>, vector<128x512xf32>
    %cst_71 = arith.constant dense<0.000000e+00> : vector<8x512xf32>
    %181 = tpu.matmul %13, %180, %cst_71 {dimension_numbers = #tpu.dot_dimension_numbers<[1], [0], [0], [1], [0, 0, 1, 1], [], []>} : vector<8x128xf32>, vector<128x512xf32>, vector<8x512xf32> -> vector<8x512xf32>
    %182 = arith.addf %179, %181 : vector<8x512xf32>
    %183 = vector.extract_strided_slice %182 {offsets = [0, 0], sizes = [8, 128], strides = [1, 1]} : vector<8x512xf32> to vector<8x128xf32>
    %184 = arith.negf %183 : vector<8x128xf32>
    %185 = math.exp %184 : vector<8x128xf32>
    %cst_72 = arith.constant 1.000000e+00 : f32
    %186 = vector.broadcast %cst_72 : f32 to vector<8x128xf32>
    %187 = arith.addf %186, %185 : vector<8x128xf32>
    %188 = arith.divf %186, %187 : vector<8x128xf32>
    %189 = vector.extract_strided_slice %182 {offsets = [0, 128], sizes = [8, 128], strides = [1, 1]} : vector<8x512xf32> to vector<8x128xf32>
    %190 = arith.negf %189 : vector<8x128xf32>
    %191 = math.exp %190 : vector<8x128xf32>
    %cst_73 = arith.constant 1.000000e+00 : f32
    %192 = vector.broadcast %cst_73 : f32 to vector<8x128xf32>
    %193 = arith.addf %192, %191 : vector<8x128xf32>
    %194 = arith.divf %192, %193 : vector<8x128xf32>
    %195 = vector.extract_strided_slice %182 {offsets = [0, 256], sizes = [8, 128], strides = [1, 1]} : vector<8x512xf32> to vector<8x128xf32>
    %196 = math.tanh %195 : vector<8x128xf32>
    %197 = vector.extract_strided_slice %182 {offsets = [0, 384], sizes = [8, 128], strides = [1, 1]} : vector<8x512xf32> to vector<8x128xf32>
    %198 = arith.negf %197 : vector<8x128xf32>
    %199 = math.exp %198 : vector<8x128xf32>
    %cst_74 = arith.constant 1.000000e+00 : f32
    %200 = vector.broadcast %cst_74 : f32 to vector<8x128xf32>
    %201 = arith.addf %200, %199 : vector<8x128xf32>
    %202 = arith.divf %200, %201 : vector<8x128xf32>
    %203 = arith.mulf %194, %17 : vector<8x128xf32>
    %204 = arith.mulf %188, %196 : vector<8x128xf32>
    %205 = arith.addf %203, %204 : vector<8x128xf32>
    %206 = math.tanh %205 : vector<8x128xf32>
    %207 = arith.mulf %202, %206 : vector<8x128xf32>
    %c3 = arith.constant 3 : index
    %c0_75 = arith.constant 0 : index
    %c0_76 = arith.constant 0 : index
    %208 = vector.load %arg17[%c3, %c0_75, %c0_76] : memref<8x8x512xf32, #tpu.memory_space<vmem>>, vector<1x8x512xf32>
    %209 = vector.shape_cast %208 : vector<1x8x512xf32> to vector<8x512xf32>
    %c0_77 = arith.constant 0 : index
    %c0_78 = arith.constant 0 : index
    %210 = vector.load %arg3[%c0_77, %c0_78] : memref<128x512xf32, #tpu.memory_space<vmem>>, vector<128x512xf32>
    %cst_79 = arith.constant dense<0.000000e+00> : vector<8x512xf32>
    %211 = tpu.matmul %141, %210, %cst_79 {dimension_numbers = #tpu.dot_dimension_numbers<[1], [0], [0], [1], [0, 0, 1, 1], [], []>} : vector<8x128xf32>, vector<128x512xf32>, vector<8x512xf32> -> vector<8x512xf32>
    %212 = arith.addf %209, %211 : vector<8x512xf32>
    %213 = vector.extract_strided_slice %212 {offsets = [0, 0], sizes = [8, 128], strides = [1, 1]} : vector<8x512xf32> to vector<8x128xf32>
    %214 = arith.negf %213 : vector<8x128xf32>
    %215 = math.exp %214 : vector<8x128xf32>
    %cst_80 = arith.constant 1.000000e+00 : f32
    %216 = vector.broadcast %cst_80 : f32 to vector<8x128xf32>
    %217 = arith.addf %216, %215 : vector<8x128xf32>
    %218 = arith.divf %216, %217 : vector<8x128xf32>
    %219 = vector.extract_strided_slice %212 {offsets = [0, 128], sizes = [8, 128], strides = [1, 1]} : vector<8x512xf32> to vector<8x128xf32>
    %220 = arith.negf %219 : vector<8x128xf32>
    %221 = math.exp %220 : vector<8x128xf32>
    %cst_81 = arith.constant 1.000000e+00 : f32
    %222 = vector.broadcast %cst_81 : f32 to vector<8x128xf32>
    %223 = arith.addf %222, %221 : vector<8x128xf32>
    %224 = arith.divf %222, %223 : vector<8x128xf32>
    %225 = vector.extract_strided_slice %212 {offsets = [0, 256], sizes = [8, 128], strides = [1, 1]} : vector<8x512xf32> to vector<8x128xf32>
    %226 = math.tanh %225 : vector<8x128xf32>
    %227 = vector.extract_strided_slice %212 {offsets = [0, 384], sizes = [8, 128], strides = [1, 1]} : vector<8x512xf32> to vector<8x128xf32>
    %228 = arith.negf %227 : vector<8x128xf32>
    %229 = math.exp %228 : vector<8x128xf32>
    %cst_82 = arith.constant 1.000000e+00 : f32
    %230 = vector.broadcast %cst_82 : f32 to vector<8x128xf32>
    %231 = arith.addf %230, %229 : vector<8x128xf32>
    %232 = arith.divf %230, %231 : vector<8x128xf32>
    %233 = arith.mulf %224, %139 : vector<8x128xf32>
    %234 = arith.mulf %218, %226 : vector<8x128xf32>
    %235 = arith.addf %233, %234 : vector<8x128xf32>
    %236 = math.tanh %235 : vector<8x128xf32>
    %237 = arith.mulf %232, %236 : vector<8x128xf32>
    %c0_83 = arith.constant 0 : index
    %c0_84 = arith.constant 0 : index
    %238 = vector.load %arg5[%c0_83, %c0_84] : memref<128x512xf32, #tpu.memory_space<vmem>>, vector<128x512xf32>
    %cst_85 = arith.constant dense<0.000000e+00> : vector<8x512xf32>
    %239 = tpu.matmul %141, %238, %cst_85 {dimension_numbers = #tpu.dot_dimension_numbers<[1], [0], [0], [1], [0, 0, 1, 1], [], []>} : vector<8x128xf32>, vector<128x512xf32>, vector<8x512xf32> -> vector<8x512xf32>
    %c0_86 = arith.constant 0 : index
    %c0_87 = arith.constant 0 : index
    %240 = vector.load %arg7[%c0_86, %c0_87] : memref<1x512xf32, #tpu.memory_space<vmem>>, vector<1x512xf32>
    %241 = vector.broadcast %240 : vector<1x512xf32> to vector<8x512xf32>
    %242 = arith.addf %239, %241 : vector<8x512xf32>
    %c0_88 = arith.constant 0 : index
    %c0_89 = arith.constant 0 : index
    %243 = vector.load %arg6[%c0_88, %c0_89] : memref<128x512xf32, #tpu.memory_space<vmem>>, vector<128x512xf32>
    %cst_90 = arith.constant dense<0.000000e+00> : vector<8x512xf32>
    %244 = tpu.matmul %174, %243, %cst_90 {dimension_numbers = #tpu.dot_dimension_numbers<[1], [0], [0], [1], [0, 0, 1, 1], [], []>} : vector<8x128xf32>, vector<128x512xf32>, vector<8x512xf32> -> vector<8x512xf32>
    %245 = arith.addf %242, %244 : vector<8x512xf32>
    %246 = vector.extract_strided_slice %245 {offsets = [0, 0], sizes = [8, 128], strides = [1, 1]} : vector<8x512xf32> to vector<8x128xf32>
    %247 = arith.negf %246 : vector<8x128xf32>
    %248 = math.exp %247 : vector<8x128xf32>
    %cst_91 = arith.constant 1.000000e+00 : f32
    %249 = vector.broadcast %cst_91 : f32 to vector<8x128xf32>
    %250 = arith.addf %249, %248 : vector<8x128xf32>
    %251 = arith.divf %249, %250 : vector<8x128xf32>
    %252 = vector.extract_strided_slice %245 {offsets = [0, 128], sizes = [8, 128], strides = [1, 1]} : vector<8x512xf32> to vector<8x128xf32>
    %253 = arith.negf %252 : vector<8x128xf32>
    %254 = math.exp %253 : vector<8x128xf32>
    %cst_92 = arith.constant 1.000000e+00 : f32
    %255 = vector.broadcast %cst_92 : f32 to vector<8x128xf32>
    %256 = arith.addf %255, %254 : vector<8x128xf32>
    %257 = arith.divf %255, %256 : vector<8x128xf32>
    %258 = vector.extract_strided_slice %245 {offsets = [0, 256], sizes = [8, 128], strides = [1, 1]} : vector<8x512xf32> to vector<8x128xf32>
    %259 = math.tanh %258 : vector<8x128xf32>
    %260 = vector.extract_strided_slice %245 {offsets = [0, 384], sizes = [8, 128], strides = [1, 1]} : vector<8x512xf32> to vector<8x128xf32>
    %261 = arith.negf %260 : vector<8x128xf32>
    %262 = math.exp %261 : vector<8x128xf32>
    %cst_93 = arith.constant 1.000000e+00 : f32
    %263 = vector.broadcast %cst_93 : f32 to vector<8x128xf32>
    %264 = arith.addf %263, %262 : vector<8x128xf32>
    %265 = arith.divf %263, %264 : vector<8x128xf32>
    %266 = arith.mulf %257, %172 : vector<8x128xf32>
    %267 = arith.mulf %251, %259 : vector<8x128xf32>
    %268 = arith.addf %266, %267 : vector<8x128xf32>
    %269 = math.tanh %268 : vector<8x128xf32>
    %270 = arith.mulf %265, %269 : vector<8x128xf32>
    %c0_94 = arith.constant 0 : index
    %c0_95 = arith.constant 0 : index
    %271 = vector.load %arg8[%c0_94, %c0_95] : memref<128x512xf32, #tpu.memory_space<vmem>>, vector<128x512xf32>
    %cst_96 = arith.constant dense<0.000000e+00> : vector<8x512xf32>
    %272 = tpu.matmul %174, %271, %cst_96 {dimension_numbers = #tpu.dot_dimension_numbers<[1], [0], [0], [1], [0, 0, 1, 1], [], []>} : vector<8x128xf32>, vector<128x512xf32>, vector<8x512xf32> -> vector<8x512xf32>
    %c0_97 = arith.constant 0 : index
    %c0_98 = arith.constant 0 : index
    %273 = vector.load %arg10[%c0_97, %c0_98] : memref<1x512xf32, #tpu.memory_space<vmem>>, vector<1x512xf32>
    %274 = vector.broadcast %273 : vector<1x512xf32> to vector<8x512xf32>
    %275 = arith.addf %272, %274 : vector<8x512xf32>
    %c0_99 = arith.constant 0 : index
    %c0_100 = arith.constant 0 : index
    %276 = vector.load %arg9[%c0_99, %c0_100] : memref<128x512xf32, #tpu.memory_space<vmem>>, vector<128x512xf32>
    %cst_101 = arith.constant dense<0.000000e+00> : vector<8x512xf32>
    %277 = tpu.matmul %207, %276, %cst_101 {dimension_numbers = #tpu.dot_dimension_numbers<[1], [0], [0], [1], [0, 0, 1, 1], [], []>} : vector<8x128xf32>, vector<128x512xf32>, vector<8x512xf32> -> vector<8x512xf32>
    %278 = arith.addf %275, %277 : vector<8x512xf32>
    %279 = vector.extract_strided_slice %278 {offsets = [0, 0], sizes = [8, 128], strides = [1, 1]} : vector<8x512xf32> to vector<8x128xf32>
    %280 = arith.negf %279 : vector<8x128xf32>
    %281 = math.exp %280 : vector<8x128xf32>
    %cst_102 = arith.constant 1.000000e+00 : f32
    %282 = vector.broadcast %cst_102 : f32 to vector<8x128xf32>
    %283 = arith.addf %282, %281 : vector<8x128xf32>
    %284 = arith.divf %282, %283 : vector<8x128xf32>
    %285 = vector.extract_strided_slice %278 {offsets = [0, 128], sizes = [8, 128], strides = [1, 1]} : vector<8x512xf32> to vector<8x128xf32>
    %286 = arith.negf %285 : vector<8x128xf32>
    %287 = math.exp %286 : vector<8x128xf32>
    %cst_103 = arith.constant 1.000000e+00 : f32
    %288 = vector.broadcast %cst_103 : f32 to vector<8x128xf32>
    %289 = arith.addf %288, %287 : vector<8x128xf32>
    %290 = arith.divf %288, %289 : vector<8x128xf32>
    %291 = vector.extract_strided_slice %278 {offsets = [0, 256], sizes = [8, 128], strides = [1, 1]} : vector<8x512xf32> to vector<8x128xf32>
    %292 = math.tanh %291 : vector<8x128xf32>
    %293 = vector.extract_strided_slice %278 {offsets = [0, 384], sizes = [8, 128], strides = [1, 1]} : vector<8x512xf32> to vector<8x128xf32>
    %294 = arith.negf %293 : vector<8x128xf32>
    %295 = math.exp %294 : vector<8x128xf32>
    %cst_104 = arith.constant 1.000000e+00 : f32
    %296 = vector.broadcast %cst_104 : f32 to vector<8x128xf32>
    %297 = arith.addf %296, %295 : vector<8x128xf32>
    %298 = arith.divf %296, %297 : vector<8x128xf32>
    %299 = arith.mulf %290, %205 : vector<8x128xf32>
    %300 = arith.mulf %284, %292 : vector<8x128xf32>
    %301 = arith.addf %299, %300 : vector<8x128xf32>
    %302 = math.tanh %301 : vector<8x128xf32>
    %303 = arith.mulf %298, %302 : vector<8x128xf32>
    %c0_105 = arith.constant 0 : index
    %c0_106 = arith.constant 0 : index
    %304 = vector.load %arg11[%c0_105, %c0_106] : memref<128x512xf32, #tpu.memory_space<vmem>>, vector<128x512xf32>
    %cst_107 = arith.constant dense<0.000000e+00> : vector<8x512xf32>
    %305 = tpu.matmul %207, %304, %cst_107 {dimension_numbers = #tpu.dot_dimension_numbers<[1], [0], [0], [1], [0, 0, 1, 1], [], []>} : vector<8x128xf32>, vector<128x512xf32>, vector<8x512xf32> -> vector<8x512xf32>
    %c0_108 = arith.constant 0 : index
    %c0_109 = arith.constant 0 : index
    %306 = vector.load %arg13[%c0_108, %c0_109] : memref<1x512xf32, #tpu.memory_space<vmem>>, vector<1x512xf32>
    %307 = vector.broadcast %306 : vector<1x512xf32> to vector<8x512xf32>
    %308 = arith.addf %305, %307 : vector<8x512xf32>
    %c0_110 = arith.constant 0 : index
    %c0_111 = arith.constant 0 : index
    %309 = vector.load %arg12[%c0_110, %c0_111] : memref<128x512xf32, #tpu.memory_space<vmem>>, vector<128x512xf32>
    %cst_112 = arith.constant dense<0.000000e+00> : vector<8x512xf32>
    %310 = tpu.matmul %14, %309, %cst_112 {dimension_numbers = #tpu.dot_dimension_numbers<[1], [0], [0], [1], [0, 0, 1, 1], [], []>} : vector<8x128xf32>, vector<128x512xf32>, vector<8x512xf32> -> vector<8x512xf32>
    %311 = arith.addf %308, %310 : vector<8x512xf32>
    %312 = vector.extract_strided_slice %311 {offsets = [0, 0], sizes = [8, 128], strides = [1, 1]} : vector<8x512xf32> to vector<8x128xf32>
    %313 = arith.negf %312 : vector<8x128xf32>
    %314 = math.exp %313 : vector<8x128xf32>
    %cst_113 = arith.constant 1.000000e+00 : f32
    %315 = vector.broadcast %cst_113 : f32 to vector<8x128xf32>
    %316 = arith.addf %315, %314 : vector<8x128xf32>
    %317 = arith.divf %315, %316 : vector<8x128xf32>
    %318 = vector.extract_strided_slice %311 {offsets = [0, 128], sizes = [8, 128], strides = [1, 1]} : vector<8x512xf32> to vector<8x128xf32>
    %319 = arith.negf %318 : vector<8x128xf32>
    %320 = math.exp %319 : vector<8x128xf32>
    %cst_114 = arith.constant 1.000000e+00 : f32
    %321 = vector.broadcast %cst_114 : f32 to vector<8x128xf32>
    %322 = arith.addf %321, %320 : vector<8x128xf32>
    %323 = arith.divf %321, %322 : vector<8x128xf32>
    %324 = vector.extract_strided_slice %311 {offsets = [0, 256], sizes = [8, 128], strides = [1, 1]} : vector<8x512xf32> to vector<8x128xf32>
    %325 = math.tanh %324 : vector<8x128xf32>
    %326 = vector.extract_strided_slice %311 {offsets = [0, 384], sizes = [8, 128], strides = [1, 1]} : vector<8x512xf32> to vector<8x128xf32>
    %327 = arith.negf %326 : vector<8x128xf32>
    %328 = math.exp %327 : vector<8x128xf32>
    %cst_115 = arith.constant 1.000000e+00 : f32
    %329 = vector.broadcast %cst_115 : f32 to vector<8x128xf32>
    %330 = arith.addf %329, %328 : vector<8x128xf32>
    %331 = arith.divf %329, %330 : vector<8x128xf32>
    %332 = arith.mulf %323, %18 : vector<8x128xf32>
    %333 = arith.mulf %317, %325 : vector<8x128xf32>
    %334 = arith.addf %332, %333 : vector<8x128xf32>
    %335 = math.tanh %334 : vector<8x128xf32>
    %336 = arith.mulf %331, %335 : vector<8x128xf32>
    %c4 = arith.constant 4 : index
    %c0_116 = arith.constant 0 : index
    %c0_117 = arith.constant 0 : index
    %337 = vector.load %arg17[%c4, %c0_116, %c0_117] : memref<8x8x512xf32, #tpu.memory_space<vmem>>, vector<1x8x512xf32>
    %338 = vector.shape_cast %337 : vector<1x8x512xf32> to vector<8x512xf32>
    %c0_118 = arith.constant 0 : index
    %c0_119 = arith.constant 0 : index
    %339 = vector.load %arg3[%c0_118, %c0_119] : memref<128x512xf32, #tpu.memory_space<vmem>>, vector<128x512xf32>
    %cst_120 = arith.constant dense<0.000000e+00> : vector<8x512xf32>
    %340 = tpu.matmul %237, %339, %cst_120 {dimension_numbers = #tpu.dot_dimension_numbers<[1], [0], [0], [1], [0, 0, 1, 1], [], []>} : vector<8x128xf32>, vector<128x512xf32>, vector<8x512xf32> -> vector<8x512xf32>
    %341 = arith.addf %338, %340 : vector<8x512xf32>
    %342 = vector.extract_strided_slice %341 {offsets = [0, 0], sizes = [8, 128], strides = [1, 1]} : vector<8x512xf32> to vector<8x128xf32>
    %343 = arith.negf %342 : vector<8x128xf32>
    %344 = math.exp %343 : vector<8x128xf32>
    %cst_121 = arith.constant 1.000000e+00 : f32
    %345 = vector.broadcast %cst_121 : f32 to vector<8x128xf32>
    %346 = arith.addf %345, %344 : vector<8x128xf32>
    %347 = arith.divf %345, %346 : vector<8x128xf32>
    %348 = vector.extract_strided_slice %341 {offsets = [0, 128], sizes = [8, 128], strides = [1, 1]} : vector<8x512xf32> to vector<8x128xf32>
    %349 = arith.negf %348 : vector<8x128xf32>
    %350 = math.exp %349 : vector<8x128xf32>
    %cst_122 = arith.constant 1.000000e+00 : f32
    %351 = vector.broadcast %cst_122 : f32 to vector<8x128xf32>
    %352 = arith.addf %351, %350 : vector<8x128xf32>
    %353 = arith.divf %351, %352 : vector<8x128xf32>
    %354 = vector.extract_strided_slice %341 {offsets = [0, 256], sizes = [8, 128], strides = [1, 1]} : vector<8x512xf32> to vector<8x128xf32>
    %355 = math.tanh %354 : vector<8x128xf32>
    %356 = vector.extract_strided_slice %341 {offsets = [0, 384], sizes = [8, 128], strides = [1, 1]} : vector<8x512xf32> to vector<8x128xf32>
    %357 = arith.negf %356 : vector<8x128xf32>
    %358 = math.exp %357 : vector<8x128xf32>
    %cst_123 = arith.constant 1.000000e+00 : f32
    %359 = vector.broadcast %cst_123 : f32 to vector<8x128xf32>
    %360 = arith.addf %359, %358 : vector<8x128xf32>
    %361 = arith.divf %359, %360 : vector<8x128xf32>
    %362 = arith.mulf %353, %235 : vector<8x128xf32>
    %363 = arith.mulf %347, %355 : vector<8x128xf32>
    %364 = arith.addf %362, %363 : vector<8x128xf32>
    %365 = math.tanh %364 : vector<8x128xf32>
    %366 = arith.mulf %361, %365 : vector<8x128xf32>
    %c0_124 = arith.constant 0 : index
    %c0_125 = arith.constant 0 : index
    %367 = vector.load %arg5[%c0_124, %c0_125] : memref<128x512xf32, #tpu.memory_space<vmem>>, vector<128x512xf32>
    %cst_126 = arith.constant dense<0.000000e+00> : vector<8x512xf32>
    %368 = tpu.matmul %237, %367, %cst_126 {dimension_numbers = #tpu.dot_dimension_numbers<[1], [0], [0], [1], [0, 0, 1, 1], [], []>} : vector<8x128xf32>, vector<128x512xf32>, vector<8x512xf32> -> vector<8x512xf32>
    %c0_127 = arith.constant 0 : index
    %c0_128 = arith.constant 0 : index
    %369 = vector.load %arg7[%c0_127, %c0_128] : memref<1x512xf32, #tpu.memory_space<vmem>>, vector<1x512xf32>
    %370 = vector.broadcast %369 : vector<1x512xf32> to vector<8x512xf32>
    %371 = arith.addf %368, %370 : vector<8x512xf32>
    %c0_129 = arith.constant 0 : index
    %c0_130 = arith.constant 0 : index
    %372 = vector.load %arg6[%c0_129, %c0_130] : memref<128x512xf32, #tpu.memory_space<vmem>>, vector<128x512xf32>
    %cst_131 = arith.constant dense<0.000000e+00> : vector<8x512xf32>
    %373 = tpu.matmul %270, %372, %cst_131 {dimension_numbers = #tpu.dot_dimension_numbers<[1], [0], [0], [1], [0, 0, 1, 1], [], []>} : vector<8x128xf32>, vector<128x512xf32>, vector<8x512xf32> -> vector<8x512xf32>
    %374 = arith.addf %371, %373 : vector<8x512xf32>
    %375 = vector.extract_strided_slice %374 {offsets = [0, 0], sizes = [8, 128], strides = [1, 1]} : vector<8x512xf32> to vector<8x128xf32>
    %376 = arith.negf %375 : vector<8x128xf32>
    %377 = math.exp %376 : vector<8x128xf32>
    %cst_132 = arith.constant 1.000000e+00 : f32
    %378 = vector.broadcast %cst_132 : f32 to vector<8x128xf32>
    %379 = arith.addf %378, %377 : vector<8x128xf32>
    %380 = arith.divf %378, %379 : vector<8x128xf32>
    %381 = vector.extract_strided_slice %374 {offsets = [0, 128], sizes = [8, 128], strides = [1, 1]} : vector<8x512xf32> to vector<8x128xf32>
    %382 = arith.negf %381 : vector<8x128xf32>
    %383 = math.exp %382 : vector<8x128xf32>
    %cst_133 = arith.constant 1.000000e+00 : f32
    %384 = vector.broadcast %cst_133 : f32 to vector<8x128xf32>
    %385 = arith.addf %384, %383 : vector<8x128xf32>
    %386 = arith.divf %384, %385 : vector<8x128xf32>
    %387 = vector.extract_strided_slice %374 {offsets = [0, 256], sizes = [8, 128], strides = [1, 1]} : vector<8x512xf32> to vector<8x128xf32>
    %388 = math.tanh %387 : vector<8x128xf32>
    %389 = vector.extract_strided_slice %374 {offsets = [0, 384], sizes = [8, 128], strides = [1, 1]} : vector<8x512xf32> to vector<8x128xf32>
    %390 = arith.negf %389 : vector<8x128xf32>
    %391 = math.exp %390 : vector<8x128xf32>
    %cst_134 = arith.constant 1.000000e+00 : f32
    %392 = vector.broadcast %cst_134 : f32 to vector<8x128xf32>
    %393 = arith.addf %392, %391 : vector<8x128xf32>
    %394 = arith.divf %392, %393 : vector<8x128xf32>
    %395 = arith.mulf %386, %268 : vector<8x128xf32>
    %396 = arith.mulf %380, %388 : vector<8x128xf32>
    %397 = arith.addf %395, %396 : vector<8x128xf32>
    %398 = math.tanh %397 : vector<8x128xf32>
    %399 = arith.mulf %394, %398 : vector<8x128xf32>
    %c0_135 = arith.constant 0 : index
    %c0_136 = arith.constant 0 : index
    %400 = vector.load %arg8[%c0_135, %c0_136] : memref<128x512xf32, #tpu.memory_space<vmem>>, vector<128x512xf32>
    %cst_137 = arith.constant dense<0.000000e+00> : vector<8x512xf32>
    %401 = tpu.matmul %270, %400, %cst_137 {dimension_numbers = #tpu.dot_dimension_numbers<[1], [0], [0], [1], [0, 0, 1, 1], [], []>} : vector<8x128xf32>, vector<128x512xf32>, vector<8x512xf32> -> vector<8x512xf32>
    %c0_138 = arith.constant 0 : index
    %c0_139 = arith.constant 0 : index
    %402 = vector.load %arg10[%c0_138, %c0_139] : memref<1x512xf32, #tpu.memory_space<vmem>>, vector<1x512xf32>
    %403 = vector.broadcast %402 : vector<1x512xf32> to vector<8x512xf32>
    %404 = arith.addf %401, %403 : vector<8x512xf32>
    %c0_140 = arith.constant 0 : index
    %c0_141 = arith.constant 0 : index
    %405 = vector.load %arg9[%c0_140, %c0_141] : memref<128x512xf32, #tpu.memory_space<vmem>>, vector<128x512xf32>
    %cst_142 = arith.constant dense<0.000000e+00> : vector<8x512xf32>
    %406 = tpu.matmul %303, %405, %cst_142 {dimension_numbers = #tpu.dot_dimension_numbers<[1], [0], [0], [1], [0, 0, 1, 1], [], []>} : vector<8x128xf32>, vector<128x512xf32>, vector<8x512xf32> -> vector<8x512xf32>
    %407 = arith.addf %404, %406 : vector<8x512xf32>
    %408 = vector.extract_strided_slice %407 {offsets = [0, 0], sizes = [8, 128], strides = [1, 1]} : vector<8x512xf32> to vector<8x128xf32>
    %409 = arith.negf %408 : vector<8x128xf32>
    %410 = math.exp %409 : vector<8x128xf32>
    %cst_143 = arith.constant 1.000000e+00 : f32
    %411 = vector.broadcast %cst_143 : f32 to vector<8x128xf32>
    %412 = arith.addf %411, %410 : vector<8x128xf32>
    %413 = arith.divf %411, %412 : vector<8x128xf32>
    %414 = vector.extract_strided_slice %407 {offsets = [0, 128], sizes = [8, 128], strides = [1, 1]} : vector<8x512xf32> to vector<8x128xf32>
    %415 = arith.negf %414 : vector<8x128xf32>
    %416 = math.exp %415 : vector<8x128xf32>
    %cst_144 = arith.constant 1.000000e+00 : f32
    %417 = vector.broadcast %cst_144 : f32 to vector<8x128xf32>
    %418 = arith.addf %417, %416 : vector<8x128xf32>
    %419 = arith.divf %417, %418 : vector<8x128xf32>
    %420 = vector.extract_strided_slice %407 {offsets = [0, 256], sizes = [8, 128], strides = [1, 1]} : vector<8x512xf32> to vector<8x128xf32>
    %421 = math.tanh %420 : vector<8x128xf32>
    %422 = vector.extract_strided_slice %407 {offsets = [0, 384], sizes = [8, 128], strides = [1, 1]} : vector<8x512xf32> to vector<8x128xf32>
    %423 = arith.negf %422 : vector<8x128xf32>
    %424 = math.exp %423 : vector<8x128xf32>
    %cst_145 = arith.constant 1.000000e+00 : f32
    %425 = vector.broadcast %cst_145 : f32 to vector<8x128xf32>
    %426 = arith.addf %425, %424 : vector<8x128xf32>
    %427 = arith.divf %425, %426 : vector<8x128xf32>
    %428 = arith.mulf %419, %301 : vector<8x128xf32>
    %429 = arith.mulf %413, %421 : vector<8x128xf32>
    %430 = arith.addf %428, %429 : vector<8x128xf32>
    %431 = math.tanh %430 : vector<8x128xf32>
    %432 = arith.mulf %427, %431 : vector<8x128xf32>
    %c0_146 = arith.constant 0 : index
    %c0_147 = arith.constant 0 : index
    %433 = vector.load %arg11[%c0_146, %c0_147] : memref<128x512xf32, #tpu.memory_space<vmem>>, vector<128x512xf32>
    %cst_148 = arith.constant dense<0.000000e+00> : vector<8x512xf32>
    %434 = tpu.matmul %303, %433, %cst_148 {dimension_numbers = #tpu.dot_dimension_numbers<[1], [0], [0], [1], [0, 0, 1, 1], [], []>} : vector<8x128xf32>, vector<128x512xf32>, vector<8x512xf32> -> vector<8x512xf32>
    %c0_149 = arith.constant 0 : index
    %c0_150 = arith.constant 0 : index
    %435 = vector.load %arg13[%c0_149, %c0_150] : memref<1x512xf32, #tpu.memory_space<vmem>>, vector<1x512xf32>
    %436 = vector.broadcast %435 : vector<1x512xf32> to vector<8x512xf32>
    %437 = arith.addf %434, %436 : vector<8x512xf32>
    %c0_151 = arith.constant 0 : index
    %c0_152 = arith.constant 0 : index
    %438 = vector.load %arg12[%c0_151, %c0_152] : memref<128x512xf32, #tpu.memory_space<vmem>>, vector<128x512xf32>
    %cst_153 = arith.constant dense<0.000000e+00> : vector<8x512xf32>
    %439 = tpu.matmul %336, %438, %cst_153 {dimension_numbers = #tpu.dot_dimension_numbers<[1], [0], [0], [1], [0, 0, 1, 1], [], []>} : vector<8x128xf32>, vector<128x512xf32>, vector<8x512xf32> -> vector<8x512xf32>
    %440 = arith.addf %437, %439 : vector<8x512xf32>
    %441 = vector.extract_strided_slice %440 {offsets = [0, 0], sizes = [8, 128], strides = [1, 1]} : vector<8x512xf32> to vector<8x128xf32>
    %442 = arith.negf %441 : vector<8x128xf32>
    %443 = math.exp %442 : vector<8x128xf32>
    %cst_154 = arith.constant 1.000000e+00 : f32
    %444 = vector.broadcast %cst_154 : f32 to vector<8x128xf32>
    %445 = arith.addf %444, %443 : vector<8x128xf32>
    %446 = arith.divf %444, %445 : vector<8x128xf32>
    %447 = vector.extract_strided_slice %440 {offsets = [0, 128], sizes = [8, 128], strides = [1, 1]} : vector<8x512xf32> to vector<8x128xf32>
    %448 = arith.negf %447 : vector<8x128xf32>
    %449 = math.exp %448 : vector<8x128xf32>
    %cst_155 = arith.constant 1.000000e+00 : f32
    %450 = vector.broadcast %cst_155 : f32 to vector<8x128xf32>
    %451 = arith.addf %450, %449 : vector<8x128xf32>
    %452 = arith.divf %450, %451 : vector<8x128xf32>
    %453 = vector.extract_strided_slice %440 {offsets = [0, 256], sizes = [8, 128], strides = [1, 1]} : vector<8x512xf32> to vector<8x128xf32>
    %454 = math.tanh %453 : vector<8x128xf32>
    %455 = vector.extract_strided_slice %440 {offsets = [0, 384], sizes = [8, 128], strides = [1, 1]} : vector<8x512xf32> to vector<8x128xf32>
    %456 = arith.negf %455 : vector<8x128xf32>
    %457 = math.exp %456 : vector<8x128xf32>
    %cst_156 = arith.constant 1.000000e+00 : f32
    %458 = vector.broadcast %cst_156 : f32 to vector<8x128xf32>
    %459 = arith.addf %458, %457 : vector<8x128xf32>
    %460 = arith.divf %458, %459 : vector<8x128xf32>
    %461 = arith.mulf %452, %334 : vector<8x128xf32>
    %462 = arith.mulf %446, %454 : vector<8x128xf32>
    %463 = arith.addf %461, %462 : vector<8x128xf32>
    %464 = math.tanh %463 : vector<8x128xf32>
    %465 = arith.mulf %460, %464 : vector<8x128xf32>
    %c5 = arith.constant 5 : index
    %c0_157 = arith.constant 0 : index
    %c0_158 = arith.constant 0 : index
    %466 = vector.load %arg17[%c5, %c0_157, %c0_158] : memref<8x8x512xf32, #tpu.memory_space<vmem>>, vector<1x8x512xf32>
    %467 = vector.shape_cast %466 : vector<1x8x512xf32> to vector<8x512xf32>
    %c0_159 = arith.constant 0 : index
    %c0_160 = arith.constant 0 : index
    %468 = vector.load %arg3[%c0_159, %c0_160] : memref<128x512xf32, #tpu.memory_space<vmem>>, vector<128x512xf32>
    %cst_161 = arith.constant dense<0.000000e+00> : vector<8x512xf32>
    %469 = tpu.matmul %366, %468, %cst_161 {dimension_numbers = #tpu.dot_dimension_numbers<[1], [0], [0], [1], [0, 0, 1, 1], [], []>} : vector<8x128xf32>, vector<128x512xf32>, vector<8x512xf32> -> vector<8x512xf32>
    %470 = arith.addf %467, %469 : vector<8x512xf32>
    %471 = vector.extract_strided_slice %470 {offsets = [0, 0], sizes = [8, 128], strides = [1, 1]} : vector<8x512xf32> to vector<8x128xf32>
    %472 = arith.negf %471 : vector<8x128xf32>
    %473 = math.exp %472 : vector<8x128xf32>
    %cst_162 = arith.constant 1.000000e+00 : f32
    %474 = vector.broadcast %cst_162 : f32 to vector<8x128xf32>
    %475 = arith.addf %474, %473 : vector<8x128xf32>
    %476 = arith.divf %474, %475 : vector<8x128xf32>
    %477 = vector.extract_strided_slice %470 {offsets = [0, 128], sizes = [8, 128], strides = [1, 1]} : vector<8x512xf32> to vector<8x128xf32>
    %478 = arith.negf %477 : vector<8x128xf32>
    %479 = math.exp %478 : vector<8x128xf32>
    %cst_163 = arith.constant 1.000000e+00 : f32
    %480 = vector.broadcast %cst_163 : f32 to vector<8x128xf32>
    %481 = arith.addf %480, %479 : vector<8x128xf32>
    %482 = arith.divf %480, %481 : vector<8x128xf32>
    %483 = vector.extract_strided_slice %470 {offsets = [0, 256], sizes = [8, 128], strides = [1, 1]} : vector<8x512xf32> to vector<8x128xf32>
    %484 = math.tanh %483 : vector<8x128xf32>
    %485 = vector.extract_strided_slice %470 {offsets = [0, 384], sizes = [8, 128], strides = [1, 1]} : vector<8x512xf32> to vector<8x128xf32>
    %486 = arith.negf %485 : vector<8x128xf32>
    %487 = math.exp %486 : vector<8x128xf32>
    %cst_164 = arith.constant 1.000000e+00 : f32
    %488 = vector.broadcast %cst_164 : f32 to vector<8x128xf32>
    %489 = arith.addf %488, %487 : vector<8x128xf32>
    %490 = arith.divf %488, %489 : vector<8x128xf32>
    %491 = arith.mulf %482, %364 : vector<8x128xf32>
    %492 = arith.mulf %476, %484 : vector<8x128xf32>
    %493 = arith.addf %491, %492 : vector<8x128xf32>
    %494 = math.tanh %493 : vector<8x128xf32>
    %495 = arith.mulf %490, %494 : vector<8x128xf32>
    %c0_165 = arith.constant 0 : index
    %c0_166 = arith.constant 0 : index
    %496 = vector.load %arg5[%c0_165, %c0_166] : memref<128x512xf32, #tpu.memory_space<vmem>>, vector<128x512xf32>
    %cst_167 = arith.constant dense<0.000000e+00> : vector<8x512xf32>
    %497 = tpu.matmul %366, %496, %cst_167 {dimension_numbers = #tpu.dot_dimension_numbers<[1], [0], [0], [1], [0, 0, 1, 1], [], []>} : vector<8x128xf32>, vector<128x512xf32>, vector<8x512xf32> -> vector<8x512xf32>
    %c0_168 = arith.constant 0 : index
    %c0_169 = arith.constant 0 : index
    %498 = vector.load %arg7[%c0_168, %c0_169] : memref<1x512xf32, #tpu.memory_space<vmem>>, vector<1x512xf32>
    %499 = vector.broadcast %498 : vector<1x512xf32> to vector<8x512xf32>
    %500 = arith.addf %497, %499 : vector<8x512xf32>
    %c0_170 = arith.constant 0 : index
    %c0_171 = arith.constant 0 : index
    %501 = vector.load %arg6[%c0_170, %c0_171] : memref<128x512xf32, #tpu.memory_space<vmem>>, vector<128x512xf32>
    %cst_172 = arith.constant dense<0.000000e+00> : vector<8x512xf32>
    %502 = tpu.matmul %399, %501, %cst_172 {dimension_numbers = #tpu.dot_dimension_numbers<[1], [0], [0], [1], [0, 0, 1, 1], [], []>} : vector<8x128xf32>, vector<128x512xf32>, vector<8x512xf32> -> vector<8x512xf32>
    %503 = arith.addf %500, %502 : vector<8x512xf32>
    %504 = vector.extract_strided_slice %503 {offsets = [0, 0], sizes = [8, 128], strides = [1, 1]} : vector<8x512xf32> to vector<8x128xf32>
    %505 = arith.negf %504 : vector<8x128xf32>
    %506 = math.exp %505 : vector<8x128xf32>
    %cst_173 = arith.constant 1.000000e+00 : f32
    %507 = vector.broadcast %cst_173 : f32 to vector<8x128xf32>
    %508 = arith.addf %507, %506 : vector<8x128xf32>
    %509 = arith.divf %507, %508 : vector<8x128xf32>
    %510 = vector.extract_strided_slice %503 {offsets = [0, 128], sizes = [8, 128], strides = [1, 1]} : vector<8x512xf32> to vector<8x128xf32>
    %511 = arith.negf %510 : vector<8x128xf32>
    %512 = math.exp %511 : vector<8x128xf32>
    %cst_174 = arith.constant 1.000000e+00 : f32
    %513 = vector.broadcast %cst_174 : f32 to vector<8x128xf32>
    %514 = arith.addf %513, %512 : vector<8x128xf32>
    %515 = arith.divf %513, %514 : vector<8x128xf32>
    %516 = vector.extract_strided_slice %503 {offsets = [0, 256], sizes = [8, 128], strides = [1, 1]} : vector<8x512xf32> to vector<8x128xf32>
    %517 = math.tanh %516 : vector<8x128xf32>
    %518 = vector.extract_strided_slice %503 {offsets = [0, 384], sizes = [8, 128], strides = [1, 1]} : vector<8x512xf32> to vector<8x128xf32>
    %519 = arith.negf %518 : vector<8x128xf32>
    %520 = math.exp %519 : vector<8x128xf32>
    %cst_175 = arith.constant 1.000000e+00 : f32
    %521 = vector.broadcast %cst_175 : f32 to vector<8x128xf32>
    %522 = arith.addf %521, %520 : vector<8x128xf32>
    %523 = arith.divf %521, %522 : vector<8x128xf32>
    %524 = arith.mulf %515, %397 : vector<8x128xf32>
    %525 = arith.mulf %509, %517 : vector<8x128xf32>
    %526 = arith.addf %524, %525 : vector<8x128xf32>
    %527 = math.tanh %526 : vector<8x128xf32>
    %528 = arith.mulf %523, %527 : vector<8x128xf32>
    %c0_176 = arith.constant 0 : index
    %c0_177 = arith.constant 0 : index
    %529 = vector.load %arg8[%c0_176, %c0_177] : memref<128x512xf32, #tpu.memory_space<vmem>>, vector<128x512xf32>
    %cst_178 = arith.constant dense<0.000000e+00> : vector<8x512xf32>
    %530 = tpu.matmul %399, %529, %cst_178 {dimension_numbers = #tpu.dot_dimension_numbers<[1], [0], [0], [1], [0, 0, 1, 1], [], []>} : vector<8x128xf32>, vector<128x512xf32>, vector<8x512xf32> -> vector<8x512xf32>
    %c0_179 = arith.constant 0 : index
    %c0_180 = arith.constant 0 : index
    %531 = vector.load %arg10[%c0_179, %c0_180] : memref<1x512xf32, #tpu.memory_space<vmem>>, vector<1x512xf32>
    %532 = vector.broadcast %531 : vector<1x512xf32> to vector<8x512xf32>
    %533 = arith.addf %530, %532 : vector<8x512xf32>
    %c0_181 = arith.constant 0 : index
    %c0_182 = arith.constant 0 : index
    %534 = vector.load %arg9[%c0_181, %c0_182] : memref<128x512xf32, #tpu.memory_space<vmem>>, vector<128x512xf32>
    %cst_183 = arith.constant dense<0.000000e+00> : vector<8x512xf32>
    %535 = tpu.matmul %432, %534, %cst_183 {dimension_numbers = #tpu.dot_dimension_numbers<[1], [0], [0], [1], [0, 0, 1, 1], [], []>} : vector<8x128xf32>, vector<128x512xf32>, vector<8x512xf32> -> vector<8x512xf32>
    %536 = arith.addf %533, %535 : vector<8x512xf32>
    %537 = vector.extract_strided_slice %536 {offsets = [0, 0], sizes = [8, 128], strides = [1, 1]} : vector<8x512xf32> to vector<8x128xf32>
    %538 = arith.negf %537 : vector<8x128xf32>
    %539 = math.exp %538 : vector<8x128xf32>
    %cst_184 = arith.constant 1.000000e+00 : f32
    %540 = vector.broadcast %cst_184 : f32 to vector<8x128xf32>
    %541 = arith.addf %540, %539 : vector<8x128xf32>
    %542 = arith.divf %540, %541 : vector<8x128xf32>
    %543 = vector.extract_strided_slice %536 {offsets = [0, 128], sizes = [8, 128], strides = [1, 1]} : vector<8x512xf32> to vector<8x128xf32>
    %544 = arith.negf %543 : vector<8x128xf32>
    %545 = math.exp %544 : vector<8x128xf32>
    %cst_185 = arith.constant 1.000000e+00 : f32
    %546 = vector.broadcast %cst_185 : f32 to vector<8x128xf32>
    %547 = arith.addf %546, %545 : vector<8x128xf32>
    %548 = arith.divf %546, %547 : vector<8x128xf32>
    %549 = vector.extract_strided_slice %536 {offsets = [0, 256], sizes = [8, 128], strides = [1, 1]} : vector<8x512xf32> to vector<8x128xf32>
    %550 = math.tanh %549 : vector<8x128xf32>
    %551 = vector.extract_strided_slice %536 {offsets = [0, 384], sizes = [8, 128], strides = [1, 1]} : vector<8x512xf32> to vector<8x128xf32>
    %552 = arith.negf %551 : vector<8x128xf32>
    %553 = math.exp %552 : vector<8x128xf32>
    %cst_186 = arith.constant 1.000000e+00 : f32
    %554 = vector.broadcast %cst_186 : f32 to vector<8x128xf32>
    %555 = arith.addf %554, %553 : vector<8x128xf32>
    %556 = arith.divf %554, %555 : vector<8x128xf32>
    %557 = arith.mulf %548, %430 : vector<8x128xf32>
    %558 = arith.mulf %542, %550 : vector<8x128xf32>
    %559 = arith.addf %557, %558 : vector<8x128xf32>
    %560 = math.tanh %559 : vector<8x128xf32>
    %561 = arith.mulf %556, %560 : vector<8x128xf32>
    %c0_187 = arith.constant 0 : index
    %c0_188 = arith.constant 0 : index
    %562 = vector.load %arg11[%c0_187, %c0_188] : memref<128x512xf32, #tpu.memory_space<vmem>>, vector<128x512xf32>
    %cst_189 = arith.constant dense<0.000000e+00> : vector<8x512xf32>
    %563 = tpu.matmul %432, %562, %cst_189 {dimension_numbers = #tpu.dot_dimension_numbers<[1], [0], [0], [1], [0, 0, 1, 1], [], []>} : vector<8x128xf32>, vector<128x512xf32>, vector<8x512xf32> -> vector<8x512xf32>
    %c0_190 = arith.constant 0 : index
    %c0_191 = arith.constant 0 : index
    %564 = vector.load %arg13[%c0_190, %c0_191] : memref<1x512xf32, #tpu.memory_space<vmem>>, vector<1x512xf32>
    %565 = vector.broadcast %564 : vector<1x512xf32> to vector<8x512xf32>
    %566 = arith.addf %563, %565 : vector<8x512xf32>
    %c0_192 = arith.constant 0 : index
    %c0_193 = arith.constant 0 : index
    %567 = vector.load %arg12[%c0_192, %c0_193] : memref<128x512xf32, #tpu.memory_space<vmem>>, vector<128x512xf32>
    %cst_194 = arith.constant dense<0.000000e+00> : vector<8x512xf32>
    %568 = tpu.matmul %465, %567, %cst_194 {dimension_numbers = #tpu.dot_dimension_numbers<[1], [0], [0], [1], [0, 0, 1, 1], [], []>} : vector<8x128xf32>, vector<128x512xf32>, vector<8x512xf32> -> vector<8x512xf32>
    %569 = arith.addf %566, %568 : vector<8x512xf32>
    %570 = vector.extract_strided_slice %569 {offsets = [0, 0], sizes = [8, 128], strides = [1, 1]} : vector<8x512xf32> to vector<8x128xf32>
    %571 = arith.negf %570 : vector<8x128xf32>
    %572 = math.exp %571 : vector<8x128xf32>
    %cst_195 = arith.constant 1.000000e+00 : f32
    %573 = vector.broadcast %cst_195 : f32 to vector<8x128xf32>
    %574 = arith.addf %573, %572 : vector<8x128xf32>
    %575 = arith.divf %573, %574 : vector<8x128xf32>
    %576 = vector.extract_strided_slice %569 {offsets = [0, 128], sizes = [8, 128], strides = [1, 1]} : vector<8x512xf32> to vector<8x128xf32>
    %577 = arith.negf %576 : vector<8x128xf32>
    %578 = math.exp %577 : vector<8x128xf32>
    %cst_196 = arith.constant 1.000000e+00 : f32
    %579 = vector.broadcast %cst_196 : f32 to vector<8x128xf32>
    %580 = arith.addf %579, %578 : vector<8x128xf32>
    %581 = arith.divf %579, %580 : vector<8x128xf32>
    %582 = vector.extract_strided_slice %569 {offsets = [0, 256], sizes = [8, 128], strides = [1, 1]} : vector<8x512xf32> to vector<8x128xf32>
    %583 = math.tanh %582 : vector<8x128xf32>
    %584 = vector.extract_strided_slice %569 {offsets = [0, 384], sizes = [8, 128], strides = [1, 1]} : vector<8x512xf32> to vector<8x128xf32>
    %585 = arith.negf %584 : vector<8x128xf32>
    %586 = math.exp %585 : vector<8x128xf32>
    %cst_197 = arith.constant 1.000000e+00 : f32
    %587 = vector.broadcast %cst_197 : f32 to vector<8x128xf32>
    %588 = arith.addf %587, %586 : vector<8x128xf32>
    %589 = arith.divf %587, %588 : vector<8x128xf32>
    %590 = arith.mulf %581, %463 : vector<8x128xf32>
    %591 = arith.mulf %575, %583 : vector<8x128xf32>
    %592 = arith.addf %590, %591 : vector<8x128xf32>
    %593 = math.tanh %592 : vector<8x128xf32>
    %594 = arith.mulf %589, %593 : vector<8x128xf32>
    %c6 = arith.constant 6 : index
    %c0_198 = arith.constant 0 : index
    %c0_199 = arith.constant 0 : index
    %595 = vector.load %arg17[%c6, %c0_198, %c0_199] : memref<8x8x512xf32, #tpu.memory_space<vmem>>, vector<1x8x512xf32>
    %596 = vector.shape_cast %595 : vector<1x8x512xf32> to vector<8x512xf32>
    %c0_200 = arith.constant 0 : index
    %c0_201 = arith.constant 0 : index
    %597 = vector.load %arg3[%c0_200, %c0_201] : memref<128x512xf32, #tpu.memory_space<vmem>>, vector<128x512xf32>
    %cst_202 = arith.constant dense<0.000000e+00> : vector<8x512xf32>
    %598 = tpu.matmul %495, %597, %cst_202 {dimension_numbers = #tpu.dot_dimension_numbers<[1], [0], [0], [1], [0, 0, 1, 1], [], []>} : vector<8x128xf32>, vector<128x512xf32>, vector<8x512xf32> -> vector<8x512xf32>
    %599 = arith.addf %596, %598 : vector<8x512xf32>
    %600 = vector.extract_strided_slice %599 {offsets = [0, 0], sizes = [8, 128], strides = [1, 1]} : vector<8x512xf32> to vector<8x128xf32>
    %601 = arith.negf %600 : vector<8x128xf32>
    %602 = math.exp %601 : vector<8x128xf32>
    %cst_203 = arith.constant 1.000000e+00 : f32
    %603 = vector.broadcast %cst_203 : f32 to vector<8x128xf32>
    %604 = arith.addf %603, %602 : vector<8x128xf32>
    %605 = arith.divf %603, %604 : vector<8x128xf32>
    %606 = vector.extract_strided_slice %599 {offsets = [0, 128], sizes = [8, 128], strides = [1, 1]} : vector<8x512xf32> to vector<8x128xf32>
    %607 = arith.negf %606 : vector<8x128xf32>
    %608 = math.exp %607 : vector<8x128xf32>
    %cst_204 = arith.constant 1.000000e+00 : f32
    %609 = vector.broadcast %cst_204 : f32 to vector<8x128xf32>
    %610 = arith.addf %609, %608 : vector<8x128xf32>
    %611 = arith.divf %609, %610 : vector<8x128xf32>
    %612 = vector.extract_strided_slice %599 {offsets = [0, 256], sizes = [8, 128], strides = [1, 1]} : vector<8x512xf32> to vector<8x128xf32>
    %613 = math.tanh %612 : vector<8x128xf32>
    %614 = vector.extract_strided_slice %599 {offsets = [0, 384], sizes = [8, 128], strides = [1, 1]} : vector<8x512xf32> to vector<8x128xf32>
    %615 = arith.negf %614 : vector<8x128xf32>
    %616 = math.exp %615 : vector<8x128xf32>
    %cst_205 = arith.constant 1.000000e+00 : f32
    %617 = vector.broadcast %cst_205 : f32 to vector<8x128xf32>
    %618 = arith.addf %617, %616 : vector<8x128xf32>
    %619 = arith.divf %617, %618 : vector<8x128xf32>
    %620 = arith.mulf %611, %493 : vector<8x128xf32>
    %621 = arith.mulf %605, %613 : vector<8x128xf32>
    %622 = arith.addf %620, %621 : vector<8x128xf32>
    %623 = math.tanh %622 : vector<8x128xf32>
    %624 = arith.mulf %619, %623 : vector<8x128xf32>
    %c0_206 = arith.constant 0 : index
    %c0_207 = arith.constant 0 : index
    %625 = vector.load %arg5[%c0_206, %c0_207] : memref<128x512xf32, #tpu.memory_space<vmem>>, vector<128x512xf32>
    %cst_208 = arith.constant dense<0.000000e+00> : vector<8x512xf32>
    %626 = tpu.matmul %495, %625, %cst_208 {dimension_numbers = #tpu.dot_dimension_numbers<[1], [0], [0], [1], [0, 0, 1, 1], [], []>} : vector<8x128xf32>, vector<128x512xf32>, vector<8x512xf32> -> vector<8x512xf32>
    %c0_209 = arith.constant 0 : index
    %c0_210 = arith.constant 0 : index
    %627 = vector.load %arg7[%c0_209, %c0_210] : memref<1x512xf32, #tpu.memory_space<vmem>>, vector<1x512xf32>
    %628 = vector.broadcast %627 : vector<1x512xf32> to vector<8x512xf32>
    %629 = arith.addf %626, %628 : vector<8x512xf32>
    %c0_211 = arith.constant 0 : index
    %c0_212 = arith.constant 0 : index
    %630 = vector.load %arg6[%c0_211, %c0_212] : memref<128x512xf32, #tpu.memory_space<vmem>>, vector<128x512xf32>
    %cst_213 = arith.constant dense<0.000000e+00> : vector<8x512xf32>
    %631 = tpu.matmul %528, %630, %cst_213 {dimension_numbers = #tpu.dot_dimension_numbers<[1], [0], [0], [1], [0, 0, 1, 1], [], []>} : vector<8x128xf32>, vector<128x512xf32>, vector<8x512xf32> -> vector<8x512xf32>
    %632 = arith.addf %629, %631 : vector<8x512xf32>
    %633 = vector.extract_strided_slice %632 {offsets = [0, 0], sizes = [8, 128], strides = [1, 1]} : vector<8x512xf32> to vector<8x128xf32>
    %634 = arith.negf %633 : vector<8x128xf32>
    %635 = math.exp %634 : vector<8x128xf32>
    %cst_214 = arith.constant 1.000000e+00 : f32
    %636 = vector.broadcast %cst_214 : f32 to vector<8x128xf32>
    %637 = arith.addf %636, %635 : vector<8x128xf32>
    %638 = arith.divf %636, %637 : vector<8x128xf32>
    %639 = vector.extract_strided_slice %632 {offsets = [0, 128], sizes = [8, 128], strides = [1, 1]} : vector<8x512xf32> to vector<8x128xf32>
    %640 = arith.negf %639 : vector<8x128xf32>
    %641 = math.exp %640 : vector<8x128xf32>
    %cst_215 = arith.constant 1.000000e+00 : f32
    %642 = vector.broadcast %cst_215 : f32 to vector<8x128xf32>
    %643 = arith.addf %642, %641 : vector<8x128xf32>
    %644 = arith.divf %642, %643 : vector<8x128xf32>
    %645 = vector.extract_strided_slice %632 {offsets = [0, 256], sizes = [8, 128], strides = [1, 1]} : vector<8x512xf32> to vector<8x128xf32>
    %646 = math.tanh %645 : vector<8x128xf32>
    %647 = vector.extract_strided_slice %632 {offsets = [0, 384], sizes = [8, 128], strides = [1, 1]} : vector<8x512xf32> to vector<8x128xf32>
    %648 = arith.negf %647 : vector<8x128xf32>
    %649 = math.exp %648 : vector<8x128xf32>
    %cst_216 = arith.constant 1.000000e+00 : f32
    %650 = vector.broadcast %cst_216 : f32 to vector<8x128xf32>
    %651 = arith.addf %650, %649 : vector<8x128xf32>
    %652 = arith.divf %650, %651 : vector<8x128xf32>
    %653 = arith.mulf %644, %526 : vector<8x128xf32>
    %654 = arith.mulf %638, %646 : vector<8x128xf32>
    %655 = arith.addf %653, %654 : vector<8x128xf32>
    %656 = math.tanh %655 : vector<8x128xf32>
    %657 = arith.mulf %652, %656 : vector<8x128xf32>
    %c0_217 = arith.constant 0 : index
    %c0_218 = arith.constant 0 : index
    %658 = vector.load %arg8[%c0_217, %c0_218] : memref<128x512xf32, #tpu.memory_space<vmem>>, vector<128x512xf32>
    %cst_219 = arith.constant dense<0.000000e+00> : vector<8x512xf32>
    %659 = tpu.matmul %528, %658, %cst_219 {dimension_numbers = #tpu.dot_dimension_numbers<[1], [0], [0], [1], [0, 0, 1, 1], [], []>} : vector<8x128xf32>, vector<128x512xf32>, vector<8x512xf32> -> vector<8x512xf32>
    %c0_220 = arith.constant 0 : index
    %c0_221 = arith.constant 0 : index
    %660 = vector.load %arg10[%c0_220, %c0_221] : memref<1x512xf32, #tpu.memory_space<vmem>>, vector<1x512xf32>
    %661 = vector.broadcast %660 : vector<1x512xf32> to vector<8x512xf32>
    %662 = arith.addf %659, %661 : vector<8x512xf32>
    %c0_222 = arith.constant 0 : index
    %c0_223 = arith.constant 0 : index
    %663 = vector.load %arg9[%c0_222, %c0_223] : memref<128x512xf32, #tpu.memory_space<vmem>>, vector<128x512xf32>
    %cst_224 = arith.constant dense<0.000000e+00> : vector<8x512xf32>
    %664 = tpu.matmul %561, %663, %cst_224 {dimension_numbers = #tpu.dot_dimension_numbers<[1], [0], [0], [1], [0, 0, 1, 1], [], []>} : vector<8x128xf32>, vector<128x512xf32>, vector<8x512xf32> -> vector<8x512xf32>
    %665 = arith.addf %662, %664 : vector<8x512xf32>
    %666 = vector.extract_strided_slice %665 {offsets = [0, 0], sizes = [8, 128], strides = [1, 1]} : vector<8x512xf32> to vector<8x128xf32>
    %667 = arith.negf %666 : vector<8x128xf32>
    %668 = math.exp %667 : vector<8x128xf32>
    %cst_225 = arith.constant 1.000000e+00 : f32
    %669 = vector.broadcast %cst_225 : f32 to vector<8x128xf32>
    %670 = arith.addf %669, %668 : vector<8x128xf32>
    %671 = arith.divf %669, %670 : vector<8x128xf32>
    %672 = vector.extract_strided_slice %665 {offsets = [0, 128], sizes = [8, 128], strides = [1, 1]} : vector<8x512xf32> to vector<8x128xf32>
    %673 = arith.negf %672 : vector<8x128xf32>
    %674 = math.exp %673 : vector<8x128xf32>
    %cst_226 = arith.constant 1.000000e+00 : f32
    %675 = vector.broadcast %cst_226 : f32 to vector<8x128xf32>
    %676 = arith.addf %675, %674 : vector<8x128xf32>
    %677 = arith.divf %675, %676 : vector<8x128xf32>
    %678 = vector.extract_strided_slice %665 {offsets = [0, 256], sizes = [8, 128], strides = [1, 1]} : vector<8x512xf32> to vector<8x128xf32>
    %679 = math.tanh %678 : vector<8x128xf32>
    %680 = vector.extract_strided_slice %665 {offsets = [0, 384], sizes = [8, 128], strides = [1, 1]} : vector<8x512xf32> to vector<8x128xf32>
    %681 = arith.negf %680 : vector<8x128xf32>
    %682 = math.exp %681 : vector<8x128xf32>
    %cst_227 = arith.constant 1.000000e+00 : f32
    %683 = vector.broadcast %cst_227 : f32 to vector<8x128xf32>
    %684 = arith.addf %683, %682 : vector<8x128xf32>
    %685 = arith.divf %683, %684 : vector<8x128xf32>
    %686 = arith.mulf %677, %559 : vector<8x128xf32>
    %687 = arith.mulf %671, %679 : vector<8x128xf32>
    %688 = arith.addf %686, %687 : vector<8x128xf32>
    %689 = math.tanh %688 : vector<8x128xf32>
    %690 = arith.mulf %685, %689 : vector<8x128xf32>
    %c0_228 = arith.constant 0 : index
    %c0_229 = arith.constant 0 : index
    %691 = vector.load %arg11[%c0_228, %c0_229] : memref<128x512xf32, #tpu.memory_space<vmem>>, vector<128x512xf32>
    %cst_230 = arith.constant dense<0.000000e+00> : vector<8x512xf32>
    %692 = tpu.matmul %561, %691, %cst_230 {dimension_numbers = #tpu.dot_dimension_numbers<[1], [0], [0], [1], [0, 0, 1, 1], [], []>} : vector<8x128xf32>, vector<128x512xf32>, vector<8x512xf32> -> vector<8x512xf32>
    %c0_231 = arith.constant 0 : index
    %c0_232 = arith.constant 0 : index
    %693 = vector.load %arg13[%c0_231, %c0_232] : memref<1x512xf32, #tpu.memory_space<vmem>>, vector<1x512xf32>
    %694 = vector.broadcast %693 : vector<1x512xf32> to vector<8x512xf32>
    %695 = arith.addf %692, %694 : vector<8x512xf32>
    %c0_233 = arith.constant 0 : index
    %c0_234 = arith.constant 0 : index
    %696 = vector.load %arg12[%c0_233, %c0_234] : memref<128x512xf32, #tpu.memory_space<vmem>>, vector<128x512xf32>
    %cst_235 = arith.constant dense<0.000000e+00> : vector<8x512xf32>
    %697 = tpu.matmul %594, %696, %cst_235 {dimension_numbers = #tpu.dot_dimension_numbers<[1], [0], [0], [1], [0, 0, 1, 1], [], []>} : vector<8x128xf32>, vector<128x512xf32>, vector<8x512xf32> -> vector<8x512xf32>
    %698 = arith.addf %695, %697 : vector<8x512xf32>
    %699 = vector.extract_strided_slice %698 {offsets = [0, 0], sizes = [8, 128], strides = [1, 1]} : vector<8x512xf32> to vector<8x128xf32>
    %700 = arith.negf %699 : vector<8x128xf32>
    %701 = math.exp %700 : vector<8x128xf32>
    %cst_236 = arith.constant 1.000000e+00 : f32
    %702 = vector.broadcast %cst_236 : f32 to vector<8x128xf32>
    %703 = arith.addf %702, %701 : vector<8x128xf32>
    %704 = arith.divf %702, %703 : vector<8x128xf32>
    %705 = vector.extract_strided_slice %698 {offsets = [0, 128], sizes = [8, 128], strides = [1, 1]} : vector<8x512xf32> to vector<8x128xf32>
    %706 = arith.negf %705 : vector<8x128xf32>
    %707 = math.exp %706 : vector<8x128xf32>
    %cst_237 = arith.constant 1.000000e+00 : f32
    %708 = vector.broadcast %cst_237 : f32 to vector<8x128xf32>
    %709 = arith.addf %708, %707 : vector<8x128xf32>
    %710 = arith.divf %708, %709 : vector<8x128xf32>
    %711 = vector.extract_strided_slice %698 {offsets = [0, 256], sizes = [8, 128], strides = [1, 1]} : vector<8x512xf32> to vector<8x128xf32>
    %712 = math.tanh %711 : vector<8x128xf32>
    %713 = vector.extract_strided_slice %698 {offsets = [0, 384], sizes = [8, 128], strides = [1, 1]} : vector<8x512xf32> to vector<8x128xf32>
    %714 = arith.negf %713 : vector<8x128xf32>
    %715 = math.exp %714 : vector<8x128xf32>
    %cst_238 = arith.constant 1.000000e+00 : f32
    %716 = vector.broadcast %cst_238 : f32 to vector<8x128xf32>
    %717 = arith.addf %716, %715 : vector<8x128xf32>
    %718 = arith.divf %716, %717 : vector<8x128xf32>
    %719 = arith.mulf %710, %592 : vector<8x128xf32>
    %720 = arith.mulf %704, %712 : vector<8x128xf32>
    %721 = arith.addf %719, %720 : vector<8x128xf32>
    %722 = math.tanh %721 : vector<8x128xf32>
    %723 = arith.mulf %718, %722 : vector<8x128xf32>
    %c7 = arith.constant 7 : index
    %c0_239 = arith.constant 0 : index
    %c0_240 = arith.constant 0 : index
    %724 = vector.load %arg17[%c7, %c0_239, %c0_240] : memref<8x8x512xf32, #tpu.memory_space<vmem>>, vector<1x8x512xf32>
    %725 = vector.shape_cast %724 : vector<1x8x512xf32> to vector<8x512xf32>
    %c0_241 = arith.constant 0 : index
    %c0_242 = arith.constant 0 : index
    %726 = vector.load %arg3[%c0_241, %c0_242] : memref<128x512xf32, #tpu.memory_space<vmem>>, vector<128x512xf32>
    %cst_243 = arith.constant dense<0.000000e+00> : vector<8x512xf32>
    %727 = tpu.matmul %624, %726, %cst_243 {dimension_numbers = #tpu.dot_dimension_numbers<[1], [0], [0], [1], [0, 0, 1, 1], [], []>} : vector<8x128xf32>, vector<128x512xf32>, vector<8x512xf32> -> vector<8x512xf32>
    %728 = arith.addf %725, %727 : vector<8x512xf32>
    %729 = vector.extract_strided_slice %728 {offsets = [0, 0], sizes = [8, 128], strides = [1, 1]} : vector<8x512xf32> to vector<8x128xf32>
    %730 = arith.negf %729 : vector<8x128xf32>
    %731 = math.exp %730 : vector<8x128xf32>
    %cst_244 = arith.constant 1.000000e+00 : f32
    %732 = vector.broadcast %cst_244 : f32 to vector<8x128xf32>
    %733 = arith.addf %732, %731 : vector<8x128xf32>
    %734 = arith.divf %732, %733 : vector<8x128xf32>
    %735 = vector.extract_strided_slice %728 {offsets = [0, 128], sizes = [8, 128], strides = [1, 1]} : vector<8x512xf32> to vector<8x128xf32>
    %736 = arith.negf %735 : vector<8x128xf32>
    %737 = math.exp %736 : vector<8x128xf32>
    %cst_245 = arith.constant 1.000000e+00 : f32
    %738 = vector.broadcast %cst_245 : f32 to vector<8x128xf32>
    %739 = arith.addf %738, %737 : vector<8x128xf32>
    %740 = arith.divf %738, %739 : vector<8x128xf32>
    %741 = vector.extract_strided_slice %728 {offsets = [0, 256], sizes = [8, 128], strides = [1, 1]} : vector<8x512xf32> to vector<8x128xf32>
    %742 = math.tanh %741 : vector<8x128xf32>
    %743 = vector.extract_strided_slice %728 {offsets = [0, 384], sizes = [8, 128], strides = [1, 1]} : vector<8x512xf32> to vector<8x128xf32>
    %744 = arith.negf %743 : vector<8x128xf32>
    %745 = math.exp %744 : vector<8x128xf32>
    %cst_246 = arith.constant 1.000000e+00 : f32
    %746 = vector.broadcast %cst_246 : f32 to vector<8x128xf32>
    %747 = arith.addf %746, %745 : vector<8x128xf32>
    %748 = arith.divf %746, %747 : vector<8x128xf32>
    %749 = arith.mulf %740, %622 : vector<8x128xf32>
    %750 = arith.mulf %734, %742 : vector<8x128xf32>
    %751 = arith.addf %749, %750 : vector<8x128xf32>
    %752 = math.tanh %751 : vector<8x128xf32>
    %753 = arith.mulf %748, %752 : vector<8x128xf32>
    %c0_247 = arith.constant 0 : index
    %c0_248 = arith.constant 0 : index
    %754 = vector.load %arg5[%c0_247, %c0_248] : memref<128x512xf32, #tpu.memory_space<vmem>>, vector<128x512xf32>
    %cst_249 = arith.constant dense<0.000000e+00> : vector<8x512xf32>
    %755 = tpu.matmul %624, %754, %cst_249 {dimension_numbers = #tpu.dot_dimension_numbers<[1], [0], [0], [1], [0, 0, 1, 1], [], []>} : vector<8x128xf32>, vector<128x512xf32>, vector<8x512xf32> -> vector<8x512xf32>
    %c0_250 = arith.constant 0 : index
    %c0_251 = arith.constant 0 : index
    %756 = vector.load %arg7[%c0_250, %c0_251] : memref<1x512xf32, #tpu.memory_space<vmem>>, vector<1x512xf32>
    %757 = vector.broadcast %756 : vector<1x512xf32> to vector<8x512xf32>
    %758 = arith.addf %755, %757 : vector<8x512xf32>
    %c0_252 = arith.constant 0 : index
    %c0_253 = arith.constant 0 : index
    %759 = vector.load %arg6[%c0_252, %c0_253] : memref<128x512xf32, #tpu.memory_space<vmem>>, vector<128x512xf32>
    %cst_254 = arith.constant dense<0.000000e+00> : vector<8x512xf32>
    %760 = tpu.matmul %657, %759, %cst_254 {dimension_numbers = #tpu.dot_dimension_numbers<[1], [0], [0], [1], [0, 0, 1, 1], [], []>} : vector<8x128xf32>, vector<128x512xf32>, vector<8x512xf32> -> vector<8x512xf32>
    %761 = arith.addf %758, %760 : vector<8x512xf32>
    %762 = vector.extract_strided_slice %761 {offsets = [0, 0], sizes = [8, 128], strides = [1, 1]} : vector<8x512xf32> to vector<8x128xf32>
    %763 = arith.negf %762 : vector<8x128xf32>
    %764 = math.exp %763 : vector<8x128xf32>
    %cst_255 = arith.constant 1.000000e+00 : f32
    %765 = vector.broadcast %cst_255 : f32 to vector<8x128xf32>
    %766 = arith.addf %765, %764 : vector<8x128xf32>
    %767 = arith.divf %765, %766 : vector<8x128xf32>
    %768 = vector.extract_strided_slice %761 {offsets = [0, 128], sizes = [8, 128], strides = [1, 1]} : vector<8x512xf32> to vector<8x128xf32>
    %769 = arith.negf %768 : vector<8x128xf32>
    %770 = math.exp %769 : vector<8x128xf32>
    %cst_256 = arith.constant 1.000000e+00 : f32
    %771 = vector.broadcast %cst_256 : f32 to vector<8x128xf32>
    %772 = arith.addf %771, %770 : vector<8x128xf32>
    %773 = arith.divf %771, %772 : vector<8x128xf32>
    %774 = vector.extract_strided_slice %761 {offsets = [0, 256], sizes = [8, 128], strides = [1, 1]} : vector<8x512xf32> to vector<8x128xf32>
    %775 = math.tanh %774 : vector<8x128xf32>
    %776 = vector.extract_strided_slice %761 {offsets = [0, 384], sizes = [8, 128], strides = [1, 1]} : vector<8x512xf32> to vector<8x128xf32>
    %777 = arith.negf %776 : vector<8x128xf32>
    %778 = math.exp %777 : vector<8x128xf32>
    %cst_257 = arith.constant 1.000000e+00 : f32
    %779 = vector.broadcast %cst_257 : f32 to vector<8x128xf32>
    %780 = arith.addf %779, %778 : vector<8x128xf32>
    %781 = arith.divf %779, %780 : vector<8x128xf32>
    %782 = arith.mulf %773, %655 : vector<8x128xf32>
    %783 = arith.mulf %767, %775 : vector<8x128xf32>
    %784 = arith.addf %782, %783 : vector<8x128xf32>
    %785 = math.tanh %784 : vector<8x128xf32>
    %786 = arith.mulf %781, %785 : vector<8x128xf32>
    %c0_258 = arith.constant 0 : index
    %c0_259 = arith.constant 0 : index
    %787 = vector.load %arg8[%c0_258, %c0_259] : memref<128x512xf32, #tpu.memory_space<vmem>>, vector<128x512xf32>
    %cst_260 = arith.constant dense<0.000000e+00> : vector<8x512xf32>
    %788 = tpu.matmul %657, %787, %cst_260 {dimension_numbers = #tpu.dot_dimension_numbers<[1], [0], [0], [1], [0, 0, 1, 1], [], []>} : vector<8x128xf32>, vector<128x512xf32>, vector<8x512xf32> -> vector<8x512xf32>
    %c0_261 = arith.constant 0 : index
    %c0_262 = arith.constant 0 : index
    %789 = vector.load %arg10[%c0_261, %c0_262] : memref<1x512xf32, #tpu.memory_space<vmem>>, vector<1x512xf32>
    %790 = vector.broadcast %789 : vector<1x512xf32> to vector<8x512xf32>
    %791 = arith.addf %788, %790 : vector<8x512xf32>
    %c0_263 = arith.constant 0 : index
    %c0_264 = arith.constant 0 : index
    %792 = vector.load %arg9[%c0_263, %c0_264] : memref<128x512xf32, #tpu.memory_space<vmem>>, vector<128x512xf32>
    %cst_265 = arith.constant dense<0.000000e+00> : vector<8x512xf32>
    %793 = tpu.matmul %690, %792, %cst_265 {dimension_numbers = #tpu.dot_dimension_numbers<[1], [0], [0], [1], [0, 0, 1, 1], [], []>} : vector<8x128xf32>, vector<128x512xf32>, vector<8x512xf32> -> vector<8x512xf32>
    %794 = arith.addf %791, %793 : vector<8x512xf32>
    %795 = vector.extract_strided_slice %794 {offsets = [0, 0], sizes = [8, 128], strides = [1, 1]} : vector<8x512xf32> to vector<8x128xf32>
    %796 = arith.negf %795 : vector<8x128xf32>
    %797 = math.exp %796 : vector<8x128xf32>
    %cst_266 = arith.constant 1.000000e+00 : f32
    %798 = vector.broadcast %cst_266 : f32 to vector<8x128xf32>
    %799 = arith.addf %798, %797 : vector<8x128xf32>
    %800 = arith.divf %798, %799 : vector<8x128xf32>
    %801 = vector.extract_strided_slice %794 {offsets = [0, 128], sizes = [8, 128], strides = [1, 1]} : vector<8x512xf32> to vector<8x128xf32>
    %802 = arith.negf %801 : vector<8x128xf32>
    %803 = math.exp %802 : vector<8x128xf32>
    %cst_267 = arith.constant 1.000000e+00 : f32
    %804 = vector.broadcast %cst_267 : f32 to vector<8x128xf32>
    %805 = arith.addf %804, %803 : vector<8x128xf32>
    %806 = arith.divf %804, %805 : vector<8x128xf32>
    %807 = vector.extract_strided_slice %794 {offsets = [0, 256], sizes = [8, 128], strides = [1, 1]} : vector<8x512xf32> to vector<8x128xf32>
    %808 = math.tanh %807 : vector<8x128xf32>
    %809 = vector.extract_strided_slice %794 {offsets = [0, 384], sizes = [8, 128], strides = [1, 1]} : vector<8x512xf32> to vector<8x128xf32>
    %810 = arith.negf %809 : vector<8x128xf32>
    %811 = math.exp %810 : vector<8x128xf32>
    %cst_268 = arith.constant 1.000000e+00 : f32
    %812 = vector.broadcast %cst_268 : f32 to vector<8x128xf32>
    %813 = arith.addf %812, %811 : vector<8x128xf32>
    %814 = arith.divf %812, %813 : vector<8x128xf32>
    %815 = arith.mulf %806, %688 : vector<8x128xf32>
    %816 = arith.mulf %800, %808 : vector<8x128xf32>
    %817 = arith.addf %815, %816 : vector<8x128xf32>
    %818 = math.tanh %817 : vector<8x128xf32>
    %819 = arith.mulf %814, %818 : vector<8x128xf32>
    %c0_269 = arith.constant 0 : index
    %c0_270 = arith.constant 0 : index
    %820 = vector.load %arg11[%c0_269, %c0_270] : memref<128x512xf32, #tpu.memory_space<vmem>>, vector<128x512xf32>
    %cst_271 = arith.constant dense<0.000000e+00> : vector<8x512xf32>
    %821 = tpu.matmul %690, %820, %cst_271 {dimension_numbers = #tpu.dot_dimension_numbers<[1], [0], [0], [1], [0, 0, 1, 1], [], []>} : vector<8x128xf32>, vector<128x512xf32>, vector<8x512xf32> -> vector<8x512xf32>
    %c0_272 = arith.constant 0 : index
    %c0_273 = arith.constant 0 : index
    %822 = vector.load %arg13[%c0_272, %c0_273] : memref<1x512xf32, #tpu.memory_space<vmem>>, vector<1x512xf32>
    %823 = vector.broadcast %822 : vector<1x512xf32> to vector<8x512xf32>
    %824 = arith.addf %821, %823 : vector<8x512xf32>
    %c0_274 = arith.constant 0 : index
    %c0_275 = arith.constant 0 : index
    %825 = vector.load %arg12[%c0_274, %c0_275] : memref<128x512xf32, #tpu.memory_space<vmem>>, vector<128x512xf32>
    %cst_276 = arith.constant dense<0.000000e+00> : vector<8x512xf32>
    %826 = tpu.matmul %723, %825, %cst_276 {dimension_numbers = #tpu.dot_dimension_numbers<[1], [0], [0], [1], [0, 0, 1, 1], [], []>} : vector<8x128xf32>, vector<128x512xf32>, vector<8x512xf32> -> vector<8x512xf32>
    %827 = arith.addf %824, %826 : vector<8x512xf32>
    %828 = vector.extract_strided_slice %827 {offsets = [0, 0], sizes = [8, 128], strides = [1, 1]} : vector<8x512xf32> to vector<8x128xf32>
    %829 = arith.negf %828 : vector<8x128xf32>
    %830 = math.exp %829 : vector<8x128xf32>
    %cst_277 = arith.constant 1.000000e+00 : f32
    %831 = vector.broadcast %cst_277 : f32 to vector<8x128xf32>
    %832 = arith.addf %831, %830 : vector<8x128xf32>
    %833 = arith.divf %831, %832 : vector<8x128xf32>
    %834 = vector.extract_strided_slice %827 {offsets = [0, 128], sizes = [8, 128], strides = [1, 1]} : vector<8x512xf32> to vector<8x128xf32>
    %835 = arith.negf %834 : vector<8x128xf32>
    %836 = math.exp %835 : vector<8x128xf32>
    %cst_278 = arith.constant 1.000000e+00 : f32
    %837 = vector.broadcast %cst_278 : f32 to vector<8x128xf32>
    %838 = arith.addf %837, %836 : vector<8x128xf32>
    %839 = arith.divf %837, %838 : vector<8x128xf32>
    %840 = vector.extract_strided_slice %827 {offsets = [0, 256], sizes = [8, 128], strides = [1, 1]} : vector<8x512xf32> to vector<8x128xf32>
    %841 = math.tanh %840 : vector<8x128xf32>
    %842 = vector.extract_strided_slice %827 {offsets = [0, 384], sizes = [8, 128], strides = [1, 1]} : vector<8x512xf32> to vector<8x128xf32>
    %843 = arith.negf %842 : vector<8x128xf32>
    %844 = math.exp %843 : vector<8x128xf32>
    %cst_279 = arith.constant 1.000000e+00 : f32
    %845 = vector.broadcast %cst_279 : f32 to vector<8x128xf32>
    %846 = arith.addf %845, %844 : vector<8x128xf32>
    %847 = arith.divf %845, %846 : vector<8x128xf32>
    %848 = arith.mulf %839, %721 : vector<8x128xf32>
    %849 = arith.mulf %833, %841 : vector<8x128xf32>
    %850 = arith.addf %848, %849 : vector<8x128xf32>
    %851 = math.tanh %850 : vector<8x128xf32>
    %852 = arith.mulf %847, %851 : vector<8x128xf32>
    %c0_280 = arith.constant 0 : index
    %c0_281 = arith.constant 0 : index
    %853 = vector.load %arg5[%c0_280, %c0_281] : memref<128x512xf32, #tpu.memory_space<vmem>>, vector<128x512xf32>
    %cst_282 = arith.constant dense<0.000000e+00> : vector<8x512xf32>
    %854 = tpu.matmul %753, %853, %cst_282 {dimension_numbers = #tpu.dot_dimension_numbers<[1], [0], [0], [1], [0, 0, 1, 1], [], []>} : vector<8x128xf32>, vector<128x512xf32>, vector<8x512xf32> -> vector<8x512xf32>
    %c0_283 = arith.constant 0 : index
    %c0_284 = arith.constant 0 : index
    %855 = vector.load %arg7[%c0_283, %c0_284] : memref<1x512xf32, #tpu.memory_space<vmem>>, vector<1x512xf32>
    %856 = vector.broadcast %855 : vector<1x512xf32> to vector<8x512xf32>
    %857 = arith.addf %854, %856 : vector<8x512xf32>
    %c0_285 = arith.constant 0 : index
    %c0_286 = arith.constant 0 : index
    %858 = vector.load %arg6[%c0_285, %c0_286] : memref<128x512xf32, #tpu.memory_space<vmem>>, vector<128x512xf32>
    %cst_287 = arith.constant dense<0.000000e+00> : vector<8x512xf32>
    %859 = tpu.matmul %786, %858, %cst_287 {dimension_numbers = #tpu.dot_dimension_numbers<[1], [0], [0], [1], [0, 0, 1, 1], [], []>} : vector<8x128xf32>, vector<128x512xf32>, vector<8x512xf32> -> vector<8x512xf32>
    %860 = arith.addf %857, %859 : vector<8x512xf32>
    %861 = vector.extract_strided_slice %860 {offsets = [0, 0], sizes = [8, 128], strides = [1, 1]} : vector<8x512xf32> to vector<8x128xf32>
    %862 = arith.negf %861 : vector<8x128xf32>
    %863 = math.exp %862 : vector<8x128xf32>
    %cst_288 = arith.constant 1.000000e+00 : f32
    %864 = vector.broadcast %cst_288 : f32 to vector<8x128xf32>
    %865 = arith.addf %864, %863 : vector<8x128xf32>
    %866 = arith.divf %864, %865 : vector<8x128xf32>
    %867 = vector.extract_strided_slice %860 {offsets = [0, 128], sizes = [8, 128], strides = [1, 1]} : vector<8x512xf32> to vector<8x128xf32>
    %868 = arith.negf %867 : vector<8x128xf32>
    %869 = math.exp %868 : vector<8x128xf32>
    %cst_289 = arith.constant 1.000000e+00 : f32
    %870 = vector.broadcast %cst_289 : f32 to vector<8x128xf32>
    %871 = arith.addf %870, %869 : vector<8x128xf32>
    %872 = arith.divf %870, %871 : vector<8x128xf32>
    %873 = vector.extract_strided_slice %860 {offsets = [0, 256], sizes = [8, 128], strides = [1, 1]} : vector<8x512xf32> to vector<8x128xf32>
    %874 = math.tanh %873 : vector<8x128xf32>
    %875 = vector.extract_strided_slice %860 {offsets = [0, 384], sizes = [8, 128], strides = [1, 1]} : vector<8x512xf32> to vector<8x128xf32>
    %876 = arith.negf %875 : vector<8x128xf32>
    %877 = math.exp %876 : vector<8x128xf32>
    %cst_290 = arith.constant 1.000000e+00 : f32
    %878 = vector.broadcast %cst_290 : f32 to vector<8x128xf32>
    %879 = arith.addf %878, %877 : vector<8x128xf32>
    %880 = arith.divf %878, %879 : vector<8x128xf32>
    %881 = arith.mulf %872, %784 : vector<8x128xf32>
    %882 = arith.mulf %866, %874 : vector<8x128xf32>
    %883 = arith.addf %881, %882 : vector<8x128xf32>
    %884 = math.tanh %883 : vector<8x128xf32>
    %885 = arith.mulf %880, %884 : vector<8x128xf32>
    %c0_291 = arith.constant 0 : index
    %c0_292 = arith.constant 0 : index
    %886 = vector.load %arg8[%c0_291, %c0_292] : memref<128x512xf32, #tpu.memory_space<vmem>>, vector<128x512xf32>
    %cst_293 = arith.constant dense<0.000000e+00> : vector<8x512xf32>
    %887 = tpu.matmul %786, %886, %cst_293 {dimension_numbers = #tpu.dot_dimension_numbers<[1], [0], [0], [1], [0, 0, 1, 1], [], []>} : vector<8x128xf32>, vector<128x512xf32>, vector<8x512xf32> -> vector<8x512xf32>
    %c0_294 = arith.constant 0 : index
    %c0_295 = arith.constant 0 : index
    %888 = vector.load %arg10[%c0_294, %c0_295] : memref<1x512xf32, #tpu.memory_space<vmem>>, vector<1x512xf32>
    %889 = vector.broadcast %888 : vector<1x512xf32> to vector<8x512xf32>
    %890 = arith.addf %887, %889 : vector<8x512xf32>
    %c0_296 = arith.constant 0 : index
    %c0_297 = arith.constant 0 : index
    %891 = vector.load %arg9[%c0_296, %c0_297] : memref<128x512xf32, #tpu.memory_space<vmem>>, vector<128x512xf32>
    %cst_298 = arith.constant dense<0.000000e+00> : vector<8x512xf32>
    %892 = tpu.matmul %819, %891, %cst_298 {dimension_numbers = #tpu.dot_dimension_numbers<[1], [0], [0], [1], [0, 0, 1, 1], [], []>} : vector<8x128xf32>, vector<128x512xf32>, vector<8x512xf32> -> vector<8x512xf32>
    %893 = arith.addf %890, %892 : vector<8x512xf32>
    %894 = vector.extract_strided_slice %893 {offsets = [0, 0], sizes = [8, 128], strides = [1, 1]} : vector<8x512xf32> to vector<8x128xf32>
    %895 = arith.negf %894 : vector<8x128xf32>
    %896 = math.exp %895 : vector<8x128xf32>
    %cst_299 = arith.constant 1.000000e+00 : f32
    %897 = vector.broadcast %cst_299 : f32 to vector<8x128xf32>
    %898 = arith.addf %897, %896 : vector<8x128xf32>
    %899 = arith.divf %897, %898 : vector<8x128xf32>
    %900 = vector.extract_strided_slice %893 {offsets = [0, 128], sizes = [8, 128], strides = [1, 1]} : vector<8x512xf32> to vector<8x128xf32>
    %901 = arith.negf %900 : vector<8x128xf32>
    %902 = math.exp %901 : vector<8x128xf32>
    %cst_300 = arith.constant 1.000000e+00 : f32
    %903 = vector.broadcast %cst_300 : f32 to vector<8x128xf32>
    %904 = arith.addf %903, %902 : vector<8x128xf32>
    %905 = arith.divf %903, %904 : vector<8x128xf32>
    %906 = vector.extract_strided_slice %893 {offsets = [0, 256], sizes = [8, 128], strides = [1, 1]} : vector<8x512xf32> to vector<8x128xf32>
    %907 = math.tanh %906 : vector<8x128xf32>
    %908 = vector.extract_strided_slice %893 {offsets = [0, 384], sizes = [8, 128], strides = [1, 1]} : vector<8x512xf32> to vector<8x128xf32>
    %909 = arith.negf %908 : vector<8x128xf32>
    %910 = math.exp %909 : vector<8x128xf32>
    %cst_301 = arith.constant 1.000000e+00 : f32
    %911 = vector.broadcast %cst_301 : f32 to vector<8x128xf32>
    %912 = arith.addf %911, %910 : vector<8x128xf32>
    %913 = arith.divf %911, %912 : vector<8x128xf32>
    %914 = arith.mulf %905, %817 : vector<8x128xf32>
    %915 = arith.mulf %899, %907 : vector<8x128xf32>
    %916 = arith.addf %914, %915 : vector<8x128xf32>
    %917 = math.tanh %916 : vector<8x128xf32>
    %918 = arith.mulf %913, %917 : vector<8x128xf32>
    %c0_302 = arith.constant 0 : index
    %c0_303 = arith.constant 0 : index
    %919 = vector.load %arg11[%c0_302, %c0_303] : memref<128x512xf32, #tpu.memory_space<vmem>>, vector<128x512xf32>
    %cst_304 = arith.constant dense<0.000000e+00> : vector<8x512xf32>
    %920 = tpu.matmul %819, %919, %cst_304 {dimension_numbers = #tpu.dot_dimension_numbers<[1], [0], [0], [1], [0, 0, 1, 1], [], []>} : vector<8x128xf32>, vector<128x512xf32>, vector<8x512xf32> -> vector<8x512xf32>
    %c0_305 = arith.constant 0 : index
    %c0_306 = arith.constant 0 : index
    %921 = vector.load %arg13[%c0_305, %c0_306] : memref<1x512xf32, #tpu.memory_space<vmem>>, vector<1x512xf32>
    %922 = vector.broadcast %921 : vector<1x512xf32> to vector<8x512xf32>
    %923 = arith.addf %920, %922 : vector<8x512xf32>
    %c0_307 = arith.constant 0 : index
    %c0_308 = arith.constant 0 : index
    %924 = vector.load %arg12[%c0_307, %c0_308] : memref<128x512xf32, #tpu.memory_space<vmem>>, vector<128x512xf32>
    %cst_309 = arith.constant dense<0.000000e+00> : vector<8x512xf32>
    %925 = tpu.matmul %852, %924, %cst_309 {dimension_numbers = #tpu.dot_dimension_numbers<[1], [0], [0], [1], [0, 0, 1, 1], [], []>} : vector<8x128xf32>, vector<128x512xf32>, vector<8x512xf32> -> vector<8x512xf32>
    %926 = arith.addf %923, %925 : vector<8x512xf32>
    %927 = vector.extract_strided_slice %926 {offsets = [0, 0], sizes = [8, 128], strides = [1, 1]} : vector<8x512xf32> to vector<8x128xf32>
    %928 = arith.negf %927 : vector<8x128xf32>
    %929 = math.exp %928 : vector<8x128xf32>
    %cst_310 = arith.constant 1.000000e+00 : f32
    %930 = vector.broadcast %cst_310 : f32 to vector<8x128xf32>
    %931 = arith.addf %930, %929 : vector<8x128xf32>
    %932 = arith.divf %930, %931 : vector<8x128xf32>
    %933 = vector.extract_strided_slice %926 {offsets = [0, 128], sizes = [8, 128], strides = [1, 1]} : vector<8x512xf32> to vector<8x128xf32>
    %934 = arith.negf %933 : vector<8x128xf32>
    %935 = math.exp %934 : vector<8x128xf32>
    %cst_311 = arith.constant 1.000000e+00 : f32
    %936 = vector.broadcast %cst_311 : f32 to vector<8x128xf32>
    %937 = arith.addf %936, %935 : vector<8x128xf32>
    %938 = arith.divf %936, %937 : vector<8x128xf32>
    %939 = vector.extract_strided_slice %926 {offsets = [0, 256], sizes = [8, 128], strides = [1, 1]} : vector<8x512xf32> to vector<8x128xf32>
    %940 = math.tanh %939 : vector<8x128xf32>
    %941 = vector.extract_strided_slice %926 {offsets = [0, 384], sizes = [8, 128], strides = [1, 1]} : vector<8x512xf32> to vector<8x128xf32>
    %942 = arith.negf %941 : vector<8x128xf32>
    %943 = math.exp %942 : vector<8x128xf32>
    %cst_312 = arith.constant 1.000000e+00 : f32
    %944 = vector.broadcast %cst_312 : f32 to vector<8x128xf32>
    %945 = arith.addf %944, %943 : vector<8x128xf32>
    %946 = arith.divf %944, %945 : vector<8x128xf32>
    %947 = arith.mulf %938, %850 : vector<8x128xf32>
    %948 = arith.mulf %932, %940 : vector<8x128xf32>
    %949 = arith.addf %947, %948 : vector<8x128xf32>
    %950 = math.tanh %949 : vector<8x128xf32>
    %951 = arith.mulf %946, %950 : vector<8x128xf32>
    %c0_313 = arith.constant 0 : index
    %c0_314 = arith.constant 0 : index
    %952 = vector.load %arg8[%c0_313, %c0_314] : memref<128x512xf32, #tpu.memory_space<vmem>>, vector<128x512xf32>
    %cst_315 = arith.constant dense<0.000000e+00> : vector<8x512xf32>
    %953 = tpu.matmul %885, %952, %cst_315 {dimension_numbers = #tpu.dot_dimension_numbers<[1], [0], [0], [1], [0, 0, 1, 1], [], []>} : vector<8x128xf32>, vector<128x512xf32>, vector<8x512xf32> -> vector<8x512xf32>
    %c0_316 = arith.constant 0 : index
    %c0_317 = arith.constant 0 : index
    %954 = vector.load %arg10[%c0_316, %c0_317] : memref<1x512xf32, #tpu.memory_space<vmem>>, vector<1x512xf32>
    %955 = vector.broadcast %954 : vector<1x512xf32> to vector<8x512xf32>
    %956 = arith.addf %953, %955 : vector<8x512xf32>
    %c0_318 = arith.constant 0 : index
    %c0_319 = arith.constant 0 : index
    %957 = vector.load %arg9[%c0_318, %c0_319] : memref<128x512xf32, #tpu.memory_space<vmem>>, vector<128x512xf32>
    %cst_320 = arith.constant dense<0.000000e+00> : vector<8x512xf32>
    %958 = tpu.matmul %918, %957, %cst_320 {dimension_numbers = #tpu.dot_dimension_numbers<[1], [0], [0], [1], [0, 0, 1, 1], [], []>} : vector<8x128xf32>, vector<128x512xf32>, vector<8x512xf32> -> vector<8x512xf32>
    %959 = arith.addf %956, %958 : vector<8x512xf32>
    %960 = vector.extract_strided_slice %959 {offsets = [0, 0], sizes = [8, 128], strides = [1, 1]} : vector<8x512xf32> to vector<8x128xf32>
    %961 = arith.negf %960 : vector<8x128xf32>
    %962 = math.exp %961 : vector<8x128xf32>
    %cst_321 = arith.constant 1.000000e+00 : f32
    %963 = vector.broadcast %cst_321 : f32 to vector<8x128xf32>
    %964 = arith.addf %963, %962 : vector<8x128xf32>
    %965 = arith.divf %963, %964 : vector<8x128xf32>
    %966 = vector.extract_strided_slice %959 {offsets = [0, 128], sizes = [8, 128], strides = [1, 1]} : vector<8x512xf32> to vector<8x128xf32>
    %967 = arith.negf %966 : vector<8x128xf32>
    %968 = math.exp %967 : vector<8x128xf32>
    %cst_322 = arith.constant 1.000000e+00 : f32
    %969 = vector.broadcast %cst_322 : f32 to vector<8x128xf32>
    %970 = arith.addf %969, %968 : vector<8x128xf32>
    %971 = arith.divf %969, %970 : vector<8x128xf32>
    %972 = vector.extract_strided_slice %959 {offsets = [0, 256], sizes = [8, 128], strides = [1, 1]} : vector<8x512xf32> to vector<8x128xf32>
    %973 = math.tanh %972 : vector<8x128xf32>
    %974 = vector.extract_strided_slice %959 {offsets = [0, 384], sizes = [8, 128], strides = [1, 1]} : vector<8x512xf32> to vector<8x128xf32>
    %975 = arith.negf %974 : vector<8x128xf32>
    %976 = math.exp %975 : vector<8x128xf32>
    %cst_323 = arith.constant 1.000000e+00 : f32
    %977 = vector.broadcast %cst_323 : f32 to vector<8x128xf32>
    %978 = arith.addf %977, %976 : vector<8x128xf32>
    %979 = arith.divf %977, %978 : vector<8x128xf32>
    %980 = arith.mulf %971, %916 : vector<8x128xf32>
    %981 = arith.mulf %965, %973 : vector<8x128xf32>
    %982 = arith.addf %980, %981 : vector<8x128xf32>
    %983 = math.tanh %982 : vector<8x128xf32>
    %984 = arith.mulf %979, %983 : vector<8x128xf32>
    %c0_324 = arith.constant 0 : index
    %c0_325 = arith.constant 0 : index
    %985 = vector.load %arg11[%c0_324, %c0_325] : memref<128x512xf32, #tpu.memory_space<vmem>>, vector<128x512xf32>
    %cst_326 = arith.constant dense<0.000000e+00> : vector<8x512xf32>
    %986 = tpu.matmul %918, %985, %cst_326 {dimension_numbers = #tpu.dot_dimension_numbers<[1], [0], [0], [1], [0, 0, 1, 1], [], []>} : vector<8x128xf32>, vector<128x512xf32>, vector<8x512xf32> -> vector<8x512xf32>
    %c0_327 = arith.constant 0 : index
    %c0_328 = arith.constant 0 : index
    %987 = vector.load %arg13[%c0_327, %c0_328] : memref<1x512xf32, #tpu.memory_space<vmem>>, vector<1x512xf32>
    %988 = vector.broadcast %987 : vector<1x512xf32> to vector<8x512xf32>
    %989 = arith.addf %986, %988 : vector<8x512xf32>
    %c0_329 = arith.constant 0 : index
    %c0_330 = arith.constant 0 : index
    %990 = vector.load %arg12[%c0_329, %c0_330] : memref<128x512xf32, #tpu.memory_space<vmem>>, vector<128x512xf32>
    %cst_331 = arith.constant dense<0.000000e+00> : vector<8x512xf32>
    %991 = tpu.matmul %951, %990, %cst_331 {dimension_numbers = #tpu.dot_dimension_numbers<[1], [0], [0], [1], [0, 0, 1, 1], [], []>} : vector<8x128xf32>, vector<128x512xf32>, vector<8x512xf32> -> vector<8x512xf32>
    %992 = arith.addf %989, %991 : vector<8x512xf32>
    %993 = vector.extract_strided_slice %992 {offsets = [0, 0], sizes = [8, 128], strides = [1, 1]} : vector<8x512xf32> to vector<8x128xf32>
    %994 = arith.negf %993 : vector<8x128xf32>
    %995 = math.exp %994 : vector<8x128xf32>
    %cst_332 = arith.constant 1.000000e+00 : f32
    %996 = vector.broadcast %cst_332 : f32 to vector<8x128xf32>
    %997 = arith.addf %996, %995 : vector<8x128xf32>
    %998 = arith.divf %996, %997 : vector<8x128xf32>
    %999 = vector.extract_strided_slice %992 {offsets = [0, 128], sizes = [8, 128], strides = [1, 1]} : vector<8x512xf32> to vector<8x128xf32>
    %1000 = arith.negf %999 : vector<8x128xf32>
    %1001 = math.exp %1000 : vector<8x128xf32>
    %cst_333 = arith.constant 1.000000e+00 : f32
    %1002 = vector.broadcast %cst_333 : f32 to vector<8x128xf32>
    %1003 = arith.addf %1002, %1001 : vector<8x128xf32>
    %1004 = arith.divf %1002, %1003 : vector<8x128xf32>
    %1005 = vector.extract_strided_slice %992 {offsets = [0, 256], sizes = [8, 128], strides = [1, 1]} : vector<8x512xf32> to vector<8x128xf32>
    %1006 = math.tanh %1005 : vector<8x128xf32>
    %1007 = vector.extract_strided_slice %992 {offsets = [0, 384], sizes = [8, 128], strides = [1, 1]} : vector<8x512xf32> to vector<8x128xf32>
    %1008 = arith.negf %1007 : vector<8x128xf32>
    %1009 = math.exp %1008 : vector<8x128xf32>
    %cst_334 = arith.constant 1.000000e+00 : f32
    %1010 = vector.broadcast %cst_334 : f32 to vector<8x128xf32>
    %1011 = arith.addf %1010, %1009 : vector<8x128xf32>
    %1012 = arith.divf %1010, %1011 : vector<8x128xf32>
    %1013 = arith.mulf %1004, %949 : vector<8x128xf32>
    %1014 = arith.mulf %998, %1006 : vector<8x128xf32>
    %1015 = arith.addf %1013, %1014 : vector<8x128xf32>
    %1016 = math.tanh %1015 : vector<8x128xf32>
    %1017 = arith.mulf %1012, %1016 : vector<8x128xf32>
    %c0_335 = arith.constant 0 : index
    %c0_336 = arith.constant 0 : index
    %1018 = vector.load %arg11[%c0_335, %c0_336] : memref<128x512xf32, #tpu.memory_space<vmem>>, vector<128x512xf32>
    %cst_337 = arith.constant dense<0.000000e+00> : vector<8x512xf32>
    %1019 = tpu.matmul %984, %1018, %cst_337 {dimension_numbers = #tpu.dot_dimension_numbers<[1], [0], [0], [1], [0, 0, 1, 1], [], []>} : vector<8x128xf32>, vector<128x512xf32>, vector<8x512xf32> -> vector<8x512xf32>
    %c0_338 = arith.constant 0 : index
    %c0_339 = arith.constant 0 : index
    %1020 = vector.load %arg13[%c0_338, %c0_339] : memref<1x512xf32, #tpu.memory_space<vmem>>, vector<1x512xf32>
    %1021 = vector.broadcast %1020 : vector<1x512xf32> to vector<8x512xf32>
    %1022 = arith.addf %1019, %1021 : vector<8x512xf32>
    %c0_340 = arith.constant 0 : index
    %c0_341 = arith.constant 0 : index
    %1023 = vector.load %arg12[%c0_340, %c0_341] : memref<128x512xf32, #tpu.memory_space<vmem>>, vector<128x512xf32>
    %cst_342 = arith.constant dense<0.000000e+00> : vector<8x512xf32>
    %1024 = tpu.matmul %1017, %1023, %cst_342 {dimension_numbers = #tpu.dot_dimension_numbers<[1], [0], [0], [1], [0, 0, 1, 1], [], []>} : vector<8x128xf32>, vector<128x512xf32>, vector<8x512xf32> -> vector<8x512xf32>
    %1025 = arith.addf %1022, %1024 : vector<8x512xf32>
    %1026 = vector.extract_strided_slice %1025 {offsets = [0, 0], sizes = [8, 128], strides = [1, 1]} : vector<8x512xf32> to vector<8x128xf32>
    %1027 = arith.negf %1026 : vector<8x128xf32>
    %1028 = math.exp %1027 : vector<8x128xf32>
    %cst_343 = arith.constant 1.000000e+00 : f32
    %1029 = vector.broadcast %cst_343 : f32 to vector<8x128xf32>
    %1030 = arith.addf %1029, %1028 : vector<8x128xf32>
    %1031 = arith.divf %1029, %1030 : vector<8x128xf32>
    %1032 = vector.extract_strided_slice %1025 {offsets = [0, 128], sizes = [8, 128], strides = [1, 1]} : vector<8x512xf32> to vector<8x128xf32>
    %1033 = arith.negf %1032 : vector<8x128xf32>
    %1034 = math.exp %1033 : vector<8x128xf32>
    %cst_344 = arith.constant 1.000000e+00 : f32
    %1035 = vector.broadcast %cst_344 : f32 to vector<8x128xf32>
    %1036 = arith.addf %1035, %1034 : vector<8x128xf32>
    %1037 = arith.divf %1035, %1036 : vector<8x128xf32>
    %1038 = vector.extract_strided_slice %1025 {offsets = [0, 256], sizes = [8, 128], strides = [1, 1]} : vector<8x512xf32> to vector<8x128xf32>
    %1039 = math.tanh %1038 : vector<8x128xf32>
    %1040 = vector.extract_strided_slice %1025 {offsets = [0, 384], sizes = [8, 128], strides = [1, 1]} : vector<8x512xf32> to vector<8x128xf32>
    %1041 = arith.negf %1040 : vector<8x128xf32>
    %1042 = math.exp %1041 : vector<8x128xf32>
    %cst_345 = arith.constant 1.000000e+00 : f32
    %1043 = vector.broadcast %cst_345 : f32 to vector<8x128xf32>
    %1044 = arith.addf %1043, %1042 : vector<8x128xf32>
    %1045 = arith.divf %1043, %1044 : vector<8x128xf32>
    %1046 = arith.mulf %1037, %1015 : vector<8x128xf32>
    %1047 = arith.mulf %1031, %1039 : vector<8x128xf32>
    %1048 = arith.addf %1046, %1047 : vector<8x128xf32>
    %1049 = math.tanh %1048 : vector<8x128xf32>
    %1050 = arith.mulf %1045, %1049 : vector<8x128xf32>
    %c0_346 = arith.constant 0 : index
    %c0_347 = arith.constant 0 : index
    %1051 = vector.load %arg14[%c0_346, %c0_347] : memref<1x128xf32, #tpu.memory_space<vmem>>, vector<1x128xf32>
    %1052 = vector.broadcast %1051 : vector<1x128xf32> to vector<8x128xf32>
    %1053 = arith.mulf %1050, %1052 : vector<8x128xf32>
    %cst_348 = arith.constant dense<0.000000e+00> : vector<8xf32>
    %1054 = vector.multi_reduction <add>, %1053, %cst_348 [1] : vector<8x128xf32> to vector<8xf32>
    %1055 = vector.shape_cast %1054 : vector<8xf32> to vector<8x1xf32>
    %c0_349 = arith.constant 0 : index
    %c0_350 = arith.constant 0 : index
    %1056 = vector.load %arg15[%c0_349, %c0_350] : memref<1x1xf32, #tpu.memory_space<vmem>>, vector<1x1xf32>
    %1057 = vector.broadcast %1056 : vector<1x1xf32> to vector<8x1xf32>
    %1058 = arith.addf %1055, %1057 : vector<8x1xf32>
    %c0_351 = arith.constant 0 : index
    %c0_352 = arith.constant 0 : index
    %1059 = vector.load %arg16[%c0_351, %c0_352] : memref<8x1xf32, #tpu.memory_space<vmem>>, vector<8x1xf32>
    tpu.vector_store %arg16[%c0_351, %c0_352], %1058 {strides = array<i32>} : memref<8x1xf32, #tpu.memory_space<vmem>>, vector<8x1xf32>,
    return
  }
  func.func @transform_0(%arg0: i32) -> (i32, i32, i32) {
    %c0_i32 = arith.constant 0 : i32
    %c0_i32_0 = arith.constant 0 : i32
    %c0_i32_1 = arith.constant 0 : i32
    return %c0_i32, %arg0, %c0_i32_0 : i32, i32, i32
  }
  func.func @transform_1(%arg0: i32) -> (i32, i32) {
    %c0_i32 = arith.constant 0 : i32
    %c0_i32_0 = arith.constant 0 : i32
    %c0_i32_1 = arith.constant 0 : i32
    return %c0_i32, %c0_i32_0 : i32, i32
  }
  func.func @transform_2(%arg0: i32) -> (i32, i32) {
    %c0_i32 = arith.constant 0 : i32
    %c0_i32_0 = arith.constant 0 : i32
    %c0_i32_1 = arith.constant 0 : i32
    return %c0_i32, %c0_i32_0 : i32, i32
  }
  func.func @transform_3(%arg0: i32) -> (i32, i32) {
    %c0_i32 = arith.constant 0 : i32
    %c0_i32_0 = arith.constant 0 : i32
    %c0_i32_1 = arith.constant 0 : i32
    return %c0_i32, %c0_i32_0 : i32, i32
  }
  func.func @transform_4(%arg0: i32) -> (i32, i32) {
    %c0_i32 = arith.constant 0 : i32
    %c0_i32_0 = arith.constant 0 : i32
    %c0_i32_1 = arith.constant 0 : i32
    return %c0_i32, %c0_i32_0 : i32, i32
  }
  func.func @transform_5(%arg0: i32) -> (i32, i32) {
    %c0_i32 = arith.constant 0 : i32
    %c0_i32_0 = arith.constant 0 : i32
    %c0_i32_1 = arith.constant 0 : i32
    return %c0_i32, %c0_i32_0 : i32, i32
  }
  func.func @transform_6(%arg0: i32) -> (i32, i32) {
    %c0_i32 = arith.constant 0 : i32
    %c0_i32_0 = arith.constant 0 : i32
    %c0_i32_1 = arith.constant 0 : i32
    return %c0_i32, %c0_i32_0 : i32, i32
  }
  func.func @transform_7(%arg0: i32) -> (i32, i32) {
    %c0_i32 = arith.constant 0 : i32
    %c0_i32_0 = arith.constant 0 : i32
    %c0_i32_1 = arith.constant 0 : i32
    return %c0_i32, %c0_i32_0 : i32, i32
  }
  func.func @transform_8(%arg0: i32) -> (i32, i32) {
    %c0_i32 = arith.constant 0 : i32
    %c0_i32_0 = arith.constant 0 : i32
    %c0_i32_1 = arith.constant 0 : i32
    return %c0_i32, %c0_i32_0 : i32, i32
  }
  func.func @transform_9(%arg0: i32) -> (i32, i32) {
    %c0_i32 = arith.constant 0 : i32
    %c0_i32_0 = arith.constant 0 : i32
    %c0_i32_1 = arith.constant 0 : i32
    return %c0_i32, %c0_i32_0 : i32, i32
  }
  func.func @transform_10(%arg0: i32) -> (i32, i32) {
    %c0_i32 = arith.constant 0 : i32
    %c0_i32_0 = arith.constant 0 : i32
    %c0_i32_1 = arith.constant 0 : i32
    return %c0_i32, %c0_i32_0 : i32, i32
  }
  func.func @transform_11(%arg0: i32) -> (i32, i32) {
    %c0_i32 = arith.constant 0 : i32
    %c0_i32_0 = arith.constant 0 : i32
    %c0_i32_1 = arith.constant 0 : i32
    return %c0_i32, %c0_i32_0 : i32, i32
  }
  func.func @transform_12(%arg0: i32) -> (i32, i32) {
    %c0_i32 = arith.constant 0 : i32
    %c0_i32_0 = arith.constant 0 : i32
    %c0_i32_1 = arith.constant 0 : i32
    return %c0_i32, %c0_i32_0 : i32, i32
  }
  func.func @transform_13(%arg0: i32) -> (i32, i32) {
    %c0_i32 = arith.constant 0 : i32
    %c0_i32_0 = arith.constant 0 : i32
    %c0_i32_1 = arith.constant 0 : i32
    return %c0_i32, %c0_i32_0 : i32, i32
  }
  func.func @transform_14(%arg0: i32) -> (i32, i32) {
    %c0_i32 = arith.constant 0 : i32
    %c0_i32_0 = arith.constant 0 : i32
    %c0_i32_1 = arith.constant 0 : i32
    return %c0_i32, %c0_i32_0 : i32, i32
  }
  func.func @transform_15(%arg0: i32) -> (i32, i32) {
    %c0_i32 = arith.constant 0 : i32
    %c0_i32_0 = arith.constant 0 : i32
    return %arg0, %c0_i32 : i32, i32
  }
}

</mosaic_0001>

<llo_original>
// kernel: stacked_lstm_forward.1
$region0: #{stacked_lstm_forward.1}
  #allocation0 [shape = 'u32[]', space=smem, size = 0x4, offset = 0x4, fixed_abs, tag = 'smem constant byte address 0x4 - core index']
  #allocation1 [shape = 'u32[72,128]{1,0:T(1,128)}', space=vmem, size = 0x9000, scoped, tag = 'internal scratch']
  #allocation2 [shape = 'f32[8,8,512]{2,1,0:T(8,128)}', space=vmem, size = 0x20000, scoped, tag = 'scratch operand']
  #allocation3 [shape = 'f32[1,1]{1,0:T(1,128)S(1)}', space=vmem, size = 0x200, scoped, tag = 'scoped memory for stacked_lstm_forward.1']
  %s0 = inlined_call_operand.vmem [shape: f32[8,8,64], index: 0, kind: input, shape index: {}]
  %s1 = inlined_call_operand.hbm [shape: f32[64,512], index: 1, kind: input, shape index: {}]
  %s2 = inlined_call_operand.hbm [shape: f32[128,512], index: 2, kind: input, shape index: {}]
  %s3 = inlined_call_operand.vmem [shape: f32[1,512], index: 3, kind: input, shape index: {}]
  %s4 = inlined_call_operand.hbm [shape: f32[128,512], index: 4, kind: input, shape index: {}]
  %s5 = inlined_call_operand.hbm [shape: f32[128,512], index: 5, kind: input, shape index: {}]
  %s6 = inlined_call_operand.vmem [shape: f32[1,512], index: 6, kind: input, shape index: {}]
  %s7 = inlined_call_operand.hbm [shape: f32[128,512], index: 7, kind: input, shape index: {}]
  %s8 = inlined_call_operand.hbm [shape: f32[128,512], index: 8, kind: input, shape index: {}]
  %s9 = inlined_call_operand.vmem [shape: f32[1,512], index: 9, kind: input, shape index: {}]
  %s10 = inlined_call_operand.hbm [shape: f32[128,512], index: 10, kind: input, shape index: {}]
  %s11 = inlined_call_operand.hbm [shape: f32[128,512], index: 11, kind: input, shape index: {}]
  %s12 = inlined_call_operand.vmem [shape: f32[1,512], index: 12, kind: input, shape index: {}]
  %s13 = inlined_call_operand.vmem [shape: f32[1,128], index: 13, kind: input, shape index: {}]
  %s14 = inlined_call_operand.<no memory space> [shape: f32[1,1], index: 14, kind: input, shape index: {}]
  %s15 = inlined_call_operand.vmem [shape: f32[8,1], index: 15, kind: output, shape index: {}]
  %s16 = sld [smem:[#allocation0]]
  $region102: #{stacked_lstm_forward.1} parent=0
    _
  %s18 = ssub.s32 1, %s16
  %s19 = scalar_select 0, %s18, %s16
  %v20 = vstv %s14
  %21 = vst [vmem:[#allocation3] sm:$0x1] %v20
  $region1: #{stacked_lstm_forward.1} parent=0
    #allocation4 [shape = 'u8[131072]{0}', space=vmem, size = 0x20000, scoped, tag = 'input window, operand 1, single buffered']
    #allocation5 [shape = 's32[1]{0}', space=sflag, size = 0x4, scoped, tag = 'scoped memory for stacked_lstm_forward.1']
    #allocation6 [shape = 'u8[262144]{0}', space=vmem, size = 0x40000, scoped, tag = 'input window, operand 2, single buffered']
    #allocation7 [shape = 's32[1]{0}', space=sflag, size = 0x4, scoped, tag = 'scoped memory for stacked_lstm_forward.1']
    #allocation8 [shape = 'u8[262144]{0}', space=vmem, size = 0x40000, scoped, tag = 'input window, operand 4, single buffered']
    #allocation9 [shape = 'u8[262144]{0}', space=vmem, size = 0x40000, scoped, tag = 'input window, operand 5, single buffered']
    #allocation10 [shape = 's32[1]{0}', space=sflag, size = 0x4, scoped, tag = 'scoped memory for stacked_lstm_forward.1']
    #allocation11 [shape = 'u8[262144]{0}', space=vmem, size = 0x40000, scoped, tag = 'input window, operand 7, single buffered']
    #allocation12 [shape = 'u8[262144]{0}', space=vmem, size = 0x40000, scoped, tag = 'input window, operand 8, single buffered']
    #allocation13 [shape = 's32[1]{0}', space=sflag, size = 0x4, scoped, tag = 'scoped memory for stacked_lstm_forward.1']
    #allocation14 [shape = 'u8[262144]{0}', space=vmem, size = 0x40000, scoped, tag = 'input window, operand 10, single buffered']
    #allocation15 [shape = 'u8[262144]{0}', space=vmem, size = 0x40000, scoped, tag = 'input window, operand 11, single buffered']
    #allocation16 [shape = 's32[1]{0}', space=sflag, size = 0x4, scoped, tag = 'scoped memory for stacked_lstm_forward.1']
    %22 = vsyncpa [#allocation5], 0
    %23 = vsyncpa [#allocation7], 0
    %24 = vsyncpa [#allocation10], 0
    %25 = vsyncpa [#allocation13], 0
    %26 = vsyncpa [#allocation16], 0
    // Predicated region
    $region2: #{stacked_lstm_forward.1} parent=1 // pred_check
      _
    $region3: #{stacked_lstm_forward.1} parent=1 // pred_check_branch
      %28 = sbr.rel (0) target = $region5
    $region4: #{stacked_lstm_forward.1} parent=1 // pred_region
      _
    $region5: #{stacked_lstm_forward.1} parent=1 // pred_fallthru
      _
    // Predicated region
    $region6: #{stacked_lstm_forward.1} parent=1 // pred_check
      _
    $region7: #{stacked_lstm_forward.1} parent=1 // pred_check_branch
      %30 = sbr.rel (0) target = $region9
    $region8: #{stacked_lstm_forward.1} parent=1 // pred_region
      %32 = vsyncadd [#allocation5], 0
      %s33 = sshll.u32 %s1, 4
      %s34 = int_to_ptr.hbm [resolvable:$true] %s33
      %s35 = sshll.u32 [#allocation4], 4
      %s36 = int_to_ptr.vmem [resolvable:$true] %s35
      %41 = dma.hbm_to_vmem [thread:$0]  %s34, 4096, %s36, [#allocation5], 512, 512, 32
    $region9: #{stacked_lstm_forward.1} parent=1 // pred_fallthru
      _
    // Predicated region
    $region10: #{stacked_lstm_forward.1} parent=1 // pred_check
      _
    $region11: #{stacked_lstm_forward.1} parent=1 // pred_check_branch
      %43 = sbr.rel (0) target = $region13
    $region12: #{stacked_lstm_forward.1} parent=1 // pred_region
      %45 = vsyncadd [#allocation7], 0
      %s46 = sshll.u32 %s2, 4
      %s47 = int_to_ptr.hbm [resolvable:$true] %s46
      %s48 = sshll.u32 [#allocation6], 4
      %s49 = int_to_ptr.vmem [resolvable:$true] %s48
      %54 = dma.hbm_to_vmem [thread:$0]  %s47, 8192, %s49, [#allocation7], 512, 512, 32
    $region13: #{stacked_lstm_forward.1} parent=1 // pred_fallthru
      _
    // Predicated region
    $region14: #{stacked_lstm_forward.1} parent=1 // pred_check
      _
    $region15: #{stacked_lstm_forward.1} parent=1 // pred_check_branch
      %56 = sbr.rel (0) target = $region17
    $region16: #{stacked_lstm_forward.1} parent=1 // pred_region
      _
    $region17: #{stacked_lstm_forward.1} parent=1 // pred_fallthru
      _
    // Predicated region
    $region18: #{stacked_lstm_forward.1} parent=1 // pred_check
      _
    $region19: #{stacked_lstm_forward.1} parent=1 // pred_check_branch
      %58 = sbr.rel (0) target = $region21
    $region20: #{stacked_lstm_forward.1} parent=1 // pred_region
      %60 = vsyncadd [#allocation7], 0
      %s61 = sshll.u32 %s4, 4
      %s62 = int_to_ptr.hbm [resolvable:$true] %s61
      %s63 = sshll.u32 [#allocation8], 4
      %s64 = int_to_ptr.vmem [resolvable:$true] %s63
      %69 = dma.hbm_to_vmem [thread:$0]  %s62, 8192, %s64, [#allocation7], 512, 512, 32
    $region21: #{stacked_lstm_forward.1} parent=1 // pred_fallthru
      _
    // Predicated region
    $region22: #{stacked_lstm_forward.1} parent=1 // pred_check
      _
    $region23: #{stacked_lstm_forward.1} parent=1 // pred_check_branch
      %71 = sbr.rel (0) target = $region25
    $region24: #{stacked_lstm_forward.1} parent=1 // pred_region
      %73 = vsyncadd [#allocation10], 0
      %s74 = sshll.u32 %s5, 4
      %s75 = int_to_ptr.hbm [resolvable:$true] %s74
      %s76 = sshll.u32 [#allocation9], 4
      %s77 = int_to_ptr.vmem [resolvable:$true] %s76
      %82 = dma.hbm_to_vmem [thread:$0]  %s75, 8192, %s77, [#allocation10], 512, 512, 32
    $region25: #{stacked_lstm_forward.1} parent=1 // pred_fallthru
      _
    // Predicated region
    $region26: #{stacked_lstm_forward.1} parent=1 // pred_check
      _
    $region27: #{stacked_lstm_forward.1} parent=1 // pred_check_branch
      %84 = sbr.rel (0) target = $region29
    $region28: #{stacked_lstm_forward.1} parent=1 // pred_region
      _
    $region29: #{stacked_lstm_forward.1} parent=1 // pred_fallthru
      _
    // Predicated region
    $region30: #{stacked_lstm_forward.1} parent=1 // pred_check
      _
    $region31: #{stacked_lstm_forward.1} parent=1 // pred_check_branch
      %86 = sbr.rel (0) target = $region33
    $region32: #{stacked_lstm_forward.1} parent=1 // pred_region
      %88 = vsyncadd [#allocation10], 0
      %s89 = sshll.u32 %s7, 4
      %s90 = int_to_ptr.hbm [resolvable:$true] %s89
      %s91 = sshll.u32 [#allocation11], 4
      %s92 = int_to_ptr.vmem [resolvable:$true] %s91
      %97 = dma.hbm_to_vmem [thread:$0]  %s90, 8192, %s92, [#allocation10], 512, 512, 32
    $region33: #{stacked_lstm_forward.1} parent=1 // pred_fallthru
      _
    // Predicated region
    $region34: #{stacked_lstm_forward.1} parent=1 // pred_check
      _
    $region35: #{stacked_lstm_forward.1} parent=1 // pred_check_branch
      %99 = sbr.rel (0) target = $region37
    $region36: #{stacked_lstm_forward.1} parent=1 // pred_region
      %101 = vsyncadd [#allocation13], 0
      %s102 = sshll.u32 %s8, 4
      %s103 = int_to_ptr.hbm [resolvable:$true] %s102
      %s104 = sshll.u32 [#allocation12], 4
      %s105 = int_to_ptr.vmem [resolvable:$true] %s104
      %110 = dma.hbm_to_vmem [thread:$0]  %s103, 8192, %s105, [#allocation13], 512, 512, 32
    $region37: #{stacked_lstm_forward.1} parent=1 // pred_fallthru
      _
    // Predicated region
    $region38: #{stacked_lstm_forward.1} parent=1 // pred_check
      _
    $region39: #{stacked_lstm_forward.1} parent=1 // pred_check_branch
      %112 = sbr.rel (0) target = $region41
    $region40: #{stacked_lstm_forward.1} parent=1 // pred_region
      _
    $region41: #{stacked_lstm_forward.1} parent=1 // pred_fallthru
      _
    // Predicated region
    $region42: #{stacked_lstm_forward.1} parent=1 // pred_check
      _
    $region43: #{stacked_lstm_forward.1} parent=1 // pred_check_branch
      %114 = sbr.rel (0) target = $region45
    $region44: #{stacked_lstm_forward.1} parent=1 // pred_region
      %116 = vsyncadd [#allocation13], 0
      %s117 = sshll.u32 %s10, 4
      %s118 = int_to_ptr.hbm [resolvable:$true] %s117
      %s119 = sshll.u32 [#allocation14], 4
      %s120 = int_to_ptr.vmem [resolvable:$true] %s119
      %125 = dma.hbm_to_vmem [thread:$0]  %s118, 8192, %s120, [#allocation13], 512, 512, 32
    $region45: #{stacked_lstm_forward.1} parent=1 // pred_fallthru
      _
    // Predicated region
    $region46: #{stacked_lstm_forward.1} parent=1 // pred_check
      _
    $region47: #{stacked_lstm_forward.1} parent=1 // pred_check_branch
      %127 = sbr.rel (0) target = $region49
    $region48: #{stacked_lstm_forward.1} parent=1 // pred_region
      %129 = vsyncadd [#allocation16], 0
      %s130 = sshll.u32 %s11, 4
      %s131 = int_to_ptr.hbm [resolvable:$true] %s130
      %s132 = sshll.u32 [#allocation15], 4
      %s133 = int_to_ptr.vmem [resolvable:$true] %s132
      %138 = dma.hbm_to_vmem [thread:$0]  %s131, 8192, %s133, [#allocation16], 512, 512, 32
    $region49: #{stacked_lstm_forward.1} parent=1 // pred_fallthru
      _
    // Predicated region
    $region50: #{stacked_lstm_forward.1} parent=1 // pred_check
      _
    $region51: #{stacked_lstm_forward.1} parent=1 // pred_check_branch
      %140 = sbr.rel (0) target = $region53
    $region52: #{stacked_lstm_forward.1} parent=1 // pred_region
      _
    $region53: #{stacked_lstm_forward.1} parent=1 // pred_fallthru
      _
    // Predicated region
    $region54: #{stacked_lstm_forward.1} parent=1 // pred_check
      _
    $region55: #{stacked_lstm_forward.1} parent=1 // pred_check_branch
      %142 = sbr.rel (0) target = $region57
    $region56: #{stacked_lstm_forward.1} parent=1 // pred_region
      _
    $region57: #{stacked_lstm_forward.1} parent=1 // pred_fallthru
      _
    // Predicated region
    $region58: #{stacked_lstm_forward.1} parent=1 // pred_check
      _
    $region59: #{stacked_lstm_forward.1} parent=1 // pred_check_branch
      %144 = sbr.rel (0) target = $region61
    $region60: #{stacked_lstm_forward.1} parent=1 // pred_region
      _
    $region61: #{stacked_lstm_forward.1} parent=1 // pred_fallthru
      _
    // Predicated region
    $region62: #{stacked_lstm_forward.1} parent=1 // pred_check
      _
    $region63: #{stacked_lstm_forward.1} parent=1 // pred_check_branch
      %146 = sbr.rel (0) target = $region65
    $region64: #{stacked_lstm_forward.1} parent=1 // pred_region
      %148 = dma.done [#allocation5], 4096
    $region65: #{stacked_lstm_forward.1} parent=1 // pred_fallthru
      _
    // Predicated region
    $region66: #{stacked_lstm_forward.1} parent=1 // pred_check
      _
    $region67: #{stacked_lstm_forward.1} parent=1 // pred_check_branch
      %150 = sbr.rel (0) target = $region69
    $region68: #{stacked_lstm_forward.1} parent=1 // pred_region
      %152 = dma.done [#allocation7], 8192
    $region69: #{stacked_lstm_forward.1} parent=1 // pred_fallthru
      _
    // Predicated region
    $region70: #{stacked_lstm_forward.1} parent=1 // pred_check
      _
    $region71: #{stacked_lstm_forward.1} parent=1 // pred_check_branch
      %154 = sbr.rel (0) target = $region73
    $region72: #{stacked_lstm_forward.1} parent=1 // pred_region
      %156 = dma.done [#allocation7], 8192
    $region73: #{stacked_lstm_forward.1} parent=1 // pred_fallthru
      _
    // Predicated region
    $region74: #{stacked_lstm_forward.1} parent=1 // pred_check
      _
    $region75: #{stacked_lstm_forward.1} parent=1 // pred_check_branch
      %158 = sbr.rel (0) target = $region77
    $region76: #{stacked_lstm_forward.1} parent=1 // pred_region
      %160 = dma.done [#allocation10], 8192
    $region77: #{stacked_lstm_forward.1} parent=1 // pred_fallthru
      _
    // Predicated region
    $region78: #{stacked_lstm_forward.1} parent=1 // pred_check
      _
    $region79: #{stacked_lstm_forward.1} parent=1 // pred_check_branch
      %162 = sbr.rel (0) target = $region81
    $region80: #{stacked_lstm_forward.1} parent=1 // pred_region
      %164 = dma.done [#allocation10], 8192
    $region81: #{stacked_lstm_forward.1} parent=1 // pred_fallthru
      _
    // Predicated region
    $region82: #{stacked_lstm_forward.1} parent=1 // pred_check
      _
    $region83: #{stacked_lstm_forward.1} parent=1 // pred_check_branch
      %166 = sbr.rel (0) target = $region85
    $region84: #{stacked_lstm_forward.1} parent=1 // pred_region
      %168 = dma.done [#allocation13], 8192
    $region85: #{stacked_lstm_forward.1} parent=1 // pred_fallthru
      _
    // Predicated region
    $region86: #{stacked_lstm_forward.1} parent=1 // pred_check
      _
    $region87: #{stacked_lstm_forward.1} parent=1 // pred_check_branch
      %170 = sbr.rel (0) target = $region89
    $region88: #{stacked_lstm_forward.1} parent=1 // pred_region
      %172 = dma.done [#allocation13], 8192
    $region89: #{stacked_lstm_forward.1} parent=1 // pred_fallthru
      _
    // Predicated region
    $region90: #{stacked_lstm_forward.1} parent=1 // pred_check
      _
    $region91: #{stacked_lstm_forward.1} parent=1 // pred_check_branch
      %174 = sbr.rel (0) target = $region93
    $region92: #{stacked_lstm_forward.1} parent=1 // pred_region
      %176 = dma.done [#allocation16], 8192
    $region93: #{stacked_lstm_forward.1} parent=1 // pred_fallthru
      _
    %v178 = vld [vmem:[%s0] sm:$0xff]
    %v179 = vld [vmem:[%s0 + $0x8] sm:$0xff]
    %v180 = vld [vmem:[%s0 + $0x10] sm:$0xff]
    %v181 = vld [vmem:[%s0 + $0x18] sm:$0xff]
    %v182 = vld [vmem:[%s0 + $0x20] sm:$0xff]
    %v183 = vld [vmem:[%s0 + $0x28] sm:$0xff]
    %v184 = vld [vmem:[%s0 + $0x30] sm:$0xff]
    %v185 = vld [vmem:[%s0 + $0x38] sm:$0xff]
    %v186 = vld [vmem:[#allocation4] sm:$0xff]
    %v187 = vld [vmem:[#allocation4 + $0x8] sm:$0xff]
    %v188 = vld [vmem:[#allocation4 + $0x10] sm:$0xff]
    %v189 = vld [vmem:[#allocation4 + $0x18] sm:$0xff]
    %v190 = vld [vmem:[#allocation4 + $0x20] sm:$0xff]
    %v191 = vld [vmem:[#allocation4 + $0x28] sm:$0xff]
    %v192 = vld [vmem:[#allocation4 + $0x30] sm:$0xff]
    %v193 = vld [vmem:[#allocation4 + $0x38] sm:$0xff]
    %v194 = vld [vmem:[#allocation4 + $0x40] sm:$0xff]
    %v195 = vld [vmem:[#allocation4 + $0x48] sm:$0xff]
    %v196 = vld [vmem:[#allocation4 + $0x50] sm:$0xff]
    %v197 = vld [vmem:[#allocation4 + $0x58] sm:$0xff]
    %v198 = vld [vmem:[#allocation4 + $0x60] sm:$0xff]
    %v199 = vld [vmem:[#allocation4 + $0x68] sm:$0xff]
    %v200 = vld [vmem:[#allocation4 + $0x70] sm:$0xff]
    %v201 = vld [vmem:[#allocation4 + $0x78] sm:$0xff]
    %v202 = vld [vmem:[#allocation4 + $0x80] sm:$0xff]
    %v203 = vld [vmem:[#allocation4 + $0x88] sm:$0xff]
    %v204 = vld [vmem:[#allocation4 + $0x90] sm:$0xff]
    %v205 = vld [vmem:[#allocation4 + $0x98] sm:$0xff]
    %v206 = vld [vmem:[#allocation4 + $0xa0] sm:$0xff]
    %v207 = vld [vmem:[#allocation4 + $0xa8] sm:$0xff]
    %v208 = vld [vmem:[#allocation4 + $0xb0] sm:$0xff]
    %v209 = vld [vmem:[#allocation4 + $0xb8] sm:$0xff]
    %v210 = vld [vmem:[#allocation4 + $0xc0] sm:$0xff]
    %v211 = vld [vmem:[#allocation4 + $0xc8] sm:$0xff]
    %v212 = vld [vmem:[#allocation4 + $0xd0] sm:$0xff]
    %v213 = vld [vmem:[#allocation4 + $0xd8] sm:$0xff]
    %v214 = vld [vmem:[#allocation4 + $0xe0] sm:$0xff]
    %v215 = vld [vmem:[#allocation4 + $0xe8] sm:$0xff]
    %v216 = vld [vmem:[#allocation4 + $0xf0] sm:$0xff]
    %v217 = vld [vmem:[#allocation4 + $0xf8] sm:$0xff]
    %v218 = vpack.c.bf16 %v179, %v178
    %v219 = vpack.c.bf16 %v181, %v180
    %v220 = vpack.c.bf16 %v183, %v182
    %v221 = vpack.c.bf16 %v185, %v184
    %v222 = vpack.c.bf16 %v190, %v186
    %v223 = vpack.c.bf16 %v191, %v187
    %v224 = vpack.c.bf16 %v192, %v188
    %v225 = vpack.c.bf16 %v193, %v189
    %v226 = vpack.c.bf16 %v198, %v194
    %v227 = vpack.c.bf16 %v199, %v195
    %v228 = vpack.c.bf16 %v200, %v196
    %v229 = vpack.c.bf16 %v201, %v197
    %v230 = vpack.c.bf16 %v206, %v202
    %v231 = vpack.c.bf16 %v207, %v203
    %v232 = vpack.c.bf16 %v208, %v204
    %v233 = vpack.c.bf16 %v209, %v205
    %v234 = vpack.c.bf16 %v214, %v210
    %v235 = vpack.c.bf16 %v215, %v211
    %v236 = vpack.c.bf16 %v216, %v212
    %v237 = vpack.c.bf16 %v217, %v213
    %v238 = vld [vmem:[%s3] sm:$0xf]
    %v240 = vperm.slane %v238, 0
    %v241 = vperm.slane %v238, 1
    %v242 = vperm.slane %v238, 2
    %v243 = vperm.slane %v238, 3
    %vm248 = vcmask 523264
    %v250 = vsel %vm248, %v218, 0
    %v253 = vsel %vm248, %v219, 0
    %v256 = vsel %vm248, %v220, 0
    %v259 = vsel %vm248, %v221, 0
    %261 = vmatpush.bf16.msra.mxu0 0
    %262 = vmatpush.bf16.msra.mxu0 0
    %263 = vmatpush.bf16.msra.mxu0 0
    %264 = vmatpush.bf16.msra.mxu0 0
    %265 = vmatpush.bf16.msra.mxu0 %v234
    %266 = vmatpush.bf16.msra.mxu0 %v230
    %267 = vmatpush.bf16.msra.mxu0 %v226
    %268 = vmatpush.bf16.msra.mxu0 %v222
    %269 = vmatmul.bf16.gmra.mxu0 %v250
    %v270 = vpop.f32.mrf.mxu0
    %v271 = vadd.f32 %v240, %v270
    %v272 = vpop.f32.mrf.mxu0
    %v273 = vadd.f32 %v240, %v272
    %274 = vmatmul.bf16.gmra.mxu0 %v253
    %v275 = vpop.f32.mrf.mxu0
    %v276 = vadd.f32 %v240, %v275
    %v277 = vpop.f32.mrf.mxu0
    %v278 = vadd.f32 %v240, %v277
    %279 = vmatmul.bf16.gmra.mxu0 %v256
    %v280 = vpop.f32.mrf.mxu0
    %v281 = vadd.f32 %v240, %v280
    %v282 = vpop.f32.mrf.mxu0
    %v283 = vadd.f32 %v240, %v282
    %284 = vmatmul.bf16.gmra.mxu0 %v259
    %v285 = vpop.f32.mrf.mxu0
    %v286 = vadd.f32 %v240, %v285
    %v287 = vpop.f32.mrf.mxu0
    %v288 = vadd.f32 %v240, %v287
    %289 = vdwg.mxu0
    %290 = vmatpush.bf16.msra.mxu0 0
    %291 = vmatpush.bf16.msra.mxu0 0
    %292 = vmatpush.bf16.msra.mxu0 0
    %293 = vmatpush.bf16.msra.mxu0 0
    %294 = vmatpush.bf16.msra.mxu0 %v235
    %295 = vmatpush.bf16.msra.mxu0 %v231
    %296 = vmatpush.bf16.msra.mxu0 %v227
    %297 = vmatpush.bf16.msra.mxu0 %v223
    %298 = vmatmul.bf16.gmra.mxu0 %v250
    %v299 = vpop.f32.mrf.mxu0
    %v300 = vadd.f32 %v241, %v299
    %v301 = vpop.f32.mrf.mxu0
    %v302 = vadd.f32 %v241, %v301
    %303 = vmatmul.bf16.gmra.mxu0 %v253
    %v304 = vpop.f32.mrf.mxu0
    %v305 = vadd.f32 %v241, %v304
    %v306 = vpop.f32.mrf.mxu0
    %v307 = vadd.f32 %v241, %v306
    %308 = vmatmul.bf16.gmra.mxu0 %v256
    %v309 = vpop.f32.mrf.mxu0
    %v310 = vadd.f32 %v241, %v309
    %v311 = vpop.f32.mrf.mxu0
    %v312 = vadd.f32 %v241, %v311
    %313 = vmatmul.bf16.gmra.mxu0 %v259
    %v314 = vpop.f32.mrf.mxu0
    %v315 = vadd.f32 %v241, %v314
    %v316 = vpop.f32.mrf.mxu0
    %v317 = vadd.f32 %v241, %v316
    %318 = vdwg.mxu0
    %319 = vmatpush.bf16.msra.mxu0 0
    %320 = vmatpush.bf16.msra.mxu0 0
    %321 = vmatpush.bf16.msra.mxu0 0
    %322 = vmatpush.bf16.msra.mxu0 0
    %323 = vmatpush.bf16.msra.mxu0 %v236
    %324 = vmatpush.bf16.msra.mxu0 %v232
    %325 = vmatpush.bf16.msra.mxu0 %v228
    %326 = vmatpush.bf16.msra.mxu0 %v224
    %327 = vmatmul.bf16.gmra.mxu0 %v250
    %v328 = vpop.f32.mrf.mxu0
    %v329 = vadd.f32 %v242, %v328
    %v330 = vpop.f32.mrf.mxu0
    %v331 = vadd.f32 %v242, %v330
    %332 = vmatmul.bf16.gmra.mxu0 %v253
    %v333 = vpop.f32.mrf.mxu0
    %v334 = vadd.f32 %v242, %v333
    %v335 = vpop.f32.mrf.mxu0
    %v336 = vadd.f32 %v242, %v335
    %337 = vmatmul.bf16.gmra.mxu0 %v256
    %v338 = vpop.f32.mrf.mxu0
    %v339 = vadd.f32 %v242, %v338
    %v340 = vpop.f32.mrf.mxu0
    %v341 = vadd.f32 %v242, %v340
    %342 = vmatmul.bf16.gmra.mxu0 %v259
    %v343 = vpop.f32.mrf.mxu0
    %v344 = vadd.f32 %v242, %v343
    %v345 = vpop.f32.mrf.mxu0
    %v346 = vadd.f32 %v242, %v345
    %347 = vdwg.mxu0
    %348 = vmatpush.bf16.msra.mxu0 0
    %349 = vmatpush.bf16.msra.mxu0 0
    %350 = vmatpush.bf16.msra.mxu0 0
    %351 = vmatpush.bf16.msra.mxu0 0
    %352 = vmatpush.bf16.msra.mxu0 %v237
    %353 = vmatpush.bf16.msra.mxu0 %v233
    %354 = vmatpush.bf16.msra.mxu0 %v229
    %355 = vmatpush.bf16.msra.mxu0 %v225
    %356 = vmatmul.bf16.gmra.mxu0 %v250
    %v357 = vpop.f32.mrf.mxu0
    %v358 = vadd.f32 %v243, %v357
    %v359 = vpop.f32.mrf.mxu0
    %v360 = vadd.f32 %v243, %v359
    %361 = vmatmul.bf16.gmra.mxu0 %v253
    %v362 = vpop.f32.mrf.mxu0
    %v363 = vadd.f32 %v243, %v362
    %v364 = vpop.f32.mrf.mxu0
    %v365 = vadd.f32 %v243, %v364
    %366 = vmatmul.bf16.gmra.mxu0 %v256
    %v367 = vpop.f32.mrf.mxu0
    %v368 = vadd.f32 %v243, %v367
    %v369 = vpop.f32.mrf.mxu0
    %v370 = vadd.f32 %v243, %v369
    %371 = vmatmul.bf16.gmra.mxu0 %v259
    %v372 = vpop.f32.mrf.mxu0
    %v373 = vadd.f32 %v243, %v372
    %v374 = vpop.f32.mrf.mxu0
    %v375 = vadd.f32 %v243, %v374
    %376 = vdwg.mxu0
    %377 = vst [vmem:[#allocation2] sm:$0xff] %v271
    %378 = vst [vmem:[#allocation2 + $0x8] sm:$0xff] %v300
    %379 = vst [vmem:[#allocation2 + $0x10] sm:$0xff] %v329
    %380 = vst [vmem:[#allocation2 + $0x18] sm:$0xff] %v358
    %381 = vst [vmem:[#allocation2 + $0x20] sm:$0xff] %v273
    %382 = vst [vmem:[#allocation2 + $0x28] sm:$0xff] %v302
    %383 = vst [vmem:[#allocation2 + $0x30] sm:$0xff] %v331
    %384 = vst [vmem:[#allocation2 + $0x38] sm:$0xff] %v360
    %385 = vst [vmem:[#allocation2 + $0x40] sm:$0xff] %v276
    %386 = vst [vmem:[#allocation2 + $0x48] sm:$0xff] %v305
    %387 = vst [vmem:[#allocation2 + $0x50] sm:$0xff] %v334
    %388 = vst [vmem:[#allocation2 + $0x58] sm:$0xff] %v363
    %389 = vst [vmem:[#allocation2 + $0x60] sm:$0xff] %v278
    %390 = vst [vmem:[#allocation2 + $0x68] sm:$0xff] %v307
    %391 = vst [vmem:[#allocation2 + $0x70] sm:$0xff] %v336
    %392 = vst [vmem:[#allocation2 + $0x78] sm:$0xff] %v365
    %393 = vst [vmem:[#allocation2 + $0x80] sm:$0xff] %v281
    %394 = vst [vmem:[#allocation2 + $0x88] sm:$0xff] %v310
    %395 = vst [vmem:[#allocation2 + $0x90] sm:$0xff] %v339
    %396 = vst [vmem:[#allocation2 + $0x98] sm:$0xff] %v368
    %397 = vst [vmem:[#allocation2 + $0xa0] sm:$0xff] %v283
    %398 = vst [vmem:[#allocation2 + $0xa8] sm:$0xff] %v312
    %399 = vst [vmem:[#allocation2 + $0xb0] sm:$0xff] %v341
    %400 = vst [vmem:[#allocation2 + $0xb8] sm:$0xff] %v370
    %401 = vst [vmem:[#allocation2 + $0xc0] sm:$0xff] %v286
    %402 = vst [vmem:[#allocation2 + $0xc8] sm:$0xff] %v315
    %403 = vst [vmem:[#allocation2 + $0xd0] sm:$0xff] %v344
    %404 = vst [vmem:[#allocation2 + $0xd8] sm:$0xff] %v373
    %405 = vst [vmem:[#allocation2 + $0xe0] sm:$0xff] %v288
    %406 = vst [vmem:[#allocation2 + $0xe8] sm:$0xff] %v317
    %407 = vst [vmem:[#allocation2 + $0xf0] sm:$0xff] %v346
    %408 = vst [vmem:[#allocation2 + $0xf8] sm:$0xff] %v375
    %v409 = vld [vmem:[#allocation2] sm:$0xff]
    %v410 = vld [vmem:[#allocation2 + $0x8] sm:$0xff]
    %v411 = vld [vmem:[#allocation2 + $0x10] sm:$0xff]
    %v412 = vld [vmem:[#allocation2 + $0x18] sm:$0xff]
    %v413 = vld [vmem:[#allocation6] sm:$0xff]
    %v414 = vld [vmem:[#allocation6 + $0x8] sm:$0xff]
    %v415 = vld [vmem:[#allocation6 + $0x10] sm:$0xff]
    %v416 = vld [vmem:[#allocation6 + $0x18] sm:$0xff]
    %v417 = vld [vmem:[#allocation6 + $0x20] sm:$0xff]
    %v418 = vld [vmem:[#allocation6 + $0x28] sm:$0xff]
    %v419 = vld [vmem:[#allocation6 + $0x30] sm:$0xff]
    %v420 = vld [vmem:[#allocation6 + $0x38] sm:$0xff]
    %v421 = vld [vmem:[#allocation6 + $0x40] sm:$0xff]
    %v422 = vld [vmem:[#allocation6 + $0x48] sm:$0xff]
    %v423 = vld [vmem:[#allocation6 + $0x50] sm:$0xff]
    %v424 = vld [vmem:[#allocation6 + $0x58] sm:$0xff]
    %v425 = vld [vmem:[#allocation6 + $0x60] sm:$0xff]
    %v426 = vld [vmem:[#allocation6 + $0x68] sm:$0xff]
    %v427 = vld [vmem:[#allocation6 + $0x70] sm:$0xff]
    %v428 = vld [vmem:[#allocation6 + $0x78] sm:$0xff]
    %v429 = vld [vmem:[#allocation6 + $0x80] sm:$0xff]
    %v430 = vld [vmem:[#allocation6 + $0x88] sm:$0xff]
    %v431 = vld [vmem:[#allocation6 + $0x90] sm:$0xff]
    %v432 = vld [vmem:[#allocation6 + $0x98] sm:$0xff]
    %v433 = vld [vmem:[#allocation6 + $0xa0] sm:$0xff]
    %v434 = vld [vmem:[#allocation6 + $0xa8] sm:$0xff]
    %v435 = vld [vmem:[#allocation6 + $0xb0] sm:$0xff]
    %v436 = vld [vmem:[#allocation6 + $0xb8] sm:$0xff]
    %v437 = vld [vmem:[#allocation6 + $0xc0] sm:$0xff]
    %v438 = vld [vmem:[#allocation6 + $0xc8] sm:$0xff]
    %v439 = vld [vmem:[#allocation6 + $0xd0] sm:$0xff]
    %v440 = vld [vmem:[#allocation6 + $0xd8] sm:$0xff]
    %v441 = vld [vmem:[#allocation6 + $0xe0] sm:$0xff]
    %v442 = vld [vmem:[#allocation6 + $0xe8] sm:$0xff]
    %v443 = vld [vmem:[#allocation6 + $0xf0] sm:$0xff]
    %v444 = vld [vmem:[#allocation6 + $0xf8] sm:$0xff]
    %v445 = vld [vmem:[#allocation6 + $0x100] sm:$0xff]
    %v446 = vld [vmem:[#allocation6 + $0x108] sm:$0xff]
    %v447 = vld [vmem:[#allocation6 + $0x110] sm:$0xff]
    %v448 = vld [vmem:[#allocation6 + $0x118] sm:$0xff]
    %v449 = vld [vmem:[#allocation6 + $0x120] sm:$0xff]
    %v450 = vld [vmem:[#allocation6 + $0x128] sm:$0xff]
    %v451 = vld [vmem:[#allocation6 + $0x130] sm:$0xff]
    %v452 = vld [vmem:[#allocation6 + $0x138] sm:$0xff]
    %v453 = vld [vmem:[#allocation6 + $0x140] sm:$0xff]
    %v454 = vld [vmem:[#allocation6 + $0x148] sm:$0xff]
    %v455 = vld [vmem:[#allocation6 + $0x150] sm:$0xff]
    %v456 = vld [vmem:[#allocation6 + $0x158] sm:$0xff]
    %v457 = vld [vmem:[#allocation6 + $0x160] sm:$0xff]
    %v458 = vld [vmem:[#allocation6 + $0x168] sm:$0xff]
    %v459 = vld [vmem:[#allocation6 + $0x170] sm:$0xff]
    %v460 = vld [vmem:[#allocation6 + $0x178] sm:$0xff]
    %v461 = vld [vmem:[#allocation6 + $0x180] sm:$0xff]
    %v462 = vld [vmem:[#allocation6 + $0x188] sm:$0xff]
    %v463 = vld [vmem:[#allocation6 + $0x190] sm:$0xff]
    %v464 = vld [vmem:[#allocation6 + $0x198] sm:$0xff]
    %v465 = vld [vmem:[#allocation6 + $0x1a0] sm:$0xff]
    %v466 = vld [vmem:[#allocation6 + $0x1a8] sm:$0xff]
    %v467 = vld [vmem:[#allocation6 + $0x1b0] sm:$0xff]
    %v468 = vld [vmem:[#allocation6 + $0x1b8] sm:$0xff]
    %v469 = vld [vmem:[#allocation6 + $0x1c0] sm:$0xff]
    %v470 = vld [vmem:[#allocation6 + $0x1c8] sm:$0xff]
    %v471 = vld [vmem:[#allocation6 + $0x1d0] sm:$0xff]
    %v472 = vld [vmem:[#allocation6 + $0x1d8] sm:$0xff]
    %v473 = vld [vmem:[#allocation6 + $0x1e0] sm:$0xff]
    %v474 = vld [vmem:[#allocation6 + $0x1e8] sm:$0xff]
    %v475 = vld [vmem:[#allocation6 + $0x1f0] sm:$0xff]
    %v476 = vld [vmem:[#allocation6 + $0x1f8] sm:$0xff]
    %477 = vmatpush.msra.mxu0 %v473
    %478 = vmatpush.msra.mxu0 %v469
    %479 = vmatpush.msra.mxu0 %v465
    %480 = vmatpush.msra.mxu0 %v461
    %481 = vmatpush.msra.mxu0 %v457
    %482 = vmatpush.msra.mxu0 %v453
    %483 = vmatpush.msra.mxu0 %v449
    %484 = vmatpush.msra.mxu0 %v445
    %485 = vmatpush.msra.mxu0 %v441
    %486 = vmatpush.msra.mxu0 %v437
    %487 = vmatpush.msra.mxu0 %v433
    %488 = vmatpush.msra.mxu0 %v429
    %489 = vmatpush.msra.mxu0 %v425
    %490 = vmatpush.msra.mxu0 %v421
    %491 = vmatpush.msra.mxu0 %v417
    %492 = vmatpush.msra.mxu0 %v413
    %493 = vmatmul.f32.gmra.mxu0 0.0
    %v494 = vpop.f32.mrf.mxu0
    %v495 = vadd.f32 0.0, %v494
    %496 = vdwg.mxu0
    %497 = vmatpush.msra.mxu0 %v474
    %498 = vmatpush.msra.mxu0 %v470
    %499 = vmatpush.msra.mxu0 %v466
    %500 = vmatpush.msra.mxu0 %v462
    %501 = vmatpush.msra.mxu0 %v458
    %502 = vmatpush.msra.mxu0 %v454
    %503 = vmatpush.msra.mxu0 %v450
    %504 = vmatpush.msra.mxu0 %v446
    %505 = vmatpush.msra.mxu0 %v442
    %506 = vmatpush.msra.mxu0 %v438
    %507 = vmatpush.msra.mxu0 %v434
    %508 = vmatpush.msra.mxu0 %v430
    %509 = vmatpush.msra.mxu0 %v426
    %510 = vmatpush.msra.mxu0 %v422
    %511 = vmatpush.msra.mxu0 %v418
    %512 = vmatpush.msra.mxu0 %v414
    %513 = vmatmul.f32.gmra.mxu0 0.0
    %v514 = vpop.f32.mrf.mxu0
    %v515 = vadd.f32 0.0, %v514
    %516 = vdwg.mxu0
    %517 = vmatpush.msra.mxu0 %v475
    %518 = vmatpush.msra.mxu0 %v471
    %519 = vmatpush.msra.mxu0 %v467
    %520 = vmatpush.msra.mxu0 %v463
    %521 = vmatpush.msra.mxu0 %v459
    %522 = vmatpush.msra.mxu0 %v455
    %523 = vmatpush.msra.mxu0 %v451
    %524 = vmatpush.msra.mxu0 %v447
    %525 = vmatpush.msra.mxu0 %v443
    %526 = vmatpush.msra.mxu0 %v439
    %527 = vmatpush.msra.mxu0 %v435
    %528 = vmatpush.msra.mxu0 %v431
    %529 = vmatpush.msra.mxu0 %v427
    %530 = vmatpush.msra.mxu0 %v423
    %531 = vmatpush.msra.mxu0 %v419
    %532 = vmatpush.msra.mxu0 %v415
    %533 = vmatmul.f32.gmra.mxu0 0.0
    %v534 = vpop.f32.mrf.mxu0
    %v535 = vadd.f32 0.0, %v534
    %536 = vdwg.mxu0
    %537 = vmatpush.msra.mxu0 %v476
    %538 = vmatpush.msra.mxu0 %v472
    %539 = vmatpush.msra.mxu0 %v468
    %540 = vmatpush.msra.mxu0 %v464
    %541 = vmatpush.msra.mxu0 %v460
    %542 = vmatpush.msra.mxu0 %v456
    %543 = vmatpush.msra.mxu0 %v452
    %544 = vmatpush.msra.mxu0 %v448
    %545 = vmatpush.msra.mxu0 %v444
    %546 = vmatpush.msra.mxu0 %v440
    %547 = vmatpush.msra.mxu0 %v436
    %548 = vmatpush.msra.mxu0 %v432
    %549 = vmatpush.msra.mxu0 %v428
    %550 = vmatpush.msra.mxu0 %v424
    %551 = vmatpush.msra.mxu0 %v420
    %552 = vmatpush.msra.mxu0 %v416
    %553 = vmatmul.f32.gmra.mxu0 0.0
    %v554 = vpop.f32.mrf.mxu0
    %v555 = vadd.f32 0.0, %v554
    %556 = vdwg.mxu0
    %v557 = vadd.f32 %v409, %v495
    %v558 = vadd.f32 %v410, %v515
    %v559 = vadd.f32 %v411, %v535
    %v560 = vadd.f32 %v412, %v555
    %v561 = vxor.u32 %v557, 2147483648
    %v562 = vmul.f32 %v561, 1.442695
    %v563 = vpow.pop %v562
    %v564 = vadd.f32 %v563, 1.0
    %v565 = vrcp.pop %v564
    %v566 = vmul.f32 %v564, %v565
    %v567 = vsub.f32 1.0, %v566
    %v568 = vmul.f32 %v565, %v567
    %v569 = vadd.f32 %v565, %v568
    %vm570 = vweird.f32 %v564
    %vm571 = vweird.f32 %v565
    %vm572 = vmor %vm570, %vm571
    %v573 = vsel %vm572, %v565, %v569
    %v574 = vand.u32 2147483647, %v564
    %vm575 = vcmp.eq.f32.partialorder %v574, 8.507059e+37
    %v576 = vand.u32 %v564, 2147483648
    %v577 = vor.u32 1.1754944e-38, %v576
    %v578 = vsel %vm575, %v577, %v573
    %v579 = vmul.f32 1.0, %v578
    %v580 = vxor.u32 %v558, 2147483648
    %v581 = vmul.f32 %v580, 1.442695
    %v582 = vpow.pop %v581
    %v583 = vadd.f32 %v582, 1.0
    %v584 = vrcp.pop %v583
    %v585 = vmul.f32 %v583, %v584
    %v586 = vsub.f32 1.0, %v585
    %v587 = vmul.f32 %v584, %v586
    %v588 = vadd.f32 %v584, %v587
    %vm589 = vweird.f32 %v583
    %vm590 = vweird.f32 %v584
    %vm591 = vmor %vm589, %vm590
    %v592 = vsel %vm591, %v584, %v588
    %v593 = vand.u32 2147483647, %v583
    %vm594 = vcmp.eq.f32.partialorder %v593, 8.507059e+37
    %v595 = vand.u32 %v583, 2147483648
    %v596 = vor.u32 1.1754944e-38, %v595
    %v597 = vsel %vm594, %v596, %v592
    %v598 = vmul.f32 1.0, %v597
    %v599 = vtanh.pop %v559
    %v600 = vxor.u32 %v560, 2147483648
    %v601 = vmul.f32 %v600, 1.442695
    %v602 = vpow.pop %v601
    %v603 = vadd.f32 %v602, 1.0
    %v604 = vrcp.pop %v603
    %v605 = vmul.f32 %v603, %v604
    %v606 = vsub.f32 1.0, %v605
    %v607 = vmul.f32 %v604, %v606
    %v608 = vadd.f32 %v604, %v607
    %vm609 = vweird.f32 %v603
    %vm610 = vweird.f32 %v604
    %vm611 = vmor %vm609, %vm610
    %v612 = vsel %vm611, %v604, %v608
    %v613 = vand.u32 2147483647, %v603
    %vm614 = vcmp.eq.f32.partialorder %v613, 8.507059e+37
    %v615 = vand.u32 %v603, 2147483648
    %v616 = vor.u32 1.1754944e-38, %v615
    %v617 = vsel %vm614, %v616, %v612
    %v618 = vmul.f32 1.0, %v617
    %v619 = vmul.f32 %v598, 0.0
    %v620 = vmul.f32 %v579, %v599
    %v621 = vadd.f32 %v619, %v620
    %v622 = vtanh.pop %v621
    %v623 = vmul.f32 %v618, %v622
    %s624 = scalar_lea.vmem [#allocation2], 32
    %v625 = vld [vmem:[%s624] sm:$0xff]
    %v626 = vld [vmem:[%s624 + $0x8] sm:$0xff]
    %v627 = vld [vmem:[%s624 + $0x10] sm:$0xff]
    %v628 = vld [vmem:[%s624 + $0x18] sm:$0xff]
    %629 = vmatpush.msra.mxu0 %v473
    %630 = vmatpush.msra.mxu0 %v469
    %631 = vmatpush.msra.mxu0 %v465
    %632 = vmatpush.msra.mxu0 %v461
    %633 = vmatpush.msra.mxu0 %v457
    %634 = vmatpush.msra.mxu0 %v453
    %635 = vmatpush.msra.mxu0 %v449
    %636 = vmatpush.msra.mxu0 %v445
    %637 = vmatpush.msra.mxu0 %v441
    %638 = vmatpush.msra.mxu0 %v437
    %639 = vmatpush.msra.mxu0 %v433
    %640 = vmatpush.msra.mxu0 %v429
    %641 = vmatpush.msra.mxu0 %v425
    %642 = vmatpush.msra.mxu0 %v421
    %643 = vmatpush.msra.mxu0 %v417
    %644 = vmatpush.msra.mxu0 %v413
    %645 = vmatmul.f32.gmra.mxu0 %v623
    %v646 = vpop.f32.mrf.mxu0
    %v647 = vadd.f32 0.0, %v646
    %648 = vdwg.mxu0
    %649 = vmatpush.msra.mxu0 %v474
    %650 = vmatpush.msra.mxu0 %v470
    %651 = vmatpush.msra.mxu0 %v466
    %652 = vmatpush.msra.mxu0 %v462
    %653 = vmatpush.msra.mxu0 %v458
    %654 = vmatpush.msra.mxu0 %v454
    %655 = vmatpush.msra.mxu0 %v450
    %656 = vmatpush.msra.mxu0 %v446
    %657 = vmatpush.msra.mxu0 %v442
    %658 = vmatpush.msra.mxu0 %v438
    %659 = vmatpush.msra.mxu0 %v434
    %660 = vmatpush.msra.mxu0 %v430
    %661 = vmatpush.msra.mxu0 %v426
    %662 = vmatpush.msra.mxu0 %v422
    %663 = vmatpush.msra.mxu0 %v418
    %664 = vmatpush.msra.mxu0 %v414
    %665 = vmatmul.f32.gmra.mxu0 %v623
    %v666 = vpop.f32.mrf.mxu0
    %v667 = vadd.f32 0.0, %v666
    %668 = vdwg.mxu0
    %669 = vmatpush.msra.mxu0 %v475
    %670 = vmatpush.msra.mxu0 %v471
    %671 = vmatpush.msra.mxu0 %v467
    %672 = vmatpush.msra.mxu0 %v463
    %673 = vmatpush.msra.mxu0 %v459
    %674 = vmatpush.msra.mxu0 %v455
    %675 = vmatpush.msra.mxu0 %v451
    %676 = vmatpush.msra.mxu0 %v447
    %677 = vmatpush.msra.mxu0 %v443
    %678 = vmatpush.msra.mxu0 %v439
    %679 = vmatpush.msra.mxu0 %v435
    %680 = vmatpush.msra.mxu0 %v431
    %681 = vmatpush.msra.mxu0 %v427
    %682 = vmatpush.msra.mxu0 %v423
    %683 = vmatpush.msra.mxu0 %v419
    %684 = vmatpush.msra.mxu0 %v415
    %685 = vmatmul.f32.gmra.mxu0 %v623
    %v686 = vpop.f32.mrf.mxu0
    %v687 = vadd.f32 0.0, %v686
    %688 = vdwg.mxu0
    %689 = vmatpush.msra.mxu0 %v476
    %690 = vmatpush.msra.mxu0 %v472
    %691 = vmatpush.msra.mxu0 %v468
    %692 = vmatpush.msra.mxu0 %v464
    %693 = vmatpush.msra.mxu0 %v460
    %694 = vmatpush.msra.mxu0 %v456
    %695 = vmatpush.msra.mxu0 %v452
    %696 = vmatpush.msra.mxu0 %v448
    %697 = vmatpush.msra.mxu0 %v444
    %698 = vmatpush.msra.mxu0 %v440
    %699 = vmatpush.msra.mxu0 %v436
    %700 = vmatpush.msra.mxu0 %v432
    %701 = vmatpush.msra.mxu0 %v428
    %702 = vmatpush.msra.mxu0 %v424
    %703 = vmatpush.msra.mxu0 %v420
    %704 = vmatpush.msra.mxu0 %v416
    %705 = vmatmul.f32.gmra.mxu0 %v623
    %v706 = vpop.f32.mrf.mxu0
    %v707 = vadd.f32 0.0, %v706
    %708 = vdwg.mxu0
    %v709 = vadd.f32 %v625, %v647
    %v710 = vadd.f32 %v626, %v667
    %v711 = vadd.f32 %v627, %v687
    %v712 = vadd.f32 %v628, %v707
    %v713 = vxor.u32 %v709, 2147483648
    %v714 = vmul.f32 %v713, 1.442695
    %v715 = vpow.pop %v714
    %v716 = vadd.f32 %v715, 1.0
    %v717 = vrcp.pop %v716
    %v718 = vmul.f32 %v716, %v717
    %v719 = vsub.f32 1.0, %v718
    %v720 = vmul.f32 %v717, %v719
    %v721 = vadd.f32 %v717, %v720
    %vm722 = vweird.f32 %v716
    %vm723 = vweird.f32 %v717
    %vm724 = vmor %vm722, %vm723
    %v725 = vsel %vm724, %v717, %v721
    %v726 = vand.u32 2147483647, %v716
    %vm727 = vcmp.eq.f32.partialorder %v726, 8.507059e+37
    %v728 = vand.u32 %v716, 2147483648
    %v729 = vor.u32 1.1754944e-38, %v728
    %v730 = vsel %vm727, %v729, %v725
    %v731 = vmul.f32 1.0, %v730
    %v732 = vxor.u32 %v710, 2147483648
    %v733 = vmul.f32 %v732, 1.442695
    %v734 = vpow.pop %v733
    %v735 = vadd.f32 %v734, 1.0
    %v736 = vrcp.pop %v735
    %v737 = vmul.f32 %v735, %v736
    %v738 = vsub.f32 1.0, %v737
    %v739 = vmul.f32 %v736, %v738
    %v740 = vadd.f32 %v736, %v739
    %vm741 = vweird.f32 %v735
    %vm742 = vweird.f32 %v736
    %vm743 = vmor %vm741, %vm742
    %v744 = vsel %vm743, %v736, %v740
    %v745 = vand.u32 2147483647, %v735
    %vm746 = vcmp.eq.f32.partialorder %v745, 8.507059e+37
    %v747 = vand.u32 %v735, 2147483648
    %v748 = vor.u32 1.1754944e-38, %v747
    %v749 = vsel %vm746, %v748, %v744
    %v750 = vmul.f32 1.0, %v749
    %v751 = vtanh.pop %v711
    %v752 = vxor.u32 %v712, 2147483648
    %v753 = vmul.f32 %v752, 1.442695
    %v754 = vpow.pop %v753
    %v755 = vadd.f32 %v754, 1.0
    %v756 = vrcp.pop %v755
    %v757 = vmul.f32 %v755, %v756
    %v758 = vsub.f32 1.0, %v757
    %v759 = vmul.f32 %v756, %v758
    %v760 = vadd.f32 %v756, %v759
    %vm761 = vweird.f32 %v755
    %vm762 = vweird.f32 %v756
    %vm763 = vmor %vm761, %vm762
    %v764 = vsel %vm763, %v756, %v760
    %v765 = vand.u32 2147483647, %v755
    %vm766 = vcmp.eq.f32.partialorder %v765, 8.507059e+37
    %v767 = vand.u32 %v755, 2147483648
    %v768 = vor.u32 1.1754944e-38, %v767
    %v769 = vsel %vm766, %v768, %v764
    %v770 = vmul.f32 1.0, %v769
    %v771 = vmul.f32 %v750, %v621
    %v772 = vmul.f32 %v731, %v751
    %v773 = vadd.f32 %v771, %v772
    %v774 = vtanh.pop %v773
    %v775 = vmul.f32 %v770, %v774
    %v776 = vld [vmem:[#allocation8] sm:$0xff]
    %v777 = vld [vmem:[#allocation8 + $0x8] sm:$0xff]
    %v778 = vld [vmem:[#allocation8 + $0x10] sm:$0xff]
    %v779 = vld [vmem:[#allocation8 + $0x18] sm:$0xff]
    %v780 = vld [vmem:[#allocation8 + $0x20] sm:$0xff]
    %v781 = vld [vmem:[#allocation8 + $0x28] sm:$0xff]
    %v782 = vld [vmem:[#allocation8 + $0x30] sm:$0xff]
    %v783 = vld [vmem:[#allocation8 + $0x38] sm:$0xff]
    %v784 = vld [vmem:[#allocation8 + $0x40] sm:$0xff]
    %v785 = vld [vmem:[#allocation8 + $0x48] sm:$0xff]
    %v786 = vld [vmem:[#allocation8 + $0x50] sm:$0xff]
    %v787 = vld [vmem:[#allocation8 + $0x58] sm:$0xff]
    %v788 = vld [vmem:[#allocation8 + $0x60] sm:$0xff]
    %v789 = vld [vmem:[#allocation8 + $0x68] sm:$0xff]
    %v790 = vld [vmem:[#allocation8 + $0x70] sm:$0xff]
    %v791 = vld [vmem:[#allocation8 + $0x78] sm:$0xff]
    %v792 = vld [vmem:[#allocation8 + $0x80] sm:$0xff]
    %v793 = vld [vmem:[#allocation8 + $0x88] sm:$0xff]
    %v794 = vld [vmem:[#allocation8 + $0x90] sm:$0xff]
    %v795 = vld [vmem:[#allocation8 + $0x98] sm:$0xff]
    %v796 = vld [vmem:[#allocation8 + $0xa0] sm:$0xff]
    %v797 = vld [vmem:[#allocation8 + $0xa8] sm:$0xff]
    %v798 = vld [vmem:[#allocation8 + $0xb0] sm:$0xff]
    %v799 = vld [vmem:[#allocation8 + $0xb8] sm:$0xff]
    %v800 = vld [vmem:[#allocation8 + $0xc0] sm:$0xff]
    %v801 = vld [vmem:[#allocation8 + $0xc8] sm:$0xff]
    %v802 = vld [vmem:[#allocation8 + $0xd0] sm:$0xff]
    %v803 = vld [vmem:[#allocation8 + $0xd8] sm:$0xff]
    %v804 = vld [vmem:[#allocation8 + $0xe0] sm:$0xff]
    %v805 = vld [vmem:[#allocation8 + $0xe8] sm:$0xff]
    %v806 = vld [vmem:[#allocation8 + $0xf0] sm:$0xff]
    %v807 = vld [vmem:[#allocation8 + $0xf8] sm:$0xff]
    %v808 = vld [vmem:[#allocation8 + $0x100] sm:$0xff]
    %v809 = vld [vmem:[#allocation8 + $0x108] sm:$0xff]
    %v810 = vld [vmem:[#allocation8 + $0x110] sm:$0xff]
    %v811 = vld [vmem:[#allocation8 + $0x118] sm:$0xff]
    %v812 = vld [vmem:[#allocation8 + $0x120] sm:$0xff]
    %v813 = vld [vmem:[#allocation8 + $0x128] sm:$0xff]
    %v814 = vld [vmem:[#allocation8 + $0x130] sm:$0xff]
    %v815 = vld [vmem:[#allocation8 + $0x138] sm:$0xff]
    %v816 = vld [vmem:[#allocation8 + $0x140] sm:$0xff]
    %v817 = vld [vmem:[#allocation8 + $0x148] sm:$0xff]
    %v818 = vld [vmem:[#allocation8 + $0x150] sm:$0xff]
    %v819 = vld [vmem:[#allocation8 + $0x158] sm:$0xff]
    %v820 = vld [vmem:[#allocation8 + $0x160] sm:$0xff]
    %v821 = vld [vmem:[#allocation8 + $0x168] sm:$0xff]
    %v822 = vld [vmem:[#allocation8 + $0x170] sm:$0xff]
    %v823 = vld [vmem:[#allocation8 + $0x178] sm:$0xff]
    %v824 = vld [vmem:[#allocation8 + $0x180] sm:$0xff]
    %v825 = vld [vmem:[#allocation8 + $0x188] sm:$0xff]
    %v826 = vld [vmem:[#allocation8 + $0x190] sm:$0xff]
    %v827 = vld [vmem:[#allocation8 + $0x198] sm:$0xff]
    %v828 = vld [vmem:[#allocation8 + $0x1a0] sm:$0xff]
    %v829 = vld [vmem:[#allocation8 + $0x1a8] sm:$0xff]
    %v830 = vld [vmem:[#allocation8 + $0x1b0] sm:$0xff]
    %v831 = vld [vmem:[#allocation8 + $0x1b8] sm:$0xff]
    %v832 = vld [vmem:[#allocation8 + $0x1c0] sm:$0xff]
    %v833 = vld [vmem:[#allocation8 + $0x1c8] sm:$0xff]
    %v834 = vld [vmem:[#allocation8 + $0x1d0] sm:$0xff]
    %v835 = vld [vmem:[#allocation8 + $0x1d8] sm:$0xff]
    %v836 = vld [vmem:[#allocation8 + $0x1e0] sm:$0xff]
    %v837 = vld [vmem:[#allocation8 + $0x1e8] sm:$0xff]
    %v838 = vld [vmem:[#allocation8 + $0x1f0] sm:$0xff]
    %v839 = vld [vmem:[#allocation8 + $0x1f8] sm:$0xff]
    %v840 = vld [vmem:[%s6] sm:$0xf]
    %v842 = vperm.slane %v840, 0
    %v843 = vperm.slane %v840, 1
    %v844 = vperm.slane %v840, 2
    %v845 = vperm.slane %v840, 3
    %850 = vmatpush.msra.mxu0 %v836
    %851 = vmatpush.msra.mxu0 %v832
    %852 = vmatpush.msra.mxu0 %v828
    %853 = vmatpush.msra.mxu0 %v824
    %854 = vmatpush.msra.mxu0 %v820
    %855 = vmatpush.msra.mxu0 %v816
    %856 = vmatpush.msra.mxu0 %v812
    %857 = vmatpush.msra.mxu0 %v808
    %858 = vmatpush.msra.mxu0 %v804
    %859 = vmatpush.msra.mxu0 %v800
    %860 = vmatpush.msra.mxu0 %v796
    %861 = vmatpush.msra.mxu0 %v792
    %862 = vmatpush.msra.mxu0 %v788
    %863 = vmatpush.msra.mxu0 %v784
    %864 = vmatpush.msra.mxu0 %v780
    %865 = vmatpush.msra.mxu0 %v776
    %866 = vmatmul.f32.gmra.mxu0 %v623
    %v867 = vpop.f32.mrf.mxu0
    %v868 = vadd.f32 %v842, %v867
    %869 = vdwg.mxu0
    %870 = vmatpush.msra.mxu0 %v837
    %871 = vmatpush.msra.mxu0 %v833
    %872 = vmatpush.msra.mxu0 %v829
    %873 = vmatpush.msra.mxu0 %v825
    %874 = vmatpush.msra.mxu0 %v821
    %875 = vmatpush.msra.mxu0 %v817
    %876 = vmatpush.msra.mxu0 %v813
    %877 = vmatpush.msra.mxu0 %v809
    %878 = vmatpush.msra.mxu0 %v805
    %879 = vmatpush.msra.mxu0 %v801
    %880 = vmatpush.msra.mxu0 %v797
    %881 = vmatpush.msra.mxu0 %v793
    %882 = vmatpush.msra.mxu0 %v789
    %883 = vmatpush.msra.mxu0 %v785
    %884 = vmatpush.msra.mxu0 %v781
    %885 = vmatpush.msra.mxu0 %v777
    %886 = vmatmul.f32.gmra.mxu0 %v623
    %v887 = vpop.f32.mrf.mxu0
    %v888 = vadd.f32 %v843, %v887
    %889 = vdwg.mxu0
    %890 = vmatpush.msra.mxu0 %v838
    %891 = vmatpush.msra.mxu0 %v834
    %892 = vmatpush.msra.mxu0 %v830
    %893 = vmatpush.msra.mxu0 %v826
    %894 = vmatpush.msra.mxu0 %v822
    %895 = vmatpush.msra.mxu0 %v818
    %896 = vmatpush.msra.mxu0 %v814
    %897 = vmatpush.msra.mxu0 %v810
    %898 = vmatpush.msra.mxu0 %v806
    %899 = vmatpush.msra.mxu0 %v802
    %900 = vmatpush.msra.mxu0 %v798
    %901 = vmatpush.msra.mxu0 %v794
    %902 = vmatpush.msra.mxu0 %v790
    %903 = vmatpush.msra.mxu0 %v786
    %904 = vmatpush.msra.mxu0 %v782
    %905 = vmatpush.msra.mxu0 %v778
    %906 = vmatmul.f32.gmra.mxu0 %v623
    %v907 = vpop.f32.mrf.mxu0
    %v908 = vadd.f32 %v844, %v907
    %909 = vdwg.mxu0
    %910 = vmatpush.msra.mxu0 %v839
    %911 = vmatpush.msra.mxu0 %v835
    %912 = vmatpush.msra.mxu0 %v831
    %913 = vmatpush.msra.mxu0 %v827
    %914 = vmatpush.msra.mxu0 %v823
    %915 = vmatpush.msra.mxu0 %v819
    %916 = vmatpush.msra.mxu0 %v815
    %917 = vmatpush.msra.mxu0 %v811
    %918 = vmatpush.msra.mxu0 %v807
    %919 = vmatpush.msra.mxu0 %v803
    %920 = vmatpush.msra.mxu0 %v799
    %921 = vmatpush.msra.mxu0 %v795
    %922 = vmatpush.msra.mxu0 %v791
    %923 = vmatpush.msra.mxu0 %v787
    %924 = vmatpush.msra.mxu0 %v783
    %925 = vmatpush.msra.mxu0 %v779
    %926 = vmatmul.f32.gmra.mxu0 %v623
    %v927 = vpop.f32.mrf.mxu0
    %v928 = vadd.f32 %v845, %v927
    %929 = vdwg.mxu0
    %v930 = vld [vmem:[#allocation9] sm:$0xff]
    %v931 = vld [vmem:[#allocation9 + $0x8] sm:$0xff]
    %v932 = vld [vmem:[#allocation9 + $0x10] sm:$0xff]
    %v933 = vld [vmem:[#allocation9 + $0x18] sm:$0xff]
    %v934 = vld [vmem:[#allocation9 + $0x20] sm:$0xff]
    %v935 = vld [vmem:[#allocation9 + $0x28] sm:$0xff]
    %v936 = vld [vmem:[#allocation9 + $0x30] sm:$0xff]
    %v937 = vld [vmem:[#allocation9 + $0x38] sm:$0xff]
    %v938 = vld [vmem:[#allocation9 + $0x40] sm:$0xff]
    %v939 = vld [vmem:[#allocation9 + $0x48] sm:$0xff]
    %v940 = vld [vmem:[#allocation9 + $0x50] sm:$0xff]
    %v941 = vld [vmem:[#allocation9 + $0x58] sm:$0xff]
    %v942 = vld [vmem:[#allocation9 + $0x60] sm:$0xff]
    %v943 = vld [vmem:[#allocation9 + $0x68] sm:$0xff]
    %v944 = vld [vmem:[#allocation9 + $0x70] sm:$0xff]
    %v945 = vld [vmem:[#allocation9 + $0x78] sm:$0xff]
    %v946 = vld [vmem:[#allocation9 + $0x80] sm:$0xff]
    %v947 = vld [vmem:[#allocation9 + $0x88] sm:$0xff]
    %v948 = vld [vmem:[#allocation9 + $0x90] sm:$0xff]
    %v949 = vld [vmem:[#allocation9 + $0x98] sm:$0xff]
    %v950 = vld [vmem:[#allocation9 + $0xa0] sm:$0xff]
    %v951 = vld [vmem:[#allocation9 + $0xa8] sm:$0xff]
    %v952 = vld [vmem:[#allocation9 + $0xb0] sm:$0xff]
    %v953 = vld [vmem:[#allocation9 + $0xb8] sm:$0xff]
    %v954 = vld [vmem:[#allocation9 + $0xc0] sm:$0xff]
    %v955 = vld [vmem:[#allocation9 + $0xc8] sm:$0xff]
    %v956 = vld [vmem:[#allocation9 + $0xd0] sm:$0xff]
    %v957 = vld [vmem:[#allocation9 + $0xd8] sm:$0xff]
    %v958 = vld [vmem:[#allocation9 + $0xe0] sm:$0xff]
    %v959 = vld [vmem:[#allocation9 + $0xe8] sm:$0xff]
    %v960 = vld [vmem:[#allocation9 + $0xf0] sm:$0xff]
    %v961 = vld [vmem:[#allocation9 + $0xf8] sm:$0xff]
    %v962 = vld [vmem:[#allocation9 + $0x100] sm:$0xff]
    %v963 = vld [vmem:[#allocation9 + $0x108] sm:$0xff]
    %v964 = vld [vmem:[#allocation9 + $0x110] sm:$0xff]
    %v965 = vld [vmem:[#allocation9 + $0x118] sm:$0xff]
    %v966 = vld [vmem:[#allocation9 + $0x120] sm:$0xff]
    %v967 = vld [vmem:[#allocation9 + $0x128] sm:$0xff]
    %v968 = vld [vmem:[#allocation9 + $0x130] sm:$0xff]
    %v969 = vld [vmem:[#allocation9 + $0x138] sm:$0xff]
    %v970 = vld [vmem:[#allocation9 + $0x140] sm:$0xff]
    %v971 = vld [vmem:[#allocation9 + $0x148] sm:$0xff]
    %v972 = vld [vmem:[#allocation9 + $0x150] sm:$0xff]
    %v973 = vld [vmem:[#allocation9 + $0x158] sm:$0xff]
    %v974 = vld [vmem:[#allocation9 + $0x160] sm:$0xff]
    %v975 = vld [vmem:[#allocation9 + $0x168] sm:$0xff]
    %v976 = vld [vmem:[#allocation9 + $0x170] sm:$0xff]
    %v977 = vld [vmem:[#allocation9 + $0x178] sm:$0xff]
    %v978 = vld [vmem:[#allocation9 + $0x180] sm:$0xff]
    %v979 = vld [vmem:[#allocation9 + $0x188] sm:$0xff]
    %v980 = vld [vmem:[#allocation9 + $0x190] sm:$0xff]
    %v981 = vld [vmem:[#allocation9 + $0x198] sm:$0xff]
    %v982 = vld [vmem:[#allocation9 + $0x1a0] sm:$0xff]
    %v983 = vld [vmem:[#allocation9 + $0x1a8] sm:$0xff]
    %v984 = vld [vmem:[#allocation9 + $0x1b0] sm:$0xff]
    %v985 = vld [vmem:[#allocation9 + $0x1b8] sm:$0xff]
    %v986 = vld [vmem:[#allocation9 + $0x1c0] sm:$0xff]
    %v987 = vld [vmem:[#allocation9 + $0x1c8] sm:$0xff]
    %v988 = vld [vmem:[#allocation9 + $0x1d0] sm:$0xff]
    %v989 = vld [vmem:[#allocation9 + $0x1d8] sm:$0xff]
    %v990 = vld [vmem:[#allocation9 + $0x1e0] sm:$0xff]
    %v991 = vld [vmem:[#allocation9 + $0x1e8] sm:$0xff]
    %v992 = vld [vmem:[#allocation9 + $0x1f0] sm:$0xff]
    %v993 = vld [vmem:[#allocation9 + $0x1f8] sm:$0xff]
    %994 = vmatpush.msra.mxu0 %v990
    %995 = vmatpush.msra.mxu0 %v986
    %996 = vmatpush.msra.mxu0 %v982
    %997 = vmatpush.msra.mxu0 %v978
    %998 = vmatpush.msra.mxu0 %v974
    %999 = vmatpush.msra.mxu0 %v970
    %1000 = vmatpush.msra.mxu0 %v966
    %1001 = vmatpush.msra.mxu0 %v962
    %1002 = vmatpush.msra.mxu0 %v958
    %1003 = vmatpush.msra.mxu0 %v954
    %1004 = vmatpush.msra.mxu0 %v950
    %1005 = vmatpush.msra.mxu0 %v946
    %1006 = vmatpush.msra.mxu0 %v942
    %1007 = vmatpush.msra.mxu0 %v938
    %1008 = vmatpush.msra.mxu0 %v934
    %1009 = vmatpush.msra.mxu0 %v930
    %1010 = vmatmul.f32.gmra.mxu0 0.0
    %v1011 = vpop.f32.mrf.mxu0
    %v1012 = vadd.f32 0.0, %v1011
    %1013 = vdwg.mxu0
    %1014 = vmatpush.msra.mxu0 %v991
    %1015 = vmatpush.msra.mxu0 %v987
    %1016 = vmatpush.msra.mxu0 %v983
    %1017 = vmatpush.msra.mxu0 %v979
    %1018 = vmatpush.msra.mxu0 %v975
    %1019 = vmatpush.msra.mxu0 %v971
    %1020 = vmatpush.msra.mxu0 %v967
    %1021 = vmatpush.msra.mxu0 %v963
    %1022 = vmatpush.msra.mxu0 %v959
    %1023 = vmatpush.msra.mxu0 %v955
    %1024 = vmatpush.msra.mxu0 %v951
    %1025 = vmatpush.msra.mxu0 %v947
    %1026 = vmatpush.msra.mxu0 %v943
    %1027 = vmatpush.msra.mxu0 %v939
    %1028 = vmatpush.msra.mxu0 %v935
    %1029 = vmatpush.msra.mxu0 %v931
    %1030 = vmatmul.f32.gmra.mxu0 0.0
    %v1031 = vpop.f32.mrf.mxu0
    %v1032 = vadd.f32 0.0, %v1031
    %1033 = vdwg.mxu0
    %1034 = vmatpush.msra.mxu0 %v992
    %1035 = vmatpush.msra.mxu0 %v988
    %1036 = vmatpush.msra.mxu0 %v984
    %1037 = vmatpush.msra.mxu0 %v980
    %1038 = vmatpush.msra.mxu0 %v976
    %1039 = vmatpush.msra.mxu0 %v972
    %1040 = vmatpush.msra.mxu0 %v968
    %1041 = vmatpush.msra.mxu0 %v964
    %1042 = vmatpush.msra.mxu0 %v960
    %1043 = vmatpush.msra.mxu0 %v956
    %1044 = vmatpush.msra.mxu0 %v952
    %1045 = vmatpush.msra.mxu0 %v948
    %1046 = vmatpush.msra.mxu0 %v944
    %1047 = vmatpush.msra.mxu0 %v940
    %1048 = vmatpush.msra.mxu0 %v936
    %1049 = vmatpush.msra.mxu0 %v932
    %1050 = vmatmul.f32.gmra.mxu0 0.0
    %v1051 = vpop.f32.mrf.mxu0
    %v1052 = vadd.f32 0.0, %v1051
    %1053 = vdwg.mxu0
    %1054 = vmatpush.msra.mxu0 %v993
    %1055 = vmatpush.msra.mxu0 %v989
    %1056 = vmatpush.msra.mxu0 %v985
    %1057 = vmatpush.msra.mxu0 %v981
    %1058 = vmatpush.msra.mxu0 %v977
    %1059 = vmatpush.msra.mxu0 %v973
    %1060 = vmatpush.msra.mxu0 %v969
    %1061 = vmatpush.msra.mxu0 %v965
    %1062 = vmatpush.msra.mxu0 %v961
    %1063 = vmatpush.msra.mxu0 %v957
    %1064 = vmatpush.msra.mxu0 %v953
    %1065 = vmatpush.msra.mxu0 %v949
    %1066 = vmatpush.msra.mxu0 %v945
    %1067 = vmatpush.msra.mxu0 %v941
    %1068 = vmatpush.msra.mxu0 %v937
    %1069 = vmatpush.msra.mxu0 %v933
    %1070 = vmatmul.f32.gmra.mxu0 0.0
    %v1071 = vpop.f32.mrf.mxu0
    %v1072 = vadd.f32 0.0, %v1071
    %1073 = vdwg.mxu0
    %v1074 = vadd.f32 %v868, %v1012
    %v1075 = vadd.f32 %v888, %v1032
    %v1076 = vadd.f32 %v908, %v1052
    %v1077 = vadd.f32 %v928, %v1072
    %v1078 = vxor.u32 %v1074, 2147483648
    %v1079 = vmul.f32 %v1078, 1.442695
    %v1080 = vpow.pop %v1079
    %v1081 = vadd.f32 %v1080, 1.0
    %v1082 = vrcp.pop %v1081
    %v1083 = vmul.f32 %v1081, %v1082
    %v1084 = vsub.f32 1.0, %v1083
    %v1085 = vmul.f32 %v1082, %v1084
    %v1086 = vadd.f32 %v1082, %v1085
    %vm1087 = vweird.f32 %v1081
    %vm1088 = vweird.f32 %v1082
    %vm1089 = vmor %vm1087, %vm1088
    %v1090 = vsel %vm1089, %v1082, %v1086
    %v1091 = vand.u32 2147483647, %v1081
    %vm1092 = vcmp.eq.f32.partialorder %v1091, 8.507059e+37
    %v1093 = vand.u32 %v1081, 2147483648
    %v1094 = vor.u32 1.1754944e-38, %v1093
    %v1095 = vsel %vm1092, %v1094, %v1090
    %v1096 = vmul.f32 1.0, %v1095
    %v1097 = vxor.u32 %v1075, 2147483648
    %v1098 = vmul.f32 %v1097, 1.442695
    %v1099 = vpow.pop %v1098
    %v1100 = vadd.f32 %v1099, 1.0
    %v1101 = vrcp.pop %v1100
    %v1102 = vmul.f32 %v1100, %v1101
    %v1103 = vsub.f32 1.0, %v1102
    %v1104 = vmul.f32 %v1101, %v1103
    %v1105 = vadd.f32 %v1101, %v1104
    %vm1106 = vweird.f32 %v1100
    %vm1107 = vweird.f32 %v1101
    %vm1108 = vmor %vm1106, %vm1107
    %v1109 = vsel %vm1108, %v1101, %v1105
    %v1110 = vand.u32 2147483647, %v1100
    %vm1111 = vcmp.eq.f32.partialorder %v1110, 8.507059e+37
    %v1112 = vand.u32 %v1100, 2147483648
    %v1113 = vor.u32 1.1754944e-38, %v1112
    %v1114 = vsel %vm1111, %v1113, %v1109
    %v1115 = vmul.f32 1.0, %v1114
    %v1116 = vtanh.pop %v1076
    %v1117 = vxor.u32 %v1077, 2147483648
    %v1118 = vmul.f32 %v1117, 1.442695
    %v1119 = vpow.pop %v1118
    %v1120 = vadd.f32 %v1119, 1.0
    %v1121 = vrcp.pop %v1120
    %v1122 = vmul.f32 %v1120, %v1121
    %v1123 = vsub.f32 1.0, %v1122
    %v1124 = vmul.f32 %v1121, %v1123
    %v1125 = vadd.f32 %v1121, %v1124
    %vm1126 = vweird.f32 %v1120
    %vm1127 = vweird.f32 %v1121
    %vm1128 = vmor %vm1126, %vm1127
    %v1129 = vsel %vm1128, %v1121, %v1125
    %v1130 = vand.u32 2147483647, %v1120
    %vm1131 = vcmp.eq.f32.partialorder %v1130, 8.507059e+37
    %v1132 = vand.u32 %v1120, 2147483648
    %v1133 = vor.u32 1.1754944e-38, %v1132
    %v1134 = vsel %vm1131, %v1133, %v1129
    %v1135 = vmul.f32 1.0, %v1134
    %v1136 = vmul.f32 %v1115, 0.0
    %v1137 = vmul.f32 %v1096, %v1116
    %v1138 = vadd.f32 %v1136, %v1137
    %v1139 = vtanh.pop %v1138
    %v1140 = vmul.f32 %v1135, %v1139
    %s1141 = scalar_lea.vmem [#allocation2], 64
    %v1142 = vld [vmem:[%s1141] sm:$0xff]
    %v1143 = vld [vmem:[%s1141 + $0x8] sm:$0xff]
    %v1144 = vld [vmem:[%s1141 + $0x10] sm:$0xff]
    %v1145 = vld [vmem:[%s1141 + $0x18] sm:$0xff]
    %1146 = vmatpush.msra.mxu0 %v473
    %1147 = vmatpush.msra.mxu0 %v469
    %1148 = vmatpush.msra.mxu0 %v465
    %1149 = vmatpush.msra.mxu0 %v461
    %1150 = vmatpush.msra.mxu0 %v457
    %1151 = vmatpush.msra.mxu0 %v453
    %1152 = vmatpush.msra.mxu0 %v449
    %1153 = vmatpush.msra.mxu0 %v445
    %1154 = vmatpush.msra.mxu0 %v441
    %1155 = vmatpush.msra.mxu0 %v437
    %1156 = vmatpush.msra.mxu0 %v433
    %1157 = vmatpush.msra.mxu0 %v429
    %1158 = vmatpush.msra.mxu0 %v425
    %1159 = vmatpush.msra.mxu0 %v421
    %1160 = vmatpush.msra.mxu0 %v417
    %1161 = vmatpush.msra.mxu0 %v413
    %1162 = vmatmul.f32.gmra.mxu0 %v775
    %v1163 = vpop.f32.mrf.mxu0
    %v1164 = vadd.f32 0.0, %v1163
    %1165 = vdwg.mxu0
    %1166 = vmatpush.msra.mxu0 %v474
    %1167 = vmatpush.msra.mxu0 %v470
    %1168 = vmatpush.msra.mxu0 %v466
    %1169 = vmatpush.msra.mxu0 %v462
    %1170 = vmatpush.msra.mxu0 %v458
    %1171 = vmatpush.msra.mxu0 %v454
    %1172 = vmatpush.msra.mxu0 %v450
    %1173 = vmatpush.msra.mxu0 %v446
    %1174 = vmatpush.msra.mxu0 %v442
    %1175 = vmatpush.msra.mxu0 %v438
    %1176 = vmatpush.msra.mxu0 %v434
    %1177 = vmatpush.msra.mxu0 %v430
    %1178 = vmatpush.msra.mxu0 %v426
    %1179 = vmatpush.msra.mxu0 %v422
    %1180 = vmatpush.msra.mxu0 %v418
    %1181 = vmatpush.msra.mxu0 %v414
    %1182 = vmatmul.f32.gmra.mxu0 %v775
    %v1183 = vpop.f32.mrf.mxu0
    %v1184 = vadd.f32 0.0, %v1183
    %1185 = vdwg.mxu0
    %1186 = vmatpush.msra.mxu0 %v475
    %1187 = vmatpush.msra.mxu0 %v471
    %1188 = vmatpush.msra.mxu0 %v467
    %1189 = vmatpush.msra.mxu0 %v463
    %1190 = vmatpush.msra.mxu0 %v459
    %1191 = vmatpush.msra.mxu0 %v455
    %1192 = vmatpush.msra.mxu0 %v451
    %1193 = vmatpush.msra.mxu0 %v447
    %1194 = vmatpush.msra.mxu0 %v443
    %1195 = vmatpush.msra.mxu0 %v439
    %1196 = vmatpush.msra.mxu0 %v435
    %1197 = vmatpush.msra.mxu0 %v431
    %1198 = vmatpush.msra.mxu0 %v427
    %1199 = vmatpush.msra.mxu0 %v423
    %1200 = vmatpush.msra.mxu0 %v419
    %1201 = vmatpush.msra.mxu0 %v415
    %1202 = vmatmul.f32.gmra.mxu0 %v775
    %v1203 = vpop.f32.mrf.mxu0
    %v1204 = vadd.f32 0.0, %v1203
    %1205 = vdwg.mxu0
    %1206 = vmatpush.msra.mxu0 %v476
    %1207 = vmatpush.msra.mxu0 %v472
    %1208 = vmatpush.msra.mxu0 %v468
    %1209 = vmatpush.msra.mxu0 %v464
    %1210 = vmatpush.msra.mxu0 %v460
    %1211 = vmatpush.msra.mxu0 %v456
    %1212 = vmatpush.msra.mxu0 %v452
    %1213 = vmatpush.msra.mxu0 %v448
    %1214 = vmatpush.msra.mxu0 %v444
    %1215 = vmatpush.msra.mxu0 %v440
    %1216 = vmatpush.msra.mxu0 %v436
    %1217 = vmatpush.msra.mxu0 %v432
    %1218 = vmatpush.msra.mxu0 %v428
    %1219 = vmatpush.msra.mxu0 %v424
    %1220 = vmatpush.msra.mxu0 %v420
    %1221 = vmatpush.msra.mxu0 %v416
    %1222 = vmatmul.f32.gmra.mxu0 %v775
    %v1223 = vpop.f32.mrf.mxu0
    %v1224 = vadd.f32 0.0, %v1223
    %1225 = vdwg.mxu0
    %v1226 = vadd.f32 %v1142, %v1164
    %v1227 = vadd.f32 %v1143, %v1184
    %v1228 = vadd.f32 %v1144, %v1204
    %v1229 = vadd.f32 %v1145, %v1224
    %v1230 = vxor.u32 %v1226, 2147483648
    %v1231 = vmul.f32 %v1230, 1.442695
    %v1232 = vpow.pop %v1231
    %v1233 = vadd.f32 %v1232, 1.0
    %v1234 = vrcp.pop %v1233
    %v1235 = vmul.f32 %v1233, %v1234
    %v1236 = vsub.f32 1.0, %v1235
    %v1237 = vmul.f32 %v1234, %v1236
    %v1238 = vadd.f32 %v1234, %v1237
    %vm1239 = vweird.f32 %v1233
    %vm1240 = vweird.f32 %v1234
    %vm1241 = vmor %vm1239, %vm1240
    %v1242 = vsel %vm1241, %v1234, %v1238
    %v1243 = vand.u32 2147483647, %v1233
    %vm1244 = vcmp.eq.f32.partialorder %v1243, 8.507059e+37
    %v1245 = vand.u32 %v1233, 2147483648
    %v1246 = vor.u32 1.1754944e-38, %v1245
    %v1247 = vsel %vm1244, %v1246, %v1242
    %v1248 = vmul.f32 1.0, %v1247
    %v1249 = vxor.u32 %v1227, 2147483648
    %v1250 = vmul.f32 %v1249, 1.442695
    %v1251 = vpow.pop %v1250
    %v1252 = vadd.f32 %v1251, 1.0
    %v1253 = vrcp.pop %v1252
    %v1254 = vmul.f32 %v1252, %v1253
    %v1255 = vsub.f32 1.0, %v1254
    %v1256 = vmul.f32 %v1253, %v1255
    %v1257 = vadd.f32 %v1253, %v1256
    %vm1258 = vweird.f32 %v1252
    %vm1259 = vweird.f32 %v1253
    %vm1260 = vmor %vm1258, %vm1259
    %v1261 = vsel %vm1260, %v1253, %v1257
    %v1262 = vand.u32 2147483647, %v1252
    %vm1263 = vcmp.eq.f32.partialorder %v1262, 8.507059e+37
    %v1264 = vand.u32 %v1252, 2147483648
    %v1265 = vor.u32 1.1754944e-38, %v1264
    %v1266 = vsel %vm1263, %v1265, %v1261
    %v1267 = vmul.f32 1.0, %v1266
    %v1268 = vtanh.pop %v1228
    %v1269 = vxor.u32 %v1229, 2147483648
    %v1270 = vmul.f32 %v1269, 1.442695
    %v1271 = vpow.pop %v1270
    %v1272 = vadd.f32 %v1271, 1.0
    %v1273 = vrcp.pop %v1272
    %v1274 = vmul.f32 %v1272, %v1273
    %v1275 = vsub.f32 1.0, %v1274
    %v1276 = vmul.f32 %v1273, %v1275
    %v1277 = vadd.f32 %v1273, %v1276
    %vm1278 = vweird.f32 %v1272
    %vm1279 = vweird.f32 %v1273
    %vm1280 = vmor %vm1278, %vm1279
    %v1281 = vsel %vm1280, %v1273, %v1277
    %v1282 = vand.u32 2147483647, %v1272
    %vm1283 = vcmp.eq.f32.partialorder %v1282, 8.507059e+37
    %v1284 = vand.u32 %v1272, 2147483648
    %v1285 = vor.u32 1.1754944e-38, %v1284
    %v1286 = vsel %vm1283, %v1285, %v1281
    %v1287 = vmul.f32 1.0, %v1286
    %v1288 = vmul.f32 %v1267, %v773
    %v1289 = vmul.f32 %v1248, %v1268
    %v1290 = vadd.f32 %v1288, %v1289
    %v1291 = vtanh.pop %v1290
    %v1292 = vmul.f32 %v1287, %v1291
    %1293 = vmatpush.msra.mxu0 %v836
    %1294 = vmatpush.msra.mxu0 %v832
    %1295 = vmatpush.msra.mxu0 %v828
    %1296 = vmatpush.msra.mxu0 %v824
    %1297 = vmatpush.msra.mxu0 %v820
    %1298 = vmatpush.msra.mxu0 %v816
    %1299 = vmatpush.msra.mxu0 %v812
    %1300 = vmatpush.msra.mxu0 %v808
    %1301 = vmatpush.msra.mxu0 %v804
    %1302 = vmatpush.msra.mxu0 %v800
    %1303 = vmatpush.msra.mxu0 %v796
    %1304 = vmatpush.msra.mxu0 %v792
    %1305 = vmatpush.msra.mxu0 %v788
    %1306 = vmatpush.msra.mxu0 %v784
    %1307 = vmatpush.msra.mxu0 %v780
    %1308 = vmatpush.msra.mxu0 %v776
    %1309 = vmatmul.f32.gmra.mxu0 %v775
    %v1310 = vpop.f32.mrf.mxu0
    %v1311 = vadd.f32 %v842, %v1310
    %1312 = vdwg.mxu0
    %1313 = vmatpush.msra.mxu0 %v837
    %1314 = vmatpush.msra.mxu0 %v833
    %1315 = vmatpush.msra.mxu0 %v829
    %1316 = vmatpush.msra.mxu0 %v825
    %1317 = vmatpush.msra.mxu0 %v821
    %1318 = vmatpush.msra.mxu0 %v817
    %1319 = vmatpush.msra.mxu0 %v813
    %1320 = vmatpush.msra.mxu0 %v809
    %1321 = vmatpush.msra.mxu0 %v805
    %1322 = vmatpush.msra.mxu0 %v801
    %1323 = vmatpush.msra.mxu0 %v797
    %1324 = vmatpush.msra.mxu0 %v793
    %1325 = vmatpush.msra.mxu0 %v789
    %1326 = vmatpush.msra.mxu0 %v785
    %1327 = vmatpush.msra.mxu0 %v781
    %1328 = vmatpush.msra.mxu0 %v777
    %1329 = vmatmul.f32.gmra.mxu0 %v775
    %v1330 = vpop.f32.mrf.mxu0
    %v1331 = vadd.f32 %v843, %v1330
    %1332 = vdwg.mxu0
    %1333 = vmatpush.msra.mxu0 %v838
    %1334 = vmatpush.msra.mxu0 %v834
    %1335 = vmatpush.msra.mxu0 %v830
    %1336 = vmatpush.msra.mxu0 %v826
    %1337 = vmatpush.msra.mxu0 %v822
    %1338 = vmatpush.msra.mxu0 %v818
    %1339 = vmatpush.msra.mxu0 %v814
    %1340 = vmatpush.msra.mxu0 %v810
    %1341 = vmatpush.msra.mxu0 %v806
    %1342 = vmatpush.msra.mxu0 %v802
    %1343 = vmatpush.msra.mxu0 %v798
    %1344 = vmatpush.msra.mxu0 %v794
    %1345 = vmatpush.msra.mxu0 %v790
    %1346 = vmatpush.msra.mxu0 %v786
    %1347 = vmatpush.msra.mxu0 %v782
    %1348 = vmatpush.msra.mxu0 %v778
    %1349 = vmatmul.f32.gmra.mxu0 %v775
    %v1350 = vpop.f32.mrf.mxu0
    %v1351 = vadd.f32 %v844, %v1350
    %1352 = vdwg.mxu0
    %1353 = vmatpush.msra.mxu0 %v839
    %1354 = vmatpush.msra.mxu0 %v835
    %1355 = vmatpush.msra.mxu0 %v831
    %1356 = vmatpush.msra.mxu0 %v827
    %1357 = vmatpush.msra.mxu0 %v823
    %1358 = vmatpush.msra.mxu0 %v819
    %1359 = vmatpush.msra.mxu0 %v815
    %1360 = vmatpush.msra.mxu0 %v811
    %1361 = vmatpush.msra.mxu0 %v807
    %1362 = vmatpush.msra.mxu0 %v803
    %1363 = vmatpush.msra.mxu0 %v799
    %1364 = vmatpush.msra.mxu0 %v795
    %1365 = vmatpush.msra.mxu0 %v791
    %1366 = vmatpush.msra.mxu0 %v787
    %1367 = vmatpush.msra.mxu0 %v783
    %1368 = vmatpush.msra.mxu0 %v779
    %1369 = vmatmul.f32.gmra.mxu0 %v775
    %v1370 = vpop.f32.mrf.mxu0
    %v1371 = vadd.f32 %v845, %v1370
    %1372 = vdwg.mxu0
    %1373 = vmatpush.msra.mxu0 %v990
    %1374 = vmatpush.msra.mxu0 %v986
    %1375 = vmatpush.msra.mxu0 %v982
    %1376 = vmatpush.msra.mxu0 %v978
    %1377 = vmatpush.msra.mxu0 %v974
    %1378 = vmatpush.msra.mxu0 %v970
    %1379 = vmatpush.msra.mxu0 %v966
    %1380 = vmatpush.msra.mxu0 %v962
    %1381 = vmatpush.msra.mxu0 %v958
    %1382 = vmatpush.msra.mxu0 %v954
    %1383 = vmatpush.msra.mxu0 %v950
    %1384 = vmatpush.msra.mxu0 %v946
    %1385 = vmatpush.msra.mxu0 %v942
    %1386 = vmatpush.msra.mxu0 %v938
    %1387 = vmatpush.msra.mxu0 %v934
    %1388 = vmatpush.msra.mxu0 %v930
    %1389 = vmatmul.f32.gmra.mxu0 %v1140
    %v1390 = vpop.f32.mrf.mxu0
    %v1391 = vadd.f32 0.0, %v1390
    %1392 = vdwg.mxu0
    %1393 = vmatpush.msra.mxu0 %v991
    %1394 = vmatpush.msra.mxu0 %v987
    %1395 = vmatpush.msra.mxu0 %v983
    %1396 = vmatpush.msra.mxu0 %v979
    %1397 = vmatpush.msra.mxu0 %v975
    %1398 = vmatpush.msra.mxu0 %v971
    %1399 = vmatpush.msra.mxu0 %v967
    %1400 = vmatpush.msra.mxu0 %v963
    %1401 = vmatpush.msra.mxu0 %v959
    %1402 = vmatpush.msra.mxu0 %v955
    %1403 = vmatpush.msra.mxu0 %v951
    %1404 = vmatpush.msra.mxu0 %v947
    %1405 = vmatpush.msra.mxu0 %v943
    %1406 = vmatpush.msra.mxu0 %v939
    %1407 = vmatpush.msra.mxu0 %v935
    %1408 = vmatpush.msra.mxu0 %v931
    %1409 = vmatmul.f32.gmra.mxu0 %v1140
    %v1410 = vpop.f32.mrf.mxu0
    %v1411 = vadd.f32 0.0, %v1410
    %1412 = vdwg.mxu0
    %1413 = vmatpush.msra.mxu0 %v992
    %1414 = vmatpush.msra.mxu0 %v988
    %1415 = vmatpush.msra.mxu0 %v984
    %1416 = vmatpush.msra.mxu0 %v980
    %1417 = vmatpush.msra.mxu0 %v976
    %1418 = vmatpush.msra.mxu0 %v972
    %1419 = vmatpush.msra.mxu0 %v968
    %1420 = vmatpush.msra.mxu0 %v964
    %1421 = vmatpush.msra.mxu0 %v960
    %1422 = vmatpush.msra.mxu0 %v956
    %1423 = vmatpush.msra.mxu0 %v952
    %1424 = vmatpush.msra.mxu0 %v948
    %1425 = vmatpush.msra.mxu0 %v944
    %1426 = vmatpush.msra.mxu0 %v940
    %1427 = vmatpush.msra.mxu0 %v936
    %1428 = vmatpush.msra.mxu0 %v932
    %1429 = vmatmul.f32.gmra.mxu0 %v1140
    %v1430 = vpop.f32.mrf.mxu0
    %v1431 = vadd.f32 0.0, %v1430
    %1432 = vdwg.mxu0
    %1433 = vmatpush.msra.mxu0 %v993
    %1434 = vmatpush.msra.mxu0 %v989
    %1435 = vmatpush.msra.mxu0 %v985
    %1436 = vmatpush.msra.mxu0 %v981
    %1437 = vmatpush.msra.mxu0 %v977
    %1438 = vmatpush.msra.mxu0 %v973
    %1439 = vmatpush.msra.mxu0 %v969
    %1440 = vmatpush.msra.mxu0 %v965
    %1441 = vmatpush.msra.mxu0 %v961
    %1442 = vmatpush.msra.mxu0 %v957
    %1443 = vmatpush.msra.mxu0 %v953
    %1444 = vmatpush.msra.mxu0 %v949
    %1445 = vmatpush.msra.mxu0 %v945
    %1446 = vmatpush.msra.mxu0 %v941
    %1447 = vmatpush.msra.mxu0 %v937
    %1448 = vmatpush.msra.mxu0 %v933
    %1449 = vmatmul.f32.gmra.mxu0 %v1140
    %v1450 = vpop.f32.mrf.mxu0
    %v1451 = vadd.f32 0.0, %v1450
    %1452 = vdwg.mxu0
    %v1453 = vadd.f32 %v1311, %v1391
    %v1454 = vadd.f32 %v1331, %v1411
    %v1455 = vadd.f32 %v1351, %v1431
    %v1456 = vadd.f32 %v1371, %v1451
    %v1457 = vxor.u32 %v1453, 2147483648
    %v1458 = vmul.f32 %v1457, 1.442695
    %v1459 = vpow.pop %v1458
    %v1460 = vadd.f32 %v1459, 1.0
    %v1461 = vrcp.pop %v1460
    %v1462 = vmul.f32 %v1460, %v1461
    %v1463 = vsub.f32 1.0, %v1462
    %v1464 = vmul.f32 %v1461, %v1463
    %v1465 = vadd.f32 %v1461, %v1464
    %vm1466 = vweird.f32 %v1460
    %vm1467 = vweird.f32 %v1461
    %vm1468 = vmor %vm1466, %vm1467
    %v1469 = vsel %vm1468, %v1461, %v1465
    %v1470 = vand.u32 2147483647, %v1460
    %vm1471 = vcmp.eq.f32.partialorder %v1470, 8.507059e+37
    %v1472 = vand.u32 %v1460, 2147483648
    %v1473 = vor.u32 1.1754944e-38, %v1472
    %v1474 = vsel %vm1471, %v1473, %v1469
    %v1475 = vmul.f32 1.0, %v1474
    %v1476 = vxor.u32 %v1454, 2147483648
    %v1477 = vmul.f32 %v1476, 1.442695
    %v1478 = vpow.pop %v1477
    %v1479 = vadd.f32 %v1478, 1.0
    %v1480 = vrcp.pop %v1479
    %v1481 = vmul.f32 %v1479, %v1480
    %v1482 = vsub.f32 1.0, %v1481
    %v1483 = vmul.f32 %v1480, %v1482
    %v1484 = vadd.f32 %v1480, %v1483
    %vm1485 = vweird.f32 %v1479
    %vm1486 = vweird.f32 %v1480
    %vm1487 = vmor %vm1485, %vm1486
    %v1488 = vsel %vm1487, %v1480, %v1484
    %v1489 = vand.u32 2147483647, %v1479
    %vm1490 = vcmp.eq.f32.partialorder %v1489, 8.507059e+37
    %v1491 = vand.u32 %v1479, 2147483648
    %v1492 = vor.u32 1.1754944e-38, %v1491
    %v1493 = vsel %vm1490, %v1492, %v1488
    %v1494 = vmul.f32 1.0, %v1493
    %v1495 = vtanh.pop %v1455
    %v1496 = vxor.u32 %v1456, 2147483648
    %v1497 = vmul.f32 %v1496, 1.442695
    %v1498 = vpow.pop %v1497
    %v1499 = vadd.f32 %v1498, 1.0
    %v1500 = vrcp.pop %v1499
    %v1501 = vmul.f32 %v1499, %v1500
    %v1502 = vsub.f32 1.0, %v1501
    %v1503 = vmul.f32 %v1500, %v1502
    %v1504 = vadd.f32 %v1500, %v1503
    %vm1505 = vweird.f32 %v1499
    %vm1506 = vweird.f32 %v1500
    %vm1507 = vmor %vm1505, %vm1506
    %v1508 = vsel %vm1507, %v1500, %v1504
    %v1509 = vand.u32 2147483647, %v1499
    %vm1510 = vcmp.eq.f32.partialorder %v1509, 8.507059e+37
    %v1511 = vand.u32 %v1499, 2147483648
    %v1512 = vor.u32 1.1754944e-38, %v1511
    %v1513 = vsel %vm1510, %v1512, %v1508
    %v1514 = vmul.f32 1.0, %v1513
    %v1515 = vmul.f32 %v1494, %v1138
    %v1516 = vmul.f32 %v1475, %v1495
    %v1517 = vadd.f32 %v1515, %v1516
    %v1518 = vtanh.pop %v1517
    %v1519 = vmul.f32 %v1514, %v1518
    %v1520 = vld [vmem:[#allocation11] sm:$0xff]
    %v1521 = vld [vmem:[#allocation11 + $0x8] sm:$0xff]
    %v1522 = vld [vmem:[#allocation11 + $0x10] sm:$0xff]
    %v1523 = vld [vmem:[#allocation11 + $0x18] sm:$0xff]
    %v1524 = vld [vmem:[#allocation11 + $0x20] sm:$0xff]
    %v1525 = vld [vmem:[#allocation11 + $0x28] sm:$0xff]
    %v1526 = vld [vmem:[#allocation11 + $0x30] sm:$0xff]
    %v1527 = vld [vmem:[#allocation11 + $0x38] sm:$0xff]
    %v1528 = vld [vmem:[#allocation11 + $0x40] sm:$0xff]
    %v1529 = vld [vmem:[#allocation11 + $0x48] sm:$0xff]
    %v1530 = vld [vmem:[#allocation11 + $0x50] sm:$0xff]
    %v1531 = vld [vmem:[#allocation11 + $0x58] sm:$0xff]
    %v1532 = vld [vmem:[#allocation11 + $0x60] sm:$0xff]
    %v1533 = vld [vmem:[#allocation11 + $0x68] sm:$0xff]
    %v1534 = vld [vmem:[#allocation11 + $0x70] sm:$0xff]
    %v1535 = vld [vmem:[#allocation11 + $0x78] sm:$0xff]
    %v1536 = vld [vmem:[#allocation11 + $0x80] sm:$0xff]
    %v1537 = vld [vmem:[#allocation11 + $0x88] sm:$0xff]
    %v1538 = vld [vmem:[#allocation11 + $0x90] sm:$0xff]
    %v1539 = vld [vmem:[#allocation11 + $0x98] sm:$0xff]
    %v1540 = vld [vmem:[#allocation11 + $0xa0] sm:$0xff]
    %v1541 = vld [vmem:[#allocation11 + $0xa8] sm:$0xff]
    %v1542 = vld [vmem:[#allocation11 + $0xb0] sm:$0xff]
    %v1543 = vld [vmem:[#allocation11 + $0xb8] sm:$0xff]
    %v1544 = vld [vmem:[#allocation11 + $0xc0] sm:$0xff]
    %v1545 = vld [vmem:[#allocation11 + $0xc8] sm:$0xff]
    %v1546 = vld [vmem:[#allocation11 + $0xd0] sm:$0xff]
    %v1547 = vld [vmem:[#allocation11 + $0xd8] sm:$0xff]
    %v1548 = vld [vmem:[#allocation11 + $0xe0] sm:$0xff]
    %v1549 = vld [vmem:[#allocation11 + $0xe8] sm:$0xff]
    %v1550 = vld [vmem:[#allocation11 + $0xf0] sm:$0xff]
    %v1551 = vld [vmem:[#allocation11 + $0xf8] sm:$0xff]
    %v1552 = vld [vmem:[#allocation11 + $0x100] sm:$0xff]
    %v1553 = vld [vmem:[#allocation11 + $0x108] sm:$0xff]
    %v1554 = vld [vmem:[#allocation11 + $0x110] sm:$0xff]
    %v1555 = vld [vmem:[#allocation11 + $0x118] sm:$0xff]
    %v1556 = vld [vmem:[#allocation11 + $0x120] sm:$0xff]
    %v1557 = vld [vmem:[#allocation11 + $0x128] sm:$0xff]
    %v1558 = vld [vmem:[#allocation11 + $0x130] sm:$0xff]
    %v1559 = vld [vmem:[#allocation11 + $0x138] sm:$0xff]
    %v1560 = vld [vmem:[#allocation11 + $0x140] sm:$0xff]
    %v1561 = vld [vmem:[#allocation11 + $0x148] sm:$0xff]
    %v1562 = vld [vmem:[#allocation11 + $0x150] sm:$0xff]
    %v1563 = vld [vmem:[#allocation11 + $0x158] sm:$0xff]
    %v1564 = vld [vmem:[#allocation11 + $0x160] sm:$0xff]
    %v1565 = vld [vmem:[#allocation11 + $0x168] sm:$0xff]
    %v1566 = vld [vmem:[#allocation11 + $0x170] sm:$0xff]
    %v1567 = vld [vmem:[#allocation11 + $0x178] sm:$0xff]
    %v1568 = vld [vmem:[#allocation11 + $0x180] sm:$0xff]
    %v1569 = vld [vmem:[#allocation11 + $0x188] sm:$0xff]
    %v1570 = vld [vmem:[#allocation11 + $0x190] sm:$0xff]
    %v1571 = vld [vmem:[#allocation11 + $0x198] sm:$0xff]
    %v1572 = vld [vmem:[#allocation11 + $0x1a0] sm:$0xff]
    %v1573 = vld [vmem:[#allocation11 + $0x1a8] sm:$0xff]
    %v1574 = vld [vmem:[#allocation11 + $0x1b0] sm:$0xff]
    %v1575 = vld [vmem:[#allocation11 + $0x1b8] sm:$0xff]
    %v1576 = vld [vmem:[#allocation11 + $0x1c0] sm:$0xff]
    %v1577 = vld [vmem:[#allocation11 + $0x1c8] sm:$0xff]
    %v1578 = vld [vmem:[#allocation11 + $0x1d0] sm:$0xff]
    %v1579 = vld [vmem:[#allocation11 + $0x1d8] sm:$0xff]
    %v1580 = vld [vmem:[#allocation11 + $0x1e0] sm:$0xff]
    %v1581 = vld [vmem:[#allocation11 + $0x1e8] sm:$0xff]
    %v1582 = vld [vmem:[#allocation11 + $0x1f0] sm:$0xff]
    %v1583 = vld [vmem:[#allocation11 + $0x1f8] sm:$0xff]
    %v1584 = vld [vmem:[%s9] sm:$0xf]
    %v1586 = vperm.slane %v1584, 0
    %v1587 = vperm.slane %v1584, 1
    %v1588 = vperm.slane %v1584, 2
    %v1589 = vperm.slane %v1584, 3
    %1594 = vmatpush.msra.mxu0 %v1580
    %1595 = vmatpush.msra.mxu0 %v1576
    %1596 = vmatpush.msra.mxu0 %v1572
    %1597 = vmatpush.msra.mxu0 %v1568
    %1598 = vmatpush.msra.mxu0 %v1564
    %1599 = vmatpush.msra.mxu0 %v1560
    %1600 = vmatpush.msra.mxu0 %v1556
    %1601 = vmatpush.msra.mxu0 %v1552
    %1602 = vmatpush.msra.mxu0 %v1548
    %1603 = vmatpush.msra.mxu0 %v1544
    %1604 = vmatpush.msra.mxu0 %v1540
    %1605 = vmatpush.msra.mxu0 %v1536
    %1606 = vmatpush.msra.mxu0 %v1532
    %1607 = vmatpush.msra.mxu0 %v1528
    %1608 = vmatpush.msra.mxu0 %v1524
    %1609 = vmatpush.msra.mxu0 %v1520
    %1610 = vmatmul.f32.gmra.mxu0 %v1140
    %v1611 = vpop.f32.mrf.mxu0
    %v1612 = vadd.f32 %v1586, %v1611
    %1613 = vdwg.mxu0
    %1614 = vmatpush.msra.mxu0 %v1581
    %1615 = vmatpush.msra.mxu0 %v1577
    %1616 = vmatpush.msra.mxu0 %v1573
    %1617 = vmatpush.msra.mxu0 %v1569
    %1618 = vmatpush.msra.mxu0 %v1565
    %1619 = vmatpush.msra.mxu0 %v1561
    %1620 = vmatpush.msra.mxu0 %v1557
    %1621 = vmatpush.msra.mxu0 %v1553
    %1622 = vmatpush.msra.mxu0 %v1549
    %1623 = vmatpush.msra.mxu0 %v1545
    %1624 = vmatpush.msra.mxu0 %v1541
    %1625 = vmatpush.msra.mxu0 %v1537
    %1626 = vmatpush.msra.mxu0 %v1533
    %1627 = vmatpush.msra.mxu0 %v1529
    %1628 = vmatpush.msra.mxu0 %v1525
    %1629 = vmatpush.msra.mxu0 %v1521
    %1630 = vmatmul.f32.gmra.mxu0 %v1140
    %v1631 = vpop.f32.mrf.mxu0
    %v1632 = vadd.f32 %v1587, %v1631
    %1633 = vdwg.mxu0
    %1634 = vmatpush.msra.mxu0 %v1582
    %1635 = vmatpush.msra.mxu0 %v1578
    %1636 = vmatpush.msra.mxu0 %v1574
    %1637 = vmatpush.msra.mxu0 %v1570
    %1638 = vmatpush.msra.mxu0 %v1566
    %1639 = vmatpush.msra.mxu0 %v1562
    %1640 = vmatpush.msra.mxu0 %v1558
    %1641 = vmatpush.msra.mxu0 %v1554
    %1642 = vmatpush.msra.mxu0 %v1550
    %1643 = vmatpush.msra.mxu0 %v1546
    %1644 = vmatpush.msra.mxu0 %v1542
    %1645 = vmatpush.msra.mxu0 %v1538
    %1646 = vmatpush.msra.mxu0 %v1534
    %1647 = vmatpush.msra.mxu0 %v1530
    %1648 = vmatpush.msra.mxu0 %v1526
    %1649 = vmatpush.msra.mxu0 %v1522
    %1650 = vmatmul.f32.gmra.mxu0 %v1140
    %v1651 = vpop.f32.mrf.mxu0
    %v1652 = vadd.f32 %v1588, %v1651
    %1653 = vdwg.mxu0
    %1654 = vmatpush.msra.mxu0 %v1583
    %1655 = vmatpush.msra.mxu0 %v1579
    %1656 = vmatpush.msra.mxu0 %v1575
    %1657 = vmatpush.msra.mxu0 %v1571
    %1658 = vmatpush.msra.mxu0 %v1567
    %1659 = vmatpush.msra.mxu0 %v1563
    %1660 = vmatpush.msra.mxu0 %v1559
    %1661 = vmatpush.msra.mxu0 %v1555
    %1662 = vmatpush.msra.mxu0 %v1551
    %1663 = vmatpush.msra.mxu0 %v1547
    %1664 = vmatpush.msra.mxu0 %v1543
    %1665 = vmatpush.msra.mxu0 %v1539
    %1666 = vmatpush.msra.mxu0 %v1535
    %1667 = vmatpush.msra.mxu0 %v1531
    %1668 = vmatpush.msra.mxu0 %v1527
    %1669 = vmatpush.msra.mxu0 %v1523
    %1670 = vmatmul.f32.gmra.mxu0 %v1140
    %v1671 = vpop.f32.mrf.mxu0
    %v1672 = vadd.f32 %v1589, %v1671
    %1673 = vdwg.mxu0
    %v1674 = vld [vmem:[#allocation12] sm:$0xff]
    %v1675 = vld [vmem:[#allocation12 + $0x8] sm:$0xff]
    %v1676 = vld [vmem:[#allocation12 + $0x10] sm:$0xff]
    %v1677 = vld [vmem:[#allocation12 + $0x18] sm:$0xff]
    %v1678 = vld [vmem:[#allocation12 + $0x20] sm:$0xff]
    %v1679 = vld [vmem:[#allocation12 + $0x28] sm:$0xff]
    %v1680 = vld [vmem:[#allocation12 + $0x30] sm:$0xff]
    %v1681 = vld [vmem:[#allocation12 + $0x38] sm:$0xff]
    %v1682 = vld [vmem:[#allocation12 + $0x40] sm:$0xff]
    %v1683 = vld [vmem:[#allocation12 + $0x48] sm:$0xff]
    %v1684 = vld [vmem:[#allocation12 + $0x50] sm:$0xff]
    %v1685 = vld [vmem:[#allocation12 + $0x58] sm:$0xff]
    %v1686 = vld [vmem:[#allocation12 + $0x60] sm:$0xff]
    %v1687 = vld [vmem:[#allocation12 + $0x68] sm:$0xff]
    %v1688 = vld [vmem:[#allocation12 + $0x70] sm:$0xff]
    %v1689 = vld [vmem:[#allocation12 + $0x78] sm:$0xff]
    %v1690 = vld [vmem:[#allocation12 + $0x80] sm:$0xff]
    %v1691 = vld [vmem:[#allocation12 + $0x88] sm:$0xff]
    %v1692 = vld [vmem:[#allocation12 + $0x90] sm:$0xff]
    %v1693 = vld [vmem:[#allocation12 + $0x98] sm:$0xff]
    %v1694 = vld [vmem:[#allocation12 + $0xa0] sm:$0xff]
    %v1695 = vld [vmem:[#allocation12 + $0xa8] sm:$0xff]
    %v1696 = vld [vmem:[#allocation12 + $0xb0] sm:$0xff]
    %v1697 = vld [vmem:[#allocation12 + $0xb8] sm:$0xff]
    %v1698 = vld [vmem:[#allocation12 + $0xc0] sm:$0xff]
    %v1699 = vld [vmem:[#allocation12 + $0xc8] sm:$0xff]
    %v1700 = vld [vmem:[#allocation12 + $0xd0] sm:$0xff]
    %v1701 = vld [vmem:[#allocation12 + $0xd8] sm:$0xff]
    %v1702 = vld [vmem:[#allocation12 + $0xe0] sm:$0xff]
    %v1703 = vld [vmem:[#allocation12 + $0xe8] sm:$0xff]
    %v1704 = vld [vmem:[#allocation12 + $0xf0] sm:$0xff]
    %v1705 = vld [vmem:[#allocation12 + $0xf8] sm:$0xff]
    %v1706 = vld [vmem:[#allocation12 + $0x100] sm:$0xff]
    %v1707 = vld [vmem:[#allocation12 + $0x108] sm:$0xff]
    %v1708 = vld [vmem:[#allocation12 + $0x110] sm:$0xff]
    %v1709 = vld [vmem:[#allocation12 + $0x118] sm:$0xff]
    %v1710 = vld [vmem:[#allocation12 + $0x120] sm:$0xff]
    %v1711 = vld [vmem:[#allocation12 + $0x128] sm:$0xff]
    %v1712 = vld [vmem:[#allocation12 + $0x130] sm:$0xff]
    %v1713 = vld [vmem:[#allocation12 + $0x138] sm:$0xff]
    %v1714 = vld [vmem:[#allocation12 + $0x140] sm:$0xff]
    %v1715 = vld [vmem:[#allocation12 + $0x148] sm:$0xff]
    %v1716 = vld [vmem:[#allocation12 + $0x150] sm:$0xff]
    %v1717 = vld [vmem:[#allocation12 + $0x158] sm:$0xff]
    %v1718 = vld [vmem:[#allocation12 + $0x160] sm:$0xff]
    %v1719 = vld [vmem:[#allocation12 + $0x168] sm:$0xff]
    %v1720 = vld [vmem:[#allocation12 + $0x170] sm:$0xff]
    %v1721 = vld [vmem:[#allocation12 + $0x178] sm:$0xff]
    %v1722 = vld [vmem:[#allocation12 + $0x180] sm:$0xff]
    %v1723 = vld [vmem:[#allocation12 + $0x188] sm:$0xff]
    %v1724 = vld [vmem:[#allocation12 + $0x190] sm:$0xff]
    %v1725 = vld [vmem:[#allocation12 + $0x198] sm:$0xff]
    %v1726 = vld [vmem:[#allocation12 + $0x1a0] sm:$0xff]
    %v1727 = vld [vmem:[#allocation12 + $0x1a8] sm:$0xff]
    %v1728 = vld [vmem:[#allocation12 + $0x1b0] sm:$0xff]
    %v1729 = vld [vmem:[#allocation12 + $0x1b8] sm:$0xff]
    %v1730 = vld [vmem:[#allocation12 + $0x1c0] sm:$0xff]
    %v1731 = vld [vmem:[#allocation12 + $0x1c8] sm:$0xff]
    %v1732 = vld [vmem:[#allocation12 + $0x1d0] sm:$0xff]
    %v1733 = vld [vmem:[#allocation12 + $0x1d8] sm:$0xff]
    %v1734 = vld [vmem:[#allocation12 + $0x1e0] sm:$0xff]
    %v1735 = vld [vmem:[#allocation12 + $0x1e8] sm:$0xff]
    %v1736 = vld [vmem:[#allocation12 + $0x1f0] sm:$0xff]
    %v1737 = vld [vmem:[#allocation12 + $0x1f8] sm:$0xff]
    %1738 = vmatpush.msra.mxu0 %v1734
    %1739 = vmatpush.msra.mxu0 %v1730
    %1740 = vmatpush.msra.mxu0 %v1726
    %1741 = vmatpush.msra.mxu0 %v1722
    %1742 = vmatpush.msra.mxu0 %v1718
    %1743 = vmatpush.msra.mxu0 %v1714
    %1744 = vmatpush.msra.mxu0 %v1710
    %1745 = vmatpush.msra.mxu0 %v1706
    %1746 = vmatpush.msra.mxu0 %v1702
    %1747 = vmatpush.msra.mxu0 %v1698
    %1748 = vmatpush.msra.mxu0 %v1694
    %1749 = vmatpush.msra.mxu0 %v1690
    %1750 = vmatpush.msra.mxu0 %v1686
    %1751 = vmatpush.msra.mxu0 %v1682
    %1752 = vmatpush.msra.mxu0 %v1678
    %1753 = vmatpush.msra.mxu0 %v1674
    %1754 = vmatmul.f32.gmra.mxu0 0.0
    %v1755 = vpop.f32.mrf.mxu0
    %v1756 = vadd.f32 0.0, %v1755
    %1757 = vdwg.mxu0
    %1758 = vmatpush.msra.mxu0 %v1735
    %1759 = vmatpush.msra.mxu0 %v1731
    %1760 = vmatpush.msra.mxu0 %v1727
    %1761 = vmatpush.msra.mxu0 %v1723
    %1762 = vmatpush.msra.mxu0 %v1719
    %1763 = vmatpush.msra.mxu0 %v1715
    %1764 = vmatpush.msra.mxu0 %v1711
    %1765 = vmatpush.msra.mxu0 %v1707
    %1766 = vmatpush.msra.mxu0 %v1703
    %1767 = vmatpush.msra.mxu0 %v1699
    %1768 = vmatpush.msra.mxu0 %v1695
    %1769 = vmatpush.msra.mxu0 %v1691
    %1770 = vmatpush.msra.mxu0 %v1687
    %1771 = vmatpush.msra.mxu0 %v1683
    %1772 = vmatpush.msra.mxu0 %v1679
    %1773 = vmatpush.msra.mxu0 %v1675
    %1774 = vmatmul.f32.gmra.mxu0 0.0
    %v1775 = vpop.f32.mrf.mxu0
    %v1776 = vadd.f32 0.0, %v1775
    %1777 = vdwg.mxu0
    %1778 = vmatpush.msra.mxu0 %v1736
    %1779 = vmatpush.msra.mxu0 %v1732
    %1780 = vmatpush.msra.mxu0 %v1728
    %1781 = vmatpush.msra.mxu0 %v1724
    %1782 = vmatpush.msra.mxu0 %v1720
    %1783 = vmatpush.msra.mxu0 %v1716
    %1784 = vmatpush.msra.mxu0 %v1712
    %1785 = vmatpush.msra.mxu0 %v1708
    %1786 = vmatpush.msra.mxu0 %v1704
    %1787 = vmatpush.msra.mxu0 %v1700
    %1788 = vmatpush.msra.mxu0 %v1696
    %1789 = vmatpush.msra.mxu0 %v1692
    %1790 = vmatpush.msra.mxu0 %v1688
    %1791 = vmatpush.msra.mxu0 %v1684
    %1792 = vmatpush.msra.mxu0 %v1680
    %1793 = vmatpush.msra.mxu0 %v1676
    %1794 = vmatmul.f32.gmra.mxu0 0.0
    %v1795 = vpop.f32.mrf.mxu0
    %v1796 = vadd.f32 0.0, %v1795
    %1797 = vdwg.mxu0
    %1798 = vmatpush.msra.mxu0 %v1737
    %1799 = vmatpush.msra.mxu0 %v1733
    %1800 = vmatpush.msra.mxu0 %v1729
    %1801 = vmatpush.msra.mxu0 %v1725
    %1802 = vmatpush.msra.mxu0 %v1721
    %1803 = vmatpush.msra.mxu0 %v1717
    %1804 = vmatpush.msra.mxu0 %v1713
    %1805 = vmatpush.msra.mxu0 %v1709
    %1806 = vmatpush.msra.mxu0 %v1705
    %1807 = vmatpush.msra.mxu0 %v1701
    %1808 = vmatpush.msra.mxu0 %v1697
    %1809 = vmatpush.msra.mxu0 %v1693
    %1810 = vmatpush.msra.mxu0 %v1689
    %1811 = vmatpush.msra.mxu0 %v1685
    %1812 = vmatpush.msra.mxu0 %v1681
    %1813 = vmatpush.msra.mxu0 %v1677
    %1814 = vmatmul.f32.gmra.mxu0 0.0
    %v1815 = vpop.f32.mrf.mxu0
    %v1816 = vadd.f32 0.0, %v1815
    %1817 = vdwg.mxu0
    %v1818 = vadd.f32 %v1612, %v1756
    %v1819 = vadd.f32 %v1632, %v1776
    %v1820 = vadd.f32 %v1652, %v1796
    %v1821 = vadd.f32 %v1672, %v1816
    %v1822 = vxor.u32 %v1818, 2147483648
    %v1823 = vmul.f32 %v1822, 1.442695
    %v1824 = vpow.pop %v1823
    %v1825 = vadd.f32 %v1824, 1.0
    %v1826 = vrcp.pop %v1825
    %v1827 = vmul.f32 %v1825, %v1826
    %v1828 = vsub.f32 1.0, %v1827
    %v1829 = vmul.f32 %v1826, %v1828
    %v1830 = vadd.f32 %v1826, %v1829
    %vm1831 = vweird.f32 %v1825
    %vm1832 = vweird.f32 %v1826
    %vm1833 = vmor %vm1831, %vm1832
    %v1834 = vsel %vm1833, %v1826, %v1830
    %v1835 = vand.u32 2147483647, %v1825
    %vm1836 = vcmp.eq.f32.partialorder %v1835, 8.507059e+37
    %v1837 = vand.u32 %v1825, 2147483648
    %v1838 = vor.u32 1.1754944e-38, %v1837
    %v1839 = vsel %vm1836, %v1838, %v1834
    %v1840 = vmul.f32 1.0, %v1839
    %v1841 = vxor.u32 %v1819, 2147483648
    %v1842 = vmul.f32 %v1841, 1.442695
    %v1843 = vpow.pop %v1842
    %v1844 = vadd.f32 %v1843, 1.0
    %v1845 = vrcp.pop %v1844
    %v1846 = vmul.f32 %v1844, %v1845
    %v1847 = vsub.f32 1.0, %v1846
    %v1848 = vmul.f32 %v1845, %v1847
    %v1849 = vadd.f32 %v1845, %v1848
    %vm1850 = vweird.f32 %v1844
    %vm1851 = vweird.f32 %v1845
    %vm1852 = vmor %vm1850, %vm1851
    %v1853 = vsel %vm1852, %v1845, %v1849
    %v1854 = vand.u32 2147483647, %v1844
    %vm1855 = vcmp.eq.f32.partialorder %v1854, 8.507059e+37
    %v1856 = vand.u32 %v1844, 2147483648
    %v1857 = vor.u32 1.1754944e-38, %v1856
    %v1858 = vsel %vm1855, %v1857, %v1853
    %v1859 = vmul.f32 1.0, %v1858
    %v1860 = vtanh.pop %v1820
    %v1861 = vxor.u32 %v1821, 2147483648
    %v1862 = vmul.f32 %v1861, 1.442695
    %v1863 = vpow.pop %v1862
    %v1864 = vadd.f32 %v1863, 1.0
    %v1865 = vrcp.pop %v1864
    %v1866 = vmul.f32 %v1864, %v1865
    %v1867 = vsub.f32 1.0, %v1866
    %v1868 = vmul.f32 %v1865, %v1867
    %v1869 = vadd.f32 %v1865, %v1868
    %vm1870 = vweird.f32 %v1864
    %vm1871 = vweird.f32 %v1865
    %vm1872 = vmor %vm1870, %vm1871
    %v1873 = vsel %vm1872, %v1865, %v1869
    %v1874 = vand.u32 2147483647, %v1864
    %vm1875 = vcmp.eq.f32.partialorder %v1874, 8.507059e+37
    %v1876 = vand.u32 %v1864, 2147483648
    %v1877 = vor.u32 1.1754944e-38, %v1876
    %v1878 = vsel %vm1875, %v1877, %v1873
    %v1879 = vmul.f32 1.0, %v1878
    %v1880 = vmul.f32 %v1859, 0.0
    %v1881 = vmul.f32 %v1840, %v1860
    %v1882 = vadd.f32 %v1880, %v1881
    %v1883 = vtanh.pop %v1882
    %v1884 = vmul.f32 %v1879, %v1883
    %s1885 = scalar_lea.vmem [#allocation2], 96
    %v1886 = vld [vmem:[%s1885] sm:$0xff]
    %v1887 = vld [vmem:[%s1885 + $0x8] sm:$0xff]
    %v1888 = vld [vmem:[%s1885 + $0x10] sm:$0xff]
    %v1889 = vld [vmem:[%s1885 + $0x18] sm:$0xff]
    %1890 = vmatpush.msra.mxu0 %v473
    %1891 = vmatpush.msra.mxu0 %v469
    %1892 = vmatpush.msra.mxu0 %v465
    %1893 = vmatpush.msra.mxu0 %v461
    %1894 = vmatpush.msra.mxu0 %v457
    %1895 = vmatpush.msra.mxu0 %v453
    %1896 = vmatpush.msra.mxu0 %v449
    %1897 = vmatpush.msra.mxu0 %v445
    %1898 = vmatpush.msra.mxu0 %v441
    %1899 = vmatpush.msra.mxu0 %v437
    %1900 = vmatpush.msra.mxu0 %v433
    %1901 = vmatpush.msra.mxu0 %v429
    %1902 = vmatpush.msra.mxu0 %v425
    %1903 = vmatpush.msra.mxu0 %v421
    %1904 = vmatpush.msra.mxu0 %v417
    %1905 = vmatpush.msra.mxu0 %v413
    %1906 = vmatmul.f32.gmra.mxu0 %v1292
    %v1907 = vpop.f32.mrf.mxu0
    %v1908 = vadd.f32 0.0, %v1907
    %1909 = vdwg.mxu0
    %1910 = vmatpush.msra.mxu0 %v474
    %1911 = vmatpush.msra.mxu0 %v470
    %1912 = vmatpush.msra.mxu0 %v466
    %1913 = vmatpush.msra.mxu0 %v462
    %1914 = vmatpush.msra.mxu0 %v458
    %1915 = vmatpush.msra.mxu0 %v454
    %1916 = vmatpush.msra.mxu0 %v450
    %1917 = vmatpush.msra.mxu0 %v446
    %1918 = vmatpush.msra.mxu0 %v442
    %1919 = vmatpush.msra.mxu0 %v438
    %1920 = vmatpush.msra.mxu0 %v434
    %1921 = vmatpush.msra.mxu0 %v430
    %1922 = vmatpush.msra.mxu0 %v426
    %1923 = vmatpush.msra.mxu0 %v422
    %1924 = vmatpush.msra.mxu0 %v418
    %1925 = vmatpush.msra.mxu0 %v414
    %1926 = vmatmul.f32.gmra.mxu0 %v1292
    %v1927 = vpop.f32.mrf.mxu0
    %v1928 = vadd.f32 0.0, %v1927
    %1929 = vdwg.mxu0
    %1930 = vmatpush.msra.mxu0 %v475
    %1931 = vmatpush.msra.mxu0 %v471
    %1932 = vmatpush.msra.mxu0 %v467
    %1933 = vmatpush.msra.mxu0 %v463
    %1934 = vmatpush.msra.mxu0 %v459
    %1935 = vmatpush.msra.mxu0 %v455
    %1936 = vmatpush.msra.mxu0 %v451
    %1937 = vmatpush.msra.mxu0 %v447
    %1938 = vmatpush.msra.mxu0 %v443
    %1939 = vmatpush.msra.mxu0 %v439
    %1940 = vmatpush.msra.mxu0 %v435
    %1941 = vmatpush.msra.mxu0 %v431
    %1942 = vmatpush.msra.mxu0 %v427
    %1943 = vmatpush.msra.mxu0 %v423
    %1944 = vmatpush.msra.mxu0 %v419
    %1945 = vmatpush.msra.mxu0 %v415
    %1946 = vmatmul.f32.gmra.mxu0 %v1292
    %v1947 = vpop.f32.mrf.mxu0
    %v1948 = vadd.f32 0.0, %v1947
    %1949 = vdwg.mxu0
    %1950 = vmatpush.msra.mxu0 %v476
    %1951 = vmatpush.msra.mxu0 %v472
    %1952 = vmatpush.msra.mxu0 %v468
    %1953 = vmatpush.msra.mxu0 %v464
    %1954 = vmatpush.msra.mxu0 %v460
    %1955 = vmatpush.msra.mxu0 %v456
    %1956 = vmatpush.msra.mxu0 %v452
    %1957 = vmatpush.msra.mxu0 %v448
    %1958 = vmatpush.msra.mxu0 %v444
    %1959 = vmatpush.msra.mxu0 %v440
    %1960 = vmatpush.msra.mxu0 %v436
    %1961 = vmatpush.msra.mxu0 %v432
    %1962 = vmatpush.msra.mxu0 %v428
    %1963 = vmatpush.msra.mxu0 %v424
    %1964 = vmatpush.msra.mxu0 %v420
    %1965 = vmatpush.msra.mxu0 %v416
    %1966 = vmatmul.f32.gmra.mxu0 %v1292
    %v1967 = vpop.f32.mrf.mxu0
    %v1968 = vadd.f32 0.0, %v1967
    %1969 = vdwg.mxu0
    %v1970 = vadd.f32 %v1886, %v1908
    %v1971 = vadd.f32 %v1887, %v1928
    %v1972 = vadd.f32 %v1888, %v1948
    %v1973 = vadd.f32 %v1889, %v1968
    %v1974 = vxor.u32 %v1970, 2147483648
    %v1975 = vmul.f32 %v1974, 1.442695
    %v1976 = vpow.pop %v1975
    %v1977 = vadd.f32 %v1976, 1.0
    %v1978 = vrcp.pop %v1977
    %v1979 = vmul.f32 %v1977, %v1978
    %v1980 = vsub.f32 1.0, %v1979
    %v1981 = vmul.f32 %v1978, %v1980
    %v1982 = vadd.f32 %v1978, %v1981
    %vm1983 = vweird.f32 %v1977
    %vm1984 = vweird.f32 %v1978
    %vm1985 = vmor %vm1983, %vm1984
    %v1986 = vsel %vm1985, %v1978, %v1982
    %v1987 = vand.u32 2147483647, %v1977
    %vm1988 = vcmp.eq.f32.partialorder %v1987, 8.507059e+37
    %v1989 = vand.u32 %v1977, 2147483648
    %v1990 = vor.u32 1.1754944e-38, %v1989
    %v1991 = vsel %vm1988, %v1990, %v1986
    %v1992 = vmul.f32 1.0, %v1991
    %v1993 = vxor.u32 %v1971, 2147483648
    %v1994 = vmul.f32 %v1993, 1.442695
    %v1995 = vpow.pop %v1994
    %v1996 = vadd.f32 %v1995, 1.0
    %v1997 = vrcp.pop %v1996
    %v1998 = vmul.f32 %v1996, %v1997
    %v1999 = vsub.f32 1.0, %v1998
    %v2000 = vmul.f32 %v1997, %v1999
    %v2001 = vadd.f32 %v1997, %v2000
    %vm2002 = vweird.f32 %v1996
    %vm2003 = vweird.f32 %v1997
    %vm2004 = vmor %vm2002, %vm2003
    %v2005 = vsel %vm2004, %v1997, %v2001
    %v2006 = vand.u32 2147483647, %v1996
    %vm2007 = vcmp.eq.f32.partialorder %v2006, 8.507059e+37
    %v2008 = vand.u32 %v1996, 2147483648
    %v2009 = vor.u32 1.1754944e-38, %v2008
    %v2010 = vsel %vm2007, %v2009, %v2005
    %v2011 = vmul.f32 1.0, %v2010
    %v2012 = vtanh.pop %v1972
    %v2013 = vxor.u32 %v1973, 2147483648
    %v2014 = vmul.f32 %v2013, 1.442695
    %v2015 = vpow.pop %v2014
    %v2016 = vadd.f32 %v2015, 1.0
    %v2017 = vrcp.pop %v2016
    %v2018 = vmul.f32 %v2016, %v2017
    %v2019 = vsub.f32 1.0, %v2018
    %v2020 = vmul.f32 %v2017, %v2019
    %v2021 = vadd.f32 %v2017, %v2020
    %vm2022 = vweird.f32 %v2016
    %vm2023 = vweird.f32 %v2017
    %vm2024 = vmor %vm2022, %vm2023
    %v2025 = vsel %vm2024, %v2017, %v2021
    %v2026 = vand.u32 2147483647, %v2016
    %vm2027 = vcmp.eq.f32.partialorder %v2026, 8.507059e+37
    %v2028 = vand.u32 %v2016, 2147483648
    %v2029 = vor.u32 1.1754944e-38, %v2028
    %v2030 = vsel %vm2027, %v2029, %v2025
    %v2031 = vmul.f32 1.0, %v2030
    %v2032 = vmul.f32 %v2011, %v1290
    %v2033 = vmul.f32 %v1992, %v2012
    %v2034 = vadd.f32 %v2032, %v2033
    %v2035 = vtanh.pop %v2034
    %v2036 = vmul.f32 %v2031, %v2035
    %2037 = vmatpush.msra.mxu0 %v836
    %2038 = vmatpush.msra.mxu0 %v832
    %2039 = vmatpush.msra.mxu0 %v828
    %2040 = vmatpush.msra.mxu0 %v824
    %2041 = vmatpush.msra.mxu0 %v820
    %2042 = vmatpush.msra.mxu0 %v816
    %2043 = vmatpush.msra.mxu0 %v812
    %2044 = vmatpush.msra.mxu0 %v808
    %2045 = vmatpush.msra.mxu0 %v804
    %2046 = vmatpush.msra.mxu0 %v800
    %2047 = vmatpush.msra.mxu0 %v796
    %2048 = vmatpush.msra.mxu0 %v792
    %2049 = vmatpush.msra.mxu0 %v788
    %2050 = vmatpush.msra.mxu0 %v784
    %2051 = vmatpush.msra.mxu0 %v780
    %2052 = vmatpush.msra.mxu0 %v776
    %2053 = vmatmul.f32.gmra.mxu0 %v1292
    %v2054 = vpop.f32.mrf.mxu0
    %v2055 = vadd.f32 %v842, %v2054
    %2056 = vdwg.mxu0
    %2057 = vmatpush.msra.mxu0 %v837
    %2058 = vmatpush.msra.mxu0 %v833
    %2059 = vmatpush.msra.mxu0 %v829
    %2060 = vmatpush.msra.mxu0 %v825
    %2061 = vmatpush.msra.mxu0 %v821
    %2062 = vmatpush.msra.mxu0 %v817
    %2063 = vmatpush.msra.mxu0 %v813
    %2064 = vmatpush.msra.mxu0 %v809
    %2065 = vmatpush.msra.mxu0 %v805
    %2066 = vmatpush.msra.mxu0 %v801
    %2067 = vmatpush.msra.mxu0 %v797
    %2068 = vmatpush.msra.mxu0 %v793
    %2069 = vmatpush.msra.mxu0 %v789
    %2070 = vmatpush.msra.mxu0 %v785
    %2071 = vmatpush.msra.mxu0 %v781
    %2072 = vmatpush.msra.mxu0 %v777
    %2073 = vmatmul.f32.gmra.mxu0 %v1292
    %v2074 = vpop.f32.mrf.mxu0
    %v2075 = vadd.f32 %v843, %v2074
    %2076 = vdwg.mxu0
    %2077 = vmatpush.msra.mxu0 %v838
    %2078 = vmatpush.msra.mxu0 %v834
    %2079 = vmatpush.msra.mxu0 %v830
    %2080 = vmatpush.msra.mxu0 %v826
    %2081 = vmatpush.msra.mxu0 %v822
    %2082 = vmatpush.msra.mxu0 %v818
    %2083 = vmatpush.msra.mxu0 %v814
    %2084 = vmatpush.msra.mxu0 %v810
    %2085 = vmatpush.msra.mxu0 %v806
    %2086 = vmatpush.msra.mxu0 %v802
    %2087 = vmatpush.msra.mxu0 %v798
    %2088 = vmatpush.msra.mxu0 %v794
    %2089 = vmatpush.msra.mxu0 %v790
    %2090 = vmatpush.msra.mxu0 %v786
    %2091 = vmatpush.msra.mxu0 %v782
    %2092 = vmatpush.msra.mxu0 %v778
    %2093 = vmatmul.f32.gmra.mxu0 %v1292
    %v2094 = vpop.f32.mrf.mxu0
    %v2095 = vadd.f32 %v844, %v2094
    %2096 = vdwg.mxu0
    %2097 = vmatpush.msra.mxu0 %v839
    %2098 = vmatpush.msra.mxu0 %v835
    %2099 = vmatpush.msra.mxu0 %v831
    %2100 = vmatpush.msra.mxu0 %v827
    %2101 = vmatpush.msra.mxu0 %v823
    %2102 = vmatpush.msra.mxu0 %v819
    %2103 = vmatpush.msra.mxu0 %v815
    %2104 = vmatpush.msra.mxu0 %v811
    %2105 = vmatpush.msra.mxu0 %v807
    %2106 = vmatpush.msra.mxu0 %v803
    %2107 = vmatpush.msra.mxu0 %v799
    %2108 = vmatpush.msra.mxu0 %v795
    %2109 = vmatpush.msra.mxu0 %v791
    %2110 = vmatpush.msra.mxu0 %v787
    %2111 = vmatpush.msra.mxu0 %v783
    %2112 = vmatpush.msra.mxu0 %v779
    %2113 = vmatmul.f32.gmra.mxu0 %v1292
    %v2114 = vpop.f32.mrf.mxu0
    %v2115 = vadd.f32 %v845, %v2114
    %2116 = vdwg.mxu0
    %2117 = vmatpush.msra.mxu0 %v990
    %2118 = vmatpush.msra.mxu0 %v986
    %2119 = vmatpush.msra.mxu0 %v982
    %2120 = vmatpush.msra.mxu0 %v978
    %2121 = vmatpush.msra.mxu0 %v974
    %2122 = vmatpush.msra.mxu0 %v970
    %2123 = vmatpush.msra.mxu0 %v966
    %2124 = vmatpush.msra.mxu0 %v962
    %2125 = vmatpush.msra.mxu0 %v958
    %2126 = vmatpush.msra.mxu0 %v954
    %2127 = vmatpush.msra.mxu0 %v950
    %2128 = vmatpush.msra.mxu0 %v946
    %2129 = vmatpush.msra.mxu0 %v942
    %2130 = vmatpush.msra.mxu0 %v938
    %2131 = vmatpush.msra.mxu0 %v934
    %2132 = vmatpush.msra.mxu0 %v930
    %2133 = vmatmul.f32.gmra.mxu0 %v1519
    %v2134 = vpop.f32.mrf.mxu0
    %v2135 = vadd.f32 0.0, %v2134
    %2136 = vdwg.mxu0
    %2137 = vmatpush.msra.mxu0 %v991
    %2138 = vmatpush.msra.mxu0 %v987
    %2139 = vmatpush.msra.mxu0 %v983
    %2140 = vmatpush.msra.mxu0 %v979
    %2141 = vmatpush.msra.mxu0 %v975
    %2142 = vmatpush.msra.mxu0 %v971
    %2143 = vmatpush.msra.mxu0 %v967
    %2144 = vmatpush.msra.mxu0 %v963
    %2145 = vmatpush.msra.mxu0 %v959
    %2146 = vmatpush.msra.mxu0 %v955
    %2147 = vmatpush.msra.mxu0 %v951
    %2148 = vmatpush.msra.mxu0 %v947
    %2149 = vmatpush.msra.mxu0 %v943
    %2150 = vmatpush.msra.mxu0 %v939
    %2151 = vmatpush.msra.mxu0 %v935
    %2152 = vmatpush.msra.mxu0 %v931
    %2153 = vmatmul.f32.gmra.mxu0 %v1519
    %v2154 = vpop.f32.mrf.mxu0
    %v2155 = vadd.f32 0.0, %v2154
    %2156 = vdwg.mxu0
    %2157 = vmatpush.msra.mxu0 %v992
    %2158 = vmatpush.msra.mxu0 %v988
    %2159 = vmatpush.msra.mxu0 %v984
    %2160 = vmatpush.msra.mxu0 %v980
    %2161 = vmatpush.msra.mxu0 %v976
    %2162 = vmatpush.msra.mxu0 %v972
    %2163 = vmatpush.msra.mxu0 %v968
    %2164 = vmatpush.msra.mxu0 %v964
    %2165 = vmatpush.msra.mxu0 %v960
    %2166 = vmatpush.msra.mxu0 %v956
    %2167 = vmatpush.msra.mxu0 %v952
    %2168 = vmatpush.msra.mxu0 %v948
    %2169 = vmatpush.msra.mxu0 %v944
    %2170 = vmatpush.msra.mxu0 %v940
    %2171 = vmatpush.msra.mxu0 %v936
    %2172 = vmatpush.msra.mxu0 %v932
    %2173 = vmatmul.f32.gmra.mxu0 %v1519
    %v2174 = vpop.f32.mrf.mxu0
    %v2175 = vadd.f32 0.0, %v2174
    %2176 = vdwg.mxu0
    %2177 = vmatpush.msra.mxu0 %v993
    %2178 = vmatpush.msra.mxu0 %v989
    %2179 = vmatpush.msra.mxu0 %v985
    %2180 = vmatpush.msra.mxu0 %v981
    %2181 = vmatpush.msra.mxu0 %v977
    %2182 = vmatpush.msra.mxu0 %v973
    %2183 = vmatpush.msra.mxu0 %v969
    %2184 = vmatpush.msra.mxu0 %v965
    %2185 = vmatpush.msra.mxu0 %v961
    %2186 = vmatpush.msra.mxu0 %v957
    %2187 = vmatpush.msra.mxu0 %v953
    %2188 = vmatpush.msra.mxu0 %v949
    %2189 = vmatpush.msra.mxu0 %v945
    %2190 = vmatpush.msra.mxu0 %v941
    %2191 = vmatpush.msra.mxu0 %v937
    %2192 = vmatpush.msra.mxu0 %v933
    %2193 = vmatmul.f32.gmra.mxu0 %v1519
    %v2194 = vpop.f32.mrf.mxu0
    %v2195 = vadd.f32 0.0, %v2194
    %2196 = vdwg.mxu0
    %v2197 = vadd.f32 %v2055, %v2135
    %v2198 = vadd.f32 %v2075, %v2155
    %v2199 = vadd.f32 %v2095, %v2175
    %v2200 = vadd.f32 %v2115, %v2195
    %v2201 = vxor.u32 %v2197, 2147483648
    %v2202 = vmul.f32 %v2201, 1.442695
    %v2203 = vpow.pop %v2202
    %v2204 = vadd.f32 %v2203, 1.0
    %v2205 = vrcp.pop %v2204
    %v2206 = vmul.f32 %v2204, %v2205
    %v2207 = vsub.f32 1.0, %v2206
    %v2208 = vmul.f32 %v2205, %v2207
    %v2209 = vadd.f32 %v2205, %v2208
    %vm2210 = vweird.f32 %v2204
    %vm2211 = vweird.f32 %v2205
    %vm2212 = vmor %vm2210, %vm2211
    %v2213 = vsel %vm2212, %v2205, %v2209
    %v2214 = vand.u32 2147483647, %v2204
    %vm2215 = vcmp.eq.f32.partialorder %v2214, 8.507059e+37
    %v2216 = vand.u32 %v2204, 2147483648
    %v2217 = vor.u32 1.1754944e-38, %v2216
    %v2218 = vsel %vm2215, %v2217, %v2213
    %v2219 = vmul.f32 1.0, %v2218
    %v2220 = vxor.u32 %v2198, 2147483648
    %v2221 = vmul.f32 %v2220, 1.442695
    %v2222 = vpow.pop %v2221
    %v2223 = vadd.f32 %v2222, 1.0
    %v2224 = vrcp.pop %v2223
    %v2225 = vmul.f32 %v2223, %v2224
    %v2226 = vsub.f32 1.0, %v2225
    %v2227 = vmul.f32 %v2224, %v2226
    %v2228 = vadd.f32 %v2224, %v2227
    %vm2229 = vweird.f32 %v2223
    %vm2230 = vweird.f32 %v2224
    %vm2231 = vmor %vm2229, %vm2230
    %v2232 = vsel %vm2231, %v2224, %v2228
    %v2233 = vand.u32 2147483647, %v2223
    %vm2234 = vcmp.eq.f32.partialorder %v2233, 8.507059e+37
    %v2235 = vand.u32 %v2223, 2147483648
    %v2236 = vor.u32 1.1754944e-38, %v2235
    %v2237 = vsel %vm2234, %v2236, %v2232
    %v2238 = vmul.f32 1.0, %v2237
    %v2239 = vtanh.pop %v2199
    %v2240 = vxor.u32 %v2200, 2147483648
    %v2241 = vmul.f32 %v2240, 1.442695
    %v2242 = vpow.pop %v2241
    %v2243 = vadd.f32 %v2242, 1.0
    %v2244 = vrcp.pop %v2243
    %v2245 = vmul.f32 %v2243, %v2244
    %v2246 = vsub.f32 1.0, %v2245
    %v2247 = vmul.f32 %v2244, %v2246
    %v2248 = vadd.f32 %v2244, %v2247
    %vm2249 = vweird.f32 %v2243
    %vm2250 = vweird.f32 %v2244
    %vm2251 = vmor %vm2249, %vm2250
    %v2252 = vsel %vm2251, %v2244, %v2248
    %v2253 = vand.u32 2147483647, %v2243
    %vm2254 = vcmp.eq.f32.partialorder %v2253, 8.507059e+37
    %v2255 = vand.u32 %v2243, 2147483648
    %v2256 = vor.u32 1.1754944e-38, %v2255
    %v2257 = vsel %vm2254, %v2256, %v2252
    %v2258 = vmul.f32 1.0, %v2257
    %v2259 = vmul.f32 %v2238, %v1517
    %v2260 = vmul.f32 %v2219, %v2239
    %v2261 = vadd.f32 %v2259, %v2260
    %v2262 = vtanh.pop %v2261
    %v2263 = vmul.f32 %v2258, %v2262
    %2264 = vmatpush.msra.mxu0 %v1580
    %2265 = vmatpush.msra.mxu0 %v1576
    %2266 = vmatpush.msra.mxu0 %v1572
    %2267 = vmatpush.msra.mxu0 %v1568
    %2268 = vmatpush.msra.mxu0 %v1564
    %2269 = vmatpush.msra.mxu0 %v1560
    %2270 = vmatpush.msra.mxu0 %v1556
    %2271 = vmatpush.msra.mxu0 %v1552
    %2272 = vmatpush.msra.mxu0 %v1548
    %2273 = vmatpush.msra.mxu0 %v1544
    %2274 = vmatpush.msra.mxu0 %v1540
    %2275 = vmatpush.msra.mxu0 %v1536
    %2276 = vmatpush.msra.mxu0 %v1532
    %2277 = vmatpush.msra.mxu0 %v1528
    %2278 = vmatpush.msra.mxu0 %v1524
    %2279 = vmatpush.msra.mxu0 %v1520
    %2280 = vmatmul.f32.gmra.mxu0 %v1519
    %v2281 = vpop.f32.mrf.mxu0
    %v2282 = vadd.f32 %v1586, %v2281
    %2283 = vdwg.mxu0
    %2284 = vmatpush.msra.mxu0 %v1581
    %2285 = vmatpush.msra.mxu0 %v1577
    %2286 = vmatpush.msra.mxu0 %v1573
    %2287 = vmatpush.msra.mxu0 %v1569
    %2288 = vmatpush.msra.mxu0 %v1565
    %2289 = vmatpush.msra.mxu0 %v1561
    %2290 = vmatpush.msra.mxu0 %v1557
    %2291 = vmatpush.msra.mxu0 %v1553
    %2292 = vmatpush.msra.mxu0 %v1549
    %2293 = vmatpush.msra.mxu0 %v1545
    %2294 = vmatpush.msra.mxu0 %v1541
    %2295 = vmatpush.msra.mxu0 %v1537
    %2296 = vmatpush.msra.mxu0 %v1533
    %2297 = vmatpush.msra.mxu0 %v1529
    %2298 = vmatpush.msra.mxu0 %v1525
    %2299 = vmatpush.msra.mxu0 %v1521
    %2300 = vmatmul.f32.gmra.mxu0 %v1519
    %v2301 = vpop.f32.mrf.mxu0
    %v2302 = vadd.f32 %v1587, %v2301
    %2303 = vdwg.mxu0
    %2304 = vmatpush.msra.mxu0 %v1582
    %2305 = vmatpush.msra.mxu0 %v1578
    %2306 = vmatpush.msra.mxu0 %v1574
    %2307 = vmatpush.msra.mxu0 %v1570
    %2308 = vmatpush.msra.mxu0 %v1566
    %2309 = vmatpush.msra.mxu0 %v1562
    %2310 = vmatpush.msra.mxu0 %v1558
    %2311 = vmatpush.msra.mxu0 %v1554
    %2312 = vmatpush.msra.mxu0 %v1550
    %2313 = vmatpush.msra.mxu0 %v1546
    %2314 = vmatpush.msra.mxu0 %v1542
    %2315 = vmatpush.msra.mxu0 %v1538
    %2316 = vmatpush.msra.mxu0 %v1534
    %2317 = vmatpush.msra.mxu0 %v1530
    %2318 = vmatpush.msra.mxu0 %v1526
    %2319 = vmatpush.msra.mxu0 %v1522
    %2320 = vmatmul.f32.gmra.mxu0 %v1519
    %v2321 = vpop.f32.mrf.mxu0
    %v2322 = vadd.f32 %v1588, %v2321
    %2323 = vdwg.mxu0
    %2324 = vmatpush.msra.mxu0 %v1583
    %2325 = vmatpush.msra.mxu0 %v1579
    %2326 = vmatpush.msra.mxu0 %v1575
    %2327 = vmatpush.msra.mxu0 %v1571
    %2328 = vmatpush.msra.mxu0 %v1567
    %2329 = vmatpush.msra.mxu0 %v1563
    %2330 = vmatpush.msra.mxu0 %v1559
    %2331 = vmatpush.msra.mxu0 %v1555
    %2332 = vmatpush.msra.mxu0 %v1551
    %2333 = vmatpush.msra.mxu0 %v1547
    %2334 = vmatpush.msra.mxu0 %v1543
    %2335 = vmatpush.msra.mxu0 %v1539
    %2336 = vmatpush.msra.mxu0 %v1535
    %2337 = vmatpush.msra.mxu0 %v1531
    %2338 = vmatpush.msra.mxu0 %v1527
    %2339 = vmatpush.msra.mxu0 %v1523
    %2340 = vmatmul.f32.gmra.mxu0 %v1519
    %v2341 = vpop.f32.mrf.mxu0
    %v2342 = vadd.f32 %v1589, %v2341
    %2343 = vdwg.mxu0
    %2344 = vmatpush.msra.mxu0 %v1734
    %2345 = vmatpush.msra.mxu0 %v1730
    %2346 = vmatpush.msra.mxu0 %v1726
    %2347 = vmatpush.msra.mxu0 %v1722
    %2348 = vmatpush.msra.mxu0 %v1718
    %2349 = vmatpush.msra.mxu0 %v1714
    %2350 = vmatpush.msra.mxu0 %v1710
    %2351 = vmatpush.msra.mxu0 %v1706
    %2352 = vmatpush.msra.mxu0 %v1702
    %2353 = vmatpush.msra.mxu0 %v1698
    %2354 = vmatpush.msra.mxu0 %v1694
    %2355 = vmatpush.msra.mxu0 %v1690
    %2356 = vmatpush.msra.mxu0 %v1686
    %2357 = vmatpush.msra.mxu0 %v1682
    %2358 = vmatpush.msra.mxu0 %v1678
    %2359 = vmatpush.msra.mxu0 %v1674
    %2360 = vmatmul.f32.gmra.mxu0 %v1884
    %v2361 = vpop.f32.mrf.mxu0
    %v2362 = vadd.f32 0.0, %v2361
    %2363 = vdwg.mxu0
    %2364 = vmatpush.msra.mxu0 %v1735
    %2365 = vmatpush.msra.mxu0 %v1731
    %2366 = vmatpush.msra.mxu0 %v1727
    %2367 = vmatpush.msra.mxu0 %v1723
    %2368 = vmatpush.msra.mxu0 %v1719
    %2369 = vmatpush.msra.mxu0 %v1715
    %2370 = vmatpush.msra.mxu0 %v1711
    %2371 = vmatpush.msra.mxu0 %v1707
    %2372 = vmatpush.msra.mxu0 %v1703
    %2373 = vmatpush.msra.mxu0 %v1699
    %2374 = vmatpush.msra.mxu0 %v1695
    %2375 = vmatpush.msra.mxu0 %v1691
    %2376 = vmatpush.msra.mxu0 %v1687
    %2377 = vmatpush.msra.mxu0 %v1683
    %2378 = vmatpush.msra.mxu0 %v1679
    %2379 = vmatpush.msra.mxu0 %v1675
    %2380 = vmatmul.f32.gmra.mxu0 %v1884
    %v2381 = vpop.f32.mrf.mxu0
    %v2382 = vadd.f32 0.0, %v2381
    %2383 = vdwg.mxu0
    %2384 = vmatpush.msra.mxu0 %v1736
    %2385 = vmatpush.msra.mxu0 %v1732
    %2386 = vmatpush.msra.mxu0 %v1728
    %2387 = vmatpush.msra.mxu0 %v1724
    %2388 = vmatpush.msra.mxu0 %v1720
    %2389 = vmatpush.msra.mxu0 %v1716
    %2390 = vmatpush.msra.mxu0 %v1712
    %2391 = vmatpush.msra.mxu0 %v1708
    %2392 = vmatpush.msra.mxu0 %v1704
    %2393 = vmatpush.msra.mxu0 %v1700
    %2394 = vmatpush.msra.mxu0 %v1696
    %2395 = vmatpush.msra.mxu0 %v1692
    %2396 = vmatpush.msra.mxu0 %v1688
    %2397 = vmatpush.msra.mxu0 %v1684
    %2398 = vmatpush.msra.mxu0 %v1680
    %2399 = vmatpush.msra.mxu0 %v1676
    %2400 = vmatmul.f32.gmra.mxu0 %v1884
    %v2401 = vpop.f32.mrf.mxu0
    %v2402 = vadd.f32 0.0, %v2401
    %2403 = vdwg.mxu0
    %2404 = vmatpush.msra.mxu0 %v1737
    %2405 = vmatpush.msra.mxu0 %v1733
    %2406 = vmatpush.msra.mxu0 %v1729
    %2407 = vmatpush.msra.mxu0 %v1725
    %2408 = vmatpush.msra.mxu0 %v1721
    %2409 = vmatpush.msra.mxu0 %v1717
    %2410 = vmatpush.msra.mxu0 %v1713
    %2411 = vmatpush.msra.mxu0 %v1709
    %2412 = vmatpush.msra.mxu0 %v1705
    %2413 = vmatpush.msra.mxu0 %v1701
    %2414 = vmatpush.msra.mxu0 %v1697
    %2415 = vmatpush.msra.mxu0 %v1693
    %2416 = vmatpush.msra.mxu0 %v1689
    %2417 = vmatpush.msra.mxu0 %v1685
    %2418 = vmatpush.msra.mxu0 %v1681
    %2419 = vmatpush.msra.mxu0 %v1677
    %2420 = vmatmul.f32.gmra.mxu0 %v1884
    %v2421 = vpop.f32.mrf.mxu0
    %v2422 = vadd.f32 0.0, %v2421
    %2423 = vdwg.mxu0
    %v2424 = vadd.f32 %v2282, %v2362
    %v2425 = vadd.f32 %v2302, %v2382
    %v2426 = vadd.f32 %v2322, %v2402
    %v2427 = vadd.f32 %v2342, %v2422
    %v2428 = vxor.u32 %v2424, 2147483648
    %v2429 = vmul.f32 %v2428, 1.442695
    %v2430 = vpow.pop %v2429
    %v2431 = vadd.f32 %v2430, 1.0
    %v2432 = vrcp.pop %v2431
    %v2433 = vmul.f32 %v2431, %v2432
    %v2434 = vsub.f32 1.0, %v2433
    %v2435 = vmul.f32 %v2432, %v2434
    %v2436 = vadd.f32 %v2432, %v2435
    %vm2437 = vweird.f32 %v2431
    %vm2438 = vweird.f32 %v2432
    %vm2439 = vmor %vm2437, %vm2438
    %v2440 = vsel %vm2439, %v2432, %v2436
    %v2441 = vand.u32 2147483647, %v2431
    %vm2442 = vcmp.eq.f32.partialorder %v2441, 8.507059e+37
    %v2443 = vand.u32 %v2431, 2147483648
    %v2444 = vor.u32 1.1754944e-38, %v2443
    %v2445 = vsel %vm2442, %v2444, %v2440
    %v2446 = vmul.f32 1.0, %v2445
    %v2447 = vxor.u32 %v2425, 2147483648
    %v2448 = vmul.f32 %v2447, 1.442695
    %v2449 = vpow.pop %v2448
    %v2450 = vadd.f32 %v2449, 1.0
    %v2451 = vrcp.pop %v2450
    %v2452 = vmul.f32 %v2450, %v2451
    %v2453 = vsub.f32 1.0, %v2452
    %v2454 = vmul.f32 %v2451, %v2453
    %v2455 = vadd.f32 %v2451, %v2454
    %vm2456 = vweird.f32 %v2450
    %vm2457 = vweird.f32 %v2451
    %vm2458 = vmor %vm2456, %vm2457
    %v2459 = vsel %vm2458, %v2451, %v2455
    %v2460 = vand.u32 2147483647, %v2450
    %vm2461 = vcmp.eq.f32.partialorder %v2460, 8.507059e+37
    %v2462 = vand.u32 %v2450, 2147483648
    %v2463 = vor.u32 1.1754944e-38, %v2462
    %v2464 = vsel %vm2461, %v2463, %v2459
    %v2465 = vmul.f32 1.0, %v2464
    %v2466 = vtanh.pop %v2426
    %v2467 = vxor.u32 %v2427, 2147483648
    %v2468 = vmul.f32 %v2467, 1.442695
    %v2469 = vpow.pop %v2468
    %v2470 = vadd.f32 %v2469, 1.0
    %v2471 = vrcp.pop %v2470
    %v2472 = vmul.f32 %v2470, %v2471
    %v2473 = vsub.f32 1.0, %v2472
    %v2474 = vmul.f32 %v2471, %v2473
    %v2475 = vadd.f32 %v2471, %v2474
    %vm2476 = vweird.f32 %v2470
    %vm2477 = vweird.f32 %v2471
    %vm2478 = vmor %vm2476, %vm2477
    %v2479 = vsel %vm2478, %v2471, %v2475
    %v2480 = vand.u32 2147483647, %v2470
    %vm2481 = vcmp.eq.f32.partialorder %v2480, 8.507059e+37
    %v2482 = vand.u32 %v2470, 2147483648
    %v2483 = vor.u32 1.1754944e-38, %v2482
    %v2484 = vsel %vm2481, %v2483, %v2479
    %v2485 = vmul.f32 1.0, %v2484
    %v2486 = vmul.f32 %v2465, %v1882
    %v2487 = vmul.f32 %v2446, %v2466
    %v2488 = vadd.f32 %v2486, %v2487
    %v2489 = vtanh.pop %v2488
    %v2490 = vmul.f32 %v2485, %v2489
    %v2491 = vld [vmem:[#allocation14] sm:$0xff]
    %v2492 = vld [vmem:[#allocation14 + $0x8] sm:$0xff]
    %v2493 = vld [vmem:[#allocation14 + $0x10] sm:$0xff]
    %v2494 = vld [vmem:[#allocation14 + $0x18] sm:$0xff]
    %v2495 = vld [vmem:[#allocation14 + $0x20] sm:$0xff]
    %v2496 = vld [vmem:[#allocation14 + $0x28] sm:$0xff]
    %v2497 = vld [vmem:[#allocation14 + $0x30] sm:$0xff]
    %v2498 = vld [vmem:[#allocation14 + $0x38] sm:$0xff]
    %v2499 = vld [vmem:[#allocation14 + $0x40] sm:$0xff]
    %v2500 = vld [vmem:[#allocation14 + $0x48] sm:$0xff]
    %v2501 = vld [vmem:[#allocation14 + $0x50] sm:$0xff]
    %v2502 = vld [vmem:[#allocation14 + $0x58] sm:$0xff]
    %v2503 = vld [vmem:[#allocation14 + $0x60] sm:$0xff]
    %v2504 = vld [vmem:[#allocation14 + $0x68] sm:$0xff]
    %v2505 = vld [vmem:[#allocation14 + $0x70] sm:$0xff]
    %v2506 = vld [vmem:[#allocation14 + $0x78] sm:$0xff]
    %v2507 = vld [vmem:[#allocation14 + $0x80] sm:$0xff]
    %v2508 = vld [vmem:[#allocation14 + $0x88] sm:$0xff]
    %v2509 = vld [vmem:[#allocation14 + $0x90] sm:$0xff]
    %v2510 = vld [vmem:[#allocation14 + $0x98] sm:$0xff]
    %v2511 = vld [vmem:[#allocation14 + $0xa0] sm:$0xff]
    %v2512 = vld [vmem:[#allocation14 + $0xa8] sm:$0xff]
    %v2513 = vld [vmem:[#allocation14 + $0xb0] sm:$0xff]
    %v2514 = vld [vmem:[#allocation14 + $0xb8] sm:$0xff]
    %v2515 = vld [vmem:[#allocation14 + $0xc0] sm:$0xff]
    %v2516 = vld [vmem:[#allocation14 + $0xc8] sm:$0xff]
    %v2517 = vld [vmem:[#allocation14 + $0xd0] sm:$0xff]
    %v2518 = vld [vmem:[#allocation14 + $0xd8] sm:$0xff]
    %v2519 = vld [vmem:[#allocation14 + $0xe0] sm:$0xff]
    %v2520 = vld [vmem:[#allocation14 + $0xe8] sm:$0xff]
    %v2521 = vld [vmem:[#allocation14 + $0xf0] sm:$0xff]
    %v2522 = vld [vmem:[#allocation14 + $0xf8] sm:$0xff]
    %v2523 = vld [vmem:[#allocation14 + $0x100] sm:$0xff]
    %v2524 = vld [vmem:[#allocation14 + $0x108] sm:$0xff]
    %v2525 = vld [vmem:[#allocation14 + $0x110] sm:$0xff]
    %v2526 = vld [vmem:[#allocation14 + $0x118] sm:$0xff]
    %v2527 = vld [vmem:[#allocation14 + $0x120] sm:$0xff]
    %v2528 = vld [vmem:[#allocation14 + $0x128] sm:$0xff]
    %v2529 = vld [vmem:[#allocation14 + $0x130] sm:$0xff]
    %v2530 = vld [vmem:[#allocation14 + $0x138] sm:$0xff]
    %v2531 = vld [vmem:[#allocation14 + $0x140] sm:$0xff]
    %v2532 = vld [vmem:[#allocation14 + $0x148] sm:$0xff]
    %v2533 = vld [vmem:[#allocation14 + $0x150] sm:$0xff]
    %v2534 = vld [vmem:[#allocation14 + $0x158] sm:$0xff]
    %v2535 = vld [vmem:[#allocation14 + $0x160] sm:$0xff]
    %v2536 = vld [vmem:[#allocation14 + $0x168] sm:$0xff]
    %v2537 = vld [vmem:[#allocation14 + $0x170] sm:$0xff]
    %v2538 = vld [vmem:[#allocation14 + $0x178] sm:$0xff]
    %v2539 = vld [vmem:[#allocation14 + $0x180] sm:$0xff]
    %v2540 = vld [vmem:[#allocation14 + $0x188] sm:$0xff]
    %v2541 = vld [vmem:[#allocation14 + $0x190] sm:$0xff]
    %v2542 = vld [vmem:[#allocation14 + $0x198] sm:$0xff]
    %v2543 = vld [vmem:[#allocation14 + $0x1a0] sm:$0xff]
    %v2544 = vld [vmem:[#allocation14 + $0x1a8] sm:$0xff]
    %v2545 = vld [vmem:[#allocation14 + $0x1b0] sm:$0xff]
    %v2546 = vld [vmem:[#allocation14 + $0x1b8] sm:$0xff]
    %v2547 = vld [vmem:[#allocation14 + $0x1c0] sm:$0xff]
    %v2548 = vld [vmem:[#allocation14 + $0x1c8] sm:$0xff]
    %v2549 = vld [vmem:[#allocation14 + $0x1d0] sm:$0xff]
    %v2550 = vld [vmem:[#allocation14 + $0x1d8] sm:$0xff]
    %v2551 = vld [vmem:[#allocation14 + $0x1e0] sm:$0xff]
    %v2552 = vld [vmem:[#allocation14 + $0x1e8] sm:$0xff]
    %v2553 = vld [vmem:[#allocation14 + $0x1f0] sm:$0xff]
    %v2554 = vld [vmem:[#allocation14 + $0x1f8] sm:$0xff]
    %v2555 = vld [vmem:[%s12] sm:$0xf]
    %v2557 = vperm.slane %v2555, 0
    %v2558 = vperm.slane %v2555, 1
    %v2559 = vperm.slane %v2555, 2
    %v2560 = vperm.slane %v2555, 3
    %2565 = vmatpush.msra.mxu0 %v2551
    %2566 = vmatpush.msra.mxu0 %v2547
    %2567 = vmatpush.msra.mxu0 %v2543
    %2568 = vmatpush.msra.mxu0 %v2539
    %2569 = vmatpush.msra.mxu0 %v2535
    %2570 = vmatpush.msra.mxu0 %v2531
    %2571 = vmatpush.msra.mxu0 %v2527
    %2572 = vmatpush.msra.mxu0 %v2523
    %2573 = vmatpush.msra.mxu0 %v2519
    %2574 = vmatpush.msra.mxu0 %v2515
    %2575 = vmatpush.msra.mxu0 %v2511
    %2576 = vmatpush.msra.mxu0 %v2507
    %2577 = vmatpush.msra.mxu0 %v2503
    %2578 = vmatpush.msra.mxu0 %v2499
    %2579 = vmatpush.msra.mxu0 %v2495
    %2580 = vmatpush.msra.mxu0 %v2491
    %2581 = vmatmul.f32.gmra.mxu0 %v1884
    %v2582 = vpop.f32.mrf.mxu0
    %v2583 = vadd.f32 %v2557, %v2582
    %2584 = vdwg.mxu0
    %2585 = vmatpush.msra.mxu0 %v2552
    %2586 = vmatpush.msra.mxu0 %v2548
    %2587 = vmatpush.msra.mxu0 %v2544
    %2588 = vmatpush.msra.mxu0 %v2540
    %2589 = vmatpush.msra.mxu0 %v2536
    %2590 = vmatpush.msra.mxu0 %v2532
    %2591 = vmatpush.msra.mxu0 %v2528
    %2592 = vmatpush.msra.mxu0 %v2524
    %2593 = vmatpush.msra.mxu0 %v2520
    %2594 = vmatpush.msra.mxu0 %v2516
    %2595 = vmatpush.msra.mxu0 %v2512
    %2596 = vmatpush.msra.mxu0 %v2508
    %2597 = vmatpush.msra.mxu0 %v2504
    %2598 = vmatpush.msra.mxu0 %v2500
    %2599 = vmatpush.msra.mxu0 %v2496
    %2600 = vmatpush.msra.mxu0 %v2492
    %2601 = vmatmul.f32.gmra.mxu0 %v1884
    %v2602 = vpop.f32.mrf.mxu0
    %v2603 = vadd.f32 %v2558, %v2602
    %2604 = vdwg.mxu0
    %2605 = vmatpush.msra.mxu0 %v2553
    %2606 = vmatpush.msra.mxu0 %v2549
    %2607 = vmatpush.msra.mxu0 %v2545
    %2608 = vmatpush.msra.mxu0 %v2541
    %2609 = vmatpush.msra.mxu0 %v2537
    %2610 = vmatpush.msra.mxu0 %v2533
    %2611 = vmatpush.msra.mxu0 %v2529
    %2612 = vmatpush.msra.mxu0 %v2525
    %2613 = vmatpush.msra.mxu0 %v2521
    %2614 = vmatpush.msra.mxu0 %v2517
    %2615 = vmatpush.msra.mxu0 %v2513
    %2616 = vmatpush.msra.mxu0 %v2509
    %2617 = vmatpush.msra.mxu0 %v2505
    %2618 = vmatpush.msra.mxu0 %v2501
    %2619 = vmatpush.msra.mxu0 %v2497
    %2620 = vmatpush.msra.mxu0 %v2493
    %2621 = vmatmul.f32.gmra.mxu0 %v1884
    %v2622 = vpop.f32.mrf.mxu0
    %v2623 = vadd.f32 %v2559, %v2622
    %2624 = vdwg.mxu0
    %2625 = vmatpush.msra.mxu0 %v2554
    %2626 = vmatpush.msra.mxu0 %v2550
    %2627 = vmatpush.msra.mxu0 %v2546
    %2628 = vmatpush.msra.mxu0 %v2542
    %2629 = vmatpush.msra.mxu0 %v2538
    %2630 = vmatpush.msra.mxu0 %v2534
    %2631 = vmatpush.msra.mxu0 %v2530
    %2632 = vmatpush.msra.mxu0 %v2526
    %2633 = vmatpush.msra.mxu0 %v2522
    %2634 = vmatpush.msra.mxu0 %v2518
    %2635 = vmatpush.msra.mxu0 %v2514
    %2636 = vmatpush.msra.mxu0 %v2510
    %2637 = vmatpush.msra.mxu0 %v2506
    %2638 = vmatpush.msra.mxu0 %v2502
    %2639 = vmatpush.msra.mxu0 %v2498
    %2640 = vmatpush.msra.mxu0 %v2494
    %2641 = vmatmul.f32.gmra.mxu0 %v1884
    %v2642 = vpop.f32.mrf.mxu0
    %v2643 = vadd.f32 %v2560, %v2642
    %2644 = vdwg.mxu0
    %v2645 = vld [vmem:[#allocation15] sm:$0xff]
    %v2646 = vld [vmem:[#allocation15 + $0x8] sm:$0xff]
    %v2647 = vld [vmem:[#allocation15 + $0x10] sm:$0xff]
    %v2648 = vld [vmem:[#allocation15 + $0x18] sm:$0xff]
    %v2649 = vld [vmem:[#allocation15 + $0x20] sm:$0xff]
    %v2650 = vld [vmem:[#allocation15 + $0x28] sm:$0xff]
    %v2651 = vld [vmem:[#allocation15 + $0x30] sm:$0xff]
    %v2652 = vld [vmem:[#allocation15 + $0x38] sm:$0xff]
    %v2653 = vld [vmem:[#allocation15 + $0x40] sm:$0xff]
    %v2654 = vld [vmem:[#allocation15 + $0x48] sm:$0xff]
    %v2655 = vld [vmem:[#allocation15 + $0x50] sm:$0xff]
    %v2656 = vld [vmem:[#allocation15 + $0x58] sm:$0xff]
    %v2657 = vld [vmem:[#allocation15 + $0x60] sm:$0xff]
    %v2658 = vld [vmem:[#allocation15 + $0x68] sm:$0xff]
    %v2659 = vld [vmem:[#allocation15 + $0x70] sm:$0xff]
    %v2660 = vld [vmem:[#allocation15 + $0x78] sm:$0xff]
    %v2661 = vld [vmem:[#allocation15 + $0x80] sm:$0xff]
    %v2662 = vld [vmem:[#allocation15 + $0x88] sm:$0xff]
    %v2663 = vld [vmem:[#allocation15 + $0x90] sm:$0xff]
    %v2664 = vld [vmem:[#allocation15 + $0x98] sm:$0xff]
    %v2665 = vld [vmem:[#allocation15 + $0xa0] sm:$0xff]
    %v2666 = vld [vmem:[#allocation15 + $0xa8] sm:$0xff]
    %v2667 = vld [vmem:[#allocation15 + $0xb0] sm:$0xff]
    %v2668 = vld [vmem:[#allocation15 + $0xb8] sm:$0xff]
    %v2669 = vld [vmem:[#allocation15 + $0xc0] sm:$0xff]
    %v2670 = vld [vmem:[#allocation15 + $0xc8] sm:$0xff]
    %v2671 = vld [vmem:[#allocation15 + $0xd0] sm:$0xff]
    %v2672 = vld [vmem:[#allocation15 + $0xd8] sm:$0xff]
    %v2673 = vld [vmem:[#allocation15 + $0xe0] sm:$0xff]
    %v2674 = vld [vmem:[#allocation15 + $0xe8] sm:$0xff]
    %v2675 = vld [vmem:[#allocation15 + $0xf0] sm:$0xff]
    %v2676 = vld [vmem:[#allocation15 + $0xf8] sm:$0xff]
    %v2677 = vld [vmem:[#allocation15 + $0x100] sm:$0xff]
    %v2678 = vld [vmem:[#allocation15 + $0x108] sm:$0xff]
    %v2679 = vld [vmem:[#allocation15 + $0x110] sm:$0xff]
    %v2680 = vld [vmem:[#allocation15 + $0x118] sm:$0xff]
    %v2681 = vld [vmem:[#allocation15 + $0x120] sm:$0xff]
    %v2682 = vld [vmem:[#allocation15 + $0x128] sm:$0xff]
    %v2683 = vld [vmem:[#allocation15 + $0x130] sm:$0xff]
    %v2684 = vld [vmem:[#allocation15 + $0x138] sm:$0xff]
    %v2685 = vld [vmem:[#allocation15 + $0x140] sm:$0xff]
    %v2686 = vld [vmem:[#allocation15 + $0x148] sm:$0xff]
    %v2687 = vld [vmem:[#allocation15 + $0x150] sm:$0xff]
    %v2688 = vld [vmem:[#allocation15 + $0x158] sm:$0xff]
    %v2689 = vld [vmem:[#allocation15 + $0x160] sm:$0xff]
    %v2690 = vld [vmem:[#allocation15 + $0x168] sm:$0xff]
    %v2691 = vld [vmem:[#allocation15 + $0x170] sm:$0xff]
    %v2692 = vld [vmem:[#allocation15 + $0x178] sm:$0xff]
    %v2693 = vld [vmem:[#allocation15 + $0x180] sm:$0xff]
    %v2694 = vld [vmem:[#allocation15 + $0x188] sm:$0xff]
    %v2695 = vld [vmem:[#allocation15 + $0x190] sm:$0xff]
    %v2696 = vld [vmem:[#allocation15 + $0x198] sm:$0xff]
    %v2697 = vld [vmem:[#allocation15 + $0x1a0] sm:$0xff]
    %v2698 = vld [vmem:[#allocation15 + $0x1a8] sm:$0xff]
    %v2699 = vld [vmem:[#allocation15 + $0x1b0] sm:$0xff]
    %v2700 = vld [vmem:[#allocation15 + $0x1b8] sm:$0xff]
    %v2701 = vld [vmem:[#allocation15 + $0x1c0] sm:$0xff]
    %v2702 = vld [vmem:[#allocation15 + $0x1c8] sm:$0xff]
    %v2703 = vld [vmem:[#allocation15 + $0x1d0] sm:$0xff]
    %v2704 = vld [vmem:[#allocation15 + $0x1d8] sm:$0xff]
    %v2705 = vld [vmem:[#allocation15 + $0x1e0] sm:$0xff]
    %v2706 = vld [vmem:[#allocation15 + $0x1e8] sm:$0xff]
    %v2707 = vld [vmem:[#allocation15 + $0x1f0] sm:$0xff]
    %v2708 = vld [vmem:[#allocation15 + $0x1f8] sm:$0xff]
    %2709 = vmatpush.msra.mxu0 %v2705
    %2710 = vmatpush.msra.mxu0 %v2701
    %2711 = vmatpush.msra.mxu0 %v2697
    %2712 = vmatpush.msra.mxu0 %v2693
    %2713 = vmatpush.msra.mxu0 %v2689
    %2714 = vmatpush.msra.mxu0 %v2685
    %2715 = vmatpush.msra.mxu0 %v2681
    %2716 = vmatpush.msra.mxu0 %v2677
    %2717 = vmatpush.msra.mxu0 %v2673
    %2718 = vmatpush.msra.mxu0 %v2669
    %2719 = vmatpush.msra.mxu0 %v2665
    %2720 = vmatpush.msra.mxu0 %v2661
    %2721 = vmatpush.msra.mxu0 %v2657
    %2722 = vmatpush.msra.mxu0 %v2653
    %2723 = vmatpush.msra.mxu0 %v2649
    %2724 = vmatpush.msra.mxu0 %v2645
    %2725 = vmatmul.f32.gmra.mxu0 0.0
    %v2726 = vpop.f32.mrf.mxu0
    %v2727 = vadd.f32 0.0, %v2726
    %2728 = vdwg.mxu0
    %2729 = vmatpush.msra.mxu0 %v2706
    %2730 = vmatpush.msra.mxu0 %v2702
    %2731 = vmatpush.msra.mxu0 %v2698
    %2732 = vmatpush.msra.mxu0 %v2694
    %2733 = vmatpush.msra.mxu0 %v2690
    %2734 = vmatpush.msra.mxu0 %v2686
    %2735 = vmatpush.msra.mxu0 %v2682
    %2736 = vmatpush.msra.mxu0 %v2678
    %2737 = vmatpush.msra.mxu0 %v2674
    %2738 = vmatpush.msra.mxu0 %v2670
    %2739 = vmatpush.msra.mxu0 %v2666
    %2740 = vmatpush.msra.mxu0 %v2662
    %2741 = vmatpush.msra.mxu0 %v2658
    %2742 = vmatpush.msra.mxu0 %v2654
    %2743 = vmatpush.msra.mxu0 %v2650
    %2744 = vmatpush.msra.mxu0 %v2646
    %2745 = vmatmul.f32.gmra.mxu0 0.0
    %v2746 = vpop.f32.mrf.mxu0
    %v2747 = vadd.f32 0.0, %v2746
    %2748 = vdwg.mxu0
    %2749 = vmatpush.msra.mxu0 %v2707
    %2750 = vmatpush.msra.mxu0 %v2703
    %2751 = vmatpush.msra.mxu0 %v2699
    %2752 = vmatpush.msra.mxu0 %v2695
    %2753 = vmatpush.msra.mxu0 %v2691
    %2754 = vmatpush.msra.mxu0 %v2687
    %2755 = vmatpush.msra.mxu0 %v2683
    %2756 = vmatpush.msra.mxu0 %v2679
    %2757 = vmatpush.msra.mxu0 %v2675
    %2758 = vmatpush.msra.mxu0 %v2671
    %2759 = vmatpush.msra.mxu0 %v2667
    %2760 = vmatpush.msra.mxu0 %v2663
    %2761 = vmatpush.msra.mxu0 %v2659
    %2762 = vmatpush.msra.mxu0 %v2655
    %2763 = vmatpush.msra.mxu0 %v2651
    %2764 = vmatpush.msra.mxu0 %v2647
    %2765 = vmatmul.f32.gmra.mxu0 0.0
    %v2766 = vpop.f32.mrf.mxu0
    %v2767 = vadd.f32 0.0, %v2766
    %2768 = vdwg.mxu0
    %2769 = vmatpush.msra.mxu0 %v2708
    %2770 = vmatpush.msra.mxu0 %v2704
    %2771 = vmatpush.msra.mxu0 %v2700
    %2772 = vmatpush.msra.mxu0 %v2696
    %2773 = vmatpush.msra.mxu0 %v2692
    %2774 = vmatpush.msra.mxu0 %v2688
    %2775 = vmatpush.msra.mxu0 %v2684
    %2776 = vmatpush.msra.mxu0 %v2680
    %2777 = vmatpush.msra.mxu0 %v2676
    %2778 = vmatpush.msra.mxu0 %v2672
    %2779 = vmatpush.msra.mxu0 %v2668
    %2780 = vmatpush.msra.mxu0 %v2664
    %2781 = vmatpush.msra.mxu0 %v2660
    %2782 = vmatpush.msra.mxu0 %v2656
    %2783 = vmatpush.msra.mxu0 %v2652
    %2784 = vmatpush.msra.mxu0 %v2648
    %2785 = vmatmul.f32.gmra.mxu0 0.0
    %v2786 = vpop.f32.mrf.mxu0
    %v2787 = vadd.f32 0.0, %v2786
    %2788 = vdwg.mxu0
    %v2789 = vadd.f32 %v2583, %v2727
    %v2790 = vadd.f32 %v2603, %v2747
    %v2791 = vadd.f32 %v2623, %v2767
    %v2792 = vadd.f32 %v2643, %v2787
    %v2793 = vxor.u32 %v2789, 2147483648
    %v2794 = vmul.f32 %v2793, 1.442695
    %v2795 = vpow.pop %v2794
    %v2796 = vadd.f32 %v2795, 1.0
    %v2797 = vrcp.pop %v2796
    %v2798 = vmul.f32 %v2796, %v2797
    %v2799 = vsub.f32 1.0, %v2798
    %v2800 = vmul.f32 %v2797, %v2799
    %v2801 = vadd.f32 %v2797, %v2800
    %vm2802 = vweird.f32 %v2796
    %vm2803 = vweird.f32 %v2797
    %vm2804 = vmor %vm2802, %vm2803
    %v2805 = vsel %vm2804, %v2797, %v2801
    %v2806 = vand.u32 2147483647, %v2796
    %vm2807 = vcmp.eq.f32.partialorder %v2806, 8.507059e+37
    %v2808 = vand.u32 %v2796, 2147483648
    %v2809 = vor.u32 1.1754944e-38, %v2808
    %v2810 = vsel %vm2807, %v2809, %v2805
    %v2811 = vmul.f32 1.0, %v2810
    %v2812 = vxor.u32 %v2790, 2147483648
    %v2813 = vmul.f32 %v2812, 1.442695
    %v2814 = vpow.pop %v2813
    %v2815 = vadd.f32 %v2814, 1.0
    %v2816 = vrcp.pop %v2815
    %v2817 = vmul.f32 %v2815, %v2816
    %v2818 = vsub.f32 1.0, %v2817
    %v2819 = vmul.f32 %v2816, %v2818
    %v2820 = vadd.f32 %v2816, %v2819
    %vm2821 = vweird.f32 %v2815
    %vm2822 = vweird.f32 %v2816
    %vm2823 = vmor %vm2821, %vm2822
    %v2824 = vsel %vm2823, %v2816, %v2820
    %v2825 = vand.u32 2147483647, %v2815
    %vm2826 = vcmp.eq.f32.partialorder %v2825, 8.507059e+37
    %v2827 = vand.u32 %v2815, 2147483648
    %v2828 = vor.u32 1.1754944e-38, %v2827
    %v2829 = vsel %vm2826, %v2828, %v2824
    %v2830 = vmul.f32 1.0, %v2829
    %v2831 = vtanh.pop %v2791
    %v2832 = vxor.u32 %v2792, 2147483648
    %v2833 = vmul.f32 %v2832, 1.442695
    %v2834 = vpow.pop %v2833
    %v2835 = vadd.f32 %v2834, 1.0
    %v2836 = vrcp.pop %v2835
    %v2837 = vmul.f32 %v2835, %v2836
    %v2838 = vsub.f32 1.0, %v2837
    %v2839 = vmul.f32 %v2836, %v2838
    %v2840 = vadd.f32 %v2836, %v2839
    %vm2841 = vweird.f32 %v2835
    %vm2842 = vweird.f32 %v2836
    %vm2843 = vmor %vm2841, %vm2842
    %v2844 = vsel %vm2843, %v2836, %v2840
    %v2845 = vand.u32 2147483647, %v2835
    %vm2846 = vcmp.eq.f32.partialorder %v2845, 8.507059e+37
    %v2847 = vand.u32 %v2835, 2147483648
    %v2848 = vor.u32 1.1754944e-38, %v2847
    %v2849 = vsel %vm2846, %v2848, %v2844
    %v2850 = vmul.f32 1.0, %v2849
    %v2851 = vmul.f32 %v2830, 0.0
    %v2852 = vmul.f32 %v2811, %v2831
    %v2853 = vadd.f32 %v2851, %v2852
    %v2854 = vtanh.pop %v2853
    %v2855 = vmul.f32 %v2850, %v2854
    %s2856 = scalar_lea.vmem [#allocation2], 128
    %v2857 = vld [vmem:[%s2856] sm:$0xff]
    %v2858 = vld [vmem:[%s2856 + $0x8] sm:$0xff]
    %v2859 = vld [vmem:[%s2856 + $0x10] sm:$0xff]
    %v2860 = vld [vmem:[%s2856 + $0x18] sm:$0xff]
    %2861 = vmatpush.msra.mxu0 %v473
    %2862 = vmatpush.msra.mxu0 %v469
    %2863 = vmatpush.msra.mxu0 %v465
    %2864 = vmatpush.msra.mxu0 %v461
    %2865 = vmatpush.msra.mxu0 %v457
    %2866 = vmatpush.msra.mxu0 %v453
    %2867 = vmatpush.msra.mxu0 %v449
    %2868 = vmatpush.msra.mxu0 %v445
    %2869 = vmatpush.msra.mxu0 %v441
    %2870 = vmatpush.msra.mxu0 %v437
    %2871 = vmatpush.msra.mxu0 %v433
    %2872 = vmatpush.msra.mxu0 %v429
    %2873 = vmatpush.msra.mxu0 %v425
    %2874 = vmatpush.msra.mxu0 %v421
    %2875 = vmatpush.msra.mxu0 %v417
    %2876 = vmatpush.msra.mxu0 %v413
    %2877 = vmatmul.f32.gmra.mxu0 %v2036
    %v2878 = vpop.f32.mrf.mxu0
    %v2879 = vadd.f32 0.0, %v2878
    %2880 = vdwg.mxu0
    %2881 = vmatpush.msra.mxu0 %v474
    %2882 = vmatpush.msra.mxu0 %v470
    %2883 = vmatpush.msra.mxu0 %v466
    %2884 = vmatpush.msra.mxu0 %v462
    %2885 = vmatpush.msra.mxu0 %v458
    %2886 = vmatpush.msra.mxu0 %v454
    %2887 = vmatpush.msra.mxu0 %v450
    %2888 = vmatpush.msra.mxu0 %v446
    %2889 = vmatpush.msra.mxu0 %v442
    %2890 = vmatpush.msra.mxu0 %v438
    %2891 = vmatpush.msra.mxu0 %v434
    %2892 = vmatpush.msra.mxu0 %v430
    %2893 = vmatpush.msra.mxu0 %v426
    %2894 = vmatpush.msra.mxu0 %v422
    %2895 = vmatpush.msra.mxu0 %v418
    %2896 = vmatpush.msra.mxu0 %v414
    %2897 = vmatmul.f32.gmra.mxu0 %v2036
    %v2898 = vpop.f32.mrf.mxu0
    %v2899 = vadd.f32 0.0, %v2898
    %2900 = vdwg.mxu0
    %2901 = vmatpush.msra.mxu0 %v475
    %2902 = vmatpush.msra.mxu0 %v471
    %2903 = vmatpush.msra.mxu0 %v467
    %2904 = vmatpush.msra.mxu0 %v463
    %2905 = vmatpush.msra.mxu0 %v459
    %2906 = vmatpush.msra.mxu0 %v455
    %2907 = vmatpush.msra.mxu0 %v451
    %2908 = vmatpush.msra.mxu0 %v447
    %2909 = vmatpush.msra.mxu0 %v443
    %2910 = vmatpush.msra.mxu0 %v439
    %2911 = vmatpush.msra.mxu0 %v435
    %2912 = vmatpush.msra.mxu0 %v431
    %2913 = vmatpush.msra.mxu0 %v427
    %2914 = vmatpush.msra.mxu0 %v423
    %2915 = vmatpush.msra.mxu0 %v419
    %2916 = vmatpush.msra.mxu0 %v415
    %2917 = vmatmul.f32.gmra.mxu0 %v2036
    %v2918 = vpop.f32.mrf.mxu0
    %v2919 = vadd.f32 0.0, %v2918
    %2920 = vdwg.mxu0
    %2921 = vmatpush.msra.mxu0 %v476
    %2922 = vmatpush.msra.mxu0 %v472
    %2923 = vmatpush.msra.mxu0 %v468
    %2924 = vmatpush.msra.mxu0 %v464
    %2925 = vmatpush.msra.mxu0 %v460
    %2926 = vmatpush.msra.mxu0 %v456
    %2927 = vmatpush.msra.mxu0 %v452
    %2928 = vmatpush.msra.mxu0 %v448
    %2929 = vmatpush.msra.mxu0 %v444
    %2930 = vmatpush.msra.mxu0 %v440
    %2931 = vmatpush.msra.mxu0 %v436
    %2932 = vmatpush.msra.mxu0 %v432
    %2933 = vmatpush.msra.mxu0 %v428
    %2934 = vmatpush.msra.mxu0 %v424
    %2935 = vmatpush.msra.mxu0 %v420
    %2936 = vmatpush.msra.mxu0 %v416
    %2937 = vmatmul.f32.gmra.mxu0 %v2036
    %v2938 = vpop.f32.mrf.mxu0
    %v2939 = vadd.f32 0.0, %v2938
    %2940 = vdwg.mxu0
    %v2941 = vadd.f32 %v2857, %v2879
    %v2942 = vadd.f32 %v2858, %v2899
    %v2943 = vadd.f32 %v2859, %v2919
    %v2944 = vadd.f32 %v2860, %v2939
    %v2945 = vxor.u32 %v2941, 2147483648
    %v2946 = vmul.f32 %v2945, 1.442695
    %v2947 = vpow.pop %v2946
    %v2948 = vadd.f32 %v2947, 1.0
    %v2949 = vrcp.pop %v2948
    %v2950 = vmul.f32 %v2948, %v2949
    %v2951 = vsub.f32 1.0, %v2950
    %v2952 = vmul.f32 %v2949, %v2951
    %v2953 = vadd.f32 %v2949, %v2952
    %vm2954 = vweird.f32 %v2948
    %vm2955 = vweird.f32 %v2949
    %vm2956 = vmor %vm2954, %vm2955
    %v2957 = vsel %vm2956, %v2949, %v2953
    %v2958 = vand.u32 2147483647, %v2948
    %vm2959 = vcmp.eq.f32.partialorder %v2958, 8.507059e+37
    %v2960 = vand.u32 %v2948, 2147483648
    %v2961 = vor.u32 1.1754944e-38, %v2960
    %v2962 = vsel %vm2959, %v2961, %v2957
    %v2963 = vmul.f32 1.0, %v2962
    %v2964 = vxor.u32 %v2942, 2147483648
    %v2965 = vmul.f32 %v2964, 1.442695
    %v2966 = vpow.pop %v2965
    %v2967 = vadd.f32 %v2966, 1.0
    %v2968 = vrcp.pop %v2967
    %v2969 = vmul.f32 %v2967, %v2968
    %v2970 = vsub.f32 1.0, %v2969
    %v2971 = vmul.f32 %v2968, %v2970
    %v2972 = vadd.f32 %v2968, %v2971
    %vm2973 = vweird.f32 %v2967
    %vm2974 = vweird.f32 %v2968
    %vm2975 = vmor %vm2973, %vm2974
    %v2976 = vsel %vm2975, %v2968, %v2972
    %v2977 = vand.u32 2147483647, %v2967
    %vm2978 = vcmp.eq.f32.partialorder %v2977, 8.507059e+37
    %v2979 = vand.u32 %v2967, 2147483648
    %v2980 = vor.u32 1.1754944e-38, %v2979
    %v2981 = vsel %vm2978, %v2980, %v2976
    %v2982 = vmul.f32 1.0, %v2981
    %v2983 = vtanh.pop %v2943
    %v2984 = vxor.u32 %v2944, 2147483648
    %v2985 = vmul.f32 %v2984, 1.442695
    %v2986 = vpow.pop %v2985
    %v2987 = vadd.f32 %v2986, 1.0
    %v2988 = vrcp.pop %v2987
    %v2989 = vmul.f32 %v2987, %v2988
    %v2990 = vsub.f32 1.0, %v2989
    %v2991 = vmul.f32 %v2988, %v2990
    %v2992 = vadd.f32 %v2988, %v2991
    %vm2993 = vweird.f32 %v2987
    %vm2994 = vweird.f32 %v2988
    %vm2995 = vmor %vm2993, %vm2994
    %v2996 = vsel %vm2995, %v2988, %v2992
    %v2997 = vand.u32 2147483647, %v2987
    %vm2998 = vcmp.eq.f32.partialorder %v2997, 8.507059e+37
    %v2999 = vand.u32 %v2987, 2147483648
    %v3000 = vor.u32 1.1754944e-38, %v2999
    %v3001 = vsel %vm2998, %v3000, %v2996
    %v3002 = vmul.f32 1.0, %v3001
    %v3003 = vmul.f32 %v2982, %v2034
    %v3004 = vmul.f32 %v2963, %v2983
    %v3005 = vadd.f32 %v3003, %v3004
    %v3006 = vtanh.pop %v3005
    %v3007 = vmul.f32 %v3002, %v3006
    %3008 = vmatpush.msra.mxu0 %v836
    %3009 = vmatpush.msra.mxu0 %v832
    %3010 = vmatpush.msra.mxu0 %v828
    %3011 = vmatpush.msra.mxu0 %v824
    %3012 = vmatpush.msra.mxu0 %v820
    %3013 = vmatpush.msra.mxu0 %v816
    %3014 = vmatpush.msra.mxu0 %v812
    %3015 = vmatpush.msra.mxu0 %v808
    %3016 = vmatpush.msra.mxu0 %v804
    %3017 = vmatpush.msra.mxu0 %v800
    %3018 = vmatpush.msra.mxu0 %v796
    %3019 = vmatpush.msra.mxu0 %v792
    %3020 = vmatpush.msra.mxu0 %v788
    %3021 = vmatpush.msra.mxu0 %v784
    %3022 = vmatpush.msra.mxu0 %v780
    %3023 = vmatpush.msra.mxu0 %v776
    %3024 = vmatmul.f32.gmra.mxu0 %v2036
    %v3025 = vpop.f32.mrf.mxu0
    %v3026 = vadd.f32 %v842, %v3025
    %3027 = vdwg.mxu0
    %3028 = vmatpush.msra.mxu0 %v837
    %3029 = vmatpush.msra.mxu0 %v833
    %3030 = vmatpush.msra.mxu0 %v829
    %3031 = vmatpush.msra.mxu0 %v825
    %3032 = vmatpush.msra.mxu0 %v821
    %3033 = vmatpush.msra.mxu0 %v817
    %3034 = vmatpush.msra.mxu0 %v813
    %3035 = vmatpush.msra.mxu0 %v809
    %3036 = vmatpush.msra.mxu0 %v805
    %3037 = vmatpush.msra.mxu0 %v801
    %3038 = vmatpush.msra.mxu0 %v797
    %3039 = vmatpush.msra.mxu0 %v793
    %3040 = vmatpush.msra.mxu0 %v789
    %3041 = vmatpush.msra.mxu0 %v785
    %3042 = vmatpush.msra.mxu0 %v781
    %3043 = vmatpush.msra.mxu0 %v777
    %3044 = vmatmul.f32.gmra.mxu0 %v2036
    %v3045 = vpop.f32.mrf.mxu0
    %v3046 = vadd.f32 %v843, %v3045
    %3047 = vdwg.mxu0
    %3048 = vmatpush.msra.mxu0 %v838
    %3049 = vmatpush.msra.mxu0 %v834
    %3050 = vmatpush.msra.mxu0 %v830
    %3051 = vmatpush.msra.mxu0 %v826
    %3052 = vmatpush.msra.mxu0 %v822
    %3053 = vmatpush.msra.mxu0 %v818
    %3054 = vmatpush.msra.mxu0 %v814
    %3055 = vmatpush.msra.mxu0 %v810
    %3056 = vmatpush.msra.mxu0 %v806
    %3057 = vmatpush.msra.mxu0 %v802
    %3058 = vmatpush.msra.mxu0 %v798
    %3059 = vmatpush.msra.mxu0 %v794
    %3060 = vmatpush.msra.mxu0 %v790
    %3061 = vmatpush.msra.mxu0 %v786
    %3062 = vmatpush.msra.mxu0 %v782
    %3063 = vmatpush.msra.mxu0 %v778
    %3064 = vmatmul.f32.gmra.mxu0 %v2036
    %v3065 = vpop.f32.mrf.mxu0
    %v3066 = vadd.f32 %v844, %v3065
    %3067 = vdwg.mxu0
    %3068 = vmatpush.msra.mxu0 %v839
    %3069 = vmatpush.msra.mxu0 %v835
    %3070 = vmatpush.msra.mxu0 %v831
    %3071 = vmatpush.msra.mxu0 %v827
    %3072 = vmatpush.msra.mxu0 %v823
    %3073 = vmatpush.msra.mxu0 %v819
    %3074 = vmatpush.msra.mxu0 %v815
    %3075 = vmatpush.msra.mxu0 %v811
    %3076 = vmatpush.msra.mxu0 %v807
    %3077 = vmatpush.msra.mxu0 %v803
    %3078 = vmatpush.msra.mxu0 %v799
    %3079 = vmatpush.msra.mxu0 %v795
    %3080 = vmatpush.msra.mxu0 %v791
    %3081 = vmatpush.msra.mxu0 %v787
    %3082 = vmatpush.msra.mxu0 %v783
    %3083 = vmatpush.msra.mxu0 %v779
    %3084 = vmatmul.f32.gmra.mxu0 %v2036
    %v3085 = vpop.f32.mrf.mxu0
    %v3086 = vadd.f32 %v845, %v3085
    %3087 = vdwg.mxu0
    %3088 = vmatpush.msra.mxu0 %v990
    %3089 = vmatpush.msra.mxu0 %v986
    %3090 = vmatpush.msra.mxu0 %v982
    %3091 = vmatpush.msra.mxu0 %v978
    %3092 = vmatpush.msra.mxu0 %v974
    %3093 = vmatpush.msra.mxu0 %v970
    %3094 = vmatpush.msra.mxu0 %v966
    %3095 = vmatpush.msra.mxu0 %v962
    %3096 = vmatpush.msra.mxu0 %v958
    %3097 = vmatpush.msra.mxu0 %v954
    %3098 = vmatpush.msra.mxu0 %v950
    %3099 = vmatpush.msra.mxu0 %v946
    %3100 = vmatpush.msra.mxu0 %v942
    %3101 = vmatpush.msra.mxu0 %v938
    %3102 = vmatpush.msra.mxu0 %v934
    %3103 = vmatpush.msra.mxu0 %v930
    %3104 = vmatmul.f32.gmra.mxu0 %v2263
    %v3105 = vpop.f32.mrf.mxu0
    %v3106 = vadd.f32 0.0, %v3105
    %3107 = vdwg.mxu0
    %3108 = vmatpush.msra.mxu0 %v991
    %3109 = vmatpush.msra.mxu0 %v987
    %3110 = vmatpush.msra.mxu0 %v983
    %3111 = vmatpush.msra.mxu0 %v979
    %3112 = vmatpush.msra.mxu0 %v975
    %3113 = vmatpush.msra.mxu0 %v971
    %3114 = vmatpush.msra.mxu0 %v967
    %3115 = vmatpush.msra.mxu0 %v963
    %3116 = vmatpush.msra.mxu0 %v959
    %3117 = vmatpush.msra.mxu0 %v955
    %3118 = vmatpush.msra.mxu0 %v951
    %3119 = vmatpush.msra.mxu0 %v947
    %3120 = vmatpush.msra.mxu0 %v943
    %3121 = vmatpush.msra.mxu0 %v939
    %3122 = vmatpush.msra.mxu0 %v935
    %3123 = vmatpush.msra.mxu0 %v931
    %3124 = vmatmul.f32.gmra.mxu0 %v2263
    %v3125 = vpop.f32.mrf.mxu0
    %v3126 = vadd.f32 0.0, %v3125
    %3127 = vdwg.mxu0
    %3128 = vmatpush.msra.mxu0 %v992
    %3129 = vmatpush.msra.mxu0 %v988
    %3130 = vmatpush.msra.mxu0 %v984
    %3131 = vmatpush.msra.mxu0 %v980
    %3132 = vmatpush.msra.mxu0 %v976
    %3133 = vmatpush.msra.mxu0 %v972
    %3134 = vmatpush.msra.mxu0 %v968
    %3135 = vmatpush.msra.mxu0 %v964
    %3136 = vmatpush.msra.mxu0 %v960
    %3137 = vmatpush.msra.mxu0 %v956
    %3138 = vmatpush.msra.mxu0 %v952
    %3139 = vmatpush.msra.mxu0 %v948
    %3140 = vmatpush.msra.mxu0 %v944
    %3141 = vmatpush.msra.mxu0 %v940
    %3142 = vmatpush.msra.mxu0 %v936
    %3143 = vmatpush.msra.mxu0 %v932
    %3144 = vmatmul.f32.gmra.mxu0 %v2263
    %v3145 = vpop.f32.mrf.mxu0
    %v3146 = vadd.f32 0.0, %v3145
    %3147 = vdwg.mxu0
    %3148 = vmatpush.msra.mxu0 %v993
    %3149 = vmatpush.msra.mxu0 %v989
    %3150 = vmatpush.msra.mxu0 %v985
    %3151 = vmatpush.msra.mxu0 %v981
    %3152 = vmatpush.msra.mxu0 %v977
    %3153 = vmatpush.msra.mxu0 %v973
    %3154 = vmatpush.msra.mxu0 %v969
    %3155 = vmatpush.msra.mxu0 %v965
    %3156 = vmatpush.msra.mxu0 %v961
    %3157 = vmatpush.msra.mxu0 %v957
    %3158 = vmatpush.msra.mxu0 %v953
    %3159 = vmatpush.msra.mxu0 %v949
    %3160 = vmatpush.msra.mxu0 %v945
    %3161 = vmatpush.msra.mxu0 %v941
    %3162 = vmatpush.msra.mxu0 %v937
    %3163 = vmatpush.msra.mxu0 %v933
    %3164 = vmatmul.f32.gmra.mxu0 %v2263
    %v3165 = vpop.f32.mrf.mxu0
    %v3166 = vadd.f32 0.0, %v3165
    %3167 = vdwg.mxu0
    %v3168 = vadd.f32 %v3026, %v3106
    %v3169 = vadd.f32 %v3046, %v3126
    %v3170 = vadd.f32 %v3066, %v3146
    %v3171 = vadd.f32 %v3086, %v3166
    %v3172 = vxor.u32 %v3168, 2147483648
    %v3173 = vmul.f32 %v3172, 1.442695
    %v3174 = vpow.pop %v3173
    %v3175 = vadd.f32 %v3174, 1.0
    %v3176 = vrcp.pop %v3175
    %v3177 = vmul.f32 %v3175, %v3176
    %v3178 = vsub.f32 1.0, %v3177
    %v3179 = vmul.f32 %v3176, %v3178
    %v3180 = vadd.f32 %v3176, %v3179
    %vm3181 = vweird.f32 %v3175
    %vm3182 = vweird.f32 %v3176
    %vm3183 = vmor %vm3181, %vm3182
    %v3184 = vsel %vm3183, %v3176, %v3180
    %v3185 = vand.u32 2147483647, %v3175
    %vm3186 = vcmp.eq.f32.partialorder %v3185, 8.507059e+37
    %v3187 = vand.u32 %v3175, 2147483648
    %v3188 = vor.u32 1.1754944e-38, %v3187
    %v3189 = vsel %vm3186, %v3188, %v3184
    %v3190 = vmul.f32 1.0, %v3189
    %v3191 = vxor.u32 %v3169, 2147483648
    %v3192 = vmul.f32 %v3191, 1.442695
    %v3193 = vpow.pop %v3192
    %v3194 = vadd.f32 %v3193, 1.0
    %v3195 = vrcp.pop %v3194
    %v3196 = vmul.f32 %v3194, %v3195
    %v3197 = vsub.f32 1.0, %v3196
    %v3198 = vmul.f32 %v3195, %v3197
    %v3199 = vadd.f32 %v3195, %v3198
    %vm3200 = vweird.f32 %v3194
    %vm3201 = vweird.f32 %v3195
    %vm3202 = vmor %vm3200, %vm3201
    %v3203 = vsel %vm3202, %v3195, %v3199
    %v3204 = vand.u32 2147483647, %v3194
    %vm3205 = vcmp.eq.f32.partialorder %v3204, 8.507059e+37
    %v3206 = vand.u32 %v3194, 2147483648
    %v3207 = vor.u32 1.1754944e-38, %v3206
    %v3208 = vsel %vm3205, %v3207, %v3203
    %v3209 = vmul.f32 1.0, %v3208
    %v3210 = vtanh.pop %v3170
    %v3211 = vxor.u32 %v3171, 2147483648
    %v3212 = vmul.f32 %v3211, 1.442695
    %v3213 = vpow.pop %v3212
    %v3214 = vadd.f32 %v3213, 1.0
    %v3215 = vrcp.pop %v3214
    %v3216 = vmul.f32 %v3214, %v3215
    %v3217 = vsub.f32 1.0, %v3216
    %v3218 = vmul.f32 %v3215, %v3217
    %v3219 = vadd.f32 %v3215, %v3218
    %vm3220 = vweird.f32 %v3214
    %vm3221 = vweird.f32 %v3215
    %vm3222 = vmor %vm3220, %vm3221
    %v3223 = vsel %vm3222, %v3215, %v3219
    %v3224 = vand.u32 2147483647, %v3214
    %vm3225 = vcmp.eq.f32.partialorder %v3224, 8.507059e+37
    %v3226 = vand.u32 %v3214, 2147483648
    %v3227 = vor.u32 1.1754944e-38, %v3226
    %v3228 = vsel %vm3225, %v3227, %v3223
    %v3229 = vmul.f32 1.0, %v3228
    %v3230 = vmul.f32 %v3209, %v2261
    %v3231 = vmul.f32 %v3190, %v3210
    %v3232 = vadd.f32 %v3230, %v3231
    %v3233 = vtanh.pop %v3232
    %v3234 = vmul.f32 %v3229, %v3233
    %3235 = vmatpush.msra.mxu0 %v1580
    %3236 = vmatpush.msra.mxu0 %v1576
    %3237 = vmatpush.msra.mxu0 %v1572
    %3238 = vmatpush.msra.mxu0 %v1568
    %3239 = vmatpush.msra.mxu0 %v1564
    %3240 = vmatpush.msra.mxu0 %v1560
    %3241 = vmatpush.msra.mxu0 %v1556
    %3242 = vmatpush.msra.mxu0 %v1552
    %3243 = vmatpush.msra.mxu0 %v1548
    %3244 = vmatpush.msra.mxu0 %v1544
    %3245 = vmatpush.msra.mxu0 %v1540
    %3246 = vmatpush.msra.mxu0 %v1536
    %3247 = vmatpush.msra.mxu0 %v1532
    %3248 = vmatpush.msra.mxu0 %v1528
    %3249 = vmatpush.msra.mxu0 %v1524
    %3250 = vmatpush.msra.mxu0 %v1520
    %3251 = vmatmul.f32.gmra.mxu0 %v2263
    %v3252 = vpop.f32.mrf.mxu0
    %v3253 = vadd.f32 %v1586, %v3252
    %3254 = vdwg.mxu0
    %3255 = vmatpush.msra.mxu0 %v1581
    %3256 = vmatpush.msra.mxu0 %v1577
    %3257 = vmatpush.msra.mxu0 %v1573
    %3258 = vmatpush.msra.mxu0 %v1569
    %3259 = vmatpush.msra.mxu0 %v1565
    %3260 = vmatpush.msra.mxu0 %v1561
    %3261 = vmatpush.msra.mxu0 %v1557
    %3262 = vmatpush.msra.mxu0 %v1553
    %3263 = vmatpush.msra.mxu0 %v1549
    %3264 = vmatpush.msra.mxu0 %v1545
    %3265 = vmatpush.msra.mxu0 %v1541
    %3266 = vmatpush.msra.mxu0 %v1537
    %3267 = vmatpush.msra.mxu0 %v1533
    %3268 = vmatpush.msra.mxu0 %v1529
    %3269 = vmatpush.msra.mxu0 %v1525
    %3270 = vmatpush.msra.mxu0 %v1521
    %3271 = vmatmul.f32.gmra.mxu0 %v2263
    %v3272 = vpop.f32.mrf.mxu0
    %v3273 = vadd.f32 %v1587, %v3272
    %3274 = vdwg.mxu0
    %3275 = vmatpush.msra.mxu0 %v1582
    %3276 = vmatpush.msra.mxu0 %v1578
    %3277 = vmatpush.msra.mxu0 %v1574
    %3278 = vmatpush.msra.mxu0 %v1570
    %3279 = vmatpush.msra.mxu0 %v1566
    %3280 = vmatpush.msra.mxu0 %v1562
    %3281 = vmatpush.msra.mxu0 %v1558
    %3282 = vmatpush.msra.mxu0 %v1554
    %3283 = vmatpush.msra.mxu0 %v1550
    %3284 = vmatpush.msra.mxu0 %v1546
    %3285 = vmatpush.msra.mxu0 %v1542
    %3286 = vmatpush.msra.mxu0 %v1538
    %3287 = vmatpush.msra.mxu0 %v1534
    %3288 = vmatpush.msra.mxu0 %v1530
    %3289 = vmatpush.msra.mxu0 %v1526
    %3290 = vmatpush.msra.mxu0 %v1522
    %3291 = vmatmul.f32.gmra.mxu0 %v2263
    %v3292 = vpop.f32.mrf.mxu0
    %v3293 = vadd.f32 %v1588, %v3292
    %3294 = vdwg.mxu0
    %3295 = vmatpush.msra.mxu0 %v1583
    %3296 = vmatpush.msra.mxu0 %v1579
    %3297 = vmatpush.msra.mxu0 %v1575
    %3298 = vmatpush.msra.mxu0 %v1571
    %3299 = vmatpush.msra.mxu0 %v1567
    %3300 = vmatpush.msra.mxu0 %v1563
    %3301 = vmatpush.msra.mxu0 %v1559
    %3302 = vmatpush.msra.mxu0 %v1555
    %3303 = vmatpush.msra.mxu0 %v1551
    %3304 = vmatpush.msra.mxu0 %v1547
    %3305 = vmatpush.msra.mxu0 %v1543
    %3306 = vmatpush.msra.mxu0 %v1539
    %3307 = vmatpush.msra.mxu0 %v1535
    %3308 = vmatpush.msra.mxu0 %v1531
    %3309 = vmatpush.msra.mxu0 %v1527
    %3310 = vmatpush.msra.mxu0 %v1523
    %3311 = vmatmul.f32.gmra.mxu0 %v2263
    %v3312 = vpop.f32.mrf.mxu0
    %v3313 = vadd.f32 %v1589, %v3312
    %3314 = vdwg.mxu0
    %3315 = vmatpush.msra.mxu0 %v1734
    %3316 = vmatpush.msra.mxu0 %v1730
    %3317 = vmatpush.msra.mxu0 %v1726
    %3318 = vmatpush.msra.mxu0 %v1722
    %3319 = vmatpush.msra.mxu0 %v1718
    %3320 = vmatpush.msra.mxu0 %v1714
    %3321 = vmatpush.msra.mxu0 %v1710
    %3322 = vmatpush.msra.mxu0 %v1706
    %3323 = vmatpush.msra.mxu0 %v1702
    %3324 = vmatpush.msra.mxu0 %v1698
    %3325 = vmatpush.msra.mxu0 %v1694
    %3326 = vmatpush.msra.mxu0 %v1690
    %3327 = vmatpush.msra.mxu0 %v1686
    %3328 = vmatpush.msra.mxu0 %v1682
    %3329 = vmatpush.msra.mxu0 %v1678
    %3330 = vmatpush.msra.mxu0 %v1674
    %3331 = vmatmul.f32.gmra.mxu0 %v2490
    %v3332 = vpop.f32.mrf.mxu0
    %v3333 = vadd.f32 0.0, %v3332
    %3334 = vdwg.mxu0
    %3335 = vmatpush.msra.mxu0 %v1735
    %3336 = vmatpush.msra.mxu0 %v1731
    %3337 = vmatpush.msra.mxu0 %v1727
    %3338 = vmatpush.msra.mxu0 %v1723
    %3339 = vmatpush.msra.mxu0 %v1719
    %3340 = vmatpush.msra.mxu0 %v1715
    %3341 = vmatpush.msra.mxu0 %v1711
    %3342 = vmatpush.msra.mxu0 %v1707
    %3343 = vmatpush.msra.mxu0 %v1703
    %3344 = vmatpush.msra.mxu0 %v1699
    %3345 = vmatpush.msra.mxu0 %v1695
    %3346 = vmatpush.msra.mxu0 %v1691
    %3347 = vmatpush.msra.mxu0 %v1687
    %3348 = vmatpush.msra.mxu0 %v1683
    %3349 = vmatpush.msra.mxu0 %v1679
    %3350 = vmatpush.msra.mxu0 %v1675
    %3351 = vmatmul.f32.gmra.mxu0 %v2490
    %v3352 = vpop.f32.mrf.mxu0
    %v3353 = vadd.f32 0.0, %v3352
    %3354 = vdwg.mxu0
    %3355 = vmatpush.msra.mxu0 %v1736
    %3356 = vmatpush.msra.mxu0 %v1732
    %3357 = vmatpush.msra.mxu0 %v1728
    %3358 = vmatpush.msra.mxu0 %v1724
    %3359 = vmatpush.msra.mxu0 %v1720
    %3360 = vmatpush.msra.mxu0 %v1716
    %3361 = vmatpush.msra.mxu0 %v1712
    %3362 = vmatpush.msra.mxu0 %v1708
    %3363 = vmatpush.msra.mxu0 %v1704
    %3364 = vmatpush.msra.mxu0 %v1700
    %3365 = vmatpush.msra.mxu0 %v1696
    %3366 = vmatpush.msra.mxu0 %v1692
    %3367 = vmatpush.msra.mxu0 %v1688
    %3368 = vmatpush.msra.mxu0 %v1684
    %3369 = vmatpush.msra.mxu0 %v1680
    %3370 = vmatpush.msra.mxu0 %v1676
    %3371 = vmatmul.f32.gmra.mxu0 %v2490
    %v3372 = vpop.f32.mrf.mxu0
    %v3373 = vadd.f32 0.0, %v3372
    %3374 = vdwg.mxu0
    %3375 = vmatpush.msra.mxu0 %v1737
    %3376 = vmatpush.msra.mxu0 %v1733
    %3377 = vmatpush.msra.mxu0 %v1729
    %3378 = vmatpush.msra.mxu0 %v1725
    %3379 = vmatpush.msra.mxu0 %v1721
    %3380 = vmatpush.msra.mxu0 %v1717
    %3381 = vmatpush.msra.mxu0 %v1713
    %3382 = vmatpush.msra.mxu0 %v1709
    %3383 = vmatpush.msra.mxu0 %v1705
    %3384 = vmatpush.msra.mxu0 %v1701
    %3385 = vmatpush.msra.mxu0 %v1697
    %3386 = vmatpush.msra.mxu0 %v1693
    %3387 = vmatpush.msra.mxu0 %v1689
    %3388 = vmatpush.msra.mxu0 %v1685
    %3389 = vmatpush.msra.mxu0 %v1681
    %3390 = vmatpush.msra.mxu0 %v1677
    %3391 = vmatmul.f32.gmra.mxu0 %v2490
    %v3392 = vpop.f32.mrf.mxu0
    %v3393 = vadd.f32 0.0, %v3392
    %3394 = vdwg.mxu0
    %v3395 = vadd.f32 %v3253, %v3333
    %v3396 = vadd.f32 %v3273, %v3353
    %v3397 = vadd.f32 %v3293, %v3373
    %v3398 = vadd.f32 %v3313, %v3393
    %v3399 = vxor.u32 %v3395, 2147483648
    %v3400 = vmul.f32 %v3399, 1.442695
    %v3401 = vpow.pop %v3400
    %v3402 = vadd.f32 %v3401, 1.0
    %v3403 = vrcp.pop %v3402
    %v3404 = vmul.f32 %v3402, %v3403
    %v3405 = vsub.f32 1.0, %v3404
    %v3406 = vmul.f32 %v3403, %v3405
    %v3407 = vadd.f32 %v3403, %v3406
    %vm3408 = vweird.f32 %v3402
    %vm3409 = vweird.f32 %v3403
    %vm3410 = vmor %vm3408, %vm3409
    %v3411 = vsel %vm3410, %v3403, %v3407
    %v3412 = vand.u32 2147483647, %v3402
    %vm3413 = vcmp.eq.f32.partialorder %v3412, 8.507059e+37
    %v3414 = vand.u32 %v3402, 2147483648
    %v3415 = vor.u32 1.1754944e-38, %v3414
    %v3416 = vsel %vm3413, %v3415, %v3411
    %v3417 = vmul.f32 1.0, %v3416
    %v3418 = vxor.u32 %v3396, 2147483648
    %v3419 = vmul.f32 %v3418, 1.442695
    %v3420 = vpow.pop %v3419
    %v3421 = vadd.f32 %v3420, 1.0
    %v3422 = vrcp.pop %v3421
    %v3423 = vmul.f32 %v3421, %v3422
    %v3424 = vsub.f32 1.0, %v3423
    %v3425 = vmul.f32 %v3422, %v3424
    %v3426 = vadd.f32 %v3422, %v3425
    %vm3427 = vweird.f32 %v3421
    %vm3428 = vweird.f32 %v3422
    %vm3429 = vmor %vm3427, %vm3428
    %v3430 = vsel %vm3429, %v3422, %v3426
    %v3431 = vand.u32 2147483647, %v3421
    %vm3432 = vcmp.eq.f32.partialorder %v3431, 8.507059e+37
    %v3433 = vand.u32 %v3421, 2147483648
    %v3434 = vor.u32 1.1754944e-38, %v3433
    %v3435 = vsel %vm3432, %v3434, %v3430
    %v3436 = vmul.f32 1.0, %v3435
    %v3437 = vtanh.pop %v3397
    %v3438 = vxor.u32 %v3398, 2147483648
    %v3439 = vmul.f32 %v3438, 1.442695
    %v3440 = vpow.pop %v3439
    %v3441 = vadd.f32 %v3440, 1.0
    %v3442 = vrcp.pop %v3441
    %v3443 = vmul.f32 %v3441, %v3442
    %v3444 = vsub.f32 1.0, %v3443
    %v3445 = vmul.f32 %v3442, %v3444
    %v3446 = vadd.f32 %v3442, %v3445
    %vm3447 = vweird.f32 %v3441
    %vm3448 = vweird.f32 %v3442
    %vm3449 = vmor %vm3447, %vm3448
    %v3450 = vsel %vm3449, %v3442, %v3446
    %v3451 = vand.u32 2147483647, %v3441
    %vm3452 = vcmp.eq.f32.partialorder %v3451, 8.507059e+37
    %v3453 = vand.u32 %v3441, 2147483648
    %v3454 = vor.u32 1.1754944e-38, %v3453
    %v3455 = vsel %vm3452, %v3454, %v3450
    %v3456 = vmul.f32 1.0, %v3455
    %v3457 = vmul.f32 %v3436, %v2488
    %v3458 = vmul.f32 %v3417, %v3437
    %v3459 = vadd.f32 %v3457, %v3458
    %v3460 = vtanh.pop %v3459
    %v3461 = vmul.f32 %v3456, %v3460
    %3462 = vmatpush.msra.mxu0 %v2551
    %3463 = vmatpush.msra.mxu0 %v2547
    %3464 = vmatpush.msra.mxu0 %v2543
    %3465 = vmatpush.msra.mxu0 %v2539
    %3466 = vmatpush.msra.mxu0 %v2535
    %3467 = vmatpush.msra.mxu0 %v2531
    %3468 = vmatpush.msra.mxu0 %v2527
    %3469 = vmatpush.msra.mxu0 %v2523
    %3470 = vmatpush.msra.mxu0 %v2519
    %3471 = vmatpush.msra.mxu0 %v2515
    %3472 = vmatpush.msra.mxu0 %v2511
    %3473 = vmatpush.msra.mxu0 %v2507
    %3474 = vmatpush.msra.mxu0 %v2503
    %3475 = vmatpush.msra.mxu0 %v2499
    %3476 = vmatpush.msra.mxu0 %v2495
    %3477 = vmatpush.msra.mxu0 %v2491
    %3478 = vmatmul.f32.gmra.mxu0 %v2490
    %v3479 = vpop.f32.mrf.mxu0
    %v3480 = vadd.f32 %v2557, %v3479
    %3481 = vdwg.mxu0
    %3482 = vmatpush.msra.mxu0 %v2552
    %3483 = vmatpush.msra.mxu0 %v2548
    %3484 = vmatpush.msra.mxu0 %v2544
    %3485 = vmatpush.msra.mxu0 %v2540
    %3486 = vmatpush.msra.mxu0 %v2536
    %3487 = vmatpush.msra.mxu0 %v2532
    %3488 = vmatpush.msra.mxu0 %v2528
    %3489 = vmatpush.msra.mxu0 %v2524
    %3490 = vmatpush.msra.mxu0 %v2520
    %3491 = vmatpush.msra.mxu0 %v2516
    %3492 = vmatpush.msra.mxu0 %v2512
    %3493 = vmatpush.msra.mxu0 %v2508
    %3494 = vmatpush.msra.mxu0 %v2504
    %3495 = vmatpush.msra.mxu0 %v2500
    %3496 = vmatpush.msra.mxu0 %v2496
    %3497 = vmatpush.msra.mxu0 %v2492
    %3498 = vmatmul.f32.gmra.mxu0 %v2490
    %v3499 = vpop.f32.mrf.mxu0
    %v3500 = vadd.f32 %v2558, %v3499
    %3501 = vdwg.mxu0
    %3502 = vmatpush.msra.mxu0 %v2553
    %3503 = vmatpush.msra.mxu0 %v2549
    %3504 = vmatpush.msra.mxu0 %v2545
    %3505 = vmatpush.msra.mxu0 %v2541
    %3506 = vmatpush.msra.mxu0 %v2537
    %3507 = vmatpush.msra.mxu0 %v2533
    %3508 = vmatpush.msra.mxu0 %v2529
    %3509 = vmatpush.msra.mxu0 %v2525
    %3510 = vmatpush.msra.mxu0 %v2521
    %3511 = vmatpush.msra.mxu0 %v2517
    %3512 = vmatpush.msra.mxu0 %v2513
    %3513 = vmatpush.msra.mxu0 %v2509
    %3514 = vmatpush.msra.mxu0 %v2505
    %3515 = vmatpush.msra.mxu0 %v2501
    %3516 = vmatpush.msra.mxu0 %v2497
    %3517 = vmatpush.msra.mxu0 %v2493
    %3518 = vmatmul.f32.gmra.mxu0 %v2490
    %v3519 = vpop.f32.mrf.mxu0
    %v3520 = vadd.f32 %v2559, %v3519
    %3521 = vdwg.mxu0
    %3522 = vmatpush.msra.mxu0 %v2554
    %3523 = vmatpush.msra.mxu0 %v2550
    %3524 = vmatpush.msra.mxu0 %v2546
    %3525 = vmatpush.msra.mxu0 %v2542
    %3526 = vmatpush.msra.mxu0 %v2538
    %3527 = vmatpush.msra.mxu0 %v2534
    %3528 = vmatpush.msra.mxu0 %v2530
    %3529 = vmatpush.msra.mxu0 %v2526
    %3530 = vmatpush.msra.mxu0 %v2522
    %3531 = vmatpush.msra.mxu0 %v2518
    %3532 = vmatpush.msra.mxu0 %v2514
    %3533 = vmatpush.msra.mxu0 %v2510
    %3534 = vmatpush.msra.mxu0 %v2506
    %3535 = vmatpush.msra.mxu0 %v2502
    %3536 = vmatpush.msra.mxu0 %v2498
    %3537 = vmatpush.msra.mxu0 %v2494
    %3538 = vmatmul.f32.gmra.mxu0 %v2490
    %v3539 = vpop.f32.mrf.mxu0
    %v3540 = vadd.f32 %v2560, %v3539
    %3541 = vdwg.mxu0
    %3542 = vmatpush.msra.mxu0 %v2705
    %3543 = vmatpush.msra.mxu0 %v2701
    %3544 = vmatpush.msra.mxu0 %v2697
    %3545 = vmatpush.msra.mxu0 %v2693
    %3546 = vmatpush.msra.mxu0 %v2689
    %3547 = vmatpush.msra.mxu0 %v2685
    %3548 = vmatpush.msra.mxu0 %v2681
    %3549 = vmatpush.msra.mxu0 %v2677
    %3550 = vmatpush.msra.mxu0 %v2673
    %3551 = vmatpush.msra.mxu0 %v2669
    %3552 = vmatpush.msra.mxu0 %v2665
    %3553 = vmatpush.msra.mxu0 %v2661
    %3554 = vmatpush.msra.mxu0 %v2657
    %3555 = vmatpush.msra.mxu0 %v2653
    %3556 = vmatpush.msra.mxu0 %v2649
    %3557 = vmatpush.msra.mxu0 %v2645
    %3558 = vmatmul.f32.gmra.mxu0 %v2855
    %v3559 = vpop.f32.mrf.mxu0
    %v3560 = vadd.f32 0.0, %v3559
    %3561 = vdwg.mxu0
    %3562 = vmatpush.msra.mxu0 %v2706
    %3563 = vmatpush.msra.mxu0 %v2702
    %3564 = vmatpush.msra.mxu0 %v2698
    %3565 = vmatpush.msra.mxu0 %v2694
    %3566 = vmatpush.msra.mxu0 %v2690
    %3567 = vmatpush.msra.mxu0 %v2686
    %3568 = vmatpush.msra.mxu0 %v2682
    %3569 = vmatpush.msra.mxu0 %v2678
    %3570 = vmatpush.msra.mxu0 %v2674
    %3571 = vmatpush.msra.mxu0 %v2670
    %3572 = vmatpush.msra.mxu0 %v2666
    %3573 = vmatpush.msra.mxu0 %v2662
    %3574 = vmatpush.msra.mxu0 %v2658
    %3575 = vmatpush.msra.mxu0 %v2654
    %3576 = vmatpush.msra.mxu0 %v2650
    %3577 = vmatpush.msra.mxu0 %v2646
    %3578 = vmatmul.f32.gmra.mxu0 %v2855
    %v3579 = vpop.f32.mrf.mxu0
    %v3580 = vadd.f32 0.0, %v3579
    %3581 = vdwg.mxu0
    %3582 = vmatpush.msra.mxu0 %v2707
    %3583 = vmatpush.msra.mxu0 %v2703
    %3584 = vmatpush.msra.mxu0 %v2699
    %3585 = vmatpush.msra.mxu0 %v2695
    %3586 = vmatpush.msra.mxu0 %v2691
    %3587 = vmatpush.msra.mxu0 %v2687
    %3588 = vmatpush.msra.mxu0 %v2683
    %3589 = vmatpush.msra.mxu0 %v2679
    %3590 = vmatpush.msra.mxu0 %v2675
    %3591 = vmatpush.msra.mxu0 %v2671
    %3592 = vmatpush.msra.mxu0 %v2667
    %3593 = vmatpush.msra.mxu0 %v2663
    %3594 = vmatpush.msra.mxu0 %v2659
    %3595 = vmatpush.msra.mxu0 %v2655
    %3596 = vmatpush.msra.mxu0 %v2651
    %3597 = vmatpush.msra.mxu0 %v2647
    %3598 = vmatmul.f32.gmra.mxu0 %v2855
    %v3599 = vpop.f32.mrf.mxu0
    %v3600 = vadd.f32 0.0, %v3599
    %3601 = vdwg.mxu0
    %3602 = vmatpush.msra.mxu0 %v2708
    %3603 = vmatpush.msra.mxu0 %v2704
    %3604 = vmatpush.msra.mxu0 %v2700
    %3605 = vmatpush.msra.mxu0 %v2696
    %3606 = vmatpush.msra.mxu0 %v2692
    %3607 = vmatpush.msra.mxu0 %v2688
    %3608 = vmatpush.msra.mxu0 %v2684
    %3609 = vmatpush.msra.mxu0 %v2680
    %3610 = vmatpush.msra.mxu0 %v2676
    %3611 = vmatpush.msra.mxu0 %v2672
    %3612 = vmatpush.msra.mxu0 %v2668
    %3613 = vmatpush.msra.mxu0 %v2664
    %3614 = vmatpush.msra.mxu0 %v2660
    %3615 = vmatpush.msra.mxu0 %v2656
    %3616 = vmatpush.msra.mxu0 %v2652
    %3617 = vmatpush.msra.mxu0 %v2648
    %3618 = vmatmul.f32.gmra.mxu0 %v2855
    %v3619 = vpop.f32.mrf.mxu0
    %v3620 = vadd.f32 0.0, %v3619
    %3621 = vdwg.mxu0
    %v3622 = vadd.f32 %v3480, %v3560
    %v3623 = vadd.f32 %v3500, %v3580
    %v3624 = vadd.f32 %v3520, %v3600
    %v3625 = vadd.f32 %v3540, %v3620
    %v3626 = vxor.u32 %v3622, 2147483648
    %v3627 = vmul.f32 %v3626, 1.442695
    %v3628 = vpow.pop %v3627
    %v3629 = vadd.f32 %v3628, 1.0
    %v3630 = vrcp.pop %v3629
    %v3631 = vmul.f32 %v3629, %v3630
    %v3632 = vsub.f32 1.0, %v3631
    %v3633 = vmul.f32 %v3630, %v3632
    %v3634 = vadd.f32 %v3630, %v3633
    %vm3635 = vweird.f32 %v3629
    %vm3636 = vweird.f32 %v3630
    %vm3637 = vmor %vm3635, %vm3636
    %v3638 = vsel %vm3637, %v3630, %v3634
    %v3639 = vand.u32 2147483647, %v3629
    %vm3640 = vcmp.eq.f32.partialorder %v3639, 8.507059e+37
    %v3641 = vand.u32 %v3629, 2147483648
    %v3642 = vor.u32 1.1754944e-38, %v3641
    %v3643 = vsel %vm3640, %v3642, %v3638
    %v3644 = vmul.f32 1.0, %v3643
    %v3645 = vxor.u32 %v3623, 2147483648
    %v3646 = vmul.f32 %v3645, 1.442695
    %v3647 = vpow.pop %v3646
    %v3648 = vadd.f32 %v3647, 1.0
    %v3649 = vrcp.pop %v3648
    %v3650 = vmul.f32 %v3648, %v3649
    %v3651 = vsub.f32 1.0, %v3650
    %v3652 = vmul.f32 %v3649, %v3651
    %v3653 = vadd.f32 %v3649, %v3652
    %vm3654 = vweird.f32 %v3648
    %vm3655 = vweird.f32 %v3649
    %vm3656 = vmor %vm3654, %vm3655
    %v3657 = vsel %vm3656, %v3649, %v3653
    %v3658 = vand.u32 2147483647, %v3648
    %vm3659 = vcmp.eq.f32.partialorder %v3658, 8.507059e+37
    %v3660 = vand.u32 %v3648, 2147483648
    %v3661 = vor.u32 1.1754944e-38, %v3660
    %v3662 = vsel %vm3659, %v3661, %v3657
    %v3663 = vmul.f32 1.0, %v3662
    %v3664 = vtanh.pop %v3624
    %v3665 = vxor.u32 %v3625, 2147483648
    %v3666 = vmul.f32 %v3665, 1.442695
    %v3667 = vpow.pop %v3666
    %v3668 = vadd.f32 %v3667, 1.0
    %v3669 = vrcp.pop %v3668
    %v3670 = vmul.f32 %v3668, %v3669
    %v3671 = vsub.f32 1.0, %v3670
    %v3672 = vmul.f32 %v3669, %v3671
    %v3673 = vadd.f32 %v3669, %v3672
    %vm3674 = vweird.f32 %v3668
    %vm3675 = vweird.f32 %v3669
    %vm3676 = vmor %vm3674, %vm3675
    %v3677 = vsel %vm3676, %v3669, %v3673
    %v3678 = vand.u32 2147483647, %v3668
    %vm3679 = vcmp.eq.f32.partialorder %v3678, 8.507059e+37
    %v3680 = vand.u32 %v3668, 2147483648
    %v3681 = vor.u32 1.1754944e-38, %v3680
    %v3682 = vsel %vm3679, %v3681, %v3677
    %v3683 = vmul.f32 1.0, %v3682
    %v3684 = vmul.f32 %v3663, %v2853
    %v3685 = vmul.f32 %v3644, %v3664
    %v3686 = vadd.f32 %v3684, %v3685
    %v3687 = vtanh.pop %v3686
    %v3688 = vmul.f32 %v3683, %v3687
    %s3689 = scalar_lea.vmem [#allocation2], 160
    %v3690 = vld [vmem:[%s3689] sm:$0xff]
    %v3691 = vld [vmem:[%s3689 + $0x8] sm:$0xff]
    %v3692 = vld [vmem:[%s3689 + $0x10] sm:$0xff]
    %v3693 = vld [vmem:[%s3689 + $0x18] sm:$0xff]
    %3694 = vmatpush.msra.mxu0 %v473
    %3695 = vmatpush.msra.mxu0 %v469
    %3696 = vmatpush.msra.mxu0 %v465
    %3697 = vmatpush.msra.mxu0 %v461
    %3698 = vmatpush.msra.mxu0 %v457
    %3699 = vmatpush.msra.mxu0 %v453
    %3700 = vmatpush.msra.mxu0 %v449
    %3701 = vmatpush.msra.mxu0 %v445
    %3702 = vmatpush.msra.mxu0 %v441
    %3703 = vmatpush.msra.mxu0 %v437
    %3704 = vmatpush.msra.mxu0 %v433
    %3705 = vmatpush.msra.mxu0 %v429
    %3706 = vmatpush.msra.mxu0 %v425
    %3707 = vmatpush.msra.mxu0 %v421
    %3708 = vmatpush.msra.mxu0 %v417
    %3709 = vmatpush.msra.mxu0 %v413
    %3710 = vmatmul.f32.gmra.mxu0 %v3007
    %v3711 = vpop.f32.mrf.mxu0
    %v3712 = vadd.f32 0.0, %v3711
    %3713 = vdwg.mxu0
    %3714 = vmatpush.msra.mxu0 %v474
    %3715 = vmatpush.msra.mxu0 %v470
    %3716 = vmatpush.msra.mxu0 %v466
    %3717 = vmatpush.msra.mxu0 %v462
    %3718 = vmatpush.msra.mxu0 %v458
    %3719 = vmatpush.msra.mxu0 %v454
    %3720 = vmatpush.msra.mxu0 %v450
    %3721 = vmatpush.msra.mxu0 %v446
    %3722 = vmatpush.msra.mxu0 %v442
    %3723 = vmatpush.msra.mxu0 %v438
    %3724 = vmatpush.msra.mxu0 %v434
    %3725 = vmatpush.msra.mxu0 %v430
    %3726 = vmatpush.msra.mxu0 %v426
    %3727 = vmatpush.msra.mxu0 %v422
    %3728 = vmatpush.msra.mxu0 %v418
    %3729 = vmatpush.msra.mxu0 %v414
    %3730 = vmatmul.f32.gmra.mxu0 %v3007
    %v3731 = vpop.f32.mrf.mxu0
    %v3732 = vadd.f32 0.0, %v3731
    %3733 = vdwg.mxu0
    %3734 = vmatpush.msra.mxu0 %v475
    %3735 = vmatpush.msra.mxu0 %v471
    %3736 = vmatpush.msra.mxu0 %v467
    %3737 = vmatpush.msra.mxu0 %v463
    %3738 = vmatpush.msra.mxu0 %v459
    %3739 = vmatpush.msra.mxu0 %v455
    %3740 = vmatpush.msra.mxu0 %v451
    %3741 = vmatpush.msra.mxu0 %v447
    %3742 = vmatpush.msra.mxu0 %v443
    %3743 = vmatpush.msra.mxu0 %v439
    %3744 = vmatpush.msra.mxu0 %v435
    %3745 = vmatpush.msra.mxu0 %v431
    %3746 = vmatpush.msra.mxu0 %v427
    %3747 = vmatpush.msra.mxu0 %v423
    %3748 = vmatpush.msra.mxu0 %v419
    %3749 = vmatpush.msra.mxu0 %v415
    %3750 = vmatmul.f32.gmra.mxu0 %v3007
    %v3751 = vpop.f32.mrf.mxu0
    %v3752 = vadd.f32 0.0, %v3751
    %3753 = vdwg.mxu0
    %3754 = vmatpush.msra.mxu0 %v476
    %3755 = vmatpush.msra.mxu0 %v472
    %3756 = vmatpush.msra.mxu0 %v468
    %3757 = vmatpush.msra.mxu0 %v464
    %3758 = vmatpush.msra.mxu0 %v460
    %3759 = vmatpush.msra.mxu0 %v456
    %3760 = vmatpush.msra.mxu0 %v452
    %3761 = vmatpush.msra.mxu0 %v448
    %3762 = vmatpush.msra.mxu0 %v444
    %3763 = vmatpush.msra.mxu0 %v440
    %3764 = vmatpush.msra.mxu0 %v436
    %3765 = vmatpush.msra.mxu0 %v432
    %3766 = vmatpush.msra.mxu0 %v428
    %3767 = vmatpush.msra.mxu0 %v424
    %3768 = vmatpush.msra.mxu0 %v420
    %3769 = vmatpush.msra.mxu0 %v416
    %3770 = vmatmul.f32.gmra.mxu0 %v3007
    %v3771 = vpop.f32.mrf.mxu0
    %v3772 = vadd.f32 0.0, %v3771
    %3773 = vdwg.mxu0
    %v3774 = vadd.f32 %v3690, %v3712
    %v3775 = vadd.f32 %v3691, %v3732
    %v3776 = vadd.f32 %v3692, %v3752
    %v3777 = vadd.f32 %v3693, %v3772
    %v3778 = vxor.u32 %v3774, 2147483648
    %v3779 = vmul.f32 %v3778, 1.442695
    %v3780 = vpow.pop %v3779
    %v3781 = vadd.f32 %v3780, 1.0
    %v3782 = vrcp.pop %v3781
    %v3783 = vmul.f32 %v3781, %v3782
    %v3784 = vsub.f32 1.0, %v3783
    %v3785 = vmul.f32 %v3782, %v3784
    %v3786 = vadd.f32 %v3782, %v3785
    %vm3787 = vweird.f32 %v3781
    %vm3788 = vweird.f32 %v3782
    %vm3789 = vmor %vm3787, %vm3788
    %v3790 = vsel %vm3789, %v3782, %v3786
    %v3791 = vand.u32 2147483647, %v3781
    %vm3792 = vcmp.eq.f32.partialorder %v3791, 8.507059e+37
    %v3793 = vand.u32 %v3781, 2147483648
    %v3794 = vor.u32 1.1754944e-38, %v3793
    %v3795 = vsel %vm3792, %v3794, %v3790
    %v3796 = vmul.f32 1.0, %v3795
    %v3797 = vxor.u32 %v3775, 2147483648
    %v3798 = vmul.f32 %v3797, 1.442695
    %v3799 = vpow.pop %v3798
    %v3800 = vadd.f32 %v3799, 1.0
    %v3801 = vrcp.pop %v3800
    %v3802 = vmul.f32 %v3800, %v3801
    %v3803 = vsub.f32 1.0, %v3802
    %v3804 = vmul.f32 %v3801, %v3803
    %v3805 = vadd.f32 %v3801, %v3804
    %vm3806 = vweird.f32 %v3800
    %vm3807 = vweird.f32 %v3801
    %vm3808 = vmor %vm3806, %vm3807
    %v3809 = vsel %vm3808, %v3801, %v3805
    %v3810 = vand.u32 2147483647, %v3800
    %vm3811 = vcmp.eq.f32.partialorder %v3810, 8.507059e+37
    %v3812 = vand.u32 %v3800, 2147483648
    %v3813 = vor.u32 1.1754944e-38, %v3812
    %v3814 = vsel %vm3811, %v3813, %v3809
    %v3815 = vmul.f32 1.0, %v3814
    %v3816 = vtanh.pop %v3776
    %v3817 = vxor.u32 %v3777, 2147483648
    %v3818 = vmul.f32 %v3817, 1.442695
    %v3819 = vpow.pop %v3818
    %v3820 = vadd.f32 %v3819, 1.0
    %v3821 = vrcp.pop %v3820
    %v3822 = vmul.f32 %v3820, %v3821
    %v3823 = vsub.f32 1.0, %v3822
    %v3824 = vmul.f32 %v3821, %v3823
    %v3825 = vadd.f32 %v3821, %v3824
    %vm3826 = vweird.f32 %v3820
    %vm3827 = vweird.f32 %v3821
    %vm3828 = vmor %vm3826, %vm3827
    %v3829 = vsel %vm3828, %v3821, %v3825
    %v3830 = vand.u32 2147483647, %v3820
    %vm3831 = vcmp.eq.f32.partialorder %v3830, 8.507059e+37
    %v3832 = vand.u32 %v3820, 2147483648
    %v3833 = vor.u32 1.1754944e-38, %v3832
    %v3834 = vsel %vm3831, %v3833, %v3829
    %v3835 = vmul.f32 1.0, %v3834
    %v3836 = vmul.f32 %v3815, %v3005
    %v3837 = vmul.f32 %v3796, %v3816
    %v3838 = vadd.f32 %v3836, %v3837
    %v3839 = vtanh.pop %v3838
    %v3840 = vmul.f32 %v3835, %v3839
    %3841 = vmatpush.msra.mxu0 %v836
    %3842 = vmatpush.msra.mxu0 %v832
    %3843 = vmatpush.msra.mxu0 %v828
    %3844 = vmatpush.msra.mxu0 %v824
    %3845 = vmatpush.msra.mxu0 %v820
    %3846 = vmatpush.msra.mxu0 %v816
    %3847 = vmatpush.msra.mxu0 %v812
    %3848 = vmatpush.msra.mxu0 %v808
    %3849 = vmatpush.msra.mxu0 %v804
    %3850 = vmatpush.msra.mxu0 %v800
    %3851 = vmatpush.msra.mxu0 %v796
    %3852 = vmatpush.msra.mxu0 %v792
    %3853 = vmatpush.msra.mxu0 %v788
    %3854 = vmatpush.msra.mxu0 %v784
    %3855 = vmatpush.msra.mxu0 %v780
    %3856 = vmatpush.msra.mxu0 %v776
    %3857 = vmatmul.f32.gmra.mxu0 %v3007
    %v3858 = vpop.f32.mrf.mxu0
    %v3859 = vadd.f32 %v842, %v3858
    %3860 = vdwg.mxu0
    %3861 = vmatpush.msra.mxu0 %v837
    %3862 = vmatpush.msra.mxu0 %v833
    %3863 = vmatpush.msra.mxu0 %v829
    %3864 = vmatpush.msra.mxu0 %v825
    %3865 = vmatpush.msra.mxu0 %v821
    %3866 = vmatpush.msra.mxu0 %v817
    %3867 = vmatpush.msra.mxu0 %v813
    %3868 = vmatpush.msra.mxu0 %v809
    %3869 = vmatpush.msra.mxu0 %v805
    %3870 = vmatpush.msra.mxu0 %v801
    %3871 = vmatpush.msra.mxu0 %v797
    %3872 = vmatpush.msra.mxu0 %v793
    %3873 = vmatpush.msra.mxu0 %v789
    %3874 = vmatpush.msra.mxu0 %v785
    %3875 = vmatpush.msra.mxu0 %v781
    %3876 = vmatpush.msra.mxu0 %v777
    %3877 = vmatmul.f32.gmra.mxu0 %v3007
    %v3878 = vpop.f32.mrf.mxu0
    %v3879 = vadd.f32 %v843, %v3878
    %3880 = vdwg.mxu0
    %3881 = vmatpush.msra.mxu0 %v838
    %3882 = vmatpush.msra.mxu0 %v834
    %3883 = vmatpush.msra.mxu0 %v830
    %3884 = vmatpush.msra.mxu0 %v826
    %3885 = vmatpush.msra.mxu0 %v822
    %3886 = vmatpush.msra.mxu0 %v818
    %3887 = vmatpush.msra.mxu0 %v814
    %3888 = vmatpush.msra.mxu0 %v810
    %3889 = vmatpush.msra.mxu0 %v806
    %3890 = vmatpush.msra.mxu0 %v802
    %3891 = vmatpush.msra.mxu0 %v798
    %3892 = vmatpush.msra.mxu0 %v794
    %3893 = vmatpush.msra.mxu0 %v790
    %3894 = vmatpush.msra.mxu0 %v786
    %3895 = vmatpush.msra.mxu0 %v782
    %3896 = vmatpush.msra.mxu0 %v778
    %3897 = vmatmul.f32.gmra.mxu0 %v3007
    %v3898 = vpop.f32.mrf.mxu0
    %v3899 = vadd.f32 %v844, %v3898
    %3900 = vdwg.mxu0
    %3901 = vmatpush.msra.mxu0 %v839
    %3902 = vmatpush.msra.mxu0 %v835
    %3903 = vmatpush.msra.mxu0 %v831
    %3904 = vmatpush.msra.mxu0 %v827
    %3905 = vmatpush.msra.mxu0 %v823
    %3906 = vmatpush.msra.mxu0 %v819
    %3907 = vmatpush.msra.mxu0 %v815
    %3908 = vmatpush.msra.mxu0 %v811
    %3909 = vmatpush.msra.mxu0 %v807
    %3910 = vmatpush.msra.mxu0 %v803
    %3911 = vmatpush.msra.mxu0 %v799
    %3912 = vmatpush.msra.mxu0 %v795
    %3913 = vmatpush.msra.mxu0 %v791
    %3914 = vmatpush.msra.mxu0 %v787
    %3915 = vmatpush.msra.mxu0 %v783
    %3916 = vmatpush.msra.mxu0 %v779
    %3917 = vmatmul.f32.gmra.mxu0 %v3007
    %v3918 = vpop.f32.mrf.mxu0
    %v3919 = vadd.f32 %v845, %v3918
    %3920 = vdwg.mxu0
    %3921 = vmatpush.msra.mxu0 %v990
    %3922 = vmatpush.msra.mxu0 %v986
    %3923 = vmatpush.msra.mxu0 %v982
    %3924 = vmatpush.msra.mxu0 %v978
    %3925 = vmatpush.msra.mxu0 %v974
    %3926 = vmatpush.msra.mxu0 %v970
    %3927 = vmatpush.msra.mxu0 %v966
    %3928 = vmatpush.msra.mxu0 %v962
    %3929 = vmatpush.msra.mxu0 %v958
    %3930 = vmatpush.msra.mxu0 %v954
    %3931 = vmatpush.msra.mxu0 %v950
    %3932 = vmatpush.msra.mxu0 %v946
    %3933 = vmatpush.msra.mxu0 %v942
    %3934 = vmatpush.msra.mxu0 %v938
    %3935 = vmatpush.msra.mxu0 %v934
    %3936 = vmatpush.msra.mxu0 %v930
    %3937 = vmatmul.f32.gmra.mxu0 %v3234
    %v3938 = vpop.f32.mrf.mxu0
    %v3939 = vadd.f32 0.0, %v3938
    %3940 = vdwg.mxu0
    %3941 = vmatpush.msra.mxu0 %v991
    %3942 = vmatpush.msra.mxu0 %v987
    %3943 = vmatpush.msra.mxu0 %v983
    %3944 = vmatpush.msra.mxu0 %v979
    %3945 = vmatpush.msra.mxu0 %v975
    %3946 = vmatpush.msra.mxu0 %v971
    %3947 = vmatpush.msra.mxu0 %v967
    %3948 = vmatpush.msra.mxu0 %v963
    %3949 = vmatpush.msra.mxu0 %v959
    %3950 = vmatpush.msra.mxu0 %v955
    %3951 = vmatpush.msra.mxu0 %v951
    %3952 = vmatpush.msra.mxu0 %v947
    %3953 = vmatpush.msra.mxu0 %v943
    %3954 = vmatpush.msra.mxu0 %v939
    %3955 = vmatpush.msra.mxu0 %v935
    %3956 = vmatpush.msra.mxu0 %v931
    %3957 = vmatmul.f32.gmra.mxu0 %v3234
    %v3958 = vpop.f32.mrf.mxu0
    %v3959 = vadd.f32 0.0, %v3958
    %3960 = vdwg.mxu0
    %3961 = vmatpush.msra.mxu0 %v992
    %3962 = vmatpush.msra.mxu0 %v988
    %3963 = vmatpush.msra.mxu0 %v984
    %3964 = vmatpush.msra.mxu0 %v980
    %3965 = vmatpush.msra.mxu0 %v976
    %3966 = vmatpush.msra.mxu0 %v972
    %3967 = vmatpush.msra.mxu0 %v968
    %3968 = vmatpush.msra.mxu0 %v964
    %3969 = vmatpush.msra.mxu0 %v960
    %3970 = vmatpush.msra.mxu0 %v956
    %3971 = vmatpush.msra.mxu0 %v952
    %3972 = vmatpush.msra.mxu0 %v948
    %3973 = vmatpush.msra.mxu0 %v944
    %3974 = vmatpush.msra.mxu0 %v940
    %3975 = vmatpush.msra.mxu0 %v936
    %3976 = vmatpush.msra.mxu0 %v932
    %3977 = vmatmul.f32.gmra.mxu0 %v3234
    %v3978 = vpop.f32.mrf.mxu0
    %v3979 = vadd.f32 0.0, %v3978
    %3980 = vdwg.mxu0
    %3981 = vmatpush.msra.mxu0 %v993
    %3982 = vmatpush.msra.mxu0 %v989
    %3983 = vmatpush.msra.mxu0 %v985
    %3984 = vmatpush.msra.mxu0 %v981
    %3985 = vmatpush.msra.mxu0 %v977
    %3986 = vmatpush.msra.mxu0 %v973
    %3987 = vmatpush.msra.mxu0 %v969
    %3988 = vmatpush.msra.mxu0 %v965
    %3989 = vmatpush.msra.mxu0 %v961
    %3990 = vmatpush.msra.mxu0 %v957
    %3991 = vmatpush.msra.mxu0 %v953
    %3992 = vmatpush.msra.mxu0 %v949
    %3993 = vmatpush.msra.mxu0 %v945
    %3994 = vmatpush.msra.mxu0 %v941
    %3995 = vmatpush.msra.mxu0 %v937
    %3996 = vmatpush.msra.mxu0 %v933
    %3997 = vmatmul.f32.gmra.mxu0 %v3234
    %v3998 = vpop.f32.mrf.mxu0
    %v3999 = vadd.f32 0.0, %v3998
    %4000 = vdwg.mxu0
    %v4001 = vadd.f32 %v3859, %v3939
    %v4002 = vadd.f32 %v3879, %v3959
    %v4003 = vadd.f32 %v3899, %v3979
    %v4004 = vadd.f32 %v3919, %v3999
    %v4005 = vxor.u32 %v4001, 2147483648
    %v4006 = vmul.f32 %v4005, 1.442695
    %v4007 = vpow.pop %v4006
    %v4008 = vadd.f32 %v4007, 1.0
    %v4009 = vrcp.pop %v4008
    %v4010 = vmul.f32 %v4008, %v4009
    %v4011 = vsub.f32 1.0, %v4010
    %v4012 = vmul.f32 %v4009, %v4011
    %v4013 = vadd.f32 %v4009, %v4012
    %vm4014 = vweird.f32 %v4008
    %vm4015 = vweird.f32 %v4009
    %vm4016 = vmor %vm4014, %vm4015
    %v4017 = vsel %vm4016, %v4009, %v4013
    %v4018 = vand.u32 2147483647, %v4008
    %vm4019 = vcmp.eq.f32.partialorder %v4018, 8.507059e+37
    %v4020 = vand.u32 %v4008, 2147483648
    %v4021 = vor.u32 1.1754944e-38, %v4020
    %v4022 = vsel %vm4019, %v4021, %v4017
    %v4023 = vmul.f32 1.0, %v4022
    %v4024 = vxor.u32 %v4002, 2147483648
    %v4025 = vmul.f32 %v4024, 1.442695
    %v4026 = vpow.pop %v4025
    %v4027 = vadd.f32 %v4026, 1.0
    %v4028 = vrcp.pop %v4027
    %v4029 = vmul.f32 %v4027, %v4028
    %v4030 = vsub.f32 1.0, %v4029
    %v4031 = vmul.f32 %v4028, %v4030
    %v4032 = vadd.f32 %v4028, %v4031
    %vm4033 = vweird.f32 %v4027
    %vm4034 = vweird.f32 %v4028
    %vm4035 = vmor %vm4033, %vm4034
    %v4036 = vsel %vm4035, %v4028, %v4032
    %v4037 = vand.u32 2147483647, %v4027
    %vm4038 = vcmp.eq.f32.partialorder %v4037, 8.507059e+37
    %v4039 = vand.u32 %v4027, 2147483648
    %v4040 = vor.u32 1.1754944e-38, %v4039
    %v4041 = vsel %vm4038, %v4040, %v4036
    %v4042 = vmul.f32 1.0, %v4041
    %v4043 = vtanh.pop %v4003
    %v4044 = vxor.u32 %v4004, 2147483648
    %v4045 = vmul.f32 %v4044, 1.442695
    %v4046 = vpow.pop %v4045
    %v4047 = vadd.f32 %v4046, 1.0
    %v4048 = vrcp.pop %v4047
    %v4049 = vmul.f32 %v4047, %v4048
    %v4050 = vsub.f32 1.0, %v4049
    %v4051 = vmul.f32 %v4048, %v4050
    %v4052 = vadd.f32 %v4048, %v4051
    %vm4053 = vweird.f32 %v4047
    %vm4054 = vweird.f32 %v4048
    %vm4055 = vmor %vm4053, %vm4054
    %v4056 = vsel %vm4055, %v4048, %v4052
    %v4057 = vand.u32 2147483647, %v4047
    %vm4058 = vcmp.eq.f32.partialorder %v4057, 8.507059e+37
    %v4059 = vand.u32 %v4047, 2147483648
    %v4060 = vor.u32 1.1754944e-38, %v4059
    %v4061 = vsel %vm4058, %v4060, %v4056
    %v4062 = vmul.f32 1.0, %v4061
    %v4063 = vmul.f32 %v4042, %v3232
    %v4064 = vmul.f32 %v4023, %v4043
    %v4065 = vadd.f32 %v4063, %v4064
    %v4066 = vtanh.pop %v4065
    %v4067 = vmul.f32 %v4062, %v4066
    %4068 = vmatpush.msra.mxu0 %v1580
    %4069 = vmatpush.msra.mxu0 %v1576
    %4070 = vmatpush.msra.mxu0 %v1572
    %4071 = vmatpush.msra.mxu0 %v1568
    %4072 = vmatpush.msra.mxu0 %v1564
    %4073 = vmatpush.msra.mxu0 %v1560
    %4074 = vmatpush.msra.mxu0 %v1556
    %4075 = vmatpush.msra.mxu0 %v1552
    %4076 = vmatpush.msra.mxu0 %v1548
    %4077 = vmatpush.msra.mxu0 %v1544
    %4078 = vmatpush.msra.mxu0 %v1540
    %4079 = vmatpush.msra.mxu0 %v1536
    %4080 = vmatpush.msra.mxu0 %v1532
    %4081 = vmatpush.msra.mxu0 %v1528
    %4082 = vmatpush.msra.mxu0 %v1524
    %4083 = vmatpush.msra.mxu0 %v1520
    %4084 = vmatmul.f32.gmra.mxu0 %v3234
    %v4085 = vpop.f32.mrf.mxu0
    %v4086 = vadd.f32 %v1586, %v4085
    %4087 = vdwg.mxu0
    %4088 = vmatpush.msra.mxu0 %v1581
    %4089 = vmatpush.msra.mxu0 %v1577
    %4090 = vmatpush.msra.mxu0 %v1573
    %4091 = vmatpush.msra.mxu0 %v1569
    %4092 = vmatpush.msra.mxu0 %v1565
    %4093 = vmatpush.msra.mxu0 %v1561
    %4094 = vmatpush.msra.mxu0 %v1557
    %4095 = vmatpush.msra.mxu0 %v1553
    %4096 = vmatpush.msra.mxu0 %v1549
    %4097 = vmatpush.msra.mxu0 %v1545
    %4098 = vmatpush.msra.mxu0 %v1541
    %4099 = vmatpush.msra.mxu0 %v1537
    %4100 = vmatpush.msra.mxu0 %v1533
    %4101 = vmatpush.msra.mxu0 %v1529
    %4102 = vmatpush.msra.mxu0 %v1525
    %4103 = vmatpush.msra.mxu0 %v1521
    %4104 = vmatmul.f32.gmra.mxu0 %v3234
    %v4105 = vpop.f32.mrf.mxu0
    %v4106 = vadd.f32 %v1587, %v4105
    %4107 = vdwg.mxu0
    %4108 = vmatpush.msra.mxu0 %v1582
    %4109 = vmatpush.msra.mxu0 %v1578
    %4110 = vmatpush.msra.mxu0 %v1574
    %4111 = vmatpush.msra.mxu0 %v1570
    %4112 = vmatpush.msra.mxu0 %v1566
    %4113 = vmatpush.msra.mxu0 %v1562
    %4114 = vmatpush.msra.mxu0 %v1558
    %4115 = vmatpush.msra.mxu0 %v1554
    %4116 = vmatpush.msra.mxu0 %v1550
    %4117 = vmatpush.msra.mxu0 %v1546
    %4118 = vmatpush.msra.mxu0 %v1542
    %4119 = vmatpush.msra.mxu0 %v1538
    %4120 = vmatpush.msra.mxu0 %v1534
    %4121 = vmatpush.msra.mxu0 %v1530
    %4122 = vmatpush.msra.mxu0 %v1526
    %4123 = vmatpush.msra.mxu0 %v1522
    %4124 = vmatmul.f32.gmra.mxu0 %v3234
    %v4125 = vpop.f32.mrf.mxu0
    %v4126 = vadd.f32 %v1588, %v4125
    %4127 = vdwg.mxu0
    %4128 = vmatpush.msra.mxu0 %v1583
    %4129 = vmatpush.msra.mxu0 %v1579
    %4130 = vmatpush.msra.mxu0 %v1575
    %4131 = vmatpush.msra.mxu0 %v1571
    %4132 = vmatpush.msra.mxu0 %v1567
    %4133 = vmatpush.msra.mxu0 %v1563
    %4134 = vmatpush.msra.mxu0 %v1559
    %4135 = vmatpush.msra.mxu0 %v1555
    %4136 = vmatpush.msra.mxu0 %v1551
    %4137 = vmatpush.msra.mxu0 %v1547
    %4138 = vmatpush.msra.mxu0 %v1543
    %4139 = vmatpush.msra.mxu0 %v1539
    %4140 = vmatpush.msra.mxu0 %v1535
    %4141 = vmatpush.msra.mxu0 %v1531
    %4142 = vmatpush.msra.mxu0 %v1527
    %4143 = vmatpush.msra.mxu0 %v1523
    %4144 = vmatmul.f32.gmra.mxu0 %v3234
    %v4145 = vpop.f32.mrf.mxu0
    %v4146 = vadd.f32 %v1589, %v4145
    %4147 = vdwg.mxu0
    %4148 = vmatpush.msra.mxu0 %v1734
    %4149 = vmatpush.msra.mxu0 %v1730
    %4150 = vmatpush.msra.mxu0 %v1726
    %4151 = vmatpush.msra.mxu0 %v1722
    %4152 = vmatpush.msra.mxu0 %v1718
    %4153 = vmatpush.msra.mxu0 %v1714
    %4154 = vmatpush.msra.mxu0 %v1710
    %4155 = vmatpush.msra.mxu0 %v1706
    %4156 = vmatpush.msra.mxu0 %v1702
    %4157 = vmatpush.msra.mxu0 %v1698
    %4158 = vmatpush.msra.mxu0 %v1694
    %4159 = vmatpush.msra.mxu0 %v1690
    %4160 = vmatpush.msra.mxu0 %v1686
    %4161 = vmatpush.msra.mxu0 %v1682
    %4162 = vmatpush.msra.mxu0 %v1678
    %4163 = vmatpush.msra.mxu0 %v1674
    %4164 = vmatmul.f32.gmra.mxu0 %v3461
    %v4165 = vpop.f32.mrf.mxu0
    %v4166 = vadd.f32 0.0, %v4165
    %4167 = vdwg.mxu0
    %4168 = vmatpush.msra.mxu0 %v1735
    %4169 = vmatpush.msra.mxu0 %v1731
    %4170 = vmatpush.msra.mxu0 %v1727
    %4171 = vmatpush.msra.mxu0 %v1723
    %4172 = vmatpush.msra.mxu0 %v1719
    %4173 = vmatpush.msra.mxu0 %v1715
    %4174 = vmatpush.msra.mxu0 %v1711
    %4175 = vmatpush.msra.mxu0 %v1707
    %4176 = vmatpush.msra.mxu0 %v1703
    %4177 = vmatpush.msra.mxu0 %v1699
    %4178 = vmatpush.msra.mxu0 %v1695
    %4179 = vmatpush.msra.mxu0 %v1691
    %4180 = vmatpush.msra.mxu0 %v1687
    %4181 = vmatpush.msra.mxu0 %v1683
    %4182 = vmatpush.msra.mxu0 %v1679
    %4183 = vmatpush.msra.mxu0 %v1675
    %4184 = vmatmul.f32.gmra.mxu0 %v3461
    %v4185 = vpop.f32.mrf.mxu0
    %v4186 = vadd.f32 0.0, %v4185
    %4187 = vdwg.mxu0
    %4188 = vmatpush.msra.mxu0 %v1736
    %4189 = vmatpush.msra.mxu0 %v1732
    %4190 = vmatpush.msra.mxu0 %v1728
    %4191 = vmatpush.msra.mxu0 %v1724
    %4192 = vmatpush.msra.mxu0 %v1720
    %4193 = vmatpush.msra.mxu0 %v1716
    %4194 = vmatpush.msra.mxu0 %v1712
    %4195 = vmatpush.msra.mxu0 %v1708
    %4196 = vmatpush.msra.mxu0 %v1704
    %4197 = vmatpush.msra.mxu0 %v1700
    %4198 = vmatpush.msra.mxu0 %v1696
    %4199 = vmatpush.msra.mxu0 %v1692
    %4200 = vmatpush.msra.mxu0 %v1688
    %4201 = vmatpush.msra.mxu0 %v1684
    %4202 = vmatpush.msra.mxu0 %v1680
    %4203 = vmatpush.msra.mxu0 %v1676
    %4204 = vmatmul.f32.gmra.mxu0 %v3461
    %v4205 = vpop.f32.mrf.mxu0
    %v4206 = vadd.f32 0.0, %v4205
    %4207 = vdwg.mxu0
    %4208 = vmatpush.msra.mxu0 %v1737
    %4209 = vmatpush.msra.mxu0 %v1733
    %4210 = vmatpush.msra.mxu0 %v1729
    %4211 = vmatpush.msra.mxu0 %v1725
    %4212 = vmatpush.msra.mxu0 %v1721
    %4213 = vmatpush.msra.mxu0 %v1717
    %4214 = vmatpush.msra.mxu0 %v1713
    %4215 = vmatpush.msra.mxu0 %v1709
    %4216 = vmatpush.msra.mxu0 %v1705
    %4217 = vmatpush.msra.mxu0 %v1701
    %4218 = vmatpush.msra.mxu0 %v1697
    %4219 = vmatpush.msra.mxu0 %v1693
    %4220 = vmatpush.msra.mxu0 %v1689
    %4221 = vmatpush.msra.mxu0 %v1685
    %4222 = vmatpush.msra.mxu0 %v1681
    %4223 = vmatpush.msra.mxu0 %v1677
    %4224 = vmatmul.f32.gmra.mxu0 %v3461
    %v4225 = vpop.f32.mrf.mxu0
    %v4226 = vadd.f32 0.0, %v4225
    %4227 = vdwg.mxu0
    %v4228 = vadd.f32 %v4086, %v4166
    %v4229 = vadd.f32 %v4106, %v4186
    %v4230 = vadd.f32 %v4126, %v4206
    %v4231 = vadd.f32 %v4146, %v4226
    %v4232 = vxor.u32 %v4228, 2147483648
    %v4233 = vmul.f32 %v4232, 1.442695
    %v4234 = vpow.pop %v4233
    %v4235 = vadd.f32 %v4234, 1.0
    %v4236 = vrcp.pop %v4235
    %v4237 = vmul.f32 %v4235, %v4236
    %v4238 = vsub.f32 1.0, %v4237
    %v4239 = vmul.f32 %v4236, %v4238
    %v4240 = vadd.f32 %v4236, %v4239
    %vm4241 = vweird.f32 %v4235
    %vm4242 = vweird.f32 %v4236
    %vm4243 = vmor %vm4241, %vm4242
    %v4244 = vsel %vm4243, %v4236, %v4240
    %v4245 = vand.u32 2147483647, %v4235
    %vm4246 = vcmp.eq.f32.partialorder %v4245, 8.507059e+37
    %v4247 = vand.u32 %v4235, 2147483648
    %v4248 = vor.u32 1.1754944e-38, %v4247
    %v4249 = vsel %vm4246, %v4248, %v4244
    %v4250 = vmul.f32 1.0, %v4249
    %v4251 = vxor.u32 %v4229, 2147483648
    %v4252 = vmul.f32 %v4251, 1.442695
    %v4253 = vpow.pop %v4252
    %v4254 = vadd.f32 %v4253, 1.0
    %v4255 = vrcp.pop %v4254
    %v4256 = vmul.f32 %v4254, %v4255
    %v4257 = vsub.f32 1.0, %v4256
    %v4258 = vmul.f32 %v4255, %v4257
    %v4259 = vadd.f32 %v4255, %v4258
    %vm4260 = vweird.f32 %v4254
    %vm4261 = vweird.f32 %v4255
    %vm4262 = vmor %vm4260, %vm4261
    %v4263 = vsel %vm4262, %v4255, %v4259
    %v4264 = vand.u32 2147483647, %v4254
    %vm4265 = vcmp.eq.f32.partialorder %v4264, 8.507059e+37
    %v4266 = vand.u32 %v4254, 2147483648
    %v4267 = vor.u32 1.1754944e-38, %v4266
    %v4268 = vsel %vm4265, %v4267, %v4263
    %v4269 = vmul.f32 1.0, %v4268
    %v4270 = vtanh.pop %v4230
    %v4271 = vxor.u32 %v4231, 2147483648
    %v4272 = vmul.f32 %v4271, 1.442695
    %v4273 = vpow.pop %v4272
    %v4274 = vadd.f32 %v4273, 1.0
    %v4275 = vrcp.pop %v4274
    %v4276 = vmul.f32 %v4274, %v4275
    %v4277 = vsub.f32 1.0, %v4276
    %v4278 = vmul.f32 %v4275, %v4277
    %v4279 = vadd.f32 %v4275, %v4278
    %vm4280 = vweird.f32 %v4274
    %vm4281 = vweird.f32 %v4275
    %vm4282 = vmor %vm4280, %vm4281
    %v4283 = vsel %vm4282, %v4275, %v4279
    %v4284 = vand.u32 2147483647, %v4274
    %vm4285 = vcmp.eq.f32.partialorder %v4284, 8.507059e+37
    %v4286 = vand.u32 %v4274, 2147483648
    %v4287 = vor.u32 1.1754944e-38, %v4286
    %v4288 = vsel %vm4285, %v4287, %v4283
    %v4289 = vmul.f32 1.0, %v4288
    %v4290 = vmul.f32 %v4269, %v3459
    %v4291 = vmul.f32 %v4250, %v4270
    %v4292 = vadd.f32 %v4290, %v4291
    %v4293 = vtanh.pop %v4292
    %v4294 = vmul.f32 %v4289, %v4293
    %4295 = vmatpush.msra.mxu0 %v2551
    %4296 = vmatpush.msra.mxu0 %v2547
    %4297 = vmatpush.msra.mxu0 %v2543
    %4298 = vmatpush.msra.mxu0 %v2539
    %4299 = vmatpush.msra.mxu0 %v2535
    %4300 = vmatpush.msra.mxu0 %v2531
    %4301 = vmatpush.msra.mxu0 %v2527
    %4302 = vmatpush.msra.mxu0 %v2523
    %4303 = vmatpush.msra.mxu0 %v2519
    %4304 = vmatpush.msra.mxu0 %v2515
    %4305 = vmatpush.msra.mxu0 %v2511
    %4306 = vmatpush.msra.mxu0 %v2507
    %4307 = vmatpush.msra.mxu0 %v2503
    %4308 = vmatpush.msra.mxu0 %v2499
    %4309 = vmatpush.msra.mxu0 %v2495
    %4310 = vmatpush.msra.mxu0 %v2491
    %4311 = vmatmul.f32.gmra.mxu0 %v3461
    %v4312 = vpop.f32.mrf.mxu0
    %v4313 = vadd.f32 %v2557, %v4312
    %4314 = vdwg.mxu0
    %4315 = vmatpush.msra.mxu0 %v2552
    %4316 = vmatpush.msra.mxu0 %v2548
    %4317 = vmatpush.msra.mxu0 %v2544
    %4318 = vmatpush.msra.mxu0 %v2540
    %4319 = vmatpush.msra.mxu0 %v2536
    %4320 = vmatpush.msra.mxu0 %v2532
    %4321 = vmatpush.msra.mxu0 %v2528
    %4322 = vmatpush.msra.mxu0 %v2524
    %4323 = vmatpush.msra.mxu0 %v2520
    %4324 = vmatpush.msra.mxu0 %v2516
    %4325 = vmatpush.msra.mxu0 %v2512
    %4326 = vmatpush.msra.mxu0 %v2508
    %4327 = vmatpush.msra.mxu0 %v2504
    %4328 = vmatpush.msra.mxu0 %v2500
    %4329 = vmatpush.msra.mxu0 %v2496
    %4330 = vmatpush.msra.mxu0 %v2492
    %4331 = vmatmul.f32.gmra.mxu0 %v3461
    %v4332 = vpop.f32.mrf.mxu0
    %v4333 = vadd.f32 %v2558, %v4332
    %4334 = vdwg.mxu0
    %4335 = vmatpush.msra.mxu0 %v2553
    %4336 = vmatpush.msra.mxu0 %v2549
    %4337 = vmatpush.msra.mxu0 %v2545
    %4338 = vmatpush.msra.mxu0 %v2541
    %4339 = vmatpush.msra.mxu0 %v2537
    %4340 = vmatpush.msra.mxu0 %v2533
    %4341 = vmatpush.msra.mxu0 %v2529
    %4342 = vmatpush.msra.mxu0 %v2525
    %4343 = vmatpush.msra.mxu0 %v2521
    %4344 = vmatpush.msra.mxu0 %v2517
    %4345 = vmatpush.msra.mxu0 %v2513
    %4346 = vmatpush.msra.mxu0 %v2509
    %4347 = vmatpush.msra.mxu0 %v2505
    %4348 = vmatpush.msra.mxu0 %v2501
    %4349 = vmatpush.msra.mxu0 %v2497
    %4350 = vmatpush.msra.mxu0 %v2493
    %4351 = vmatmul.f32.gmra.mxu0 %v3461
    %v4352 = vpop.f32.mrf.mxu0
    %v4353 = vadd.f32 %v2559, %v4352
    %4354 = vdwg.mxu0
    %4355 = vmatpush.msra.mxu0 %v2554
    %4356 = vmatpush.msra.mxu0 %v2550
    %4357 = vmatpush.msra.mxu0 %v2546
    %4358 = vmatpush.msra.mxu0 %v2542
    %4359 = vmatpush.msra.mxu0 %v2538
    %4360 = vmatpush.msra.mxu0 %v2534
    %4361 = vmatpush.msra.mxu0 %v2530
    %4362 = vmatpush.msra.mxu0 %v2526
    %4363 = vmatpush.msra.mxu0 %v2522
    %4364 = vmatpush.msra.mxu0 %v2518
    %4365 = vmatpush.msra.mxu0 %v2514
    %4366 = vmatpush.msra.mxu0 %v2510
    %4367 = vmatpush.msra.mxu0 %v2506
    %4368 = vmatpush.msra.mxu0 %v2502
    %4369 = vmatpush.msra.mxu0 %v2498
    %4370 = vmatpush.msra.mxu0 %v2494
    %4371 = vmatmul.f32.gmra.mxu0 %v3461
    %v4372 = vpop.f32.mrf.mxu0
    %v4373 = vadd.f32 %v2560, %v4372
    %4374 = vdwg.mxu0
    %4375 = vmatpush.msra.mxu0 %v2705
    %4376 = vmatpush.msra.mxu0 %v2701
    %4377 = vmatpush.msra.mxu0 %v2697
    %4378 = vmatpush.msra.mxu0 %v2693
    %4379 = vmatpush.msra.mxu0 %v2689
    %4380 = vmatpush.msra.mxu0 %v2685
    %4381 = vmatpush.msra.mxu0 %v2681
    %4382 = vmatpush.msra.mxu0 %v2677
    %4383 = vmatpush.msra.mxu0 %v2673
    %4384 = vmatpush.msra.mxu0 %v2669
    %4385 = vmatpush.msra.mxu0 %v2665
    %4386 = vmatpush.msra.mxu0 %v2661
    %4387 = vmatpush.msra.mxu0 %v2657
    %4388 = vmatpush.msra.mxu0 %v2653
    %4389 = vmatpush.msra.mxu0 %v2649
    %4390 = vmatpush.msra.mxu0 %v2645
    %4391 = vmatmul.f32.gmra.mxu0 %v3688
    %v4392 = vpop.f32.mrf.mxu0
    %v4393 = vadd.f32 0.0, %v4392
    %4394 = vdwg.mxu0
    %4395 = vmatpush.msra.mxu0 %v2706
    %4396 = vmatpush.msra.mxu0 %v2702
    %4397 = vmatpush.msra.mxu0 %v2698
    %4398 = vmatpush.msra.mxu0 %v2694
    %4399 = vmatpush.msra.mxu0 %v2690
    %4400 = vmatpush.msra.mxu0 %v2686
    %4401 = vmatpush.msra.mxu0 %v2682
    %4402 = vmatpush.msra.mxu0 %v2678
    %4403 = vmatpush.msra.mxu0 %v2674
    %4404 = vmatpush.msra.mxu0 %v2670
    %4405 = vmatpush.msra.mxu0 %v2666
    %4406 = vmatpush.msra.mxu0 %v2662
    %4407 = vmatpush.msra.mxu0 %v2658
    %4408 = vmatpush.msra.mxu0 %v2654
    %4409 = vmatpush.msra.mxu0 %v2650
    %4410 = vmatpush.msra.mxu0 %v2646
    %4411 = vmatmul.f32.gmra.mxu0 %v3688
    %v4412 = vpop.f32.mrf.mxu0
    %v4413 = vadd.f32 0.0, %v4412
    %4414 = vdwg.mxu0
    %4415 = vmatpush.msra.mxu0 %v2707
    %4416 = vmatpush.msra.mxu0 %v2703
    %4417 = vmatpush.msra.mxu0 %v2699
    %4418 = vmatpush.msra.mxu0 %v2695
    %4419 = vmatpush.msra.mxu0 %v2691
    %4420 = vmatpush.msra.mxu0 %v2687
    %4421 = vmatpush.msra.mxu0 %v2683
    %4422 = vmatpush.msra.mxu0 %v2679
    %4423 = vmatpush.msra.mxu0 %v2675
    %4424 = vmatpush.msra.mxu0 %v2671
    %4425 = vmatpush.msra.mxu0 %v2667
    %4426 = vmatpush.msra.mxu0 %v2663
    %4427 = vmatpush.msra.mxu0 %v2659
    %4428 = vmatpush.msra.mxu0 %v2655
    %4429 = vmatpush.msra.mxu0 %v2651
    %4430 = vmatpush.msra.mxu0 %v2647
    %4431 = vmatmul.f32.gmra.mxu0 %v3688
    %v4432 = vpop.f32.mrf.mxu0
    %v4433 = vadd.f32 0.0, %v4432
    %4434 = vdwg.mxu0
    %4435 = vmatpush.msra.mxu0 %v2708
    %4436 = vmatpush.msra.mxu0 %v2704
    %4437 = vmatpush.msra.mxu0 %v2700
    %4438 = vmatpush.msra.mxu0 %v2696
    %4439 = vmatpush.msra.mxu0 %v2692
    %4440 = vmatpush.msra.mxu0 %v2688
    %4441 = vmatpush.msra.mxu0 %v2684
    %4442 = vmatpush.msra.mxu0 %v2680
    %4443 = vmatpush.msra.mxu0 %v2676
    %4444 = vmatpush.msra.mxu0 %v2672
    %4445 = vmatpush.msra.mxu0 %v2668
    %4446 = vmatpush.msra.mxu0 %v2664
    %4447 = vmatpush.msra.mxu0 %v2660
    %4448 = vmatpush.msra.mxu0 %v2656
    %4449 = vmatpush.msra.mxu0 %v2652
    %4450 = vmatpush.msra.mxu0 %v2648
    %4451 = vmatmul.f32.gmra.mxu0 %v3688
    %v4452 = vpop.f32.mrf.mxu0
    %v4453 = vadd.f32 0.0, %v4452
    %4454 = vdwg.mxu0
    %v4455 = vadd.f32 %v4313, %v4393
    %v4456 = vadd.f32 %v4333, %v4413
    %v4457 = vadd.f32 %v4353, %v4433
    %v4458 = vadd.f32 %v4373, %v4453
    %v4459 = vxor.u32 %v4455, 2147483648
    %v4460 = vmul.f32 %v4459, 1.442695
    %v4461 = vpow.pop %v4460
    %v4462 = vadd.f32 %v4461, 1.0
    %v4463 = vrcp.pop %v4462
    %v4464 = vmul.f32 %v4462, %v4463
    %v4465 = vsub.f32 1.0, %v4464
    %v4466 = vmul.f32 %v4463, %v4465
    %v4467 = vadd.f32 %v4463, %v4466
    %vm4468 = vweird.f32 %v4462
    %vm4469 = vweird.f32 %v4463
    %vm4470 = vmor %vm4468, %vm4469
    %v4471 = vsel %vm4470, %v4463, %v4467
    %v4472 = vand.u32 2147483647, %v4462
    %vm4473 = vcmp.eq.f32.partialorder %v4472, 8.507059e+37
    %v4474 = vand.u32 %v4462, 2147483648
    %v4475 = vor.u32 1.1754944e-38, %v4474
    %v4476 = vsel %vm4473, %v4475, %v4471
    %v4477 = vmul.f32 1.0, %v4476
    %v4478 = vxor.u32 %v4456, 2147483648
    %v4479 = vmul.f32 %v4478, 1.442695
    %v4480 = vpow.pop %v4479
    %v4481 = vadd.f32 %v4480, 1.0
    %v4482 = vrcp.pop %v4481
    %v4483 = vmul.f32 %v4481, %v4482
    %v4484 = vsub.f32 1.0, %v4483
    %v4485 = vmul.f32 %v4482, %v4484
    %v4486 = vadd.f32 %v4482, %v4485
    %vm4487 = vweird.f32 %v4481
    %vm4488 = vweird.f32 %v4482
    %vm4489 = vmor %vm4487, %vm4488
    %v4490 = vsel %vm4489, %v4482, %v4486
    %v4491 = vand.u32 2147483647, %v4481
    %vm4492 = vcmp.eq.f32.partialorder %v4491, 8.507059e+37
    %v4493 = vand.u32 %v4481, 2147483648
    %v4494 = vor.u32 1.1754944e-38, %v4493
    %v4495 = vsel %vm4492, %v4494, %v4490
    %v4496 = vmul.f32 1.0, %v4495
    %v4497 = vtanh.pop %v4457
    %v4498 = vxor.u32 %v4458, 2147483648
    %v4499 = vmul.f32 %v4498, 1.442695
    %v4500 = vpow.pop %v4499
    %v4501 = vadd.f32 %v4500, 1.0
    %v4502 = vrcp.pop %v4501
    %v4503 = vmul.f32 %v4501, %v4502
    %v4504 = vsub.f32 1.0, %v4503
    %v4505 = vmul.f32 %v4502, %v4504
    %v4506 = vadd.f32 %v4502, %v4505
    %vm4507 = vweird.f32 %v4501
    %vm4508 = vweird.f32 %v4502
    %vm4509 = vmor %vm4507, %vm4508
    %v4510 = vsel %vm4509, %v4502, %v4506
    %v4511 = vand.u32 2147483647, %v4501
    %vm4512 = vcmp.eq.f32.partialorder %v4511, 8.507059e+37
    %v4513 = vand.u32 %v4501, 2147483648
    %v4514 = vor.u32 1.1754944e-38, %v4513
    %v4515 = vsel %vm4512, %v4514, %v4510
    %v4516 = vmul.f32 1.0, %v4515
    %v4517 = vmul.f32 %v4496, %v3686
    %v4518 = vmul.f32 %v4477, %v4497
    %v4519 = vadd.f32 %v4517, %v4518
    %v4520 = vtanh.pop %v4519
    %v4521 = vmul.f32 %v4516, %v4520
    %s4522 = scalar_lea.vmem [#allocation2], 192
    %v4523 = vld [vmem:[%s4522] sm:$0xff]
    %v4524 = vld [vmem:[%s4522 + $0x8] sm:$0xff]
    %v4525 = vld [vmem:[%s4522 + $0x10] sm:$0xff]
    %v4526 = vld [vmem:[%s4522 + $0x18] sm:$0xff]
    %4527 = vmatpush.msra.mxu0 %v473
    %4528 = vmatpush.msra.mxu0 %v469
    %4529 = vmatpush.msra.mxu0 %v465
    %4530 = vmatpush.msra.mxu0 %v461
    %4531 = vmatpush.msra.mxu0 %v457
    %4532 = vmatpush.msra.mxu0 %v453
    %4533 = vmatpush.msra.mxu0 %v449
    %4534 = vmatpush.msra.mxu0 %v445
    %4535 = vmatpush.msra.mxu0 %v441
    %4536 = vmatpush.msra.mxu0 %v437
    %4537 = vmatpush.msra.mxu0 %v433
    %4538 = vmatpush.msra.mxu0 %v429
    %4539 = vmatpush.msra.mxu0 %v425
    %4540 = vmatpush.msra.mxu0 %v421
    %4541 = vmatpush.msra.mxu0 %v417
    %4542 = vmatpush.msra.mxu0 %v413
    %4543 = vmatmul.f32.gmra.mxu0 %v3840
    %v4544 = vpop.f32.mrf.mxu0
    %v4545 = vadd.f32 0.0, %v4544
    %4546 = vdwg.mxu0
    %4547 = vmatpush.msra.mxu0 %v474
    %4548 = vmatpush.msra.mxu0 %v470
    %4549 = vmatpush.msra.mxu0 %v466
    %4550 = vmatpush.msra.mxu0 %v462
    %4551 = vmatpush.msra.mxu0 %v458
    %4552 = vmatpush.msra.mxu0 %v454
    %4553 = vmatpush.msra.mxu0 %v450
    %4554 = vmatpush.msra.mxu0 %v446
    %4555 = vmatpush.msra.mxu0 %v442
    %4556 = vmatpush.msra.mxu0 %v438
    %4557 = vmatpush.msra.mxu0 %v434
    %4558 = vmatpush.msra.mxu0 %v430
    %4559 = vmatpush.msra.mxu0 %v426
    %4560 = vmatpush.msra.mxu0 %v422
    %4561 = vmatpush.msra.mxu0 %v418
    %4562 = vmatpush.msra.mxu0 %v414
    %4563 = vmatmul.f32.gmra.mxu0 %v3840
    %v4564 = vpop.f32.mrf.mxu0
    %v4565 = vadd.f32 0.0, %v4564
    %4566 = vdwg.mxu0
    %4567 = vmatpush.msra.mxu0 %v475
    %4568 = vmatpush.msra.mxu0 %v471
    %4569 = vmatpush.msra.mxu0 %v467
    %4570 = vmatpush.msra.mxu0 %v463
    %4571 = vmatpush.msra.mxu0 %v459
    %4572 = vmatpush.msra.mxu0 %v455
    %4573 = vmatpush.msra.mxu0 %v451
    %4574 = vmatpush.msra.mxu0 %v447
    %4575 = vmatpush.msra.mxu0 %v443
    %4576 = vmatpush.msra.mxu0 %v439
    %4577 = vmatpush.msra.mxu0 %v435
    %4578 = vmatpush.msra.mxu0 %v431
    %4579 = vmatpush.msra.mxu0 %v427
    %4580 = vmatpush.msra.mxu0 %v423
    %4581 = vmatpush.msra.mxu0 %v419
    %4582 = vmatpush.msra.mxu0 %v415
    %4583 = vmatmul.f32.gmra.mxu0 %v3840
    %v4584 = vpop.f32.mrf.mxu0
    %v4585 = vadd.f32 0.0, %v4584
    %4586 = vdwg.mxu0
    %4587 = vmatpush.msra.mxu0 %v476
    %4588 = vmatpush.msra.mxu0 %v472
    %4589 = vmatpush.msra.mxu0 %v468
    %4590 = vmatpush.msra.mxu0 %v464
    %4591 = vmatpush.msra.mxu0 %v460
    %4592 = vmatpush.msra.mxu0 %v456
    %4593 = vmatpush.msra.mxu0 %v452
    %4594 = vmatpush.msra.mxu0 %v448
    %4595 = vmatpush.msra.mxu0 %v444
    %4596 = vmatpush.msra.mxu0 %v440
    %4597 = vmatpush.msra.mxu0 %v436
    %4598 = vmatpush.msra.mxu0 %v432
    %4599 = vmatpush.msra.mxu0 %v428
    %4600 = vmatpush.msra.mxu0 %v424
    %4601 = vmatpush.msra.mxu0 %v420
    %4602 = vmatpush.msra.mxu0 %v416
    %4603 = vmatmul.f32.gmra.mxu0 %v3840
    %v4604 = vpop.f32.mrf.mxu0
    %v4605 = vadd.f32 0.0, %v4604
    %4606 = vdwg.mxu0
    %v4607 = vadd.f32 %v4523, %v4545
    %v4608 = vadd.f32 %v4524, %v4565
    %v4609 = vadd.f32 %v4525, %v4585
    %v4610 = vadd.f32 %v4526, %v4605
    %v4611 = vxor.u32 %v4607, 2147483648
    %v4612 = vmul.f32 %v4611, 1.442695
    %v4613 = vpow.pop %v4612
    %v4614 = vadd.f32 %v4613, 1.0
    %v4615 = vrcp.pop %v4614
    %v4616 = vmul.f32 %v4614, %v4615
    %v4617 = vsub.f32 1.0, %v4616
    %v4618 = vmul.f32 %v4615, %v4617
    %v4619 = vadd.f32 %v4615, %v4618
    %vm4620 = vweird.f32 %v4614
    %vm4621 = vweird.f32 %v4615
    %vm4622 = vmor %vm4620, %vm4621
    %v4623 = vsel %vm4622, %v4615, %v4619
    %v4624 = vand.u32 2147483647, %v4614
    %vm4625 = vcmp.eq.f32.partialorder %v4624, 8.507059e+37
    %v4626 = vand.u32 %v4614, 2147483648
    %v4627 = vor.u32 1.1754944e-38, %v4626
    %v4628 = vsel %vm4625, %v4627, %v4623
    %v4629 = vmul.f32 1.0, %v4628
    %v4630 = vxor.u32 %v4608, 2147483648
    %v4631 = vmul.f32 %v4630, 1.442695
    %v4632 = vpow.pop %v4631
    %v4633 = vadd.f32 %v4632, 1.0
    %v4634 = vrcp.pop %v4633
    %v4635 = vmul.f32 %v4633, %v4634
    %v4636 = vsub.f32 1.0, %v4635
    %v4637 = vmul.f32 %v4634, %v4636
    %v4638 = vadd.f32 %v4634, %v4637
    %vm4639 = vweird.f32 %v4633
    %vm4640 = vweird.f32 %v4634
    %vm4641 = vmor %vm4639, %vm4640
    %v4642 = vsel %vm4641, %v4634, %v4638
    %v4643 = vand.u32 2147483647, %v4633
    %vm4644 = vcmp.eq.f32.partialorder %v4643, 8.507059e+37
    %v4645 = vand.u32 %v4633, 2147483648
    %v4646 = vor.u32 1.1754944e-38, %v4645
    %v4647 = vsel %vm4644, %v4646, %v4642
    %v4648 = vmul.f32 1.0, %v4647
    %v4649 = vtanh.pop %v4609
    %v4650 = vxor.u32 %v4610, 2147483648
    %v4651 = vmul.f32 %v4650, 1.442695
    %v4652 = vpow.pop %v4651
    %v4653 = vadd.f32 %v4652, 1.0
    %v4654 = vrcp.pop %v4653
    %v4655 = vmul.f32 %v4653, %v4654
    %v4656 = vsub.f32 1.0, %v4655
    %v4657 = vmul.f32 %v4654, %v4656
    %v4658 = vadd.f32 %v4654, %v4657
    %vm4659 = vweird.f32 %v4653
    %vm4660 = vweird.f32 %v4654
    %vm4661 = vmor %vm4659, %vm4660
    %v4662 = vsel %vm4661, %v4654, %v4658
    %v4663 = vand.u32 2147483647, %v4653
    %vm4664 = vcmp.eq.f32.partialorder %v4663, 8.507059e+37
    %v4665 = vand.u32 %v4653, 2147483648
    %v4666 = vor.u32 1.1754944e-38, %v4665
    %v4667 = vsel %vm4664, %v4666, %v4662
    %v4668 = vmul.f32 1.0, %v4667
    %v4669 = vmul.f32 %v4648, %v3838
    %v4670 = vmul.f32 %v4629, %v4649
    %v4671 = vadd.f32 %v4669, %v4670
    %v4672 = vtanh.pop %v4671
    %v4673 = vmul.f32 %v4668, %v4672
    %4674 = vmatpush.msra.mxu0 %v836
    %4675 = vmatpush.msra.mxu0 %v832
    %4676 = vmatpush.msra.mxu0 %v828
    %4677 = vmatpush.msra.mxu0 %v824
    %4678 = vmatpush.msra.mxu0 %v820
    %4679 = vmatpush.msra.mxu0 %v816
    %4680 = vmatpush.msra.mxu0 %v812
    %4681 = vmatpush.msra.mxu0 %v808
    %4682 = vmatpush.msra.mxu0 %v804
    %4683 = vmatpush.msra.mxu0 %v800
    %4684 = vmatpush.msra.mxu0 %v796
    %4685 = vmatpush.msra.mxu0 %v792
    %4686 = vmatpush.msra.mxu0 %v788
    %4687 = vmatpush.msra.mxu0 %v784
    %4688 = vmatpush.msra.mxu0 %v780
    %4689 = vmatpush.msra.mxu0 %v776
    %4690 = vmatmul.f32.gmra.mxu0 %v3840
    %v4691 = vpop.f32.mrf.mxu0
    %v4692 = vadd.f32 %v842, %v4691
    %4693 = vdwg.mxu0
    %4694 = vmatpush.msra.mxu0 %v837
    %4695 = vmatpush.msra.mxu0 %v833
    %4696 = vmatpush.msra.mxu0 %v829
    %4697 = vmatpush.msra.mxu0 %v825
    %4698 = vmatpush.msra.mxu0 %v821
    %4699 = vmatpush.msra.mxu0 %v817
    %4700 = vmatpush.msra.mxu0 %v813
    %4701 = vmatpush.msra.mxu0 %v809
    %4702 = vmatpush.msra.mxu0 %v805
    %4703 = vmatpush.msra.mxu0 %v801
    %4704 = vmatpush.msra.mxu0 %v797
    %4705 = vmatpush.msra.mxu0 %v793
    %4706 = vmatpush.msra.mxu0 %v789
    %4707 = vmatpush.msra.mxu0 %v785
    %4708 = vmatpush.msra.mxu0 %v781
    %4709 = vmatpush.msra.mxu0 %v777
    %4710 = vmatmul.f32.gmra.mxu0 %v3840
    %v4711 = vpop.f32.mrf.mxu0
    %v4712 = vadd.f32 %v843, %v4711
    %4713 = vdwg.mxu0
    %4714 = vmatpush.msra.mxu0 %v838
    %4715 = vmatpush.msra.mxu0 %v834
    %4716 = vmatpush.msra.mxu0 %v830
    %4717 = vmatpush.msra.mxu0 %v826
    %4718 = vmatpush.msra.mxu0 %v822
    %4719 = vmatpush.msra.mxu0 %v818
    %4720 = vmatpush.msra.mxu0 %v814
    %4721 = vmatpush.msra.mxu0 %v810
    %4722 = vmatpush.msra.mxu0 %v806
    %4723 = vmatpush.msra.mxu0 %v802
    %4724 = vmatpush.msra.mxu0 %v798
    %4725 = vmatpush.msra.mxu0 %v794
    %4726 = vmatpush.msra.mxu0 %v790
    %4727 = vmatpush.msra.mxu0 %v786
    %4728 = vmatpush.msra.mxu0 %v782
    %4729 = vmatpush.msra.mxu0 %v778
    %4730 = vmatmul.f32.gmra.mxu0 %v3840
    %v4731 = vpop.f32.mrf.mxu0
    %v4732 = vadd.f32 %v844, %v4731
    %4733 = vdwg.mxu0
    %4734 = vmatpush.msra.mxu0 %v839
    %4735 = vmatpush.msra.mxu0 %v835
    %4736 = vmatpush.msra.mxu0 %v831
    %4737 = vmatpush.msra.mxu0 %v827
    %4738 = vmatpush.msra.mxu0 %v823
    %4739 = vmatpush.msra.mxu0 %v819
    %4740 = vmatpush.msra.mxu0 %v815
    %4741 = vmatpush.msra.mxu0 %v811
    %4742 = vmatpush.msra.mxu0 %v807
    %4743 = vmatpush.msra.mxu0 %v803
    %4744 = vmatpush.msra.mxu0 %v799
    %4745 = vmatpush.msra.mxu0 %v795
    %4746 = vmatpush.msra.mxu0 %v791
    %4747 = vmatpush.msra.mxu0 %v787
    %4748 = vmatpush.msra.mxu0 %v783
    %4749 = vmatpush.msra.mxu0 %v779
    %4750 = vmatmul.f32.gmra.mxu0 %v3840
    %v4751 = vpop.f32.mrf.mxu0
    %v4752 = vadd.f32 %v845, %v4751
    %4753 = vdwg.mxu0
    %4754 = vmatpush.msra.mxu0 %v990
    %4755 = vmatpush.msra.mxu0 %v986
    %4756 = vmatpush.msra.mxu0 %v982
    %4757 = vmatpush.msra.mxu0 %v978
    %4758 = vmatpush.msra.mxu0 %v974
    %4759 = vmatpush.msra.mxu0 %v970
    %4760 = vmatpush.msra.mxu0 %v966
    %4761 = vmatpush.msra.mxu0 %v962
    %4762 = vmatpush.msra.mxu0 %v958
    %4763 = vmatpush.msra.mxu0 %v954
    %4764 = vmatpush.msra.mxu0 %v950
    %4765 = vmatpush.msra.mxu0 %v946
    %4766 = vmatpush.msra.mxu0 %v942
    %4767 = vmatpush.msra.mxu0 %v938
    %4768 = vmatpush.msra.mxu0 %v934
    %4769 = vmatpush.msra.mxu0 %v930
    %4770 = vmatmul.f32.gmra.mxu0 %v4067
    %v4771 = vpop.f32.mrf.mxu0
    %v4772 = vadd.f32 0.0, %v4771
    %4773 = vdwg.mxu0
    %4774 = vmatpush.msra.mxu0 %v991
    %4775 = vmatpush.msra.mxu0 %v987
    %4776 = vmatpush.msra.mxu0 %v983
    %4777 = vmatpush.msra.mxu0 %v979
    %4778 = vmatpush.msra.mxu0 %v975
    %4779 = vmatpush.msra.mxu0 %v971
    %4780 = vmatpush.msra.mxu0 %v967
    %4781 = vmatpush.msra.mxu0 %v963
    %4782 = vmatpush.msra.mxu0 %v959
    %4783 = vmatpush.msra.mxu0 %v955
    %4784 = vmatpush.msra.mxu0 %v951
    %4785 = vmatpush.msra.mxu0 %v947
    %4786 = vmatpush.msra.mxu0 %v943
    %4787 = vmatpush.msra.mxu0 %v939
    %4788 = vmatpush.msra.mxu0 %v935
    %4789 = vmatpush.msra.mxu0 %v931
    %4790 = vmatmul.f32.gmra.mxu0 %v4067
    %v4791 = vpop.f32.mrf.mxu0
    %v4792 = vadd.f32 0.0, %v4791
    %4793 = vdwg.mxu0
    %4794 = vmatpush.msra.mxu0 %v992
    %4795 = vmatpush.msra.mxu0 %v988
    %4796 = vmatpush.msra.mxu0 %v984
    %4797 = vmatpush.msra.mxu0 %v980
    %4798 = vmatpush.msra.mxu0 %v976
    %4799 = vmatpush.msra.mxu0 %v972
    %4800 = vmatpush.msra.mxu0 %v968
    %4801 = vmatpush.msra.mxu0 %v964
    %4802 = vmatpush.msra.mxu0 %v960
    %4803 = vmatpush.msra.mxu0 %v956
    %4804 = vmatpush.msra.mxu0 %v952
    %4805 = vmatpush.msra.mxu0 %v948
    %4806 = vmatpush.msra.mxu0 %v944
    %4807 = vmatpush.msra.mxu0 %v940
    %4808 = vmatpush.msra.mxu0 %v936
    %4809 = vmatpush.msra.mxu0 %v932
    %4810 = vmatmul.f32.gmra.mxu0 %v4067
    %v4811 = vpop.f32.mrf.mxu0
    %v4812 = vadd.f32 0.0, %v4811
    %4813 = vdwg.mxu0
    %4814 = vmatpush.msra.mxu0 %v993
    %4815 = vmatpush.msra.mxu0 %v989
    %4816 = vmatpush.msra.mxu0 %v985
    %4817 = vmatpush.msra.mxu0 %v981
    %4818 = vmatpush.msra.mxu0 %v977
    %4819 = vmatpush.msra.mxu0 %v973
    %4820 = vmatpush.msra.mxu0 %v969
    %4821 = vmatpush.msra.mxu0 %v965
    %4822 = vmatpush.msra.mxu0 %v961
    %4823 = vmatpush.msra.mxu0 %v957
    %4824 = vmatpush.msra.mxu0 %v953
    %4825 = vmatpush.msra.mxu0 %v949
    %4826 = vmatpush.msra.mxu0 %v945
    %4827 = vmatpush.msra.mxu0 %v941
    %4828 = vmatpush.msra.mxu0 %v937
    %4829 = vmatpush.msra.mxu0 %v933
    %4830 = vmatmul.f32.gmra.mxu0 %v4067
    %v4831 = vpop.f32.mrf.mxu0
    %v4832 = vadd.f32 0.0, %v4831
    %4833 = vdwg.mxu0
    %v4834 = vadd.f32 %v4692, %v4772
    %v4835 = vadd.f32 %v4712, %v4792
    %v4836 = vadd.f32 %v4732, %v4812
    %v4837 = vadd.f32 %v4752, %v4832
    %v4838 = vxor.u32 %v4834, 2147483648
    %v4839 = vmul.f32 %v4838, 1.442695
    %v4840 = vpow.pop %v4839
    %v4841 = vadd.f32 %v4840, 1.0
    %v4842 = vrcp.pop %v4841
    %v4843 = vmul.f32 %v4841, %v4842
    %v4844 = vsub.f32 1.0, %v4843
    %v4845 = vmul.f32 %v4842, %v4844
    %v4846 = vadd.f32 %v4842, %v4845
    %vm4847 = vweird.f32 %v4841
    %vm4848 = vweird.f32 %v4842
    %vm4849 = vmor %vm4847, %vm4848
    %v4850 = vsel %vm4849, %v4842, %v4846
    %v4851 = vand.u32 2147483647, %v4841
    %vm4852 = vcmp.eq.f32.partialorder %v4851, 8.507059e+37
    %v4853 = vand.u32 %v4841, 2147483648
    %v4854 = vor.u32 1.1754944e-38, %v4853
    %v4855 = vsel %vm4852, %v4854, %v4850
    %v4856 = vmul.f32 1.0, %v4855
    %v4857 = vxor.u32 %v4835, 2147483648
    %v4858 = vmul.f32 %v4857, 1.442695
    %v4859 = vpow.pop %v4858
    %v4860 = vadd.f32 %v4859, 1.0
    %v4861 = vrcp.pop %v4860
    %v4862 = vmul.f32 %v4860, %v4861
    %v4863 = vsub.f32 1.0, %v4862
    %v4864 = vmul.f32 %v4861, %v4863
    %v4865 = vadd.f32 %v4861, %v4864
    %vm4866 = vweird.f32 %v4860
    %vm4867 = vweird.f32 %v4861
    %vm4868 = vmor %vm4866, %vm4867
    %v4869 = vsel %vm4868, %v4861, %v4865
    %v4870 = vand.u32 2147483647, %v4860
    %vm4871 = vcmp.eq.f32.partialorder %v4870, 8.507059e+37
    %v4872 = vand.u32 %v4860, 2147483648
    %v4873 = vor.u32 1.1754944e-38, %v4872
    %v4874 = vsel %vm4871, %v4873, %v4869
    %v4875 = vmul.f32 1.0, %v4874
    %v4876 = vtanh.pop %v4836
    %v4877 = vxor.u32 %v4837, 2147483648
    %v4878 = vmul.f32 %v4877, 1.442695
    %v4879 = vpow.pop %v4878
    %v4880 = vadd.f32 %v4879, 1.0
    %v4881 = vrcp.pop %v4880
    %v4882 = vmul.f32 %v4880, %v4881
    %v4883 = vsub.f32 1.0, %v4882
    %v4884 = vmul.f32 %v4881, %v4883
    %v4885 = vadd.f32 %v4881, %v4884
    %vm4886 = vweird.f32 %v4880
    %vm4887 = vweird.f32 %v4881
    %vm4888 = vmor %vm4886, %vm4887
    %v4889 = vsel %vm4888, %v4881, %v4885
    %v4890 = vand.u32 2147483647, %v4880
    %vm4891 = vcmp.eq.f32.partialorder %v4890, 8.507059e+37
    %v4892 = vand.u32 %v4880, 2147483648
    %v4893 = vor.u32 1.1754944e-38, %v4892
    %v4894 = vsel %vm4891, %v4893, %v4889
    %v4895 = vmul.f32 1.0, %v4894
    %v4896 = vmul.f32 %v4875, %v4065
    %v4897 = vmul.f32 %v4856, %v4876
    %v4898 = vadd.f32 %v4896, %v4897
    %v4899 = vtanh.pop %v4898
    %v4900 = vmul.f32 %v4895, %v4899
    %4901 = vmatpush.msra.mxu0 %v1580
    %4902 = vmatpush.msra.mxu0 %v1576
    %4903 = vmatpush.msra.mxu0 %v1572
    %4904 = vmatpush.msra.mxu0 %v1568
    %4905 = vmatpush.msra.mxu0 %v1564
    %4906 = vmatpush.msra.mxu0 %v1560
    %4907 = vmatpush.msra.mxu0 %v1556
    %4908 = vmatpush.msra.mxu0 %v1552
    %4909 = vmatpush.msra.mxu0 %v1548
    %4910 = vmatpush.msra.mxu0 %v1544
    %4911 = vmatpush.msra.mxu0 %v1540
    %4912 = vmatpush.msra.mxu0 %v1536
    %4913 = vmatpush.msra.mxu0 %v1532
    %4914 = vmatpush.msra.mxu0 %v1528
    %4915 = vmatpush.msra.mxu0 %v1524
    %4916 = vmatpush.msra.mxu0 %v1520
    %4917 = vmatmul.f32.gmra.mxu0 %v4067
    %v4918 = vpop.f32.mrf.mxu0
    %v4919 = vadd.f32 %v1586, %v4918
    %4920 = vdwg.mxu0
    %4921 = vmatpush.msra.mxu0 %v1581
    %4922 = vmatpush.msra.mxu0 %v1577
    %4923 = vmatpush.msra.mxu0 %v1573
    %4924 = vmatpush.msra.mxu0 %v1569
    %4925 = vmatpush.msra.mxu0 %v1565
    %4926 = vmatpush.msra.mxu0 %v1561
    %4927 = vmatpush.msra.mxu0 %v1557
    %4928 = vmatpush.msra.mxu0 %v1553
    %4929 = vmatpush.msra.mxu0 %v1549
    %4930 = vmatpush.msra.mxu0 %v1545
    %4931 = vmatpush.msra.mxu0 %v1541
    %4932 = vmatpush.msra.mxu0 %v1537
    %4933 = vmatpush.msra.mxu0 %v1533
    %4934 = vmatpush.msra.mxu0 %v1529
    %4935 = vmatpush.msra.mxu0 %v1525
    %4936 = vmatpush.msra.mxu0 %v1521
    %4937 = vmatmul.f32.gmra.mxu0 %v4067
    %v4938 = vpop.f32.mrf.mxu0
    %v4939 = vadd.f32 %v1587, %v4938
    %4940 = vdwg.mxu0
    %4941 = vmatpush.msra.mxu0 %v1582
    %4942 = vmatpush.msra.mxu0 %v1578
    %4943 = vmatpush.msra.mxu0 %v1574
    %4944 = vmatpush.msra.mxu0 %v1570
    %4945 = vmatpush.msra.mxu0 %v1566
    %4946 = vmatpush.msra.mxu0 %v1562
    %4947 = vmatpush.msra.mxu0 %v1558
    %4948 = vmatpush.msra.mxu0 %v1554
    %4949 = vmatpush.msra.mxu0 %v1550
    %4950 = vmatpush.msra.mxu0 %v1546
    %4951 = vmatpush.msra.mxu0 %v1542
    %4952 = vmatpush.msra.mxu0 %v1538
    %4953 = vmatpush.msra.mxu0 %v1534
    %4954 = vmatpush.msra.mxu0 %v1530
    %4955 = vmatpush.msra.mxu0 %v1526
    %4956 = vmatpush.msra.mxu0 %v1522
    %4957 = vmatmul.f32.gmra.mxu0 %v4067
    %v4958 = vpop.f32.mrf.mxu0
    %v4959 = vadd.f32 %v1588, %v4958
    %4960 = vdwg.mxu0
    %4961 = vmatpush.msra.mxu0 %v1583
    %4962 = vmatpush.msra.mxu0 %v1579
    %4963 = vmatpush.msra.mxu0 %v1575
    %4964 = vmatpush.msra.mxu0 %v1571
    %4965 = vmatpush.msra.mxu0 %v1567
    %4966 = vmatpush.msra.mxu0 %v1563
    %4967 = vmatpush.msra.mxu0 %v1559
    %4968 = vmatpush.msra.mxu0 %v1555
    %4969 = vmatpush.msra.mxu0 %v1551
    %4970 = vmatpush.msra.mxu0 %v1547
    %4971 = vmatpush.msra.mxu0 %v1543
    %4972 = vmatpush.msra.mxu0 %v1539
    %4973 = vmatpush.msra.mxu0 %v1535
    %4974 = vmatpush.msra.mxu0 %v1531
    %4975 = vmatpush.msra.mxu0 %v1527
    %4976 = vmatpush.msra.mxu0 %v1523
    %4977 = vmatmul.f32.gmra.mxu0 %v4067
    %v4978 = vpop.f32.mrf.mxu0
    %v4979 = vadd.f32 %v1589, %v4978
    %4980 = vdwg.mxu0
    %4981 = vmatpush.msra.mxu0 %v1734
    %4982 = vmatpush.msra.mxu0 %v1730
    %4983 = vmatpush.msra.mxu0 %v1726
    %4984 = vmatpush.msra.mxu0 %v1722
    %4985 = vmatpush.msra.mxu0 %v1718
    %4986 = vmatpush.msra.mxu0 %v1714
    %4987 = vmatpush.msra.mxu0 %v1710
    %4988 = vmatpush.msra.mxu0 %v1706
    %4989 = vmatpush.msra.mxu0 %v1702
    %4990 = vmatpush.msra.mxu0 %v1698
    %4991 = vmatpush.msra.mxu0 %v1694
    %4992 = vmatpush.msra.mxu0 %v1690
    %4993 = vmatpush.msra.mxu0 %v1686
    %4994 = vmatpush.msra.mxu0 %v1682
    %4995 = vmatpush.msra.mxu0 %v1678
    %4996 = vmatpush.msra.mxu0 %v1674
    %4997 = vmatmul.f32.gmra.mxu0 %v4294
    %v4998 = vpop.f32.mrf.mxu0
    %v4999 = vadd.f32 0.0, %v4998
    %5000 = vdwg.mxu0
    %5001 = vmatpush.msra.mxu0 %v1735
    %5002 = vmatpush.msra.mxu0 %v1731
    %5003 = vmatpush.msra.mxu0 %v1727
    %5004 = vmatpush.msra.mxu0 %v1723
    %5005 = vmatpush.msra.mxu0 %v1719
    %5006 = vmatpush.msra.mxu0 %v1715
    %5007 = vmatpush.msra.mxu0 %v1711
    %5008 = vmatpush.msra.mxu0 %v1707
    %5009 = vmatpush.msra.mxu0 %v1703
    %5010 = vmatpush.msra.mxu0 %v1699
    %5011 = vmatpush.msra.mxu0 %v1695
    %5012 = vmatpush.msra.mxu0 %v1691
    %5013 = vmatpush.msra.mxu0 %v1687
    %5014 = vmatpush.msra.mxu0 %v1683
    %5015 = vmatpush.msra.mxu0 %v1679
    %5016 = vmatpush.msra.mxu0 %v1675
    %5017 = vmatmul.f32.gmra.mxu0 %v4294
    %v5018 = vpop.f32.mrf.mxu0
    %v5019 = vadd.f32 0.0, %v5018
    %5020 = vdwg.mxu0
    %5021 = vmatpush.msra.mxu0 %v1736
    %5022 = vmatpush.msra.mxu0 %v1732
    %5023 = vmatpush.msra.mxu0 %v1728
    %5024 = vmatpush.msra.mxu0 %v1724
    %5025 = vmatpush.msra.mxu0 %v1720
    %5026 = vmatpush.msra.mxu0 %v1716
    %5027 = vmatpush.msra.mxu0 %v1712
    %5028 = vmatpush.msra.mxu0 %v1708
    %5029 = vmatpush.msra.mxu0 %v1704
    %5030 = vmatpush.msra.mxu0 %v1700
    %5031 = vmatpush.msra.mxu0 %v1696
    %5032 = vmatpush.msra.mxu0 %v1692
    %5033 = vmatpush.msra.mxu0 %v1688
    %5034 = vmatpush.msra.mxu0 %v1684
    %5035 = vmatpush.msra.mxu0 %v1680
    %5036 = vmatpush.msra.mxu0 %v1676
    %5037 = vmatmul.f32.gmra.mxu0 %v4294
    %v5038 = vpop.f32.mrf.mxu0
    %v5039 = vadd.f32 0.0, %v5038
    %5040 = vdwg.mxu0
    %5041 = vmatpush.msra.mxu0 %v1737
    %5042 = vmatpush.msra.mxu0 %v1733
    %5043 = vmatpush.msra.mxu0 %v1729
    %5044 = vmatpush.msra.mxu0 %v1725
    %5045 = vmatpush.msra.mxu0 %v1721
    %5046 = vmatpush.msra.mxu0 %v1717
    %5047 = vmatpush.msra.mxu0 %v1713
    %5048 = vmatpush.msra.mxu0 %v1709
    %5049 = vmatpush.msra.mxu0 %v1705
    %5050 = vmatpush.msra.mxu0 %v1701
    %5051 = vmatpush.msra.mxu0 %v1697
    %5052 = vmatpush.msra.mxu0 %v1693
    %5053 = vmatpush.msra.mxu0 %v1689
    %5054 = vmatpush.msra.mxu0 %v1685
    %5055 = vmatpush.msra.mxu0 %v1681
    %5056 = vmatpush.msra.mxu0 %v1677
    %5057 = vmatmul.f32.gmra.mxu0 %v4294
    %v5058 = vpop.f32.mrf.mxu0
    %v5059 = vadd.f32 0.0, %v5058
    %5060 = vdwg.mxu0
    %v5061 = vadd.f32 %v4919, %v4999
    %v5062 = vadd.f32 %v4939, %v5019
    %v5063 = vadd.f32 %v4959, %v5039
    %v5064 = vadd.f32 %v4979, %v5059
    %v5065 = vxor.u32 %v5061, 2147483648
    %v5066 = vmul.f32 %v5065, 1.442695
    %v5067 = vpow.pop %v5066
    %v5068 = vadd.f32 %v5067, 1.0
    %v5069 = vrcp.pop %v5068
    %v5070 = vmul.f32 %v5068, %v5069
    %v5071 = vsub.f32 1.0, %v5070
    %v5072 = vmul.f32 %v5069, %v5071
    %v5073 = vadd.f32 %v5069, %v5072
    %vm5074 = vweird.f32 %v5068
    %vm5075 = vweird.f32 %v5069
    %vm5076 = vmor %vm5074, %vm5075
    %v5077 = vsel %vm5076, %v5069, %v5073
    %v5078 = vand.u32 2147483647, %v5068
    %vm5079 = vcmp.eq.f32.partialorder %v5078, 8.507059e+37
    %v5080 = vand.u32 %v5068, 2147483648
    %v5081 = vor.u32 1.1754944e-38, %v5080
    %v5082 = vsel %vm5079, %v5081, %v5077
    %v5083 = vmul.f32 1.0, %v5082
    %v5084 = vxor.u32 %v5062, 2147483648
    %v5085 = vmul.f32 %v5084, 1.442695
    %v5086 = vpow.pop %v5085
    %v5087 = vadd.f32 %v5086, 1.0
    %v5088 = vrcp.pop %v5087
    %v5089 = vmul.f32 %v5087, %v5088
    %v5090 = vsub.f32 1.0, %v5089
    %v5091 = vmul.f32 %v5088, %v5090
    %v5092 = vadd.f32 %v5088, %v5091
    %vm5093 = vweird.f32 %v5087
    %vm5094 = vweird.f32 %v5088
    %vm5095 = vmor %vm5093, %vm5094
    %v5096 = vsel %vm5095, %v5088, %v5092
    %v5097 = vand.u32 2147483647, %v5087
    %vm5098 = vcmp.eq.f32.partialorder %v5097, 8.507059e+37
    %v5099 = vand.u32 %v5087, 2147483648
    %v5100 = vor.u32 1.1754944e-38, %v5099
    %v5101 = vsel %vm5098, %v5100, %v5096
    %v5102 = vmul.f32 1.0, %v5101
    %v5103 = vtanh.pop %v5063
    %v5104 = vxor.u32 %v5064, 2147483648
    %v5105 = vmul.f32 %v5104, 1.442695
    %v5106 = vpow.pop %v5105
    %v5107 = vadd.f32 %v5106, 1.0
    %v5108 = vrcp.pop %v5107
    %v5109 = vmul.f32 %v5107, %v5108
    %v5110 = vsub.f32 1.0, %v5109
    %v5111 = vmul.f32 %v5108, %v5110
    %v5112 = vadd.f32 %v5108, %v5111
    %vm5113 = vweird.f32 %v5107
    %vm5114 = vweird.f32 %v5108
    %vm5115 = vmor %vm5113, %vm5114
    %v5116 = vsel %vm5115, %v5108, %v5112
    %v5117 = vand.u32 2147483647, %v5107
    %vm5118 = vcmp.eq.f32.partialorder %v5117, 8.507059e+37
    %v5119 = vand.u32 %v5107, 2147483648
    %v5120 = vor.u32 1.1754944e-38, %v5119
    %v5121 = vsel %vm5118, %v5120, %v5116
    %v5122 = vmul.f32 1.0, %v5121
    %v5123 = vmul.f32 %v5102, %v4292
    %v5124 = vmul.f32 %v5083, %v5103
    %v5125 = vadd.f32 %v5123, %v5124
    %v5126 = vtanh.pop %v5125
    %v5127 = vmul.f32 %v5122, %v5126
    %5128 = vmatpush.msra.mxu0 %v2551
    %5129 = vmatpush.msra.mxu0 %v2547
    %5130 = vmatpush.msra.mxu0 %v2543
    %5131 = vmatpush.msra.mxu0 %v2539
    %5132 = vmatpush.msra.mxu0 %v2535
    %5133 = vmatpush.msra.mxu0 %v2531
    %5134 = vmatpush.msra.mxu0 %v2527
    %5135 = vmatpush.msra.mxu0 %v2523
    %5136 = vmatpush.msra.mxu0 %v2519
    %5137 = vmatpush.msra.mxu0 %v2515
    %5138 = vmatpush.msra.mxu0 %v2511
    %5139 = vmatpush.msra.mxu0 %v2507
    %5140 = vmatpush.msra.mxu0 %v2503
    %5141 = vmatpush.msra.mxu0 %v2499
    %5142 = vmatpush.msra.mxu0 %v2495
    %5143 = vmatpush.msra.mxu0 %v2491
    %5144 = vmatmul.f32.gmra.mxu0 %v4294
    %v5145 = vpop.f32.mrf.mxu0
    %v5146 = vadd.f32 %v2557, %v5145
    %5147 = vdwg.mxu0
    %5148 = vmatpush.msra.mxu0 %v2552
    %5149 = vmatpush.msra.mxu0 %v2548
    %5150 = vmatpush.msra.mxu0 %v2544
    %5151 = vmatpush.msra.mxu0 %v2540
    %5152 = vmatpush.msra.mxu0 %v2536
    %5153 = vmatpush.msra.mxu0 %v2532
    %5154 = vmatpush.msra.mxu0 %v2528
    %5155 = vmatpush.msra.mxu0 %v2524
    %5156 = vmatpush.msra.mxu0 %v2520
    %5157 = vmatpush.msra.mxu0 %v2516
    %5158 = vmatpush.msra.mxu0 %v2512
    %5159 = vmatpush.msra.mxu0 %v2508
    %5160 = vmatpush.msra.mxu0 %v2504
    %5161 = vmatpush.msra.mxu0 %v2500
    %5162 = vmatpush.msra.mxu0 %v2496
    %5163 = vmatpush.msra.mxu0 %v2492
    %5164 = vmatmul.f32.gmra.mxu0 %v4294
    %v5165 = vpop.f32.mrf.mxu0
    %v5166 = vadd.f32 %v2558, %v5165
    %5167 = vdwg.mxu0
    %5168 = vmatpush.msra.mxu0 %v2553
    %5169 = vmatpush.msra.mxu0 %v2549
    %5170 = vmatpush.msra.mxu0 %v2545
    %5171 = vmatpush.msra.mxu0 %v2541
    %5172 = vmatpush.msra.mxu0 %v2537
    %5173 = vmatpush.msra.mxu0 %v2533
    %5174 = vmatpush.msra.mxu0 %v2529
    %5175 = vmatpush.msra.mxu0 %v2525
    %5176 = vmatpush.msra.mxu0 %v2521
    %5177 = vmatpush.msra.mxu0 %v2517
    %5178 = vmatpush.msra.mxu0 %v2513
    %5179 = vmatpush.msra.mxu0 %v2509
    %5180 = vmatpush.msra.mxu0 %v2505
    %5181 = vmatpush.msra.mxu0 %v2501
    %5182 = vmatpush.msra.mxu0 %v2497
    %5183 = vmatpush.msra.mxu0 %v2493
    %5184 = vmatmul.f32.gmra.mxu0 %v4294
    %v5185 = vpop.f32.mrf.mxu0
    %v5186 = vadd.f32 %v2559, %v5185
    %5187 = vdwg.mxu0
    %5188 = vmatpush.msra.mxu0 %v2554
    %5189 = vmatpush.msra.mxu0 %v2550
    %5190 = vmatpush.msra.mxu0 %v2546
    %5191 = vmatpush.msra.mxu0 %v2542
    %5192 = vmatpush.msra.mxu0 %v2538
    %5193 = vmatpush.msra.mxu0 %v2534
    %5194 = vmatpush.msra.mxu0 %v2530
    %5195 = vmatpush.msra.mxu0 %v2526
    %5196 = vmatpush.msra.mxu0 %v2522
    %5197 = vmatpush.msra.mxu0 %v2518
    %5198 = vmatpush.msra.mxu0 %v2514
    %5199 = vmatpush.msra.mxu0 %v2510
    %5200 = vmatpush.msra.mxu0 %v2506
    %5201 = vmatpush.msra.mxu0 %v2502
    %5202 = vmatpush.msra.mxu0 %v2498
    %5203 = vmatpush.msra.mxu0 %v2494
    %5204 = vmatmul.f32.gmra.mxu0 %v4294
    %v5205 = vpop.f32.mrf.mxu0
    %v5206 = vadd.f32 %v2560, %v5205
    %5207 = vdwg.mxu0
    %5208 = vmatpush.msra.mxu0 %v2705
    %5209 = vmatpush.msra.mxu0 %v2701
    %5210 = vmatpush.msra.mxu0 %v2697
    %5211 = vmatpush.msra.mxu0 %v2693
    %5212 = vmatpush.msra.mxu0 %v2689
    %5213 = vmatpush.msra.mxu0 %v2685
    %5214 = vmatpush.msra.mxu0 %v2681
    %5215 = vmatpush.msra.mxu0 %v2677
    %5216 = vmatpush.msra.mxu0 %v2673
    %5217 = vmatpush.msra.mxu0 %v2669
    %5218 = vmatpush.msra.mxu0 %v2665
    %5219 = vmatpush.msra.mxu0 %v2661
    %5220 = vmatpush.msra.mxu0 %v2657
    %5221 = vmatpush.msra.mxu0 %v2653
    %5222 = vmatpush.msra.mxu0 %v2649
    %5223 = vmatpush.msra.mxu0 %v2645
    %5224 = vmatmul.f32.gmra.mxu0 %v4521
    %v5225 = vpop.f32.mrf.mxu0
    %v5226 = vadd.f32 0.0, %v5225
    %5227 = vdwg.mxu0
    %5228 = vmatpush.msra.mxu0 %v2706
    %5229 = vmatpush.msra.mxu0 %v2702
    %5230 = vmatpush.msra.mxu0 %v2698
    %5231 = vmatpush.msra.mxu0 %v2694
    %5232 = vmatpush.msra.mxu0 %v2690
    %5233 = vmatpush.msra.mxu0 %v2686
    %5234 = vmatpush.msra.mxu0 %v2682
    %5235 = vmatpush.msra.mxu0 %v2678
    %5236 = vmatpush.msra.mxu0 %v2674
    %5237 = vmatpush.msra.mxu0 %v2670
    %5238 = vmatpush.msra.mxu0 %v2666
    %5239 = vmatpush.msra.mxu0 %v2662
    %5240 = vmatpush.msra.mxu0 %v2658
    %5241 = vmatpush.msra.mxu0 %v2654
    %5242 = vmatpush.msra.mxu0 %v2650
    %5243 = vmatpush.msra.mxu0 %v2646
    %5244 = vmatmul.f32.gmra.mxu0 %v4521
    %v5245 = vpop.f32.mrf.mxu0
    %v5246 = vadd.f32 0.0, %v5245
    %5247 = vdwg.mxu0
    %5248 = vmatpush.msra.mxu0 %v2707
    %5249 = vmatpush.msra.mxu0 %v2703
    %5250 = vmatpush.msra.mxu0 %v2699
    %5251 = vmatpush.msra.mxu0 %v2695
    %5252 = vmatpush.msra.mxu0 %v2691
    %5253 = vmatpush.msra.mxu0 %v2687
    %5254 = vmatpush.msra.mxu0 %v2683
    %5255 = vmatpush.msra.mxu0 %v2679
    %5256 = vmatpush.msra.mxu0 %v2675
    %5257 = vmatpush.msra.mxu0 %v2671
    %5258 = vmatpush.msra.mxu0 %v2667
    %5259 = vmatpush.msra.mxu0 %v2663
    %5260 = vmatpush.msra.mxu0 %v2659
    %5261 = vmatpush.msra.mxu0 %v2655
    %5262 = vmatpush.msra.mxu0 %v2651
    %5263 = vmatpush.msra.mxu0 %v2647
    %5264 = vmatmul.f32.gmra.mxu0 %v4521
    %v5265 = vpop.f32.mrf.mxu0
    %v5266 = vadd.f32 0.0, %v5265
    %5267 = vdwg.mxu0
    %5268 = vmatpush.msra.mxu0 %v2708
    %5269 = vmatpush.msra.mxu0 %v2704
    %5270 = vmatpush.msra.mxu0 %v2700
    %5271 = vmatpush.msra.mxu0 %v2696
    %5272 = vmatpush.msra.mxu0 %v2692
    %5273 = vmatpush.msra.mxu0 %v2688
    %5274 = vmatpush.msra.mxu0 %v2684
    %5275 = vmatpush.msra.mxu0 %v2680
    %5276 = vmatpush.msra.mxu0 %v2676
    %5277 = vmatpush.msra.mxu0 %v2672
    %5278 = vmatpush.msra.mxu0 %v2668
    %5279 = vmatpush.msra.mxu0 %v2664
    %5280 = vmatpush.msra.mxu0 %v2660
    %5281 = vmatpush.msra.mxu0 %v2656
    %5282 = vmatpush.msra.mxu0 %v2652
    %5283 = vmatpush.msra.mxu0 %v2648
    %5284 = vmatmul.f32.gmra.mxu0 %v4521
    %v5285 = vpop.f32.mrf.mxu0
    %v5286 = vadd.f32 0.0, %v5285
    %5287 = vdwg.mxu0
    %v5288 = vadd.f32 %v5146, %v5226
    %v5289 = vadd.f32 %v5166, %v5246
    %v5290 = vadd.f32 %v5186, %v5266
    %v5291 = vadd.f32 %v5206, %v5286
    %v5292 = vxor.u32 %v5288, 2147483648
    %v5293 = vmul.f32 %v5292, 1.442695
    %v5294 = vpow.pop %v5293
    %v5295 = vadd.f32 %v5294, 1.0
    %v5296 = vrcp.pop %v5295
    %v5297 = vmul.f32 %v5295, %v5296
    %v5298 = vsub.f32 1.0, %v5297
    %v5299 = vmul.f32 %v5296, %v5298
    %v5300 = vadd.f32 %v5296, %v5299
    %vm5301 = vweird.f32 %v5295
    %vm5302 = vweird.f32 %v5296
    %vm5303 = vmor %vm5301, %vm5302
    %v5304 = vsel %vm5303, %v5296, %v5300
    %v5305 = vand.u32 2147483647, %v5295
    %vm5306 = vcmp.eq.f32.partialorder %v5305, 8.507059e+37
    %v5307 = vand.u32 %v5295, 2147483648
    %v5308 = vor.u32 1.1754944e-38, %v5307
    %v5309 = vsel %vm5306, %v5308, %v5304
    %v5310 = vmul.f32 1.0, %v5309
    %v5311 = vxor.u32 %v5289, 2147483648
    %v5312 = vmul.f32 %v5311, 1.442695
    %v5313 = vpow.pop %v5312
    %v5314 = vadd.f32 %v5313, 1.0
    %v5315 = vrcp.pop %v5314
    %v5316 = vmul.f32 %v5314, %v5315
    %v5317 = vsub.f32 1.0, %v5316
    %v5318 = vmul.f32 %v5315, %v5317
    %v5319 = vadd.f32 %v5315, %v5318
    %vm5320 = vweird.f32 %v5314
    %vm5321 = vweird.f32 %v5315
    %vm5322 = vmor %vm5320, %vm5321
    %v5323 = vsel %vm5322, %v5315, %v5319
    %v5324 = vand.u32 2147483647, %v5314
    %vm5325 = vcmp.eq.f32.partialorder %v5324, 8.507059e+37
    %v5326 = vand.u32 %v5314, 2147483648
    %v5327 = vor.u32 1.1754944e-38, %v5326
    %v5328 = vsel %vm5325, %v5327, %v5323
    %v5329 = vmul.f32 1.0, %v5328
    %v5330 = vtanh.pop %v5290
    %v5331 = vxor.u32 %v5291, 2147483648
    %v5332 = vmul.f32 %v5331, 1.442695
    %v5333 = vpow.pop %v5332
    %v5334 = vadd.f32 %v5333, 1.0
    %v5335 = vrcp.pop %v5334
    %v5336 = vmul.f32 %v5334, %v5335
    %v5337 = vsub.f32 1.0, %v5336
    %v5338 = vmul.f32 %v5335, %v5337
    %v5339 = vadd.f32 %v5335, %v5338
    %vm5340 = vweird.f32 %v5334
    %vm5341 = vweird.f32 %v5335
    %vm5342 = vmor %vm5340, %vm5341
    %v5343 = vsel %vm5342, %v5335, %v5339
    %v5344 = vand.u32 2147483647, %v5334
    %vm5345 = vcmp.eq.f32.partialorder %v5344, 8.507059e+37
    %v5346 = vand.u32 %v5334, 2147483648
    %v5347 = vor.u32 1.1754944e-38, %v5346
    %v5348 = vsel %vm5345, %v5347, %v5343
    %v5349 = vmul.f32 1.0, %v5348
    %v5350 = vmul.f32 %v5329, %v4519
    %v5351 = vmul.f32 %v5310, %v5330
    %v5352 = vadd.f32 %v5350, %v5351
    %v5353 = vtanh.pop %v5352
    %v5354 = vmul.f32 %v5349, %v5353
    %s5355 = scalar_lea.vmem [#allocation2], 224
    %v5356 = vld [vmem:[%s5355] sm:$0xff]
    %v5357 = vld [vmem:[%s5355 + $0x8] sm:$0xff]
    %v5358 = vld [vmem:[%s5355 + $0x10] sm:$0xff]
    %v5359 = vld [vmem:[%s5355 + $0x18] sm:$0xff]
    %5360 = vmatpush.msra.mxu0 %v473
    %5361 = vmatpush.msra.mxu0 %v469
    %5362 = vmatpush.msra.mxu0 %v465
    %5363 = vmatpush.msra.mxu0 %v461
    %5364 = vmatpush.msra.mxu0 %v457
    %5365 = vmatpush.msra.mxu0 %v453
    %5366 = vmatpush.msra.mxu0 %v449
    %5367 = vmatpush.msra.mxu0 %v445
    %5368 = vmatpush.msra.mxu0 %v441
    %5369 = vmatpush.msra.mxu0 %v437
    %5370 = vmatpush.msra.mxu0 %v433
    %5371 = vmatpush.msra.mxu0 %v429
    %5372 = vmatpush.msra.mxu0 %v425
    %5373 = vmatpush.msra.mxu0 %v421
    %5374 = vmatpush.msra.mxu0 %v417
    %5375 = vmatpush.msra.mxu0 %v413
    %5376 = vmatmul.f32.gmra.mxu0 %v4673
    %v5377 = vpop.f32.mrf.mxu0
    %v5378 = vadd.f32 0.0, %v5377
    %5379 = vdwg.mxu0
    %5380 = vmatpush.msra.mxu0 %v474
    %5381 = vmatpush.msra.mxu0 %v470
    %5382 = vmatpush.msra.mxu0 %v466
    %5383 = vmatpush.msra.mxu0 %v462
    %5384 = vmatpush.msra.mxu0 %v458
    %5385 = vmatpush.msra.mxu0 %v454
    %5386 = vmatpush.msra.mxu0 %v450
    %5387 = vmatpush.msra.mxu0 %v446
    %5388 = vmatpush.msra.mxu0 %v442
    %5389 = vmatpush.msra.mxu0 %v438
    %5390 = vmatpush.msra.mxu0 %v434
    %5391 = vmatpush.msra.mxu0 %v430
    %5392 = vmatpush.msra.mxu0 %v426
    %5393 = vmatpush.msra.mxu0 %v422
    %5394 = vmatpush.msra.mxu0 %v418
    %5395 = vmatpush.msra.mxu0 %v414
    %5396 = vmatmul.f32.gmra.mxu0 %v4673
    %v5397 = vpop.f32.mrf.mxu0
    %v5398 = vadd.f32 0.0, %v5397
    %5399 = vdwg.mxu0
    %5400 = vmatpush.msra.mxu0 %v475
    %5401 = vmatpush.msra.mxu0 %v471
    %5402 = vmatpush.msra.mxu0 %v467
    %5403 = vmatpush.msra.mxu0 %v463
    %5404 = vmatpush.msra.mxu0 %v459
    %5405 = vmatpush.msra.mxu0 %v455
    %5406 = vmatpush.msra.mxu0 %v451
    %5407 = vmatpush.msra.mxu0 %v447
    %5408 = vmatpush.msra.mxu0 %v443
    %5409 = vmatpush.msra.mxu0 %v439
    %5410 = vmatpush.msra.mxu0 %v435
    %5411 = vmatpush.msra.mxu0 %v431
    %5412 = vmatpush.msra.mxu0 %v427
    %5413 = vmatpush.msra.mxu0 %v423
    %5414 = vmatpush.msra.mxu0 %v419
    %5415 = vmatpush.msra.mxu0 %v415
    %5416 = vmatmul.f32.gmra.mxu0 %v4673
    %v5417 = vpop.f32.mrf.mxu0
    %v5418 = vadd.f32 0.0, %v5417
    %5419 = vdwg.mxu0
    %5420 = vmatpush.msra.mxu0 %v476
    %5421 = vmatpush.msra.mxu0 %v472
    %5422 = vmatpush.msra.mxu0 %v468
    %5423 = vmatpush.msra.mxu0 %v464
    %5424 = vmatpush.msra.mxu0 %v460
    %5425 = vmatpush.msra.mxu0 %v456
    %5426 = vmatpush.msra.mxu0 %v452
    %5427 = vmatpush.msra.mxu0 %v448
    %5428 = vmatpush.msra.mxu0 %v444
    %5429 = vmatpush.msra.mxu0 %v440
    %5430 = vmatpush.msra.mxu0 %v436
    %5431 = vmatpush.msra.mxu0 %v432
    %5432 = vmatpush.msra.mxu0 %v428
    %5433 = vmatpush.msra.mxu0 %v424
    %5434 = vmatpush.msra.mxu0 %v420
    %5435 = vmatpush.msra.mxu0 %v416
    %5436 = vmatmul.f32.gmra.mxu0 %v4673
    %v5437 = vpop.f32.mrf.mxu0
    %v5438 = vadd.f32 0.0, %v5437
    %5439 = vdwg.mxu0
    %v5440 = vadd.f32 %v5356, %v5378
    %v5441 = vadd.f32 %v5357, %v5398
    %v5442 = vadd.f32 %v5358, %v5418
    %v5443 = vadd.f32 %v5359, %v5438
    %v5444 = vxor.u32 %v5440, 2147483648
    %v5445 = vmul.f32 %v5444, 1.442695
    %v5446 = vpow.pop %v5445
    %v5447 = vadd.f32 %v5446, 1.0
    %v5448 = vrcp.pop %v5447
    %v5449 = vmul.f32 %v5447, %v5448
    %v5450 = vsub.f32 1.0, %v5449
    %v5451 = vmul.f32 %v5448, %v5450
    %v5452 = vadd.f32 %v5448, %v5451
    %vm5453 = vweird.f32 %v5447
    %vm5454 = vweird.f32 %v5448
    %vm5455 = vmor %vm5453, %vm5454
    %v5456 = vsel %vm5455, %v5448, %v5452
    %v5457 = vand.u32 2147483647, %v5447
    %vm5458 = vcmp.eq.f32.partialorder %v5457, 8.507059e+37
    %v5459 = vand.u32 %v5447, 2147483648
    %v5460 = vor.u32 1.1754944e-38, %v5459
    %v5461 = vsel %vm5458, %v5460, %v5456
    %v5462 = vmul.f32 1.0, %v5461
    %v5463 = vxor.u32 %v5441, 2147483648
    %v5464 = vmul.f32 %v5463, 1.442695
    %v5465 = vpow.pop %v5464
    %v5466 = vadd.f32 %v5465, 1.0
    %v5467 = vrcp.pop %v5466
    %v5468 = vmul.f32 %v5466, %v5467
    %v5469 = vsub.f32 1.0, %v5468
    %v5470 = vmul.f32 %v5467, %v5469
    %v5471 = vadd.f32 %v5467, %v5470
    %vm5472 = vweird.f32 %v5466
    %vm5473 = vweird.f32 %v5467
    %vm5474 = vmor %vm5472, %vm5473
    %v5475 = vsel %vm5474, %v5467, %v5471
    %v5476 = vand.u32 2147483647, %v5466
    %vm5477 = vcmp.eq.f32.partialorder %v5476, 8.507059e+37
    %v5478 = vand.u32 %v5466, 2147483648
    %v5479 = vor.u32 1.1754944e-38, %v5478
    %v5480 = vsel %vm5477, %v5479, %v5475
    %v5481 = vmul.f32 1.0, %v5480
    %v5482 = vtanh.pop %v5442
    %v5483 = vxor.u32 %v5443, 2147483648
    %v5484 = vmul.f32 %v5483, 1.442695
    %v5485 = vpow.pop %v5484
    %v5486 = vadd.f32 %v5485, 1.0
    %v5487 = vrcp.pop %v5486
    %v5488 = vmul.f32 %v5486, %v5487
    %v5489 = vsub.f32 1.0, %v5488
    %v5490 = vmul.f32 %v5487, %v5489
    %v5491 = vadd.f32 %v5487, %v5490
    %vm5492 = vweird.f32 %v5486
    %vm5493 = vweird.f32 %v5487
    %vm5494 = vmor %vm5492, %vm5493
    %v5495 = vsel %vm5494, %v5487, %v5491
    %v5496 = vand.u32 2147483647, %v5486
    %vm5497 = vcmp.eq.f32.partialorder %v5496, 8.507059e+37
    %v5498 = vand.u32 %v5486, 2147483648
    %v5499 = vor.u32 1.1754944e-38, %v5498
    %v5500 = vsel %vm5497, %v5499, %v5495
    %v5501 = vmul.f32 1.0, %v5500
    %v5502 = vmul.f32 %v5481, %v4671
    %v5503 = vmul.f32 %v5462, %v5482
    %v5504 = vadd.f32 %v5502, %v5503
    %v5505 = vtanh.pop %v5504
    %v5506 = vmul.f32 %v5501, %v5505
    %5507 = vmatpush.msra.mxu0 %v836
    %5508 = vmatpush.msra.mxu0 %v832
    %5509 = vmatpush.msra.mxu0 %v828
    %5510 = vmatpush.msra.mxu0 %v824
    %5511 = vmatpush.msra.mxu0 %v820
    %5512 = vmatpush.msra.mxu0 %v816
    %5513 = vmatpush.msra.mxu0 %v812
    %5514 = vmatpush.msra.mxu0 %v808
    %5515 = vmatpush.msra.mxu0 %v804
    %5516 = vmatpush.msra.mxu0 %v800
    %5517 = vmatpush.msra.mxu0 %v796
    %5518 = vmatpush.msra.mxu0 %v792
    %5519 = vmatpush.msra.mxu0 %v788
    %5520 = vmatpush.msra.mxu0 %v784
    %5521 = vmatpush.msra.mxu0 %v780
    %5522 = vmatpush.msra.mxu0 %v776
    %5523 = vmatmul.f32.gmra.mxu0 %v4673
    %v5524 = vpop.f32.mrf.mxu0
    %v5525 = vadd.f32 %v842, %v5524
    %5526 = vdwg.mxu0
    %5527 = vmatpush.msra.mxu0 %v837
    %5528 = vmatpush.msra.mxu0 %v833
    %5529 = vmatpush.msra.mxu0 %v829
    %5530 = vmatpush.msra.mxu0 %v825
    %5531 = vmatpush.msra.mxu0 %v821
    %5532 = vmatpush.msra.mxu0 %v817
    %5533 = vmatpush.msra.mxu0 %v813
    %5534 = vmatpush.msra.mxu0 %v809
    %5535 = vmatpush.msra.mxu0 %v805
    %5536 = vmatpush.msra.mxu0 %v801
    %5537 = vmatpush.msra.mxu0 %v797
    %5538 = vmatpush.msra.mxu0 %v793
    %5539 = vmatpush.msra.mxu0 %v789
    %5540 = vmatpush.msra.mxu0 %v785
    %5541 = vmatpush.msra.mxu0 %v781
    %5542 = vmatpush.msra.mxu0 %v777
    %5543 = vmatmul.f32.gmra.mxu0 %v4673
    %v5544 = vpop.f32.mrf.mxu0
    %v5545 = vadd.f32 %v843, %v5544
    %5546 = vdwg.mxu0
    %5547 = vmatpush.msra.mxu0 %v838
    %5548 = vmatpush.msra.mxu0 %v834
    %5549 = vmatpush.msra.mxu0 %v830
    %5550 = vmatpush.msra.mxu0 %v826
    %5551 = vmatpush.msra.mxu0 %v822
    %5552 = vmatpush.msra.mxu0 %v818
    %5553 = vmatpush.msra.mxu0 %v814
    %5554 = vmatpush.msra.mxu0 %v810
    %5555 = vmatpush.msra.mxu0 %v806
    %5556 = vmatpush.msra.mxu0 %v802
    %5557 = vmatpush.msra.mxu0 %v798
    %5558 = vmatpush.msra.mxu0 %v794
    %5559 = vmatpush.msra.mxu0 %v790
    %5560 = vmatpush.msra.mxu0 %v786
    %5561 = vmatpush.msra.mxu0 %v782
    %5562 = vmatpush.msra.mxu0 %v778
    %5563 = vmatmul.f32.gmra.mxu0 %v4673
    %v5564 = vpop.f32.mrf.mxu0
    %v5565 = vadd.f32 %v844, %v5564
    %5566 = vdwg.mxu0
    %5567 = vmatpush.msra.mxu0 %v839
    %5568 = vmatpush.msra.mxu0 %v835
    %5569 = vmatpush.msra.mxu0 %v831
    %5570 = vmatpush.msra.mxu0 %v827
    %5571 = vmatpush.msra.mxu0 %v823
    %5572 = vmatpush.msra.mxu0 %v819
    %5573 = vmatpush.msra.mxu0 %v815
    %5574 = vmatpush.msra.mxu0 %v811
    %5575 = vmatpush.msra.mxu0 %v807
    %5576 = vmatpush.msra.mxu0 %v803
    %5577 = vmatpush.msra.mxu0 %v799
    %5578 = vmatpush.msra.mxu0 %v795
    %5579 = vmatpush.msra.mxu0 %v791
    %5580 = vmatpush.msra.mxu0 %v787
    %5581 = vmatpush.msra.mxu0 %v783
    %5582 = vmatpush.msra.mxu0 %v779
    %5583 = vmatmul.f32.gmra.mxu0 %v4673
    %v5584 = vpop.f32.mrf.mxu0
    %v5585 = vadd.f32 %v845, %v5584
    %5586 = vdwg.mxu0
    %5587 = vmatpush.msra.mxu0 %v990
    %5588 = vmatpush.msra.mxu0 %v986
    %5589 = vmatpush.msra.mxu0 %v982
    %5590 = vmatpush.msra.mxu0 %v978
    %5591 = vmatpush.msra.mxu0 %v974
    %5592 = vmatpush.msra.mxu0 %v970
    %5593 = vmatpush.msra.mxu0 %v966
    %5594 = vmatpush.msra.mxu0 %v962
    %5595 = vmatpush.msra.mxu0 %v958
    %5596 = vmatpush.msra.mxu0 %v954
    %5597 = vmatpush.msra.mxu0 %v950
    %5598 = vmatpush.msra.mxu0 %v946
    %5599 = vmatpush.msra.mxu0 %v942
    %5600 = vmatpush.msra.mxu0 %v938
    %5601 = vmatpush.msra.mxu0 %v934
    %5602 = vmatpush.msra.mxu0 %v930
    %5603 = vmatmul.f32.gmra.mxu0 %v4900
    %v5604 = vpop.f32.mrf.mxu0
    %v5605 = vadd.f32 0.0, %v5604
    %5606 = vdwg.mxu0
    %5607 = vmatpush.msra.mxu0 %v991
    %5608 = vmatpush.msra.mxu0 %v987
    %5609 = vmatpush.msra.mxu0 %v983
    %5610 = vmatpush.msra.mxu0 %v979
    %5611 = vmatpush.msra.mxu0 %v975
    %5612 = vmatpush.msra.mxu0 %v971
    %5613 = vmatpush.msra.mxu0 %v967
    %5614 = vmatpush.msra.mxu0 %v963
    %5615 = vmatpush.msra.mxu0 %v959
    %5616 = vmatpush.msra.mxu0 %v955
    %5617 = vmatpush.msra.mxu0 %v951
    %5618 = vmatpush.msra.mxu0 %v947
    %5619 = vmatpush.msra.mxu0 %v943
    %5620 = vmatpush.msra.mxu0 %v939
    %5621 = vmatpush.msra.mxu0 %v935
    %5622 = vmatpush.msra.mxu0 %v931
    %5623 = vmatmul.f32.gmra.mxu0 %v4900
    %v5624 = vpop.f32.mrf.mxu0
    %v5625 = vadd.f32 0.0, %v5624
    %5626 = vdwg.mxu0
    %5627 = vmatpush.msra.mxu0 %v992
    %5628 = vmatpush.msra.mxu0 %v988
    %5629 = vmatpush.msra.mxu0 %v984
    %5630 = vmatpush.msra.mxu0 %v980
    %5631 = vmatpush.msra.mxu0 %v976
    %5632 = vmatpush.msra.mxu0 %v972
    %5633 = vmatpush.msra.mxu0 %v968
    %5634 = vmatpush.msra.mxu0 %v964
    %5635 = vmatpush.msra.mxu0 %v960
    %5636 = vmatpush.msra.mxu0 %v956
    %5637 = vmatpush.msra.mxu0 %v952
    %5638 = vmatpush.msra.mxu0 %v948
    %5639 = vmatpush.msra.mxu0 %v944
    %5640 = vmatpush.msra.mxu0 %v940
    %5641 = vmatpush.msra.mxu0 %v936
    %5642 = vmatpush.msra.mxu0 %v932
    %5643 = vmatmul.f32.gmra.mxu0 %v4900
    %v5644 = vpop.f32.mrf.mxu0
    %v5645 = vadd.f32 0.0, %v5644
    %5646 = vdwg.mxu0
    %5647 = vmatpush.msra.mxu0 %v993
    %5648 = vmatpush.msra.mxu0 %v989
    %5649 = vmatpush.msra.mxu0 %v985
    %5650 = vmatpush.msra.mxu0 %v981
    %5651 = vmatpush.msra.mxu0 %v977
    %5652 = vmatpush.msra.mxu0 %v973
    %5653 = vmatpush.msra.mxu0 %v969
    %5654 = vmatpush.msra.mxu0 %v965
    %5655 = vmatpush.msra.mxu0 %v961
    %5656 = vmatpush.msra.mxu0 %v957
    %5657 = vmatpush.msra.mxu0 %v953
    %5658 = vmatpush.msra.mxu0 %v949
    %5659 = vmatpush.msra.mxu0 %v945
    %5660 = vmatpush.msra.mxu0 %v941
    %5661 = vmatpush.msra.mxu0 %v937
    %5662 = vmatpush.msra.mxu0 %v933
    %5663 = vmatmul.f32.gmra.mxu0 %v4900
    %v5664 = vpop.f32.mrf.mxu0
    %v5665 = vadd.f32 0.0, %v5664
    %5666 = vdwg.mxu0
    %v5667 = vadd.f32 %v5525, %v5605
    %v5668 = vadd.f32 %v5545, %v5625
    %v5669 = vadd.f32 %v5565, %v5645
    %v5670 = vadd.f32 %v5585, %v5665
    %v5671 = vxor.u32 %v5667, 2147483648
    %v5672 = vmul.f32 %v5671, 1.442695
    %v5673 = vpow.pop %v5672
    %v5674 = vadd.f32 %v5673, 1.0
    %v5675 = vrcp.pop %v5674
    %v5676 = vmul.f32 %v5674, %v5675
    %v5677 = vsub.f32 1.0, %v5676
    %v5678 = vmul.f32 %v5675, %v5677
    %v5679 = vadd.f32 %v5675, %v5678
    %vm5680 = vweird.f32 %v5674
    %vm5681 = vweird.f32 %v5675
    %vm5682 = vmor %vm5680, %vm5681
    %v5683 = vsel %vm5682, %v5675, %v5679
    %v5684 = vand.u32 2147483647, %v5674
    %vm5685 = vcmp.eq.f32.partialorder %v5684, 8.507059e+37
    %v5686 = vand.u32 %v5674, 2147483648
    %v5687 = vor.u32 1.1754944e-38, %v5686
    %v5688 = vsel %vm5685, %v5687, %v5683
    %v5689 = vmul.f32 1.0, %v5688
    %v5690 = vxor.u32 %v5668, 2147483648
    %v5691 = vmul.f32 %v5690, 1.442695
    %v5692 = vpow.pop %v5691
    %v5693 = vadd.f32 %v5692, 1.0
    %v5694 = vrcp.pop %v5693
    %v5695 = vmul.f32 %v5693, %v5694
    %v5696 = vsub.f32 1.0, %v5695
    %v5697 = vmul.f32 %v5694, %v5696
    %v5698 = vadd.f32 %v5694, %v5697
    %vm5699 = vweird.f32 %v5693
    %vm5700 = vweird.f32 %v5694
    %vm5701 = vmor %vm5699, %vm5700
    %v5702 = vsel %vm5701, %v5694, %v5698
    %v5703 = vand.u32 2147483647, %v5693
    %vm5704 = vcmp.eq.f32.partialorder %v5703, 8.507059e+37
    %v5705 = vand.u32 %v5693, 2147483648
    %v5706 = vor.u32 1.1754944e-38, %v5705
    %v5707 = vsel %vm5704, %v5706, %v5702
    %v5708 = vmul.f32 1.0, %v5707
    %v5709 = vtanh.pop %v5669
    %v5710 = vxor.u32 %v5670, 2147483648
    %v5711 = vmul.f32 %v5710, 1.442695
    %v5712 = vpow.pop %v5711
    %v5713 = vadd.f32 %v5712, 1.0
    %v5714 = vrcp.pop %v5713
    %v5715 = vmul.f32 %v5713, %v5714
    %v5716 = vsub.f32 1.0, %v5715
    %v5717 = vmul.f32 %v5714, %v5716
    %v5718 = vadd.f32 %v5714, %v5717
    %vm5719 = vweird.f32 %v5713
    %vm5720 = vweird.f32 %v5714
    %vm5721 = vmor %vm5719, %vm5720
    %v5722 = vsel %vm5721, %v5714, %v5718
    %v5723 = vand.u32 2147483647, %v5713
    %vm5724 = vcmp.eq.f32.partialorder %v5723, 8.507059e+37
    %v5725 = vand.u32 %v5713, 2147483648
    %v5726 = vor.u32 1.1754944e-38, %v5725
    %v5727 = vsel %vm5724, %v5726, %v5722
    %v5728 = vmul.f32 1.0, %v5727
    %v5729 = vmul.f32 %v5708, %v4898
    %v5730 = vmul.f32 %v5689, %v5709
    %v5731 = vadd.f32 %v5729, %v5730
    %v5732 = vtanh.pop %v5731
    %v5733 = vmul.f32 %v5728, %v5732
    %5734 = vmatpush.msra.mxu0 %v1580
    %5735 = vmatpush.msra.mxu0 %v1576
    %5736 = vmatpush.msra.mxu0 %v1572
    %5737 = vmatpush.msra.mxu0 %v1568
    %5738 = vmatpush.msra.mxu0 %v1564
    %5739 = vmatpush.msra.mxu0 %v1560
    %5740 = vmatpush.msra.mxu0 %v1556
    %5741 = vmatpush.msra.mxu0 %v1552
    %5742 = vmatpush.msra.mxu0 %v1548
    %5743 = vmatpush.msra.mxu0 %v1544
    %5744 = vmatpush.msra.mxu0 %v1540
    %5745 = vmatpush.msra.mxu0 %v1536
    %5746 = vmatpush.msra.mxu0 %v1532
    %5747 = vmatpush.msra.mxu0 %v1528
    %5748 = vmatpush.msra.mxu0 %v1524
    %5749 = vmatpush.msra.mxu0 %v1520
    %5750 = vmatmul.f32.gmra.mxu0 %v4900
    %v5751 = vpop.f32.mrf.mxu0
    %v5752 = vadd.f32 %v1586, %v5751
    %5753 = vdwg.mxu0
    %5754 = vmatpush.msra.mxu0 %v1581
    %5755 = vmatpush.msra.mxu0 %v1577
    %5756 = vmatpush.msra.mxu0 %v1573
    %5757 = vmatpush.msra.mxu0 %v1569
    %5758 = vmatpush.msra.mxu0 %v1565
    %5759 = vmatpush.msra.mxu0 %v1561
    %5760 = vmatpush.msra.mxu0 %v1557
    %5761 = vmatpush.msra.mxu0 %v1553
    %5762 = vmatpush.msra.mxu0 %v1549
    %5763 = vmatpush.msra.mxu0 %v1545
    %5764 = vmatpush.msra.mxu0 %v1541
    %5765 = vmatpush.msra.mxu0 %v1537
    %5766 = vmatpush.msra.mxu0 %v1533
    %5767 = vmatpush.msra.mxu0 %v1529
    %5768 = vmatpush.msra.mxu0 %v1525
    %5769 = vmatpush.msra.mxu0 %v1521
    %5770 = vmatmul.f32.gmra.mxu0 %v4900
    %v5771 = vpop.f32.mrf.mxu0
    %v5772 = vadd.f32 %v1587, %v5771
    %5773 = vdwg.mxu0
    %5774 = vmatpush.msra.mxu0 %v1582
    %5775 = vmatpush.msra.mxu0 %v1578
    %5776 = vmatpush.msra.mxu0 %v1574
    %5777 = vmatpush.msra.mxu0 %v1570
    %5778 = vmatpush.msra.mxu0 %v1566
    %5779 = vmatpush.msra.mxu0 %v1562
    %5780 = vmatpush.msra.mxu0 %v1558
    %5781 = vmatpush.msra.mxu0 %v1554
    %5782 = vmatpush.msra.mxu0 %v1550
    %5783 = vmatpush.msra.mxu0 %v1546
    %5784 = vmatpush.msra.mxu0 %v1542
    %5785 = vmatpush.msra.mxu0 %v1538
    %5786 = vmatpush.msra.mxu0 %v1534
    %5787 = vmatpush.msra.mxu0 %v1530
    %5788 = vmatpush.msra.mxu0 %v1526
    %5789 = vmatpush.msra.mxu0 %v1522
    %5790 = vmatmul.f32.gmra.mxu0 %v4900
    %v5791 = vpop.f32.mrf.mxu0
    %v5792 = vadd.f32 %v1588, %v5791
    %5793 = vdwg.mxu0
    %5794 = vmatpush.msra.mxu0 %v1583
    %5795 = vmatpush.msra.mxu0 %v1579
    %5796 = vmatpush.msra.mxu0 %v1575
    %5797 = vmatpush.msra.mxu0 %v1571
    %5798 = vmatpush.msra.mxu0 %v1567
    %5799 = vmatpush.msra.mxu0 %v1563
    %5800 = vmatpush.msra.mxu0 %v1559
    %5801 = vmatpush.msra.mxu0 %v1555
    %5802 = vmatpush.msra.mxu0 %v1551
    %5803 = vmatpush.msra.mxu0 %v1547
    %5804 = vmatpush.msra.mxu0 %v1543
    %5805 = vmatpush.msra.mxu0 %v1539
    %5806 = vmatpush.msra.mxu0 %v1535
    %5807 = vmatpush.msra.mxu0 %v1531
    %5808 = vmatpush.msra.mxu0 %v1527
    %5809 = vmatpush.msra.mxu0 %v1523
    %5810 = vmatmul.f32.gmra.mxu0 %v4900
    %v5811 = vpop.f32.mrf.mxu0
    %v5812 = vadd.f32 %v1589, %v5811
    %5813 = vdwg.mxu0
    %5814 = vmatpush.msra.mxu0 %v1734
    %5815 = vmatpush.msra.mxu0 %v1730
    %5816 = vmatpush.msra.mxu0 %v1726
    %5817 = vmatpush.msra.mxu0 %v1722
    %5818 = vmatpush.msra.mxu0 %v1718
    %5819 = vmatpush.msra.mxu0 %v1714
    %5820 = vmatpush.msra.mxu0 %v1710
    %5821 = vmatpush.msra.mxu0 %v1706
    %5822 = vmatpush.msra.mxu0 %v1702
    %5823 = vmatpush.msra.mxu0 %v1698
    %5824 = vmatpush.msra.mxu0 %v1694
    %5825 = vmatpush.msra.mxu0 %v1690
    %5826 = vmatpush.msra.mxu0 %v1686
    %5827 = vmatpush.msra.mxu0 %v1682
    %5828 = vmatpush.msra.mxu0 %v1678
    %5829 = vmatpush.msra.mxu0 %v1674
    %5830 = vmatmul.f32.gmra.mxu0 %v5127
    %v5831 = vpop.f32.mrf.mxu0
    %v5832 = vadd.f32 0.0, %v5831
    %5833 = vdwg.mxu0
    %5834 = vmatpush.msra.mxu0 %v1735
    %5835 = vmatpush.msra.mxu0 %v1731
    %5836 = vmatpush.msra.mxu0 %v1727
    %5837 = vmatpush.msra.mxu0 %v1723
    %5838 = vmatpush.msra.mxu0 %v1719
    %5839 = vmatpush.msra.mxu0 %v1715
    %5840 = vmatpush.msra.mxu0 %v1711
    %5841 = vmatpush.msra.mxu0 %v1707
    %5842 = vmatpush.msra.mxu0 %v1703
    %5843 = vmatpush.msra.mxu0 %v1699
    %5844 = vmatpush.msra.mxu0 %v1695
    %5845 = vmatpush.msra.mxu0 %v1691
    %5846 = vmatpush.msra.mxu0 %v1687
    %5847 = vmatpush.msra.mxu0 %v1683
    %5848 = vmatpush.msra.mxu0 %v1679
    %5849 = vmatpush.msra.mxu0 %v1675
    %5850 = vmatmul.f32.gmra.mxu0 %v5127
    %v5851 = vpop.f32.mrf.mxu0
    %v5852 = vadd.f32 0.0, %v5851
    %5853 = vdwg.mxu0
    %5854 = vmatpush.msra.mxu0 %v1736
    %5855 = vmatpush.msra.mxu0 %v1732
    %5856 = vmatpush.msra.mxu0 %v1728
    %5857 = vmatpush.msra.mxu0 %v1724
    %5858 = vmatpush.msra.mxu0 %v1720
    %5859 = vmatpush.msra.mxu0 %v1716
    %5860 = vmatpush.msra.mxu0 %v1712
    %5861 = vmatpush.msra.mxu0 %v1708
    %5862 = vmatpush.msra.mxu0 %v1704
    %5863 = vmatpush.msra.mxu0 %v1700
    %5864 = vmatpush.msra.mxu0 %v1696
    %5865 = vmatpush.msra.mxu0 %v1692
    %5866 = vmatpush.msra.mxu0 %v1688
    %5867 = vmatpush.msra.mxu0 %v1684
    %5868 = vmatpush.msra.mxu0 %v1680
    %5869 = vmatpush.msra.mxu0 %v1676
    %5870 = vmatmul.f32.gmra.mxu0 %v5127
    %v5871 = vpop.f32.mrf.mxu0
    %v5872 = vadd.f32 0.0, %v5871
    %5873 = vdwg.mxu0
    %5874 = vmatpush.msra.mxu0 %v1737
    %5875 = vmatpush.msra.mxu0 %v1733
    %5876 = vmatpush.msra.mxu0 %v1729
    %5877 = vmatpush.msra.mxu0 %v1725
    %5878 = vmatpush.msra.mxu0 %v1721
    %5879 = vmatpush.msra.mxu0 %v1717
    %5880 = vmatpush.msra.mxu0 %v1713
    %5881 = vmatpush.msra.mxu0 %v1709
    %5882 = vmatpush.msra.mxu0 %v1705
    %5883 = vmatpush.msra.mxu0 %v1701
    %5884 = vmatpush.msra.mxu0 %v1697
    %5885 = vmatpush.msra.mxu0 %v1693
    %5886 = vmatpush.msra.mxu0 %v1689
    %5887 = vmatpush.msra.mxu0 %v1685
    %5888 = vmatpush.msra.mxu0 %v1681
    %5889 = vmatpush.msra.mxu0 %v1677
    %5890 = vmatmul.f32.gmra.mxu0 %v5127
    %v5891 = vpop.f32.mrf.mxu0
    %v5892 = vadd.f32 0.0, %v5891
    %5893 = vdwg.mxu0
    %v5894 = vadd.f32 %v5752, %v5832
    %v5895 = vadd.f32 %v5772, %v5852
    %v5896 = vadd.f32 %v5792, %v5872
    %v5897 = vadd.f32 %v5812, %v5892
    %v5898 = vxor.u32 %v5894, 2147483648
    %v5899 = vmul.f32 %v5898, 1.442695
    %v5900 = vpow.pop %v5899
    %v5901 = vadd.f32 %v5900, 1.0
    %v5902 = vrcp.pop %v5901
    %v5903 = vmul.f32 %v5901, %v5902
    %v5904 = vsub.f32 1.0, %v5903
    %v5905 = vmul.f32 %v5902, %v5904
    %v5906 = vadd.f32 %v5902, %v5905
    %vm5907 = vweird.f32 %v5901
    %vm5908 = vweird.f32 %v5902
    %vm5909 = vmor %vm5907, %vm5908
    %v5910 = vsel %vm5909, %v5902, %v5906
    %v5911 = vand.u32 2147483647, %v5901
    %vm5912 = vcmp.eq.f32.partialorder %v5911, 8.507059e+37
    %v5913 = vand.u32 %v5901, 2147483648
    %v5914 = vor.u32 1.1754944e-38, %v5913
    %v5915 = vsel %vm5912, %v5914, %v5910
    %v5916 = vmul.f32 1.0, %v5915
    %v5917 = vxor.u32 %v5895, 2147483648
    %v5918 = vmul.f32 %v5917, 1.442695
    %v5919 = vpow.pop %v5918
    %v5920 = vadd.f32 %v5919, 1.0
    %v5921 = vrcp.pop %v5920
    %v5922 = vmul.f32 %v5920, %v5921
    %v5923 = vsub.f32 1.0, %v5922
    %v5924 = vmul.f32 %v5921, %v5923
    %v5925 = vadd.f32 %v5921, %v5924
    %vm5926 = vweird.f32 %v5920
    %vm5927 = vweird.f32 %v5921
    %vm5928 = vmor %vm5926, %vm5927
    %v5929 = vsel %vm5928, %v5921, %v5925
    %v5930 = vand.u32 2147483647, %v5920
    %vm5931 = vcmp.eq.f32.partialorder %v5930, 8.507059e+37
    %v5932 = vand.u32 %v5920, 2147483648
    %v5933 = vor.u32 1.1754944e-38, %v5932
    %v5934 = vsel %vm5931, %v5933, %v5929
    %v5935 = vmul.f32 1.0, %v5934
    %v5936 = vtanh.pop %v5896
    %v5937 = vxor.u32 %v5897, 2147483648
    %v5938 = vmul.f32 %v5937, 1.442695
    %v5939 = vpow.pop %v5938
    %v5940 = vadd.f32 %v5939, 1.0
    %v5941 = vrcp.pop %v5940
    %v5942 = vmul.f32 %v5940, %v5941
    %v5943 = vsub.f32 1.0, %v5942
    %v5944 = vmul.f32 %v5941, %v5943
    %v5945 = vadd.f32 %v5941, %v5944
    %vm5946 = vweird.f32 %v5940
    %vm5947 = vweird.f32 %v5941
    %vm5948 = vmor %vm5946, %vm5947
    %v5949 = vsel %vm5948, %v5941, %v5945
    %v5950 = vand.u32 2147483647, %v5940
    %vm5951 = vcmp.eq.f32.partialorder %v5950, 8.507059e+37
    %v5952 = vand.u32 %v5940, 2147483648
    %v5953 = vor.u32 1.1754944e-38, %v5952
    %v5954 = vsel %vm5951, %v5953, %v5949
    %v5955 = vmul.f32 1.0, %v5954
    %v5956 = vmul.f32 %v5935, %v5125
    %v5957 = vmul.f32 %v5916, %v5936
    %v5958 = vadd.f32 %v5956, %v5957
    %v5959 = vtanh.pop %v5958
    %v5960 = vmul.f32 %v5955, %v5959
    %5961 = vmatpush.msra.mxu0 %v2551
    %5962 = vmatpush.msra.mxu0 %v2547
    %5963 = vmatpush.msra.mxu0 %v2543
    %5964 = vmatpush.msra.mxu0 %v2539
    %5965 = vmatpush.msra.mxu0 %v2535
    %5966 = vmatpush.msra.mxu0 %v2531
    %5967 = vmatpush.msra.mxu0 %v2527
    %5968 = vmatpush.msra.mxu0 %v2523
    %5969 = vmatpush.msra.mxu0 %v2519
    %5970 = vmatpush.msra.mxu0 %v2515
    %5971 = vmatpush.msra.mxu0 %v2511
    %5972 = vmatpush.msra.mxu0 %v2507
    %5973 = vmatpush.msra.mxu0 %v2503
    %5974 = vmatpush.msra.mxu0 %v2499
    %5975 = vmatpush.msra.mxu0 %v2495
    %5976 = vmatpush.msra.mxu0 %v2491
    %5977 = vmatmul.f32.gmra.mxu0 %v5127
    %v5978 = vpop.f32.mrf.mxu0
    %v5979 = vadd.f32 %v2557, %v5978
    %5980 = vdwg.mxu0
    %5981 = vmatpush.msra.mxu0 %v2552
    %5982 = vmatpush.msra.mxu0 %v2548
    %5983 = vmatpush.msra.mxu0 %v2544
    %5984 = vmatpush.msra.mxu0 %v2540
    %5985 = vmatpush.msra.mxu0 %v2536
    %5986 = vmatpush.msra.mxu0 %v2532
    %5987 = vmatpush.msra.mxu0 %v2528
    %5988 = vmatpush.msra.mxu0 %v2524
    %5989 = vmatpush.msra.mxu0 %v2520
    %5990 = vmatpush.msra.mxu0 %v2516
    %5991 = vmatpush.msra.mxu0 %v2512
    %5992 = vmatpush.msra.mxu0 %v2508
    %5993 = vmatpush.msra.mxu0 %v2504
    %5994 = vmatpush.msra.mxu0 %v2500
    %5995 = vmatpush.msra.mxu0 %v2496
    %5996 = vmatpush.msra.mxu0 %v2492
    %5997 = vmatmul.f32.gmra.mxu0 %v5127
    %v5998 = vpop.f32.mrf.mxu0
    %v5999 = vadd.f32 %v2558, %v5998
    %6000 = vdwg.mxu0
    %6001 = vmatpush.msra.mxu0 %v2553
    %6002 = vmatpush.msra.mxu0 %v2549
    %6003 = vmatpush.msra.mxu0 %v2545
    %6004 = vmatpush.msra.mxu0 %v2541
    %6005 = vmatpush.msra.mxu0 %v2537
    %6006 = vmatpush.msra.mxu0 %v2533
    %6007 = vmatpush.msra.mxu0 %v2529
    %6008 = vmatpush.msra.mxu0 %v2525
    %6009 = vmatpush.msra.mxu0 %v2521
    %6010 = vmatpush.msra.mxu0 %v2517
    %6011 = vmatpush.msra.mxu0 %v2513
    %6012 = vmatpush.msra.mxu0 %v2509
    %6013 = vmatpush.msra.mxu0 %v2505
    %6014 = vmatpush.msra.mxu0 %v2501
    %6015 = vmatpush.msra.mxu0 %v2497
    %6016 = vmatpush.msra.mxu0 %v2493
    %6017 = vmatmul.f32.gmra.mxu0 %v5127
    %v6018 = vpop.f32.mrf.mxu0
    %v6019 = vadd.f32 %v2559, %v6018
    %6020 = vdwg.mxu0
    %6021 = vmatpush.msra.mxu0 %v2554
    %6022 = vmatpush.msra.mxu0 %v2550
    %6023 = vmatpush.msra.mxu0 %v2546
    %6024 = vmatpush.msra.mxu0 %v2542
    %6025 = vmatpush.msra.mxu0 %v2538
    %6026 = vmatpush.msra.mxu0 %v2534
    %6027 = vmatpush.msra.mxu0 %v2530
    %6028 = vmatpush.msra.mxu0 %v2526
    %6029 = vmatpush.msra.mxu0 %v2522
    %6030 = vmatpush.msra.mxu0 %v2518
    %6031 = vmatpush.msra.mxu0 %v2514
    %6032 = vmatpush.msra.mxu0 %v2510
    %6033 = vmatpush.msra.mxu0 %v2506
    %6034 = vmatpush.msra.mxu0 %v2502
    %6035 = vmatpush.msra.mxu0 %v2498
    %6036 = vmatpush.msra.mxu0 %v2494
    %6037 = vmatmul.f32.gmra.mxu0 %v5127
    %v6038 = vpop.f32.mrf.mxu0
    %v6039 = vadd.f32 %v2560, %v6038
    %6040 = vdwg.mxu0
    %6041 = vmatpush.msra.mxu0 %v2705
    %6042 = vmatpush.msra.mxu0 %v2701
    %6043 = vmatpush.msra.mxu0 %v2697
    %6044 = vmatpush.msra.mxu0 %v2693
    %6045 = vmatpush.msra.mxu0 %v2689
    %6046 = vmatpush.msra.mxu0 %v2685
    %6047 = vmatpush.msra.mxu0 %v2681
    %6048 = vmatpush.msra.mxu0 %v2677
    %6049 = vmatpush.msra.mxu0 %v2673
    %6050 = vmatpush.msra.mxu0 %v2669
    %6051 = vmatpush.msra.mxu0 %v2665
    %6052 = vmatpush.msra.mxu0 %v2661
    %6053 = vmatpush.msra.mxu0 %v2657
    %6054 = vmatpush.msra.mxu0 %v2653
    %6055 = vmatpush.msra.mxu0 %v2649
    %6056 = vmatpush.msra.mxu0 %v2645
    %6057 = vmatmul.f32.gmra.mxu0 %v5354
    %v6058 = vpop.f32.mrf.mxu0
    %v6059 = vadd.f32 0.0, %v6058
    %6060 = vdwg.mxu0
    %6061 = vmatpush.msra.mxu0 %v2706
    %6062 = vmatpush.msra.mxu0 %v2702
    %6063 = vmatpush.msra.mxu0 %v2698
    %6064 = vmatpush.msra.mxu0 %v2694
    %6065 = vmatpush.msra.mxu0 %v2690
    %6066 = vmatpush.msra.mxu0 %v2686
    %6067 = vmatpush.msra.mxu0 %v2682
    %6068 = vmatpush.msra.mxu0 %v2678
    %6069 = vmatpush.msra.mxu0 %v2674
    %6070 = vmatpush.msra.mxu0 %v2670
    %6071 = vmatpush.msra.mxu0 %v2666
    %6072 = vmatpush.msra.mxu0 %v2662
    %6073 = vmatpush.msra.mxu0 %v2658
    %6074 = vmatpush.msra.mxu0 %v2654
    %6075 = vmatpush.msra.mxu0 %v2650
    %6076 = vmatpush.msra.mxu0 %v2646
    %6077 = vmatmul.f32.gmra.mxu0 %v5354
    %v6078 = vpop.f32.mrf.mxu0
    %v6079 = vadd.f32 0.0, %v6078
    %6080 = vdwg.mxu0
    %6081 = vmatpush.msra.mxu0 %v2707
    %6082 = vmatpush.msra.mxu0 %v2703
    %6083 = vmatpush.msra.mxu0 %v2699
    %6084 = vmatpush.msra.mxu0 %v2695
    %6085 = vmatpush.msra.mxu0 %v2691
    %6086 = vmatpush.msra.mxu0 %v2687
    %6087 = vmatpush.msra.mxu0 %v2683
    %6088 = vmatpush.msra.mxu0 %v2679
    %6089 = vmatpush.msra.mxu0 %v2675
    %6090 = vmatpush.msra.mxu0 %v2671
    %6091 = vmatpush.msra.mxu0 %v2667
    %6092 = vmatpush.msra.mxu0 %v2663
    %6093 = vmatpush.msra.mxu0 %v2659
    %6094 = vmatpush.msra.mxu0 %v2655
    %6095 = vmatpush.msra.mxu0 %v2651
    %6096 = vmatpush.msra.mxu0 %v2647
    %6097 = vmatmul.f32.gmra.mxu0 %v5354
    %v6098 = vpop.f32.mrf.mxu0
    %v6099 = vadd.f32 0.0, %v6098
    %6100 = vdwg.mxu0
    %6101 = vmatpush.msra.mxu0 %v2708
    %6102 = vmatpush.msra.mxu0 %v2704
    %6103 = vmatpush.msra.mxu0 %v2700
    %6104 = vmatpush.msra.mxu0 %v2696
    %6105 = vmatpush.msra.mxu0 %v2692
    %6106 = vmatpush.msra.mxu0 %v2688
    %6107 = vmatpush.msra.mxu0 %v2684
    %6108 = vmatpush.msra.mxu0 %v2680
    %6109 = vmatpush.msra.mxu0 %v2676
    %6110 = vmatpush.msra.mxu0 %v2672
    %6111 = vmatpush.msra.mxu0 %v2668
    %6112 = vmatpush.msra.mxu0 %v2664
    %6113 = vmatpush.msra.mxu0 %v2660
    %6114 = vmatpush.msra.mxu0 %v2656
    %6115 = vmatpush.msra.mxu0 %v2652
    %6116 = vmatpush.msra.mxu0 %v2648
    %6117 = vmatmul.f32.gmra.mxu0 %v5354
    %v6118 = vpop.f32.mrf.mxu0
    %v6119 = vadd.f32 0.0, %v6118
    %6120 = vdwg.mxu0
    %v6121 = vadd.f32 %v5979, %v6059
    %v6122 = vadd.f32 %v5999, %v6079
    %v6123 = vadd.f32 %v6019, %v6099
    %v6124 = vadd.f32 %v6039, %v6119
    %v6125 = vxor.u32 %v6121, 2147483648
    %v6126 = vmul.f32 %v6125, 1.442695
    %v6127 = vpow.pop %v6126
    %v6128 = vadd.f32 %v6127, 1.0
    %v6129 = vrcp.pop %v6128
    %v6130 = vmul.f32 %v6128, %v6129
    %v6131 = vsub.f32 1.0, %v6130
    %v6132 = vmul.f32 %v6129, %v6131
    %v6133 = vadd.f32 %v6129, %v6132
    %vm6134 = vweird.f32 %v6128
    %vm6135 = vweird.f32 %v6129
    %vm6136 = vmor %vm6134, %vm6135
    %v6137 = vsel %vm6136, %v6129, %v6133
    %v6138 = vand.u32 2147483647, %v6128
    %vm6139 = vcmp.eq.f32.partialorder %v6138, 8.507059e+37
    %v6140 = vand.u32 %v6128, 2147483648
    %v6141 = vor.u32 1.1754944e-38, %v6140
    %v6142 = vsel %vm6139, %v6141, %v6137
    %v6143 = vmul.f32 1.0, %v6142
    %v6144 = vxor.u32 %v6122, 2147483648
    %v6145 = vmul.f32 %v6144, 1.442695
    %v6146 = vpow.pop %v6145
    %v6147 = vadd.f32 %v6146, 1.0
    %v6148 = vrcp.pop %v6147
    %v6149 = vmul.f32 %v6147, %v6148
    %v6150 = vsub.f32 1.0, %v6149
    %v6151 = vmul.f32 %v6148, %v6150
    %v6152 = vadd.f32 %v6148, %v6151
    %vm6153 = vweird.f32 %v6147
    %vm6154 = vweird.f32 %v6148
    %vm6155 = vmor %vm6153, %vm6154
    %v6156 = vsel %vm6155, %v6148, %v6152
    %v6157 = vand.u32 2147483647, %v6147
    %vm6158 = vcmp.eq.f32.partialorder %v6157, 8.507059e+37
    %v6159 = vand.u32 %v6147, 2147483648
    %v6160 = vor.u32 1.1754944e-38, %v6159
    %v6161 = vsel %vm6158, %v6160, %v6156
    %v6162 = vmul.f32 1.0, %v6161
    %v6163 = vtanh.pop %v6123
    %v6164 = vxor.u32 %v6124, 2147483648
    %v6165 = vmul.f32 %v6164, 1.442695
    %v6166 = vpow.pop %v6165
    %v6167 = vadd.f32 %v6166, 1.0
    %v6168 = vrcp.pop %v6167
    %v6169 = vmul.f32 %v6167, %v6168
    %v6170 = vsub.f32 1.0, %v6169
    %v6171 = vmul.f32 %v6168, %v6170
    %v6172 = vadd.f32 %v6168, %v6171
    %vm6173 = vweird.f32 %v6167
    %vm6174 = vweird.f32 %v6168
    %vm6175 = vmor %vm6173, %vm6174
    %v6176 = vsel %vm6175, %v6168, %v6172
    %v6177 = vand.u32 2147483647, %v6167
    %vm6178 = vcmp.eq.f32.partialorder %v6177, 8.507059e+37
    %v6179 = vand.u32 %v6167, 2147483648
    %v6180 = vor.u32 1.1754944e-38, %v6179
    %v6181 = vsel %vm6178, %v6180, %v6176
    %v6182 = vmul.f32 1.0, %v6181
    %v6183 = vmul.f32 %v6162, %v5352
    %v6184 = vmul.f32 %v6143, %v6163
    %v6185 = vadd.f32 %v6183, %v6184
    %v6186 = vtanh.pop %v6185
    %v6187 = vmul.f32 %v6182, %v6186
    %6188 = vmatpush.msra.mxu0 %v836
    %6189 = vmatpush.msra.mxu0 %v832
    %6190 = vmatpush.msra.mxu0 %v828
    %6191 = vmatpush.msra.mxu0 %v824
    %6192 = vmatpush.msra.mxu0 %v820
    %6193 = vmatpush.msra.mxu0 %v816
    %6194 = vmatpush.msra.mxu0 %v812
    %6195 = vmatpush.msra.mxu0 %v808
    %6196 = vmatpush.msra.mxu0 %v804
    %6197 = vmatpush.msra.mxu0 %v800
    %6198 = vmatpush.msra.mxu0 %v796
    %6199 = vmatpush.msra.mxu0 %v792
    %6200 = vmatpush.msra.mxu0 %v788
    %6201 = vmatpush.msra.mxu0 %v784
    %6202 = vmatpush.msra.mxu0 %v780
    %6203 = vmatpush.msra.mxu0 %v776
    %6204 = vmatmul.f32.gmra.mxu0 %v5506
    %v6205 = vpop.f32.mrf.mxu0
    %v6206 = vadd.f32 %v842, %v6205
    %6207 = vdwg.mxu0
    %6208 = vmatpush.msra.mxu0 %v837
    %6209 = vmatpush.msra.mxu0 %v833
    %6210 = vmatpush.msra.mxu0 %v829
    %6211 = vmatpush.msra.mxu0 %v825
    %6212 = vmatpush.msra.mxu0 %v821
    %6213 = vmatpush.msra.mxu0 %v817
    %6214 = vmatpush.msra.mxu0 %v813
    %6215 = vmatpush.msra.mxu0 %v809
    %6216 = vmatpush.msra.mxu0 %v805
    %6217 = vmatpush.msra.mxu0 %v801
    %6218 = vmatpush.msra.mxu0 %v797
    %6219 = vmatpush.msra.mxu0 %v793
    %6220 = vmatpush.msra.mxu0 %v789
    %6221 = vmatpush.msra.mxu0 %v785
    %6222 = vmatpush.msra.mxu0 %v781
    %6223 = vmatpush.msra.mxu0 %v777
    %6224 = vmatmul.f32.gmra.mxu0 %v5506
    %v6225 = vpop.f32.mrf.mxu0
    %v6226 = vadd.f32 %v843, %v6225
    %6227 = vdwg.mxu0
    %6228 = vmatpush.msra.mxu0 %v838
    %6229 = vmatpush.msra.mxu0 %v834
    %6230 = vmatpush.msra.mxu0 %v830
    %6231 = vmatpush.msra.mxu0 %v826
    %6232 = vmatpush.msra.mxu0 %v822
    %6233 = vmatpush.msra.mxu0 %v818
    %6234 = vmatpush.msra.mxu0 %v814
    %6235 = vmatpush.msra.mxu0 %v810
    %6236 = vmatpush.msra.mxu0 %v806
    %6237 = vmatpush.msra.mxu0 %v802
    %6238 = vmatpush.msra.mxu0 %v798
    %6239 = vmatpush.msra.mxu0 %v794
    %6240 = vmatpush.msra.mxu0 %v790
    %6241 = vmatpush.msra.mxu0 %v786
    %6242 = vmatpush.msra.mxu0 %v782
    %6243 = vmatpush.msra.mxu0 %v778
    %6244 = vmatmul.f32.gmra.mxu0 %v5506
    %v6245 = vpop.f32.mrf.mxu0
    %v6246 = vadd.f32 %v844, %v6245
    %6247 = vdwg.mxu0
    %6248 = vmatpush.msra.mxu0 %v839
    %6249 = vmatpush.msra.mxu0 %v835
    %6250 = vmatpush.msra.mxu0 %v831
    %6251 = vmatpush.msra.mxu0 %v827
    %6252 = vmatpush.msra.mxu0 %v823
    %6253 = vmatpush.msra.mxu0 %v819
    %6254 = vmatpush.msra.mxu0 %v815
    %6255 = vmatpush.msra.mxu0 %v811
    %6256 = vmatpush.msra.mxu0 %v807
    %6257 = vmatpush.msra.mxu0 %v803
    %6258 = vmatpush.msra.mxu0 %v799
    %6259 = vmatpush.msra.mxu0 %v795
    %6260 = vmatpush.msra.mxu0 %v791
    %6261 = vmatpush.msra.mxu0 %v787
    %6262 = vmatpush.msra.mxu0 %v783
    %6263 = vmatpush.msra.mxu0 %v779
    %6264 = vmatmul.f32.gmra.mxu0 %v5506
    %v6265 = vpop.f32.mrf.mxu0
    %v6266 = vadd.f32 %v845, %v6265
    %6267 = vdwg.mxu0
    %6268 = vmatpush.msra.mxu0 %v990
    %6269 = vmatpush.msra.mxu0 %v986
    %6270 = vmatpush.msra.mxu0 %v982
    %6271 = vmatpush.msra.mxu0 %v978
    %6272 = vmatpush.msra.mxu0 %v974
    %6273 = vmatpush.msra.mxu0 %v970
    %6274 = vmatpush.msra.mxu0 %v966
    %6275 = vmatpush.msra.mxu0 %v962
    %6276 = vmatpush.msra.mxu0 %v958
    %6277 = vmatpush.msra.mxu0 %v954
    %6278 = vmatpush.msra.mxu0 %v950
    %6279 = vmatpush.msra.mxu0 %v946
    %6280 = vmatpush.msra.mxu0 %v942
    %6281 = vmatpush.msra.mxu0 %v938
    %6282 = vmatpush.msra.mxu0 %v934
    %6283 = vmatpush.msra.mxu0 %v930
    %6284 = vmatmul.f32.gmra.mxu0 %v5733
    %v6285 = vpop.f32.mrf.mxu0
    %v6286 = vadd.f32 0.0, %v6285
    %6287 = vdwg.mxu0
    %6288 = vmatpush.msra.mxu0 %v991
    %6289 = vmatpush.msra.mxu0 %v987
    %6290 = vmatpush.msra.mxu0 %v983
    %6291 = vmatpush.msra.mxu0 %v979
    %6292 = vmatpush.msra.mxu0 %v975
    %6293 = vmatpush.msra.mxu0 %v971
    %6294 = vmatpush.msra.mxu0 %v967
    %6295 = vmatpush.msra.mxu0 %v963
    %6296 = vmatpush.msra.mxu0 %v959
    %6297 = vmatpush.msra.mxu0 %v955
    %6298 = vmatpush.msra.mxu0 %v951
    %6299 = vmatpush.msra.mxu0 %v947
    %6300 = vmatpush.msra.mxu0 %v943
    %6301 = vmatpush.msra.mxu0 %v939
    %6302 = vmatpush.msra.mxu0 %v935
    %6303 = vmatpush.msra.mxu0 %v931
    %6304 = vmatmul.f32.gmra.mxu0 %v5733
    %v6305 = vpop.f32.mrf.mxu0
    %v6306 = vadd.f32 0.0, %v6305
    %6307 = vdwg.mxu0
    %6308 = vmatpush.msra.mxu0 %v992
    %6309 = vmatpush.msra.mxu0 %v988
    %6310 = vmatpush.msra.mxu0 %v984
    %6311 = vmatpush.msra.mxu0 %v980
    %6312 = vmatpush.msra.mxu0 %v976
    %6313 = vmatpush.msra.mxu0 %v972
    %6314 = vmatpush.msra.mxu0 %v968
    %6315 = vmatpush.msra.mxu0 %v964
    %6316 = vmatpush.msra.mxu0 %v960
    %6317 = vmatpush.msra.mxu0 %v956
    %6318 = vmatpush.msra.mxu0 %v952
    %6319 = vmatpush.msra.mxu0 %v948
    %6320 = vmatpush.msra.mxu0 %v944
    %6321 = vmatpush.msra.mxu0 %v940
    %6322 = vmatpush.msra.mxu0 %v936
    %6323 = vmatpush.msra.mxu0 %v932
    %6324 = vmatmul.f32.gmra.mxu0 %v5733
    %v6325 = vpop.f32.mrf.mxu0
    %v6326 = vadd.f32 0.0, %v6325
    %6327 = vdwg.mxu0
    %6328 = vmatpush.msra.mxu0 %v993
    %6329 = vmatpush.msra.mxu0 %v989
    %6330 = vmatpush.msra.mxu0 %v985
    %6331 = vmatpush.msra.mxu0 %v981
    %6332 = vmatpush.msra.mxu0 %v977
    %6333 = vmatpush.msra.mxu0 %v973
    %6334 = vmatpush.msra.mxu0 %v969
    %6335 = vmatpush.msra.mxu0 %v965
    %6336 = vmatpush.msra.mxu0 %v961
    %6337 = vmatpush.msra.mxu0 %v957
    %6338 = vmatpush.msra.mxu0 %v953
    %6339 = vmatpush.msra.mxu0 %v949
    %6340 = vmatpush.msra.mxu0 %v945
    %6341 = vmatpush.msra.mxu0 %v941
    %6342 = vmatpush.msra.mxu0 %v937
    %6343 = vmatpush.msra.mxu0 %v933
    %6344 = vmatmul.f32.gmra.mxu0 %v5733
    %v6345 = vpop.f32.mrf.mxu0
    %v6346 = vadd.f32 0.0, %v6345
    %6347 = vdwg.mxu0
    %v6348 = vadd.f32 %v6206, %v6286
    %v6349 = vadd.f32 %v6226, %v6306
    %v6350 = vadd.f32 %v6246, %v6326
    %v6351 = vadd.f32 %v6266, %v6346
    %v6352 = vxor.u32 %v6348, 2147483648
    %v6353 = vmul.f32 %v6352, 1.442695
    %v6354 = vpow.pop %v6353
    %v6355 = vadd.f32 %v6354, 1.0
    %v6356 = vrcp.pop %v6355
    %v6357 = vmul.f32 %v6355, %v6356
    %v6358 = vsub.f32 1.0, %v6357
    %v6359 = vmul.f32 %v6356, %v6358
    %v6360 = vadd.f32 %v6356, %v6359
    %vm6361 = vweird.f32 %v6355
    %vm6362 = vweird.f32 %v6356
    %vm6363 = vmor %vm6361, %vm6362
    %v6364 = vsel %vm6363, %v6356, %v6360
    %v6365 = vand.u32 2147483647, %v6355
    %vm6366 = vcmp.eq.f32.partialorder %v6365, 8.507059e+37
    %v6367 = vand.u32 %v6355, 2147483648
    %v6368 = vor.u32 1.1754944e-38, %v6367
    %v6369 = vsel %vm6366, %v6368, %v6364
    %v6370 = vmul.f32 1.0, %v6369
    %v6371 = vxor.u32 %v6349, 2147483648
    %v6372 = vmul.f32 %v6371, 1.442695
    %v6373 = vpow.pop %v6372
    %v6374 = vadd.f32 %v6373, 1.0
    %v6375 = vrcp.pop %v6374
    %v6376 = vmul.f32 %v6374, %v6375
    %v6377 = vsub.f32 1.0, %v6376
    %v6378 = vmul.f32 %v6375, %v6377
    %v6379 = vadd.f32 %v6375, %v6378
    %vm6380 = vweird.f32 %v6374
    %vm6381 = vweird.f32 %v6375
    %vm6382 = vmor %vm6380, %vm6381
    %v6383 = vsel %vm6382, %v6375, %v6379
    %v6384 = vand.u32 2147483647, %v6374
    %vm6385 = vcmp.eq.f32.partialorder %v6384, 8.507059e+37
    %v6386 = vand.u32 %v6374, 2147483648
    %v6387 = vor.u32 1.1754944e-38, %v6386
    %v6388 = vsel %vm6385, %v6387, %v6383
    %v6389 = vmul.f32 1.0, %v6388
    %v6390 = vtanh.pop %v6350
    %v6391 = vxor.u32 %v6351, 2147483648
    %v6392 = vmul.f32 %v6391, 1.442695
    %v6393 = vpow.pop %v6392
    %v6394 = vadd.f32 %v6393, 1.0
    %v6395 = vrcp.pop %v6394
    %v6396 = vmul.f32 %v6394, %v6395
    %v6397 = vsub.f32 1.0, %v6396
    %v6398 = vmul.f32 %v6395, %v6397
    %v6399 = vadd.f32 %v6395, %v6398
    %vm6400 = vweird.f32 %v6394
    %vm6401 = vweird.f32 %v6395
    %vm6402 = vmor %vm6400, %vm6401
    %v6403 = vsel %vm6402, %v6395, %v6399
    %v6404 = vand.u32 2147483647, %v6394
    %vm6405 = vcmp.eq.f32.partialorder %v6404, 8.507059e+37
    %v6406 = vand.u32 %v6394, 2147483648
    %v6407 = vor.u32 1.1754944e-38, %v6406
    %v6408 = vsel %vm6405, %v6407, %v6403
    %v6409 = vmul.f32 1.0, %v6408
    %v6410 = vmul.f32 %v6389, %v5731
    %v6411 = vmul.f32 %v6370, %v6390
    %v6412 = vadd.f32 %v6410, %v6411
    %v6413 = vtanh.pop %v6412
    %v6414 = vmul.f32 %v6409, %v6413
    %6415 = vmatpush.msra.mxu0 %v1580
    %6416 = vmatpush.msra.mxu0 %v1576
    %6417 = vmatpush.msra.mxu0 %v1572
    %6418 = vmatpush.msra.mxu0 %v1568
    %6419 = vmatpush.msra.mxu0 %v1564
    %6420 = vmatpush.msra.mxu0 %v1560
    %6421 = vmatpush.msra.mxu0 %v1556
    %6422 = vmatpush.msra.mxu0 %v1552
    %6423 = vmatpush.msra.mxu0 %v1548
    %6424 = vmatpush.msra.mxu0 %v1544
    %6425 = vmatpush.msra.mxu0 %v1540
    %6426 = vmatpush.msra.mxu0 %v1536
    %6427 = vmatpush.msra.mxu0 %v1532
    %6428 = vmatpush.msra.mxu0 %v1528
    %6429 = vmatpush.msra.mxu0 %v1524
    %6430 = vmatpush.msra.mxu0 %v1520
    %6431 = vmatmul.f32.gmra.mxu0 %v5733
    %v6432 = vpop.f32.mrf.mxu0
    %v6433 = vadd.f32 %v1586, %v6432
    %6434 = vdwg.mxu0
    %6435 = vmatpush.msra.mxu0 %v1581
    %6436 = vmatpush.msra.mxu0 %v1577
    %6437 = vmatpush.msra.mxu0 %v1573
    %6438 = vmatpush.msra.mxu0 %v1569
    %6439 = vmatpush.msra.mxu0 %v1565
    %6440 = vmatpush.msra.mxu0 %v1561
    %6441 = vmatpush.msra.mxu0 %v1557
    %6442 = vmatpush.msra.mxu0 %v1553
    %6443 = vmatpush.msra.mxu0 %v1549
    %6444 = vmatpush.msra.mxu0 %v1545
    %6445 = vmatpush.msra.mxu0 %v1541
    %6446 = vmatpush.msra.mxu0 %v1537
    %6447 = vmatpush.msra.mxu0 %v1533
    %6448 = vmatpush.msra.mxu0 %v1529
    %6449 = vmatpush.msra.mxu0 %v1525
    %6450 = vmatpush.msra.mxu0 %v1521
    %6451 = vmatmul.f32.gmra.mxu0 %v5733
    %v6452 = vpop.f32.mrf.mxu0
    %v6453 = vadd.f32 %v1587, %v6452
    %6454 = vdwg.mxu0
    %6455 = vmatpush.msra.mxu0 %v1582
    %6456 = vmatpush.msra.mxu0 %v1578
    %6457 = vmatpush.msra.mxu0 %v1574
    %6458 = vmatpush.msra.mxu0 %v1570
    %6459 = vmatpush.msra.mxu0 %v1566
    %6460 = vmatpush.msra.mxu0 %v1562
    %6461 = vmatpush.msra.mxu0 %v1558
    %6462 = vmatpush.msra.mxu0 %v1554
    %6463 = vmatpush.msra.mxu0 %v1550
    %6464 = vmatpush.msra.mxu0 %v1546
    %6465 = vmatpush.msra.mxu0 %v1542
    %6466 = vmatpush.msra.mxu0 %v1538
    %6467 = vmatpush.msra.mxu0 %v1534
    %6468 = vmatpush.msra.mxu0 %v1530
    %6469 = vmatpush.msra.mxu0 %v1526
    %6470 = vmatpush.msra.mxu0 %v1522
    %6471 = vmatmul.f32.gmra.mxu0 %v5733
    %v6472 = vpop.f32.mrf.mxu0
    %v6473 = vadd.f32 %v1588, %v6472
    %6474 = vdwg.mxu0
    %6475 = vmatpush.msra.mxu0 %v1583
    %6476 = vmatpush.msra.mxu0 %v1579
    %6477 = vmatpush.msra.mxu0 %v1575
    %6478 = vmatpush.msra.mxu0 %v1571
    %6479 = vmatpush.msra.mxu0 %v1567
    %6480 = vmatpush.msra.mxu0 %v1563
    %6481 = vmatpush.msra.mxu0 %v1559
    %6482 = vmatpush.msra.mxu0 %v1555
    %6483 = vmatpush.msra.mxu0 %v1551
    %6484 = vmatpush.msra.mxu0 %v1547
    %6485 = vmatpush.msra.mxu0 %v1543
    %6486 = vmatpush.msra.mxu0 %v1539
    %6487 = vmatpush.msra.mxu0 %v1535
    %6488 = vmatpush.msra.mxu0 %v1531
    %6489 = vmatpush.msra.mxu0 %v1527
    %6490 = vmatpush.msra.mxu0 %v1523
    %6491 = vmatmul.f32.gmra.mxu0 %v5733
    %v6492 = vpop.f32.mrf.mxu0
    %v6493 = vadd.f32 %v1589, %v6492
    %6494 = vdwg.mxu0
    %6495 = vmatpush.msra.mxu0 %v1734
    %6496 = vmatpush.msra.mxu0 %v1730
    %6497 = vmatpush.msra.mxu0 %v1726
    %6498 = vmatpush.msra.mxu0 %v1722
    %6499 = vmatpush.msra.mxu0 %v1718
    %6500 = vmatpush.msra.mxu0 %v1714
    %6501 = vmatpush.msra.mxu0 %v1710
    %6502 = vmatpush.msra.mxu0 %v1706
    %6503 = vmatpush.msra.mxu0 %v1702
    %6504 = vmatpush.msra.mxu0 %v1698
    %6505 = vmatpush.msra.mxu0 %v1694
    %6506 = vmatpush.msra.mxu0 %v1690
    %6507 = vmatpush.msra.mxu0 %v1686
    %6508 = vmatpush.msra.mxu0 %v1682
    %6509 = vmatpush.msra.mxu0 %v1678
    %6510 = vmatpush.msra.mxu0 %v1674
    %6511 = vmatmul.f32.gmra.mxu0 %v5960
    %v6512 = vpop.f32.mrf.mxu0
    %v6513 = vadd.f32 0.0, %v6512
    %6514 = vdwg.mxu0
    %6515 = vmatpush.msra.mxu0 %v1735
    %6516 = vmatpush.msra.mxu0 %v1731
    %6517 = vmatpush.msra.mxu0 %v1727
    %6518 = vmatpush.msra.mxu0 %v1723
    %6519 = vmatpush.msra.mxu0 %v1719
    %6520 = vmatpush.msra.mxu0 %v1715
    %6521 = vmatpush.msra.mxu0 %v1711
    %6522 = vmatpush.msra.mxu0 %v1707
    %6523 = vmatpush.msra.mxu0 %v1703
    %6524 = vmatpush.msra.mxu0 %v1699
    %6525 = vmatpush.msra.mxu0 %v1695
    %6526 = vmatpush.msra.mxu0 %v1691
    %6527 = vmatpush.msra.mxu0 %v1687
    %6528 = vmatpush.msra.mxu0 %v1683
    %6529 = vmatpush.msra.mxu0 %v1679
    %6530 = vmatpush.msra.mxu0 %v1675
    %6531 = vmatmul.f32.gmra.mxu0 %v5960
    %v6532 = vpop.f32.mrf.mxu0
    %v6533 = vadd.f32 0.0, %v6532
    %6534 = vdwg.mxu0
    %6535 = vmatpush.msra.mxu0 %v1736
    %6536 = vmatpush.msra.mxu0 %v1732
    %6537 = vmatpush.msra.mxu0 %v1728
    %6538 = vmatpush.msra.mxu0 %v1724
    %6539 = vmatpush.msra.mxu0 %v1720
    %6540 = vmatpush.msra.mxu0 %v1716
    %6541 = vmatpush.msra.mxu0 %v1712
    %6542 = vmatpush.msra.mxu0 %v1708
    %6543 = vmatpush.msra.mxu0 %v1704
    %6544 = vmatpush.msra.mxu0 %v1700
    %6545 = vmatpush.msra.mxu0 %v1696
    %6546 = vmatpush.msra.mxu0 %v1692
    %6547 = vmatpush.msra.mxu0 %v1688
    %6548 = vmatpush.msra.mxu0 %v1684
    %6549 = vmatpush.msra.mxu0 %v1680
    %6550 = vmatpush.msra.mxu0 %v1676
    %6551 = vmatmul.f32.gmra.mxu0 %v5960
    %v6552 = vpop.f32.mrf.mxu0
    %v6553 = vadd.f32 0.0, %v6552
    %6554 = vdwg.mxu0
    %6555 = vmatpush.msra.mxu0 %v1737
    %6556 = vmatpush.msra.mxu0 %v1733
    %6557 = vmatpush.msra.mxu0 %v1729
    %6558 = vmatpush.msra.mxu0 %v1725
    %6559 = vmatpush.msra.mxu0 %v1721
    %6560 = vmatpush.msra.mxu0 %v1717
    %6561 = vmatpush.msra.mxu0 %v1713
    %6562 = vmatpush.msra.mxu0 %v1709
    %6563 = vmatpush.msra.mxu0 %v1705
    %6564 = vmatpush.msra.mxu0 %v1701
    %6565 = vmatpush.msra.mxu0 %v1697
    %6566 = vmatpush.msra.mxu0 %v1693
    %6567 = vmatpush.msra.mxu0 %v1689
    %6568 = vmatpush.msra.mxu0 %v1685
    %6569 = vmatpush.msra.mxu0 %v1681
    %6570 = vmatpush.msra.mxu0 %v1677
    %6571 = vmatmul.f32.gmra.mxu0 %v5960
    %v6572 = vpop.f32.mrf.mxu0
    %v6573 = vadd.f32 0.0, %v6572
    %6574 = vdwg.mxu0
    %v6575 = vadd.f32 %v6433, %v6513
    %v6576 = vadd.f32 %v6453, %v6533
    %v6577 = vadd.f32 %v6473, %v6553
    %v6578 = vadd.f32 %v6493, %v6573
    %v6579 = vxor.u32 %v6575, 2147483648
    %v6580 = vmul.f32 %v6579, 1.442695
    %v6581 = vpow.pop %v6580
    %v6582 = vadd.f32 %v6581, 1.0
    %v6583 = vrcp.pop %v6582
    %v6584 = vmul.f32 %v6582, %v6583
    %v6585 = vsub.f32 1.0, %v6584
    %v6586 = vmul.f32 %v6583, %v6585
    %v6587 = vadd.f32 %v6583, %v6586
    %vm6588 = vweird.f32 %v6582
    %vm6589 = vweird.f32 %v6583
    %vm6590 = vmor %vm6588, %vm6589
    %v6591 = vsel %vm6590, %v6583, %v6587
    %v6592 = vand.u32 2147483647, %v6582
    %vm6593 = vcmp.eq.f32.partialorder %v6592, 8.507059e+37
    %v6594 = vand.u32 %v6582, 2147483648
    %v6595 = vor.u32 1.1754944e-38, %v6594
    %v6596 = vsel %vm6593, %v6595, %v6591
    %v6597 = vmul.f32 1.0, %v6596
    %v6598 = vxor.u32 %v6576, 2147483648
    %v6599 = vmul.f32 %v6598, 1.442695
    %v6600 = vpow.pop %v6599
    %v6601 = vadd.f32 %v6600, 1.0
    %v6602 = vrcp.pop %v6601
    %v6603 = vmul.f32 %v6601, %v6602
    %v6604 = vsub.f32 1.0, %v6603
    %v6605 = vmul.f32 %v6602, %v6604
    %v6606 = vadd.f32 %v6602, %v6605
    %vm6607 = vweird.f32 %v6601
    %vm6608 = vweird.f32 %v6602
    %vm6609 = vmor %vm6607, %vm6608
    %v6610 = vsel %vm6609, %v6602, %v6606
    %v6611 = vand.u32 2147483647, %v6601
    %vm6612 = vcmp.eq.f32.partialorder %v6611, 8.507059e+37
    %v6613 = vand.u32 %v6601, 2147483648
    %v6614 = vor.u32 1.1754944e-38, %v6613
    %v6615 = vsel %vm6612, %v6614, %v6610
    %v6616 = vmul.f32 1.0, %v6615
    %v6617 = vtanh.pop %v6577
    %v6618 = vxor.u32 %v6578, 2147483648
    %v6619 = vmul.f32 %v6618, 1.442695
    %v6620 = vpow.pop %v6619
    %v6621 = vadd.f32 %v6620, 1.0
    %v6622 = vrcp.pop %v6621
    %v6623 = vmul.f32 %v6621, %v6622
    %v6624 = vsub.f32 1.0, %v6623
    %v6625 = vmul.f32 %v6622, %v6624
    %v6626 = vadd.f32 %v6622, %v6625
    %vm6627 = vweird.f32 %v6621
    %vm6628 = vweird.f32 %v6622
    %vm6629 = vmor %vm6627, %vm6628
    %v6630 = vsel %vm6629, %v6622, %v6626
    %v6631 = vand.u32 2147483647, %v6621
    %vm6632 = vcmp.eq.f32.partialorder %v6631, 8.507059e+37
    %v6633 = vand.u32 %v6621, 2147483648
    %v6634 = vor.u32 1.1754944e-38, %v6633
    %v6635 = vsel %vm6632, %v6634, %v6630
    %v6636 = vmul.f32 1.0, %v6635
    %v6637 = vmul.f32 %v6616, %v5958
    %v6638 = vmul.f32 %v6597, %v6617
    %v6639 = vadd.f32 %v6637, %v6638
    %v6640 = vtanh.pop %v6639
    %v6641 = vmul.f32 %v6636, %v6640
    %6642 = vmatpush.msra.mxu0 %v2551
    %6643 = vmatpush.msra.mxu0 %v2547
    %6644 = vmatpush.msra.mxu0 %v2543
    %6645 = vmatpush.msra.mxu0 %v2539
    %6646 = vmatpush.msra.mxu0 %v2535
    %6647 = vmatpush.msra.mxu0 %v2531
    %6648 = vmatpush.msra.mxu0 %v2527
    %6649 = vmatpush.msra.mxu0 %v2523
    %6650 = vmatpush.msra.mxu0 %v2519
    %6651 = vmatpush.msra.mxu0 %v2515
    %6652 = vmatpush.msra.mxu0 %v2511
    %6653 = vmatpush.msra.mxu0 %v2507
    %6654 = vmatpush.msra.mxu0 %v2503
    %6655 = vmatpush.msra.mxu0 %v2499
    %6656 = vmatpush.msra.mxu0 %v2495
    %6657 = vmatpush.msra.mxu0 %v2491
    %6658 = vmatmul.f32.gmra.mxu0 %v5960
    %v6659 = vpop.f32.mrf.mxu0
    %v6660 = vadd.f32 %v2557, %v6659
    %6661 = vdwg.mxu0
    %6662 = vmatpush.msra.mxu0 %v2552
    %6663 = vmatpush.msra.mxu0 %v2548
    %6664 = vmatpush.msra.mxu0 %v2544
    %6665 = vmatpush.msra.mxu0 %v2540
    %6666 = vmatpush.msra.mxu0 %v2536
    %6667 = vmatpush.msra.mxu0 %v2532
    %6668 = vmatpush.msra.mxu0 %v2528
    %6669 = vmatpush.msra.mxu0 %v2524
    %6670 = vmatpush.msra.mxu0 %v2520
    %6671 = vmatpush.msra.mxu0 %v2516
    %6672 = vmatpush.msra.mxu0 %v2512
    %6673 = vmatpush.msra.mxu0 %v2508
    %6674 = vmatpush.msra.mxu0 %v2504
    %6675 = vmatpush.msra.mxu0 %v2500
    %6676 = vmatpush.msra.mxu0 %v2496
    %6677 = vmatpush.msra.mxu0 %v2492
    %6678 = vmatmul.f32.gmra.mxu0 %v5960
    %v6679 = vpop.f32.mrf.mxu0
    %v6680 = vadd.f32 %v2558, %v6679
    %6681 = vdwg.mxu0
    %6682 = vmatpush.msra.mxu0 %v2553
    %6683 = vmatpush.msra.mxu0 %v2549
    %6684 = vmatpush.msra.mxu0 %v2545
    %6685 = vmatpush.msra.mxu0 %v2541
    %6686 = vmatpush.msra.mxu0 %v2537
    %6687 = vmatpush.msra.mxu0 %v2533
    %6688 = vmatpush.msra.mxu0 %v2529
    %6689 = vmatpush.msra.mxu0 %v2525
    %6690 = vmatpush.msra.mxu0 %v2521
    %6691 = vmatpush.msra.mxu0 %v2517
    %6692 = vmatpush.msra.mxu0 %v2513
    %6693 = vmatpush.msra.mxu0 %v2509
    %6694 = vmatpush.msra.mxu0 %v2505
    %6695 = vmatpush.msra.mxu0 %v2501
    %6696 = vmatpush.msra.mxu0 %v2497
    %6697 = vmatpush.msra.mxu0 %v2493
    %6698 = vmatmul.f32.gmra.mxu0 %v5960
    %v6699 = vpop.f32.mrf.mxu0
    %v6700 = vadd.f32 %v2559, %v6699
    %6701 = vdwg.mxu0
    %6702 = vmatpush.msra.mxu0 %v2554
    %6703 = vmatpush.msra.mxu0 %v2550
    %6704 = vmatpush.msra.mxu0 %v2546
    %6705 = vmatpush.msra.mxu0 %v2542
    %6706 = vmatpush.msra.mxu0 %v2538
    %6707 = vmatpush.msra.mxu0 %v2534
    %6708 = vmatpush.msra.mxu0 %v2530
    %6709 = vmatpush.msra.mxu0 %v2526
    %6710 = vmatpush.msra.mxu0 %v2522
    %6711 = vmatpush.msra.mxu0 %v2518
    %6712 = vmatpush.msra.mxu0 %v2514
    %6713 = vmatpush.msra.mxu0 %v2510
    %6714 = vmatpush.msra.mxu0 %v2506
    %6715 = vmatpush.msra.mxu0 %v2502
    %6716 = vmatpush.msra.mxu0 %v2498
    %6717 = vmatpush.msra.mxu0 %v2494
    %6718 = vmatmul.f32.gmra.mxu0 %v5960
    %v6719 = vpop.f32.mrf.mxu0
    %v6720 = vadd.f32 %v2560, %v6719
    %6721 = vdwg.mxu0
    %6722 = vmatpush.msra.mxu0 %v2705
    %6723 = vmatpush.msra.mxu0 %v2701
    %6724 = vmatpush.msra.mxu0 %v2697
    %6725 = vmatpush.msra.mxu0 %v2693
    %6726 = vmatpush.msra.mxu0 %v2689
    %6727 = vmatpush.msra.mxu0 %v2685
    %6728 = vmatpush.msra.mxu0 %v2681
    %6729 = vmatpush.msra.mxu0 %v2677
    %6730 = vmatpush.msra.mxu0 %v2673
    %6731 = vmatpush.msra.mxu0 %v2669
    %6732 = vmatpush.msra.mxu0 %v2665
    %6733 = vmatpush.msra.mxu0 %v2661
    %6734 = vmatpush.msra.mxu0 %v2657
    %6735 = vmatpush.msra.mxu0 %v2653
    %6736 = vmatpush.msra.mxu0 %v2649
    %6737 = vmatpush.msra.mxu0 %v2645
    %6738 = vmatmul.f32.gmra.mxu0 %v6187
    %v6739 = vpop.f32.mrf.mxu0
    %v6740 = vadd.f32 0.0, %v6739
    %6741 = vdwg.mxu0
    %6742 = vmatpush.msra.mxu0 %v2706
    %6743 = vmatpush.msra.mxu0 %v2702
    %6744 = vmatpush.msra.mxu0 %v2698
    %6745 = vmatpush.msra.mxu0 %v2694
    %6746 = vmatpush.msra.mxu0 %v2690
    %6747 = vmatpush.msra.mxu0 %v2686
    %6748 = vmatpush.msra.mxu0 %v2682
    %6749 = vmatpush.msra.mxu0 %v2678
    %6750 = vmatpush.msra.mxu0 %v2674
    %6751 = vmatpush.msra.mxu0 %v2670
    %6752 = vmatpush.msra.mxu0 %v2666
    %6753 = vmatpush.msra.mxu0 %v2662
    %6754 = vmatpush.msra.mxu0 %v2658
    %6755 = vmatpush.msra.mxu0 %v2654
    %6756 = vmatpush.msra.mxu0 %v2650
    %6757 = vmatpush.msra.mxu0 %v2646
    %6758 = vmatmul.f32.gmra.mxu0 %v6187
    %v6759 = vpop.f32.mrf.mxu0
    %v6760 = vadd.f32 0.0, %v6759
    %6761 = vdwg.mxu0
    %6762 = vmatpush.msra.mxu0 %v2707
    %6763 = vmatpush.msra.mxu0 %v2703
    %6764 = vmatpush.msra.mxu0 %v2699
    %6765 = vmatpush.msra.mxu0 %v2695
    %6766 = vmatpush.msra.mxu0 %v2691
    %6767 = vmatpush.msra.mxu0 %v2687
    %6768 = vmatpush.msra.mxu0 %v2683
    %6769 = vmatpush.msra.mxu0 %v2679
    %6770 = vmatpush.msra.mxu0 %v2675
    %6771 = vmatpush.msra.mxu0 %v2671
    %6772 = vmatpush.msra.mxu0 %v2667
    %6773 = vmatpush.msra.mxu0 %v2663
    %6774 = vmatpush.msra.mxu0 %v2659
    %6775 = vmatpush.msra.mxu0 %v2655
    %6776 = vmatpush.msra.mxu0 %v2651
    %6777 = vmatpush.msra.mxu0 %v2647
    %6778 = vmatmul.f32.gmra.mxu0 %v6187
    %v6779 = vpop.f32.mrf.mxu0
    %v6780 = vadd.f32 0.0, %v6779
    %6781 = vdwg.mxu0
    %6782 = vmatpush.msra.mxu0 %v2708
    %6783 = vmatpush.msra.mxu0 %v2704
    %6784 = vmatpush.msra.mxu0 %v2700
    %6785 = vmatpush.msra.mxu0 %v2696
    %6786 = vmatpush.msra.mxu0 %v2692
    %6787 = vmatpush.msra.mxu0 %v2688
    %6788 = vmatpush.msra.mxu0 %v2684
    %6789 = vmatpush.msra.mxu0 %v2680
    %6790 = vmatpush.msra.mxu0 %v2676
    %6791 = vmatpush.msra.mxu0 %v2672
    %6792 = vmatpush.msra.mxu0 %v2668
    %6793 = vmatpush.msra.mxu0 %v2664
    %6794 = vmatpush.msra.mxu0 %v2660
    %6795 = vmatpush.msra.mxu0 %v2656
    %6796 = vmatpush.msra.mxu0 %v2652
    %6797 = vmatpush.msra.mxu0 %v2648
    %6798 = vmatmul.f32.gmra.mxu0 %v6187
    %v6799 = vpop.f32.mrf.mxu0
    %v6800 = vadd.f32 0.0, %v6799
    %6801 = vdwg.mxu0
    %v6802 = vadd.f32 %v6660, %v6740
    %v6803 = vadd.f32 %v6680, %v6760
    %v6804 = vadd.f32 %v6700, %v6780
    %v6805 = vadd.f32 %v6720, %v6800
    %v6806 = vxor.u32 %v6802, 2147483648
    %v6807 = vmul.f32 %v6806, 1.442695
    %v6808 = vpow.pop %v6807
    %v6809 = vadd.f32 %v6808, 1.0
    %v6810 = vrcp.pop %v6809
    %v6811 = vmul.f32 %v6809, %v6810
    %v6812 = vsub.f32 1.0, %v6811
    %v6813 = vmul.f32 %v6810, %v6812
    %v6814 = vadd.f32 %v6810, %v6813
    %vm6815 = vweird.f32 %v6809
    %vm6816 = vweird.f32 %v6810
    %vm6817 = vmor %vm6815, %vm6816
    %v6818 = vsel %vm6817, %v6810, %v6814
    %v6819 = vand.u32 2147483647, %v6809
    %vm6820 = vcmp.eq.f32.partialorder %v6819, 8.507059e+37
    %v6821 = vand.u32 %v6809, 2147483648
    %v6822 = vor.u32 1.1754944e-38, %v6821
    %v6823 = vsel %vm6820, %v6822, %v6818
    %v6824 = vmul.f32 1.0, %v6823
    %v6825 = vxor.u32 %v6803, 2147483648
    %v6826 = vmul.f32 %v6825, 1.442695
    %v6827 = vpow.pop %v6826
    %v6828 = vadd.f32 %v6827, 1.0
    %v6829 = vrcp.pop %v6828
    %v6830 = vmul.f32 %v6828, %v6829
    %v6831 = vsub.f32 1.0, %v6830
    %v6832 = vmul.f32 %v6829, %v6831
    %v6833 = vadd.f32 %v6829, %v6832
    %vm6834 = vweird.f32 %v6828
    %vm6835 = vweird.f32 %v6829
    %vm6836 = vmor %vm6834, %vm6835
    %v6837 = vsel %vm6836, %v6829, %v6833
    %v6838 = vand.u32 2147483647, %v6828
    %vm6839 = vcmp.eq.f32.partialorder %v6838, 8.507059e+37
    %v6840 = vand.u32 %v6828, 2147483648
    %v6841 = vor.u32 1.1754944e-38, %v6840
    %v6842 = vsel %vm6839, %v6841, %v6837
    %v6843 = vmul.f32 1.0, %v6842
    %v6844 = vtanh.pop %v6804
    %v6845 = vxor.u32 %v6805, 2147483648
    %v6846 = vmul.f32 %v6845, 1.442695
    %v6847 = vpow.pop %v6846
    %v6848 = vadd.f32 %v6847, 1.0
    %v6849 = vrcp.pop %v6848
    %v6850 = vmul.f32 %v6848, %v6849
    %v6851 = vsub.f32 1.0, %v6850
    %v6852 = vmul.f32 %v6849, %v6851
    %v6853 = vadd.f32 %v6849, %v6852
    %vm6854 = vweird.f32 %v6848
    %vm6855 = vweird.f32 %v6849
    %vm6856 = vmor %vm6854, %vm6855
    %v6857 = vsel %vm6856, %v6849, %v6853
    %v6858 = vand.u32 2147483647, %v6848
    %vm6859 = vcmp.eq.f32.partialorder %v6858, 8.507059e+37
    %v6860 = vand.u32 %v6848, 2147483648
    %v6861 = vor.u32 1.1754944e-38, %v6860
    %v6862 = vsel %vm6859, %v6861, %v6857
    %v6863 = vmul.f32 1.0, %v6862
    %v6864 = vmul.f32 %v6843, %v6185
    %v6865 = vmul.f32 %v6824, %v6844
    %v6866 = vadd.f32 %v6864, %v6865
    %v6867 = vtanh.pop %v6866
    %v6868 = vmul.f32 %v6863, %v6867
    %6869 = vmatpush.msra.mxu0 %v1580
    %6870 = vmatpush.msra.mxu0 %v1576
    %6871 = vmatpush.msra.mxu0 %v1572
    %6872 = vmatpush.msra.mxu0 %v1568
    %6873 = vmatpush.msra.mxu0 %v1564
    %6874 = vmatpush.msra.mxu0 %v1560
    %6875 = vmatpush.msra.mxu0 %v1556
    %6876 = vmatpush.msra.mxu0 %v1552
    %6877 = vmatpush.msra.mxu0 %v1548
    %6878 = vmatpush.msra.mxu0 %v1544
    %6879 = vmatpush.msra.mxu0 %v1540
    %6880 = vmatpush.msra.mxu0 %v1536
    %6881 = vmatpush.msra.mxu0 %v1532
    %6882 = vmatpush.msra.mxu0 %v1528
    %6883 = vmatpush.msra.mxu0 %v1524
    %6884 = vmatpush.msra.mxu0 %v1520
    %6885 = vmatmul.f32.gmra.mxu0 %v6414
    %v6886 = vpop.f32.mrf.mxu0
    %v6887 = vadd.f32 %v1586, %v6886
    %6888 = vdwg.mxu0
    %6889 = vmatpush.msra.mxu0 %v1581
    %6890 = vmatpush.msra.mxu0 %v1577
    %6891 = vmatpush.msra.mxu0 %v1573
    %6892 = vmatpush.msra.mxu0 %v1569
    %6893 = vmatpush.msra.mxu0 %v1565
    %6894 = vmatpush.msra.mxu0 %v1561
    %6895 = vmatpush.msra.mxu0 %v1557
    %6896 = vmatpush.msra.mxu0 %v1553
    %6897 = vmatpush.msra.mxu0 %v1549
    %6898 = vmatpush.msra.mxu0 %v1545
    %6899 = vmatpush.msra.mxu0 %v1541
    %6900 = vmatpush.msra.mxu0 %v1537
    %6901 = vmatpush.msra.mxu0 %v1533
    %6902 = vmatpush.msra.mxu0 %v1529
    %6903 = vmatpush.msra.mxu0 %v1525
    %6904 = vmatpush.msra.mxu0 %v1521
    %6905 = vmatmul.f32.gmra.mxu0 %v6414
    %v6906 = vpop.f32.mrf.mxu0
    %v6907 = vadd.f32 %v1587, %v6906
    %6908 = vdwg.mxu0
    %6909 = vmatpush.msra.mxu0 %v1582
    %6910 = vmatpush.msra.mxu0 %v1578
    %6911 = vmatpush.msra.mxu0 %v1574
    %6912 = vmatpush.msra.mxu0 %v1570
    %6913 = vmatpush.msra.mxu0 %v1566
    %6914 = vmatpush.msra.mxu0 %v1562
    %6915 = vmatpush.msra.mxu0 %v1558
    %6916 = vmatpush.msra.mxu0 %v1554
    %6917 = vmatpush.msra.mxu0 %v1550
    %6918 = vmatpush.msra.mxu0 %v1546
    %6919 = vmatpush.msra.mxu0 %v1542
    %6920 = vmatpush.msra.mxu0 %v1538
    %6921 = vmatpush.msra.mxu0 %v1534
    %6922 = vmatpush.msra.mxu0 %v1530
    %6923 = vmatpush.msra.mxu0 %v1526
    %6924 = vmatpush.msra.mxu0 %v1522
    %6925 = vmatmul.f32.gmra.mxu0 %v6414
    %v6926 = vpop.f32.mrf.mxu0
    %v6927 = vadd.f32 %v1588, %v6926
    %6928 = vdwg.mxu0
    %6929 = vmatpush.msra.mxu0 %v1583
    %6930 = vmatpush.msra.mxu0 %v1579
    %6931 = vmatpush.msra.mxu0 %v1575
    %6932 = vmatpush.msra.mxu0 %v1571
    %6933 = vmatpush.msra.mxu0 %v1567
    %6934 = vmatpush.msra.mxu0 %v1563
    %6935 = vmatpush.msra.mxu0 %v1559
    %6936 = vmatpush.msra.mxu0 %v1555
    %6937 = vmatpush.msra.mxu0 %v1551
    %6938 = vmatpush.msra.mxu0 %v1547
    %6939 = vmatpush.msra.mxu0 %v1543
    %6940 = vmatpush.msra.mxu0 %v1539
    %6941 = vmatpush.msra.mxu0 %v1535
    %6942 = vmatpush.msra.mxu0 %v1531
    %6943 = vmatpush.msra.mxu0 %v1527
    %6944 = vmatpush.msra.mxu0 %v1523
    %6945 = vmatmul.f32.gmra.mxu0 %v6414
    %v6946 = vpop.f32.mrf.mxu0
    %v6947 = vadd.f32 %v1589, %v6946
    %6948 = vdwg.mxu0
    %6949 = vmatpush.msra.mxu0 %v1734
    %6950 = vmatpush.msra.mxu0 %v1730
    %6951 = vmatpush.msra.mxu0 %v1726
    %6952 = vmatpush.msra.mxu0 %v1722
    %6953 = vmatpush.msra.mxu0 %v1718
    %6954 = vmatpush.msra.mxu0 %v1714
    %6955 = vmatpush.msra.mxu0 %v1710
    %6956 = vmatpush.msra.mxu0 %v1706
    %6957 = vmatpush.msra.mxu0 %v1702
    %6958 = vmatpush.msra.mxu0 %v1698
    %6959 = vmatpush.msra.mxu0 %v1694
    %6960 = vmatpush.msra.mxu0 %v1690
    %6961 = vmatpush.msra.mxu0 %v1686
    %6962 = vmatpush.msra.mxu0 %v1682
    %6963 = vmatpush.msra.mxu0 %v1678
    %6964 = vmatpush.msra.mxu0 %v1674
    %6965 = vmatmul.f32.gmra.mxu0 %v6641
    %v6966 = vpop.f32.mrf.mxu0
    %v6967 = vadd.f32 0.0, %v6966
    %6968 = vdwg.mxu0
    %6969 = vmatpush.msra.mxu0 %v1735
    %6970 = vmatpush.msra.mxu0 %v1731
    %6971 = vmatpush.msra.mxu0 %v1727
    %6972 = vmatpush.msra.mxu0 %v1723
    %6973 = vmatpush.msra.mxu0 %v1719
    %6974 = vmatpush.msra.mxu0 %v1715
    %6975 = vmatpush.msra.mxu0 %v1711
    %6976 = vmatpush.msra.mxu0 %v1707
    %6977 = vmatpush.msra.mxu0 %v1703
    %6978 = vmatpush.msra.mxu0 %v1699
    %6979 = vmatpush.msra.mxu0 %v1695
    %6980 = vmatpush.msra.mxu0 %v1691
    %6981 = vmatpush.msra.mxu0 %v1687
    %6982 = vmatpush.msra.mxu0 %v1683
    %6983 = vmatpush.msra.mxu0 %v1679
    %6984 = vmatpush.msra.mxu0 %v1675
    %6985 = vmatmul.f32.gmra.mxu0 %v6641
    %v6986 = vpop.f32.mrf.mxu0
    %v6987 = vadd.f32 0.0, %v6986
    %6988 = vdwg.mxu0
    %6989 = vmatpush.msra.mxu0 %v1736
    %6990 = vmatpush.msra.mxu0 %v1732
    %6991 = vmatpush.msra.mxu0 %v1728
    %6992 = vmatpush.msra.mxu0 %v1724
    %6993 = vmatpush.msra.mxu0 %v1720
    %6994 = vmatpush.msra.mxu0 %v1716
    %6995 = vmatpush.msra.mxu0 %v1712
    %6996 = vmatpush.msra.mxu0 %v1708
    %6997 = vmatpush.msra.mxu0 %v1704
    %6998 = vmatpush.msra.mxu0 %v1700
    %6999 = vmatpush.msra.mxu0 %v1696
    %7000 = vmatpush.msra.mxu0 %v1692
    %7001 = vmatpush.msra.mxu0 %v1688
    %7002 = vmatpush.msra.mxu0 %v1684
    %7003 = vmatpush.msra.mxu0 %v1680
    %7004 = vmatpush.msra.mxu0 %v1676
    %7005 = vmatmul.f32.gmra.mxu0 %v6641
    %v7006 = vpop.f32.mrf.mxu0
    %v7007 = vadd.f32 0.0, %v7006
    %7008 = vdwg.mxu0
    %7009 = vmatpush.msra.mxu0 %v1737
    %7010 = vmatpush.msra.mxu0 %v1733
    %7011 = vmatpush.msra.mxu0 %v1729
    %7012 = vmatpush.msra.mxu0 %v1725
    %7013 = vmatpush.msra.mxu0 %v1721
    %7014 = vmatpush.msra.mxu0 %v1717
    %7015 = vmatpush.msra.mxu0 %v1713
    %7016 = vmatpush.msra.mxu0 %v1709
    %7017 = vmatpush.msra.mxu0 %v1705
    %7018 = vmatpush.msra.mxu0 %v1701
    %7019 = vmatpush.msra.mxu0 %v1697
    %7020 = vmatpush.msra.mxu0 %v1693
    %7021 = vmatpush.msra.mxu0 %v1689
    %7022 = vmatpush.msra.mxu0 %v1685
    %7023 = vmatpush.msra.mxu0 %v1681
    %7024 = vmatpush.msra.mxu0 %v1677
    %7025 = vmatmul.f32.gmra.mxu0 %v6641
    %v7026 = vpop.f32.mrf.mxu0
    %v7027 = vadd.f32 0.0, %v7026
    %7028 = vdwg.mxu0
    %v7029 = vadd.f32 %v6887, %v6967
    %v7030 = vadd.f32 %v6907, %v6987
    %v7031 = vadd.f32 %v6927, %v7007
    %v7032 = vadd.f32 %v6947, %v7027
    %v7033 = vxor.u32 %v7029, 2147483648
    %v7034 = vmul.f32 %v7033, 1.442695
    %v7035 = vpow.pop %v7034
    %v7036 = vadd.f32 %v7035, 1.0
    %v7037 = vrcp.pop %v7036
    %v7038 = vmul.f32 %v7036, %v7037
    %v7039 = vsub.f32 1.0, %v7038
    %v7040 = vmul.f32 %v7037, %v7039
    %v7041 = vadd.f32 %v7037, %v7040
    %vm7042 = vweird.f32 %v7036
    %vm7043 = vweird.f32 %v7037
    %vm7044 = vmor %vm7042, %vm7043
    %v7045 = vsel %vm7044, %v7037, %v7041
    %v7046 = vand.u32 2147483647, %v7036
    %vm7047 = vcmp.eq.f32.partialorder %v7046, 8.507059e+37
    %v7048 = vand.u32 %v7036, 2147483648
    %v7049 = vor.u32 1.1754944e-38, %v7048
    %v7050 = vsel %vm7047, %v7049, %v7045
    %v7051 = vmul.f32 1.0, %v7050
    %v7052 = vxor.u32 %v7030, 2147483648
    %v7053 = vmul.f32 %v7052, 1.442695
    %v7054 = vpow.pop %v7053
    %v7055 = vadd.f32 %v7054, 1.0
    %v7056 = vrcp.pop %v7055
    %v7057 = vmul.f32 %v7055, %v7056
    %v7058 = vsub.f32 1.0, %v7057
    %v7059 = vmul.f32 %v7056, %v7058
    %v7060 = vadd.f32 %v7056, %v7059
    %vm7061 = vweird.f32 %v7055
    %vm7062 = vweird.f32 %v7056
    %vm7063 = vmor %vm7061, %vm7062
    %v7064 = vsel %vm7063, %v7056, %v7060
    %v7065 = vand.u32 2147483647, %v7055
    %vm7066 = vcmp.eq.f32.partialorder %v7065, 8.507059e+37
    %v7067 = vand.u32 %v7055, 2147483648
    %v7068 = vor.u32 1.1754944e-38, %v7067
    %v7069 = vsel %vm7066, %v7068, %v7064
    %v7070 = vmul.f32 1.0, %v7069
    %v7071 = vtanh.pop %v7031
    %v7072 = vxor.u32 %v7032, 2147483648
    %v7073 = vmul.f32 %v7072, 1.442695
    %v7074 = vpow.pop %v7073
    %v7075 = vadd.f32 %v7074, 1.0
    %v7076 = vrcp.pop %v7075
    %v7077 = vmul.f32 %v7075, %v7076
    %v7078 = vsub.f32 1.0, %v7077
    %v7079 = vmul.f32 %v7076, %v7078
    %v7080 = vadd.f32 %v7076, %v7079
    %vm7081 = vweird.f32 %v7075
    %vm7082 = vweird.f32 %v7076
    %vm7083 = vmor %vm7081, %vm7082
    %v7084 = vsel %vm7083, %v7076, %v7080
    %v7085 = vand.u32 2147483647, %v7075
    %vm7086 = vcmp.eq.f32.partialorder %v7085, 8.507059e+37
    %v7087 = vand.u32 %v7075, 2147483648
    %v7088 = vor.u32 1.1754944e-38, %v7087
    %v7089 = vsel %vm7086, %v7088, %v7084
    %v7090 = vmul.f32 1.0, %v7089
    %v7091 = vmul.f32 %v7070, %v6639
    %v7092 = vmul.f32 %v7051, %v7071
    %v7093 = vadd.f32 %v7091, %v7092
    %v7094 = vtanh.pop %v7093
    %v7095 = vmul.f32 %v7090, %v7094
    %7096 = vmatpush.msra.mxu0 %v2551
    %7097 = vmatpush.msra.mxu0 %v2547
    %7098 = vmatpush.msra.mxu0 %v2543
    %7099 = vmatpush.msra.mxu0 %v2539
    %7100 = vmatpush.msra.mxu0 %v2535
    %7101 = vmatpush.msra.mxu0 %v2531
    %7102 = vmatpush.msra.mxu0 %v2527
    %7103 = vmatpush.msra.mxu0 %v2523
    %7104 = vmatpush.msra.mxu0 %v2519
    %7105 = vmatpush.msra.mxu0 %v2515
    %7106 = vmatpush.msra.mxu0 %v2511
    %7107 = vmatpush.msra.mxu0 %v2507
    %7108 = vmatpush.msra.mxu0 %v2503
    %7109 = vmatpush.msra.mxu0 %v2499
    %7110 = vmatpush.msra.mxu0 %v2495
    %7111 = vmatpush.msra.mxu0 %v2491
    %7112 = vmatmul.f32.gmra.mxu0 %v6641
    %v7113 = vpop.f32.mrf.mxu0
    %v7114 = vadd.f32 %v2557, %v7113
    %7115 = vdwg.mxu0
    %7116 = vmatpush.msra.mxu0 %v2552
    %7117 = vmatpush.msra.mxu0 %v2548
    %7118 = vmatpush.msra.mxu0 %v2544
    %7119 = vmatpush.msra.mxu0 %v2540
    %7120 = vmatpush.msra.mxu0 %v2536
    %7121 = vmatpush.msra.mxu0 %v2532
    %7122 = vmatpush.msra.mxu0 %v2528
    %7123 = vmatpush.msra.mxu0 %v2524
    %7124 = vmatpush.msra.mxu0 %v2520
    %7125 = vmatpush.msra.mxu0 %v2516
    %7126 = vmatpush.msra.mxu0 %v2512
    %7127 = vmatpush.msra.mxu0 %v2508
    %7128 = vmatpush.msra.mxu0 %v2504
    %7129 = vmatpush.msra.mxu0 %v2500
    %7130 = vmatpush.msra.mxu0 %v2496
    %7131 = vmatpush.msra.mxu0 %v2492
    %7132 = vmatmul.f32.gmra.mxu0 %v6641
    %v7133 = vpop.f32.mrf.mxu0
    %v7134 = vadd.f32 %v2558, %v7133
    %7135 = vdwg.mxu0
    %7136 = vmatpush.msra.mxu0 %v2553
    %7137 = vmatpush.msra.mxu0 %v2549
    %7138 = vmatpush.msra.mxu0 %v2545
    %7139 = vmatpush.msra.mxu0 %v2541
    %7140 = vmatpush.msra.mxu0 %v2537
    %7141 = vmatpush.msra.mxu0 %v2533
    %7142 = vmatpush.msra.mxu0 %v2529
    %7143 = vmatpush.msra.mxu0 %v2525
    %7144 = vmatpush.msra.mxu0 %v2521
    %7145 = vmatpush.msra.mxu0 %v2517
    %7146 = vmatpush.msra.mxu0 %v2513
    %7147 = vmatpush.msra.mxu0 %v2509
    %7148 = vmatpush.msra.mxu0 %v2505
    %7149 = vmatpush.msra.mxu0 %v2501
    %7150 = vmatpush.msra.mxu0 %v2497
    %7151 = vmatpush.msra.mxu0 %v2493
    %7152 = vmatmul.f32.gmra.mxu0 %v6641
    %v7153 = vpop.f32.mrf.mxu0
    %v7154 = vadd.f32 %v2559, %v7153
    %7155 = vdwg.mxu0
    %7156 = vmatpush.msra.mxu0 %v2554
    %7157 = vmatpush.msra.mxu0 %v2550
    %7158 = vmatpush.msra.mxu0 %v2546
    %7159 = vmatpush.msra.mxu0 %v2542
    %7160 = vmatpush.msra.mxu0 %v2538
    %7161 = vmatpush.msra.mxu0 %v2534
    %7162 = vmatpush.msra.mxu0 %v2530
    %7163 = vmatpush.msra.mxu0 %v2526
    %7164 = vmatpush.msra.mxu0 %v2522
    %7165 = vmatpush.msra.mxu0 %v2518
    %7166 = vmatpush.msra.mxu0 %v2514
    %7167 = vmatpush.msra.mxu0 %v2510
    %7168 = vmatpush.msra.mxu0 %v2506
    %7169 = vmatpush.msra.mxu0 %v2502
    %7170 = vmatpush.msra.mxu0 %v2498
    %7171 = vmatpush.msra.mxu0 %v2494
    %7172 = vmatmul.f32.gmra.mxu0 %v6641
    %v7173 = vpop.f32.mrf.mxu0
    %v7174 = vadd.f32 %v2560, %v7173
    %7175 = vdwg.mxu0
    %7176 = vmatpush.msra.mxu0 %v2705
    %7177 = vmatpush.msra.mxu0 %v2701
    %7178 = vmatpush.msra.mxu0 %v2697
    %7179 = vmatpush.msra.mxu0 %v2693
    %7180 = vmatpush.msra.mxu0 %v2689
    %7181 = vmatpush.msra.mxu0 %v2685
    %7182 = vmatpush.msra.mxu0 %v2681
    %7183 = vmatpush.msra.mxu0 %v2677
    %7184 = vmatpush.msra.mxu0 %v2673
    %7185 = vmatpush.msra.mxu0 %v2669
    %7186 = vmatpush.msra.mxu0 %v2665
    %7187 = vmatpush.msra.mxu0 %v2661
    %7188 = vmatpush.msra.mxu0 %v2657
    %7189 = vmatpush.msra.mxu0 %v2653
    %7190 = vmatpush.msra.mxu0 %v2649
    %7191 = vmatpush.msra.mxu0 %v2645
    %7192 = vmatmul.f32.gmra.mxu0 %v6868
    %v7193 = vpop.f32.mrf.mxu0
    %v7194 = vadd.f32 0.0, %v7193
    %7195 = vdwg.mxu0
    %7196 = vmatpush.msra.mxu0 %v2706
    %7197 = vmatpush.msra.mxu0 %v2702
    %7198 = vmatpush.msra.mxu0 %v2698
    %7199 = vmatpush.msra.mxu0 %v2694
    %7200 = vmatpush.msra.mxu0 %v2690
    %7201 = vmatpush.msra.mxu0 %v2686
    %7202 = vmatpush.msra.mxu0 %v2682
    %7203 = vmatpush.msra.mxu0 %v2678
    %7204 = vmatpush.msra.mxu0 %v2674
    %7205 = vmatpush.msra.mxu0 %v2670
    %7206 = vmatpush.msra.mxu0 %v2666
    %7207 = vmatpush.msra.mxu0 %v2662
    %7208 = vmatpush.msra.mxu0 %v2658
    %7209 = vmatpush.msra.mxu0 %v2654
    %7210 = vmatpush.msra.mxu0 %v2650
    %7211 = vmatpush.msra.mxu0 %v2646
    %7212 = vmatmul.f32.gmra.mxu0 %v6868
    %v7213 = vpop.f32.mrf.mxu0
    %v7214 = vadd.f32 0.0, %v7213
    %7215 = vdwg.mxu0
    %7216 = vmatpush.msra.mxu0 %v2707
    %7217 = vmatpush.msra.mxu0 %v2703
    %7218 = vmatpush.msra.mxu0 %v2699
    %7219 = vmatpush.msra.mxu0 %v2695
    %7220 = vmatpush.msra.mxu0 %v2691
    %7221 = vmatpush.msra.mxu0 %v2687
    %7222 = vmatpush.msra.mxu0 %v2683
    %7223 = vmatpush.msra.mxu0 %v2679
    %7224 = vmatpush.msra.mxu0 %v2675
    %7225 = vmatpush.msra.mxu0 %v2671
    %7226 = vmatpush.msra.mxu0 %v2667
    %7227 = vmatpush.msra.mxu0 %v2663
    %7228 = vmatpush.msra.mxu0 %v2659
    %7229 = vmatpush.msra.mxu0 %v2655
    %7230 = vmatpush.msra.mxu0 %v2651
    %7231 = vmatpush.msra.mxu0 %v2647
    %7232 = vmatmul.f32.gmra.mxu0 %v6868
    %v7233 = vpop.f32.mrf.mxu0
    %v7234 = vadd.f32 0.0, %v7233
    %7235 = vdwg.mxu0
    %7236 = vmatpush.msra.mxu0 %v2708
    %7237 = vmatpush.msra.mxu0 %v2704
    %7238 = vmatpush.msra.mxu0 %v2700
    %7239 = vmatpush.msra.mxu0 %v2696
    %7240 = vmatpush.msra.mxu0 %v2692
    %7241 = vmatpush.msra.mxu0 %v2688
    %7242 = vmatpush.msra.mxu0 %v2684
    %7243 = vmatpush.msra.mxu0 %v2680
    %7244 = vmatpush.msra.mxu0 %v2676
    %7245 = vmatpush.msra.mxu0 %v2672
    %7246 = vmatpush.msra.mxu0 %v2668
    %7247 = vmatpush.msra.mxu0 %v2664
    %7248 = vmatpush.msra.mxu0 %v2660
    %7249 = vmatpush.msra.mxu0 %v2656
    %7250 = vmatpush.msra.mxu0 %v2652
    %7251 = vmatpush.msra.mxu0 %v2648
    %7252 = vmatmul.f32.gmra.mxu0 %v6868
    %v7253 = vpop.f32.mrf.mxu0
    %v7254 = vadd.f32 0.0, %v7253
    %7255 = vdwg.mxu0
    %v7256 = vadd.f32 %v7114, %v7194
    %v7257 = vadd.f32 %v7134, %v7214
    %v7258 = vadd.f32 %v7154, %v7234
    %v7259 = vadd.f32 %v7174, %v7254
    %v7260 = vxor.u32 %v7256, 2147483648
    %v7261 = vmul.f32 %v7260, 1.442695
    %v7262 = vpow.pop %v7261
    %v7263 = vadd.f32 %v7262, 1.0
    %v7264 = vrcp.pop %v7263
    %v7265 = vmul.f32 %v7263, %v7264
    %v7266 = vsub.f32 1.0, %v7265
    %v7267 = vmul.f32 %v7264, %v7266
    %v7268 = vadd.f32 %v7264, %v7267
    %vm7269 = vweird.f32 %v7263
    %vm7270 = vweird.f32 %v7264
    %vm7271 = vmor %vm7269, %vm7270
    %v7272 = vsel %vm7271, %v7264, %v7268
    %v7273 = vand.u32 2147483647, %v7263
    %vm7274 = vcmp.eq.f32.partialorder %v7273, 8.507059e+37
    %v7275 = vand.u32 %v7263, 2147483648
    %v7276 = vor.u32 1.1754944e-38, %v7275
    %v7277 = vsel %vm7274, %v7276, %v7272
    %v7278 = vmul.f32 1.0, %v7277
    %v7279 = vxor.u32 %v7257, 2147483648
    %v7280 = vmul.f32 %v7279, 1.442695
    %v7281 = vpow.pop %v7280
    %v7282 = vadd.f32 %v7281, 1.0
    %v7283 = vrcp.pop %v7282
    %v7284 = vmul.f32 %v7282, %v7283
    %v7285 = vsub.f32 1.0, %v7284
    %v7286 = vmul.f32 %v7283, %v7285
    %v7287 = vadd.f32 %v7283, %v7286
    %vm7288 = vweird.f32 %v7282
    %vm7289 = vweird.f32 %v7283
    %vm7290 = vmor %vm7288, %vm7289
    %v7291 = vsel %vm7290, %v7283, %v7287
    %v7292 = vand.u32 2147483647, %v7282
    %vm7293 = vcmp.eq.f32.partialorder %v7292, 8.507059e+37
    %v7294 = vand.u32 %v7282, 2147483648
    %v7295 = vor.u32 1.1754944e-38, %v7294
    %v7296 = vsel %vm7293, %v7295, %v7291
    %v7297 = vmul.f32 1.0, %v7296
    %v7298 = vtanh.pop %v7258
    %v7299 = vxor.u32 %v7259, 2147483648
    %v7300 = vmul.f32 %v7299, 1.442695
    %v7301 = vpow.pop %v7300
    %v7302 = vadd.f32 %v7301, 1.0
    %v7303 = vrcp.pop %v7302
    %v7304 = vmul.f32 %v7302, %v7303
    %v7305 = vsub.f32 1.0, %v7304
    %v7306 = vmul.f32 %v7303, %v7305
    %v7307 = vadd.f32 %v7303, %v7306
    %vm7308 = vweird.f32 %v7302
    %vm7309 = vweird.f32 %v7303
    %vm7310 = vmor %vm7308, %vm7309
    %v7311 = vsel %vm7310, %v7303, %v7307
    %v7312 = vand.u32 2147483647, %v7302
    %vm7313 = vcmp.eq.f32.partialorder %v7312, 8.507059e+37
    %v7314 = vand.u32 %v7302, 2147483648
    %v7315 = vor.u32 1.1754944e-38, %v7314
    %v7316 = vsel %vm7313, %v7315, %v7311
    %v7317 = vmul.f32 1.0, %v7316
    %v7318 = vmul.f32 %v7297, %v6866
    %v7319 = vmul.f32 %v7278, %v7298
    %v7320 = vadd.f32 %v7318, %v7319
    %v7321 = vtanh.pop %v7320
    %v7322 = vmul.f32 %v7317, %v7321
    %7323 = vmatpush.msra.mxu0 %v2551
    %7324 = vmatpush.msra.mxu0 %v2547
    %7325 = vmatpush.msra.mxu0 %v2543
    %7326 = vmatpush.msra.mxu0 %v2539
    %7327 = vmatpush.msra.mxu0 %v2535
    %7328 = vmatpush.msra.mxu0 %v2531
    %7329 = vmatpush.msra.mxu0 %v2527
    %7330 = vmatpush.msra.mxu0 %v2523
    %7331 = vmatpush.msra.mxu0 %v2519
    %7332 = vmatpush.msra.mxu0 %v2515
    %7333 = vmatpush.msra.mxu0 %v2511
    %7334 = vmatpush.msra.mxu0 %v2507
    %7335 = vmatpush.msra.mxu0 %v2503
    %7336 = vmatpush.msra.mxu0 %v2499
    %7337 = vmatpush.msra.mxu0 %v2495
    %7338 = vmatpush.msra.mxu0 %v2491
    %7339 = vmatmul.f32.gmra.mxu0 %v7095
    %v7340 = vpop.f32.mrf.mxu0
    %v7341 = vadd.f32 %v2557, %v7340
    %7342 = vdwg.mxu0
    %7343 = vmatpush.msra.mxu0 %v2552
    %7344 = vmatpush.msra.mxu0 %v2548
    %7345 = vmatpush.msra.mxu0 %v2544
    %7346 = vmatpush.msra.mxu0 %v2540
    %7347 = vmatpush.msra.mxu0 %v2536
    %7348 = vmatpush.msra.mxu0 %v2532
    %7349 = vmatpush.msra.mxu0 %v2528
    %7350 = vmatpush.msra.mxu0 %v2524
    %7351 = vmatpush.msra.mxu0 %v2520
    %7352 = vmatpush.msra.mxu0 %v2516
    %7353 = vmatpush.msra.mxu0 %v2512
    %7354 = vmatpush.msra.mxu0 %v2508
    %7355 = vmatpush.msra.mxu0 %v2504
    %7356 = vmatpush.msra.mxu0 %v2500
    %7357 = vmatpush.msra.mxu0 %v2496
    %7358 = vmatpush.msra.mxu0 %v2492
    %7359 = vmatmul.f32.gmra.mxu0 %v7095
    %v7360 = vpop.f32.mrf.mxu0
    %v7361 = vadd.f32 %v2558, %v7360
    %7362 = vdwg.mxu0
    %7363 = vmatpush.msra.mxu0 %v2553
    %7364 = vmatpush.msra.mxu0 %v2549
    %7365 = vmatpush.msra.mxu0 %v2545
    %7366 = vmatpush.msra.mxu0 %v2541
    %7367 = vmatpush.msra.mxu0 %v2537
    %7368 = vmatpush.msra.mxu0 %v2533
    %7369 = vmatpush.msra.mxu0 %v2529
    %7370 = vmatpush.msra.mxu0 %v2525
    %7371 = vmatpush.msra.mxu0 %v2521
    %7372 = vmatpush.msra.mxu0 %v2517
    %7373 = vmatpush.msra.mxu0 %v2513
    %7374 = vmatpush.msra.mxu0 %v2509
    %7375 = vmatpush.msra.mxu0 %v2505
    %7376 = vmatpush.msra.mxu0 %v2501
    %7377 = vmatpush.msra.mxu0 %v2497
    %7378 = vmatpush.msra.mxu0 %v2493
    %7379 = vmatmul.f32.gmra.mxu0 %v7095
    %v7380 = vpop.f32.mrf.mxu0
    %v7381 = vadd.f32 %v2559, %v7380
    %7382 = vdwg.mxu0
    %7383 = vmatpush.msra.mxu0 %v2554
    %7384 = vmatpush.msra.mxu0 %v2550
    %7385 = vmatpush.msra.mxu0 %v2546
    %7386 = vmatpush.msra.mxu0 %v2542
    %7387 = vmatpush.msra.mxu0 %v2538
    %7388 = vmatpush.msra.mxu0 %v2534
    %7389 = vmatpush.msra.mxu0 %v2530
    %7390 = vmatpush.msra.mxu0 %v2526
    %7391 = vmatpush.msra.mxu0 %v2522
    %7392 = vmatpush.msra.mxu0 %v2518
    %7393 = vmatpush.msra.mxu0 %v2514
    %7394 = vmatpush.msra.mxu0 %v2510
    %7395 = vmatpush.msra.mxu0 %v2506
    %7396 = vmatpush.msra.mxu0 %v2502
    %7397 = vmatpush.msra.mxu0 %v2498
    %7398 = vmatpush.msra.mxu0 %v2494
    %7399 = vmatmul.f32.gmra.mxu0 %v7095
    %v7400 = vpop.f32.mrf.mxu0
    %v7401 = vadd.f32 %v2560, %v7400
    %7402 = vdwg.mxu0
    %7403 = vmatpush.msra.mxu0 %v2705
    %7404 = vmatpush.msra.mxu0 %v2701
    %7405 = vmatpush.msra.mxu0 %v2697
    %7406 = vmatpush.msra.mxu0 %v2693
    %7407 = vmatpush.msra.mxu0 %v2689
    %7408 = vmatpush.msra.mxu0 %v2685
    %7409 = vmatpush.msra.mxu0 %v2681
    %7410 = vmatpush.msra.mxu0 %v2677
    %7411 = vmatpush.msra.mxu0 %v2673
    %7412 = vmatpush.msra.mxu0 %v2669
    %7413 = vmatpush.msra.mxu0 %v2665
    %7414 = vmatpush.msra.mxu0 %v2661
    %7415 = vmatpush.msra.mxu0 %v2657
    %7416 = vmatpush.msra.mxu0 %v2653
    %7417 = vmatpush.msra.mxu0 %v2649
    %7418 = vmatpush.msra.mxu0 %v2645
    %7419 = vmatmul.f32.gmra.mxu0 %v7322
    %v7420 = vpop.f32.mrf.mxu0
    %v7421 = vadd.f32 0.0, %v7420
    %7422 = vdwg.mxu0
    %7423 = vmatpush.msra.mxu0 %v2706
    %7424 = vmatpush.msra.mxu0 %v2702
    %7425 = vmatpush.msra.mxu0 %v2698
    %7426 = vmatpush.msra.mxu0 %v2694
    %7427 = vmatpush.msra.mxu0 %v2690
    %7428 = vmatpush.msra.mxu0 %v2686
    %7429 = vmatpush.msra.mxu0 %v2682
    %7430 = vmatpush.msra.mxu0 %v2678
    %7431 = vmatpush.msra.mxu0 %v2674
    %7432 = vmatpush.msra.mxu0 %v2670
    %7433 = vmatpush.msra.mxu0 %v2666
    %7434 = vmatpush.msra.mxu0 %v2662
    %7435 = vmatpush.msra.mxu0 %v2658
    %7436 = vmatpush.msra.mxu0 %v2654
    %7437 = vmatpush.msra.mxu0 %v2650
    %7438 = vmatpush.msra.mxu0 %v2646
    %7439 = vmatmul.f32.gmra.mxu0 %v7322
    %v7440 = vpop.f32.mrf.mxu0
    %v7441 = vadd.f32 0.0, %v7440
    %7442 = vdwg.mxu0
    %7443 = vmatpush.msra.mxu0 %v2707
    %7444 = vmatpush.msra.mxu0 %v2703
    %7445 = vmatpush.msra.mxu0 %v2699
    %7446 = vmatpush.msra.mxu0 %v2695
    %7447 = vmatpush.msra.mxu0 %v2691
    %7448 = vmatpush.msra.mxu0 %v2687
    %7449 = vmatpush.msra.mxu0 %v2683
    %7450 = vmatpush.msra.mxu0 %v2679
    %7451 = vmatpush.msra.mxu0 %v2675
    %7452 = vmatpush.msra.mxu0 %v2671
    %7453 = vmatpush.msra.mxu0 %v2667
    %7454 = vmatpush.msra.mxu0 %v2663
    %7455 = vmatpush.msra.mxu0 %v2659
    %7456 = vmatpush.msra.mxu0 %v2655
    %7457 = vmatpush.msra.mxu0 %v2651
    %7458 = vmatpush.msra.mxu0 %v2647
    %7459 = vmatmul.f32.gmra.mxu0 %v7322
    %v7460 = vpop.f32.mrf.mxu0
    %v7461 = vadd.f32 0.0, %v7460
    %7462 = vdwg.mxu0
    %7463 = vmatpush.msra.mxu0 %v2708
    %7464 = vmatpush.msra.mxu0 %v2704
    %7465 = vmatpush.msra.mxu0 %v2700
    %7466 = vmatpush.msra.mxu0 %v2696
    %7467 = vmatpush.msra.mxu0 %v2692
    %7468 = vmatpush.msra.mxu0 %v2688
    %7469 = vmatpush.msra.mxu0 %v2684
    %7470 = vmatpush.msra.mxu0 %v2680
    %7471 = vmatpush.msra.mxu0 %v2676
    %7472 = vmatpush.msra.mxu0 %v2672
    %7473 = vmatpush.msra.mxu0 %v2668
    %7474 = vmatpush.msra.mxu0 %v2664
    %7475 = vmatpush.msra.mxu0 %v2660
    %7476 = vmatpush.msra.mxu0 %v2656
    %7477 = vmatpush.msra.mxu0 %v2652
    %7478 = vmatpush.msra.mxu0 %v2648
    %7479 = vmatmul.f32.gmra.mxu0 %v7322
    %v7480 = vpop.f32.mrf.mxu0
    %v7481 = vadd.f32 0.0, %v7480
    %7482 = vdwg.mxu0
    %v7483 = vadd.f32 %v7341, %v7421
    %v7484 = vadd.f32 %v7361, %v7441
    %v7485 = vadd.f32 %v7381, %v7461
    %v7486 = vadd.f32 %v7401, %v7481
    %v7487 = vxor.u32 %v7483, 2147483648
    %v7488 = vmul.f32 %v7487, 1.442695
    %v7489 = vpow.pop %v7488
    %v7490 = vadd.f32 %v7489, 1.0
    %v7491 = vrcp.pop %v7490
    %v7492 = vmul.f32 %v7490, %v7491
    %v7493 = vsub.f32 1.0, %v7492
    %v7494 = vmul.f32 %v7491, %v7493
    %v7495 = vadd.f32 %v7491, %v7494
    %vm7496 = vweird.f32 %v7490
    %vm7497 = vweird.f32 %v7491
    %vm7498 = vmor %vm7496, %vm7497
    %v7499 = vsel %vm7498, %v7491, %v7495
    %v7500 = vand.u32 2147483647, %v7490
    %vm7501 = vcmp.eq.f32.partialorder %v7500, 8.507059e+37
    %v7502 = vand.u32 %v7490, 2147483648
    %v7503 = vor.u32 1.1754944e-38, %v7502
    %v7504 = vsel %vm7501, %v7503, %v7499
    %v7505 = vmul.f32 1.0, %v7504
    %v7506 = vxor.u32 %v7484, 2147483648
    %v7507 = vmul.f32 %v7506, 1.442695
    %v7508 = vpow.pop %v7507
    %v7509 = vadd.f32 %v7508, 1.0
    %v7510 = vrcp.pop %v7509
    %v7511 = vmul.f32 %v7509, %v7510
    %v7512 = vsub.f32 1.0, %v7511
    %v7513 = vmul.f32 %v7510, %v7512
    %v7514 = vadd.f32 %v7510, %v7513
    %vm7515 = vweird.f32 %v7509
    %vm7516 = vweird.f32 %v7510
    %vm7517 = vmor %vm7515, %vm7516
    %v7518 = vsel %vm7517, %v7510, %v7514
    %v7519 = vand.u32 2147483647, %v7509
    %vm7520 = vcmp.eq.f32.partialorder %v7519, 8.507059e+37
    %v7521 = vand.u32 %v7509, 2147483648
    %v7522 = vor.u32 1.1754944e-38, %v7521
    %v7523 = vsel %vm7520, %v7522, %v7518
    %v7524 = vmul.f32 1.0, %v7523
    %v7525 = vtanh.pop %v7485
    %v7526 = vxor.u32 %v7486, 2147483648
    %v7527 = vmul.f32 %v7526, 1.442695
    %v7528 = vpow.pop %v7527
    %v7529 = vadd.f32 %v7528, 1.0
    %v7530 = vrcp.pop %v7529
    %v7531 = vmul.f32 %v7529, %v7530
    %v7532 = vsub.f32 1.0, %v7531
    %v7533 = vmul.f32 %v7530, %v7532
    %v7534 = vadd.f32 %v7530, %v7533
    %vm7535 = vweird.f32 %v7529
    %vm7536 = vweird.f32 %v7530
    %vm7537 = vmor %vm7535, %vm7536
    %v7538 = vsel %vm7537, %v7530, %v7534
    %v7539 = vand.u32 2147483647, %v7529
    %vm7540 = vcmp.eq.f32.partialorder %v7539, 8.507059e+37
    %v7541 = vand.u32 %v7529, 2147483648
    %v7542 = vor.u32 1.1754944e-38, %v7541
    %v7543 = vsel %vm7540, %v7542, %v7538
    %v7544 = vmul.f32 1.0, %v7543
    %v7545 = vmul.f32 %v7524, %v7320
    %v7546 = vmul.f32 %v7505, %v7525
    %v7547 = vadd.f32 %v7545, %v7546
    %v7548 = vtanh.pop %v7547
    %v7549 = vmul.f32 %v7544, %v7548
    %v7550 = vld [vmem:[%s13] sm:$0x1]
    %v7552 = vperm.slane %v7550, 0
    %v7554 = vmul.f32 %v7549, %v7552
    %7555 = vadd.xlane.f32.xlu0 %v7554
    %v7556 = vpop.xlane.xlu0 %7555
    %v7557 = vld [vmem:[#allocation3] sm:$0x1]
    %v7559 = vperm.slane %v7557, 0
    %v7561 = vadd.f32 %v7556, %v7559
    %vm7562 = vcmask 7168
    %7563 = vst.msk [vmem:[%s15] sm:$0xff] %vm7562, %v7561
    // Predicated region
    $region94: #{stacked_lstm_forward.1} parent=1 // pred_check
      _
    $region95: #{stacked_lstm_forward.1} parent=1 // pred_check_branch
      %7565 = sbr.rel (0) target = $region97
    $region96: #{stacked_lstm_forward.1} parent=1 // pred_region
      _
    $region97: #{stacked_lstm_forward.1} parent=1 // pred_fallthru
      _
    // Predicated region
    $region98: #{stacked_lstm_forward.1} parent=1 // pred_check
      _
    $region99: #{stacked_lstm_forward.1} parent=1 // pred_check_branch
      %7567 = sbr.rel (0) target = $region101
    $region100: #{stacked_lstm_forward.1} parent=1 // pred_region
      _
    $region101: #{stacked_lstm_forward.1} parent=1 // pred_fallthru
      _
    %7568 = vsyncpa [#allocation5], 1
    %7569 = vsyncpa [#allocation7], 1
    %7570 = vsyncpa [#allocation10], 1
    %7571 = vsyncpa [#allocation13], 1
    %7572 = vsyncpa [#allocation16], 1

</llo_original>
